<compile_context>
chip_gen: v5e
topology: v5e:2x2
jax: 0.10.0
libtpu: 0.0.40
codegen_flags: <defaults>
</compile_context>

<pallas_src>
import numpy as np
import jax
import jax.numpy as jnp
from jax.experimental import pallas as pl
from jax.experimental.pallas import tpu as pltpu

BN_EPS = 1e-3            # torchvision EfficientNet: BatchNorm2d(eps=1e-3)
STEM_C = 16              # EfficientNet-B0: 32
HEAD_C = 640             # EfficientNet-B0: 1280
# (expand_ratio, kernel, stride, out_channels, repeats) -- B0 stage layout,
# widths/repeats scaled.  B0 reference: (1,3,1,16,1) (6,3,2,24,2) (6,5,2,40,2)
# (6,3,2,80,3) (6,5,1,112,3) (6,5,2,192,4) (6,3,1,320,1).
STAGES = (
    (1, 3, 1, 8,   1),
    (6, 3, 2, 16,  2),
    (6, 5, 2, 24,  1),
    (6, 3, 2, 40,  1),
    (6, 5, 1, 56,  1),
    (6, 5, 2, 96,  1),
    (6, 3, 1, 160, 1),
)


# --------------------------------------------------------------- static config
def _block_cfgs():
    """Per-MBConv-block channel config (mirrors torchvision MBConvConfig)."""
    cfgs, cin = [], STEM_C
    for expand, k, stride, cout, repeats in STAGES:
        for r in range(repeats):
            s = stride if r == 0 else 1
            cfgs.append(dict(expand=expand, k=k, stride=s, cin=cin, cout=cout,
                             cexp=cin * expand, csq=max(1, cin // 4),
                             use_res=(s == 1 and cin == cout)))
            cin = cout
    return cfgs, cin


def _conv_out(n, k, s):
    return (n + 2 * (k // 2) - k) // s + 1


def _dw_gather(h, w, k, stride):
    """Per-image constant 0/1 gather matrix G (k*k*p_out, p_in): row
    t*p_out + r selects the input pixel of tap t for output pixel r (all-zero
    row = padding).  Shared across the batch (the batch grid handles images).
    Depthwise conv then becomes  sum_t G_t@x * w[t]  with VPU tap accumulation.
    """
    pad = k // 2
    oh, ow = _conv_out(h, k, stride), _conv_out(w, k, stride)
    p_in, p_out = h * w, oh * ow
    g = np.zeros((k * k, p_out, p_in), np.float32)
    for oy in range(oh):
        for ox in range(ow):
            r = oy * ow + ox
            for kh in range(k):
                for kw in range(k):
                    iy, ix = oy * stride + kh - pad, ox * stride + kw - pad
                    if 0 <= iy < h and 0 <= ix < w:
                        g[kh * k + kw, r, iy * w + ix] = 1.0
    return g.reshape(k * k * p_out, p_in)


def _build_plan(height, width):
    """Static execution plan: per-block metadata + per-image gather matrices."""
    cfgs, _ = _block_cfgs()
    h, w = _conv_out(height, 3, 2), _conv_out(width, 3, 2)    # after the stem
    plan = []
    for cfg in cfgs:
        blk = dict(cfg)
        oh = _conv_out(h, cfg["k"], cfg["stride"])
        ow = _conv_out(w, cfg["k"], cfg["stride"])
        blk["p_in"], blk["p_out"] = h * w, oh * ow
        blk["use_g"] = not (blk["p_in"] == 1 and blk["p_out"] == 1)
        if blk["use_g"]:
            # TODO(synk): for large resolutions (where G ~ O(P^2*k^2) would
            # pressure VMEM, especially on v7x) the gather matmul should be
            # replaced by k^2 shifted-slice VPU MACs on a (H, W, C) layout.
            blk["g"] = _dw_gather(h, w, cfg["k"], cfg["stride"])
        plan.append(blk)
        h, w = oh, ow
    return plan, h * w


# -------------------------------------------------------------------- params
def _bn_params(c):
    """Raw BatchNorm2d inference params (PyTorch init: gamma=1, beta=0,
    running_mean=0, running_var=1); folded into the conv weights at call time."""
    return dict(gamma=jnp.ones((1, c), jnp.float32),
                beta=jnp.zeros((1, c), jnp.float32),
                mean=jnp.zeros((1, c), jnp.float32),
                var=jnp.ones((1, c), jnp.float32))


def _bn_fold(bn):
    scale = bn["gamma"] * jax.lax.rsqrt(bn["var"] + BN_EPS)
    return scale, bn["beta"] - bn["mean"] * scale


def init_params(key, num_channels):
    """Deterministic synthetic weights.  Layouts are matmul-ready:
       Conv2d (Cout, Cin, kh, kw)    -> (Cin*kh*kw, Cout)
       depthwise Conv2d (C, 1, k, k) -> (k*k, C)
       nn.Linear (out, in)           -> (in, out)
    # TODO(synk): torchvision weights='DEFAULT' cannot be downloaded in-script;
    # deterministic random weights with the same shapes are used instead."""
    cfgs, c_last = _block_cfgs()
    keys = iter(jax.random.split(key, 64))

    def n(shape, std=0.1):
        return (std * jax.random.normal(next(keys), shape)).astype(jnp.float32)

    params = dict(
        stem=dict(w=n((num_channels * 9, STEM_C)), bn=_bn_params(STEM_C)),
        blocks=[],
        head=dict(w=n((c_last, HEAD_C)), bn=_bn_params(HEAD_C)),
        cls=dict(w=n((HEAD_C, 1)), b=jnp.zeros((1, 1), jnp.float32)),
    )
    for cfg in cfgs:
        cexp, csq, k = cfg["cexp"], cfg["csq"], cfg["k"]
        blk = dict(w_dw=n((k * k, cexp)), bn_dw=_bn_params(cexp),
                   w_se1=n((cexp, csq)), b_se1=jnp.zeros((1, csq), jnp.float32),
                   w_se2=n((csq, cexp)), b_se2=jnp.zeros((1, cexp), jnp.float32),
                   w_proj=n((cexp, cfg["cout"])), bn_proj=_bn_params(cfg["cout"]))
        if cfg["expand"] != 1:
            blk["w_exp"] = n((cfg["cin"], cexp))
            blk["bn_exp"] = _bn_params(cexp)
        params["blocks"].append(blk)
    return params


# --------------------------------------------------------------- slab packing
def _round_up(x, m):
    return ((x + m - 1) // m) * m


class _SlabPacker:
    """Packs many small 2-D operands into a few (rows, width) slabs, grouped by
    lane width (cols rounded up to a multiple of 128); each entry's rows are
    padded to a multiple of 8 so every in-kernel slice starts sublane-aligned.
    Collapses ~100 tiny HBM->VMEM DMAs (each padded to an (8,128) tile) into a
    handful of dense ones."""

    def __init__(self, dtype):
        self.dtype = dtype
        self._groups = {}     # width -> list of (name, rows, cols, array)
        self.index = {}       # name  -> (width, row_offset, rows, cols)

    def add(self, name, arr):
        arr = jnp.asarray(arr, jnp.float32)
        rows, cols = arr.shape
        width = _round_up(max(cols, 1), 128)
        self._groups.setdefault(width, []).append((name, rows, cols, arr))

    def finalize(self):
        slabs = {}
        for width in sorted(self._groups):
            parts, off = [], 0
            for name, rows, cols, arr in self._groups[width]:
                rpad = _round_up(rows, 8)
                parts.append(jnp.pad(arr, ((0, rpad - rows), (0, width - cols))))
                self.index[name] = (width, off, rows, cols)
                off += rpad
            slabs[width] = jnp.concatenate(parts, axis=0).astype(self.dtype)
        return slabs


# ------------------------------------------------------------------- forward
def _stem_patches(x):
    """im2col of the network input for the stem Conv2d(C, STEM_C, 3, 2, 1):
    returns (B, OH*OW, C*9) in bf16 with column order (c, kh, kw)."""
    b, c, h, w = x.shape
    k, s, pad = 3, 2, 1
    oh, ow = _conv_out(h, k, s), _conv_out(w, k, s)
    xp = jnp.pad(x, ((0, 0), (0, 0), (pad, pad), (pad, pad)))
    taps = [xp[:, :, kh:kh + s * oh:s, kw:kw + s * ow:s]
            for kh in range(k) for kw in range(k)]
    pat = jnp.stack(taps, axis=2)                   # (B, C, 9, OH, OW)
    pat = pat.transpose(0, 3, 4, 1, 2)              # (B, OH, OW, C, 9)
    return pat.reshape(b, oh * ow, c * k * k).astype(jnp.bfloat16)


def efficientnet_b0_forward(x, params):
    """Inference forward pass; one Pallas kernel, grid=(batch,), weights packed
    into a few VMEM-resident slabs shared by every grid step."""
    batch, chan, height, width = x.shape
    plan, p_last = _build_plan(height, width)
    p0 = _conv_out(height, 3, 2) * _conv_out(width, 3, 2)
    cp = chan * 9

    # ---- trace-time preprocessing: fold BN scales into conv weights, pack
    # every weight / gather matrix into bf16 slabs and every bias into f32 ----
    wpack = _SlabPacker(jnp.bfloat16)     # matmul & depthwise weights
    bpack = _SlabPacker(jnp.float32)      # biases stay f32 (VPU adds)

    def fold(w, bn):
        scale, bias = _bn_fold(bn)
        return w * scale, bias

    sw, sb = fold(params["stem"]["w"], params["stem"]["bn"])
    wpack.add("stem_w", sw); bpack.add("stem_b", sb)

    for i, (blk, bp) in enumerate(zip(plan, params["blocks"])):
        if blk["use_g"]:
            wpack.add(f"g{i}", blk["g"])
        if blk["expand"] != 1:
            we, be = fold(bp["w_exp"], bp["bn_exp"])
            wpack.add(f"exp_w{i}", we); bpack.add(f"exp_b{i}", be)
        wd, bd = fold(bp["w_dw"], bp["bn_dw"])                 # (k*k, cexp)
        if not blk["use_g"]:    # 1x1 spatial map: only the centre tap is real
            ctr = (blk["k"] // 2) * blk["k"] + blk["k"] // 2
            wd = wd[ctr:ctr + 1, :]
        wpack.add(f"dw_w{i}", wd); bpack.add(f"dw_b{i}", bd)
        wpack.add(f"se1_w{i}", bp["w_se1"]); bpack.add(f"se1_b{i}", bp["b_se1"])
        wpack.add(f"se2_w{i}", bp["w_se2"]); bpack.add(f"se2_b{i}", bp["b_se2"])
        wpj, bpj = fold(bp["w_proj"], bp["bn_proj"])
        wpack.add(f"proj_w{i}", wpj); bpack.add(f"proj_b{i}", bpj)

    hw_, hb_ = fold(params["head"]["w"], params["head"]["bn"])
    wpack.add("head_w", hw_); bpack.add("head_b", hb_)
    wpack.add("cls_w", params["cls"]["w"]); bpack.add("cls_b", params["cls"]["b"])

    w_slabs, b_slabs = wpack.finalize(), bpack.finalize()
    w_widths, b_widths = sorted(w_slabs), sorted(b_slabs)
    n_w = len(w_widths)

    patches = _stem_patches(x)                     # (B, p0, chan*9) bf16
    args = ([patches]
            + [w_slabs[k] for k in w_widths]
            + [b_slabs[k] for k in b_widths])

    # ---- in-kernel helpers ----
    def _sig(v):                       # sigmoid via EUP exp + approx reciprocal
        return pl.reciprocal(1.0 + jnp.exp(-v), approx=True)

    def _silu(v):
        return v * _sig(v)

    def _dot(a, b):                    # bf16 MXU matmul, f32 accumulation
        return jnp.dot(a.astype(jnp.bfloat16), b.astype(jnp.bfloat16),
                       preferred_element_type=jnp.float32)

    def kernel(patches_ref, *refs):    # one grid step == one image
        o_ref = refs[-1]
        w_refs = dict(zip(w_widths, refs[:n_w]))
        b_refs = dict(zip(b_widths, refs[n_w:-1]))

        def W(name):                   # bf16 weight slice out of its slab
            width, off, r, c = wpack.index[name]
            return w_refs[width][pl.ds(off, r), pl.ds(0, c)]

        def Bv(name):                  # f32 (1, C) bias slice
            width, off, r, c = bpack.index[name]
            return b_refs[width][pl.ds(off, r), pl.ds(0, c)]

        # stem: Conv3x3/s2 (im2col matmul, BN scale folded in) + bias + SiLU
        h = _silu(_dot(patches_ref[...], W("stem_w")) + Bv("stem_b"))

        for i, blk in enumerate(plan):                      # static unroll
            res = h
            if blk["expand"] != 1:                          # expand 1x1 + BN + SiLU
                h = _silu(_dot(h, W(f"exp_w{i}")) + Bv(f"exp_b{i}"))
            wd = W(f"dw_w{i}").astype(jnp.float32)          # (k*k | 1, cexp)
            if blk["use_g"]:
                # depthwise kxk/s: one per-image gather matmul + k*k per-tap
                # VPU multiply-accumulates (f32), replacing the old S matmul
                # and the row-replicated depthwise weight.
                taps = _dot(W(f"g{i}"), h)                  # (k*k*p_out, cexp)
                p_out = blk["p_out"]
                d = taps[0:p_out, :] * wd[0:1, :]
                for t in range(1, blk["k"] * blk["k"]):
                    d = d + taps[t * p_out:(t + 1) * p_out, :] * wd[t:t + 1, :]
            else:                                           # 1x1 spatial map
                d = h * wd
            d = _silu(d + Bv(f"dw_b{i}"))
            # squeeze-excitation: spatial mean, two tiny FCs, rescale
            pooled = jnp.mean(d, axis=0, keepdims=True)     # (1, cexp)
            se = _silu(_dot(pooled, W(f"se1_w{i}")) + Bv(f"se1_b{i}"))
            se = _sig(_dot(se, W(f"se2_w{i}")) + Bv(f"se2_b{i}"))
            d = d * se
            # project 1x1 + BN (scale folded); stochastic depth = id (eval)
            h = _dot(d, W(f"proj_w{i}")) + Bv(f"proj_b{i}")
            if blk["use_res"]:
                h = h + res

        h = _silu(_dot(h, W("head_w")) + Bv("head_b"))      # head 1x1 + BN + SiLU
        if p_last > 1:                                      # AdaptiveAvgPool2d(1)
            h = jnp.mean(h, axis=0, keepdims=True)
        logit = _dot(h, W("cls_w")) + Bv("cls_b")           # Dropout = id; Linear
        o_ref[...] = 1.0 / (1.0 + jnp.exp(-logit))          # exact output sigmoid

    in_specs = [pl.BlockSpec((None, p0, cp), lambda b: (b, 0, 0))]
    in_specs += [pl.BlockSpec(w_slabs[k].shape, lambda b: (0, 0)) for k in w_widths]
    in_specs += [pl.BlockSpec(b_slabs[k].shape, lambda b: (0, 0)) for k in b_widths]

    out = pl.pallas_call(
        kernel,
        out_shape=jax.ShapeDtypeStruct((batch, 1, 1), jnp.float32),
        grid=(batch,),
        in_specs=in_specs,
        out_specs=pl.BlockSpec((None, 1, 1), lambda b: (b, 0, 0)),
        compiler_params=pltpu.CompilerParams(
            dimension_semantics=("parallel",),      # 2 TCs on v7x; ~free on 1-TC chips
            vmem_limit_bytes=32 * 1024 * 1024),
    )(*args)
    return out.reshape(batch, 1)


if __name__ == "__main__":
    key = jax.random.PRNGKey(0)
    k_x, k_p = jax.random.split(key)

    B, C, IMG = 2, 4, 16
    x = jax.random.normal(k_x, (B, C, IMG, IMG), dtype=jnp.float32)
    params = init_params(k_p, num_channels=C)

    out = jax.jit(efficientnet_b0_forward)(x, params)
    jax.block_until_ready(out)
    assert out.shape == (B, 1)
    assert bool(jnp.all(jnp.isfinite(out)))
    print("KERNEL_OK")
</pallas_src>

<mosaic_0001>
module attributes {stable_mosaic.version = 11 : i64} {
  func.func @kernel(%arg0: i32, %arg1: memref<1x64x36xbf16, #tpu.memory_space<vmem>>, %arg2: memref<4344x128xbf16, #tpu.memory_space<vmem>>, %arg3: memref<688x256xbf16, #tpu.memory_space<vmem>>, %arg4: memref<80x384xbf16, #tpu.memory_space<vmem>>, %arg5: memref<288x640xbf16, #tpu.memory_space<vmem>>, %arg6: memref<224x128xf32, #tpu.memory_space<vmem>>, %arg7: memref<56x256xf32, #tpu.memory_space<vmem>>, %arg8: memref<24x384xf32, #tpu.memory_space<vmem>>, %arg9: memref<32x640xf32, #tpu.memory_space<vmem>>, %arg10: memref<1x1x1xf32, #tpu.memory_space<vmem>>) attributes {dimension_semantics = [#tpu.dimension_semantics<parallel>], iteration_bounds = array<i64: 2>, scalar_prefetch = 0 : i64, scratch_operands = 0 : i64, tpu.core_type = #tpu.core_type<tc>, window_params = [{transform_indices = @transform_0, window_bounds = array<i64: 1, 64, 36>}, {pipeline_mode = #tpu.pipeline_mode<synchronous>, transform_indices = @transform_1, window_bounds = array<i64: 4344, 128>}, {pipeline_mode = #tpu.pipeline_mode<synchronous>, transform_indices = @transform_2, window_bounds = array<i64: 688, 256>}, {pipeline_mode = #tpu.pipeline_mode<synchronous>, transform_indices = @transform_3, window_bounds = array<i64: 80, 384>}, {pipeline_mode = #tpu.pipeline_mode<synchronous>, transform_indices = @transform_4, window_bounds = array<i64: 288, 640>}, {pipeline_mode = #tpu.pipeline_mode<synchronous>, transform_indices = @transform_5, window_bounds = array<i64: 224, 128>}, {pipeline_mode = #tpu.pipeline_mode<synchronous>, transform_indices = @transform_6, window_bounds = array<i64: 56, 256>}, {pipeline_mode = #tpu.pipeline_mode<synchronous>, transform_indices = @transform_7, window_bounds = array<i64: 24, 384>}, {pipeline_mode = #tpu.pipeline_mode<synchronous>, transform_indices = @transform_8, window_bounds = array<i64: 32, 640>}, {transform_indices = @transform_9, window_bounds = array<i64: 1, 1, 1>}]} {
    %c0 = arith.constant 0 : index
    %c0_0 = arith.constant 0 : index
    %c0_1 = arith.constant 0 : index
    %0 = vector.load %arg1[%c0, %c0_0, %c0_1] : memref<1x64x36xbf16, #tpu.memory_space<vmem>>, vector<1x64x36xbf16>
    %1 = vector.shape_cast %0 : vector<1x64x36xbf16> to vector<64x36xbf16>
    %c0_2 = arith.constant 0 : index
    %c0_3 = arith.constant 0 : index
    %2 = vector.load %arg2[%c0_2, %c0_3] : memref<4344x128xbf16, #tpu.memory_space<vmem>>, vector<36x16xbf16>
    %cst = arith.constant dense<0.000000e+00> : vector<64x16xf32>
    %3 = tpu.matmul %1, %2, %cst {dimension_numbers = #tpu.dot_dimension_numbers<[1], [0], [0], [1], [0, 0, 1, 1], [], []>} : vector<64x36xbf16>, vector<36x16xbf16>, vector<64x16xf32> -> vector<64x16xf32>
    %c0_4 = arith.constant 0 : index
    %c0_5 = arith.constant 0 : index
    %4 = vector.load %arg6[%c0_4, %c0_5] : memref<224x128xf32, #tpu.memory_space<vmem>>, vector<1x16xf32>
    %5 = vector.broadcast %4 : vector<1x16xf32> to vector<64x16xf32>
    %6 = arith.addf %3, %5 : vector<64x16xf32>
    %cst_6 = arith.constant 0.000000e+00 : f32
    %7 = vector.broadcast %cst_6 : f32 to vector<64x16xf32>
    %8 = arith.subf %7, %6 : vector<64x16xf32>
    %9 = math.exp %8 : vector<64x16xf32>
    %cst_7 = arith.constant 1.000000e+00 : f32
    %10 = vector.broadcast %cst_7 : f32 to vector<64x16xf32>
    %11 = arith.addf %10, %9 : vector<64x16xf32>
    %12 = tpu.reciprocal %11 {approx = true} : vector<64x16xf32> -> vector<64x16xf32>
    %13 = arith.mulf %6, %12 : vector<64x16xf32>
    %c616 = arith.constant 616 : index
    %c0_8 = arith.constant 0 : index
    %14 = vector.load %arg2[%c616, %c0_8] : memref<4344x128xbf16, #tpu.memory_space<vmem>>, vector<9x16xbf16>
    %15 = arith.extf %14 : vector<9x16xbf16> to vector<9x16xf32>
    %c40 = arith.constant 40 : index
    %c0_9 = arith.constant 0 : index
    %16 = vector.load %arg2[%c40, %c0_9] : memref<4344x128xbf16, #tpu.memory_space<vmem>>, vector<576x64xbf16>
    %17 = arith.truncf %13 : vector<64x16xf32> to vector<64x16xbf16>
    %cst_10 = arith.constant dense<0.000000e+00> : vector<576x16xf32>
    %18 = tpu.matmul %16, %17, %cst_10 {dimension_numbers = #tpu.dot_dimension_numbers<[1], [0], [0], [1], [0, 0, 1, 1], [], []>} : vector<576x64xbf16>, vector<64x16xbf16>, vector<576x16xf32> -> vector<576x16xf32>
    %19 = vector.extract_strided_slice %18 {offsets = [0, 0], sizes = [64, 16], strides = [1, 1]} : vector<576x16xf32> to vector<64x16xf32>
    %20 = vector.extract_strided_slice %15 {offsets = [0, 0], sizes = [1, 16], strides = [1, 1]} : vector<9x16xf32> to vector<1x16xf32>
    %21 = vector.broadcast %20 : vector<1x16xf32> to vector<64x16xf32>
    %22 = arith.mulf %19, %21 : vector<64x16xf32>
    %23 = vector.extract_strided_slice %18 {offsets = [64, 0], sizes = [64, 16], strides = [1, 1]} : vector<576x16xf32> to vector<64x16xf32>
    %24 = vector.extract_strided_slice %15 {offsets = [1, 0], sizes = [1, 16], strides = [1, 1]} : vector<9x16xf32> to vector<1x16xf32>
    %25 = vector.broadcast %24 : vector<1x16xf32> to vector<64x16xf32>
    %26 = arith.mulf %23, %25 : vector<64x16xf32>
    %27 = arith.addf %22, %26 : vector<64x16xf32>
    %28 = vector.extract_strided_slice %18 {offsets = [128, 0], sizes = [64, 16], strides = [1, 1]} : vector<576x16xf32> to vector<64x16xf32>
    %29 = vector.extract_strided_slice %15 {offsets = [2, 0], sizes = [1, 16], strides = [1, 1]} : vector<9x16xf32> to vector<1x16xf32>
    %30 = vector.broadcast %29 : vector<1x16xf32> to vector<64x16xf32>
    %31 = arith.mulf %28, %30 : vector<64x16xf32>
    %32 = arith.addf %27, %31 : vector<64x16xf32>
    %33 = vector.extract_strided_slice %18 {offsets = [192, 0], sizes = [64, 16], strides = [1, 1]} : vector<576x16xf32> to vector<64x16xf32>
    %34 = vector.extract_strided_slice %15 {offsets = [3, 0], sizes = [1, 16], strides = [1, 1]} : vector<9x16xf32> to vector<1x16xf32>
    %35 = vector.broadcast %34 : vector<1x16xf32> to vector<64x16xf32>
    %36 = arith.mulf %33, %35 : vector<64x16xf32>
    %37 = arith.addf %32, %36 : vector<64x16xf32>
    %38 = vector.extract_strided_slice %18 {offsets = [256, 0], sizes = [64, 16], strides = [1, 1]} : vector<576x16xf32> to vector<64x16xf32>
    %39 = vector.extract_strided_slice %15 {offsets = [4, 0], sizes = [1, 16], strides = [1, 1]} : vector<9x16xf32> to vector<1x16xf32>
    %40 = vector.broadcast %39 : vector<1x16xf32> to vector<64x16xf32>
    %41 = arith.mulf %38, %40 : vector<64x16xf32>
    %42 = arith.addf %37, %41 : vector<64x16xf32>
    %43 = vector.extract_strided_slice %18 {offsets = [320, 0], sizes = [64, 16], strides = [1, 1]} : vector<576x16xf32> to vector<64x16xf32>
    %44 = vector.extract_strided_slice %15 {offsets = [5, 0], sizes = [1, 16], strides = [1, 1]} : vector<9x16xf32> to vector<1x16xf32>
    %45 = vector.broadcast %44 : vector<1x16xf32> to vector<64x16xf32>
    %46 = arith.mulf %43, %45 : vector<64x16xf32>
    %47 = arith.addf %42, %46 : vector<64x16xf32>
    %48 = vector.extract_strided_slice %18 {offsets = [384, 0], sizes = [64, 16], strides = [1, 1]} : vector<576x16xf32> to vector<64x16xf32>
    %49 = vector.extract_strided_slice %15 {offsets = [6, 0], sizes = [1, 16], strides = [1, 1]} : vector<9x16xf32> to vector<1x16xf32>
    %50 = vector.broadcast %49 : vector<1x16xf32> to vector<64x16xf32>
    %51 = arith.mulf %48, %50 : vector<64x16xf32>
    %52 = arith.addf %47, %51 : vector<64x16xf32>
    %53 = vector.extract_strided_slice %18 {offsets = [448, 0], sizes = [64, 16], strides = [1, 1]} : vector<576x16xf32> to vector<64x16xf32>
    %54 = vector.extract_strided_slice %15 {offsets = [7, 0], sizes = [1, 16], strides = [1, 1]} : vector<9x16xf32> to vector<1x16xf32>
    %55 = vector.broadcast %54 : vector<1x16xf32> to vector<64x16xf32>
    %56 = arith.mulf %53, %55 : vector<64x16xf32>
    %57 = arith.addf %52, %56 : vector<64x16xf32>
    %58 = vector.extract_strided_slice %18 {offsets = [512, 0], sizes = [64, 16], strides = [1, 1]} : vector<576x16xf32> to vector<64x16xf32>
    %59 = vector.extract_strided_slice %15 {offsets = [8, 0], sizes = [1, 16], strides = [1, 1]} : vector<9x16xf32> to vector<1x16xf32>
    %60 = vector.broadcast %59 : vector<1x16xf32> to vector<64x16xf32>
    %61 = arith.mulf %58, %60 : vector<64x16xf32>
    %62 = arith.addf %57, %61 : vector<64x16xf32>
    %c8 = arith.constant 8 : index
    %c0_11 = arith.constant 0 : index
    %63 = vector.load %arg6[%c8, %c0_11] : memref<224x128xf32, #tpu.memory_space<vmem>>, vector<1x16xf32>
    %64 = vector.broadcast %63 : vector<1x16xf32> to vector<64x16xf32>
    %65 = arith.addf %62, %64 : vector<64x16xf32>
    %cst_12 = arith.constant 0.000000e+00 : f32
    %66 = vector.broadcast %cst_12 : f32 to vector<64x16xf32>
    %67 = arith.subf %66, %65 : vector<64x16xf32>
    %68 = math.exp %67 : vector<64x16xf32>
    %cst_13 = arith.constant 1.000000e+00 : f32
    %69 = vector.broadcast %cst_13 : f32 to vector<64x16xf32>
    %70 = arith.addf %69, %68 : vector<64x16xf32>
    %71 = tpu.reciprocal %70 {approx = true} : vector<64x16xf32> -> vector<64x16xf32>
    %72 = arith.mulf %65, %71 : vector<64x16xf32>
    %cst_14 = arith.constant dense<0.000000e+00> : vector<16xf32>
    %73 = vector.multi_reduction <add>, %72, %cst_14 [0] : vector<64x16xf32> to vector<16xf32>
    %74 = vector.shape_cast %73 : vector<16xf32> to vector<1x16xf32>
    %cst_15 = arith.constant 6.400000e+01 : f32
    %75 = vector.broadcast %cst_15 : f32 to vector<1x16xf32>
    %76 = arith.divf %74, %75 : vector<1x16xf32>
    %c632 = arith.constant 632 : index
    %c0_16 = arith.constant 0 : index
    %77 = vector.load %arg2[%c632, %c0_16] : memref<4344x128xbf16, #tpu.memory_space<vmem>>, vector<16x4xbf16>
    %78 = arith.truncf %76 : vector<1x16xf32> to vector<1x16xbf16>
    %cst_17 = arith.constant dense<0.000000e+00> : vector<1x4xf32>
    %79 = tpu.matmul %78, %77, %cst_17 {dimension_numbers = #tpu.dot_dimension_numbers<[1], [0], [0], [1], [0, 0, 1, 1], [], []>} : vector<1x16xbf16>, vector<16x4xbf16>, vector<1x4xf32> -> vector<1x4xf32>
    %c16 = arith.constant 16 : index
    %c0_18 = arith.constant 0 : index
    %80 = vector.load %arg6[%c16, %c0_18] : memref<224x128xf32, #tpu.memory_space<vmem>>, vector<1x4xf32>
    %81 = arith.addf %79, %80 : vector<1x4xf32>
    %cst_19 = arith.constant 0.000000e+00 : f32
    %82 = vector.broadcast %cst_19 : f32 to vector<1x4xf32>
    %83 = arith.subf %82, %81 : vector<1x4xf32>
    %84 = math.exp %83 : vector<1x4xf32>
    %cst_20 = arith.constant 1.000000e+00 : f32
    %85 = vector.broadcast %cst_20 : f32 to vector<1x4xf32>
    %86 = arith.addf %85, %84 : vector<1x4xf32>
    %87 = tpu.reciprocal %86 {approx = true} : vector<1x4xf32> -> vector<1x4xf32>
    %88 = arith.mulf %81, %87 : vector<1x4xf32>
    %c648 = arith.constant 648 : index
    %c0_21 = arith.constant 0 : index
    %89 = vector.load %arg2[%c648, %c0_21] : memref<4344x128xbf16, #tpu.memory_space<vmem>>, vector<4x16xbf16>
    %90 = arith.truncf %88 : vector<1x4xf32> to vector<1x4xbf16>
    %cst_22 = arith.constant dense<0.000000e+00> : vector<1x16xf32>
    %91 = tpu.matmul %90, %89, %cst_22 {dimension_numbers = #tpu.dot_dimension_numbers<[1], [0], [0], [1], [0, 0, 1, 1], [], []>} : vector<1x4xbf16>, vector<4x16xbf16>, vector<1x16xf32> -> vector<1x16xf32>
    %c24 = arith.constant 24 : index
    %c0_23 = arith.constant 0 : index
    %92 = vector.load %arg6[%c24, %c0_23] : memref<224x128xf32, #tpu.memory_space<vmem>>, vector<1x16xf32>
    %93 = arith.addf %91, %92 : vector<1x16xf32>
    %cst_24 = arith.constant 0.000000e+00 : f32
    %94 = vector.broadcast %cst_24 : f32 to vector<1x16xf32>
    %95 = arith.subf %94, %93 : vector<1x16xf32>
    %96 = math.exp %95 : vector<1x16xf32>
    %cst_25 = arith.constant 1.000000e+00 : f32
    %97 = vector.broadcast %cst_25 : f32 to vector<1x16xf32>
    %98 = arith.addf %97, %96 : vector<1x16xf32>
    %99 = tpu.reciprocal %98 {approx = true} : vector<1x16xf32> -> vector<1x16xf32>
    %100 = vector.broadcast %99 : vector<1x16xf32> to vector<64x16xf32>
    %101 = arith.mulf %72, %100 : vector<64x16xf32>
    %c656 = arith.constant 656 : index
    %c0_26 = arith.constant 0 : index
    %102 = vector.load %arg2[%c656, %c0_26] : memref<4344x128xbf16, #tpu.memory_space<vmem>>, vector<16x8xbf16>
    %103 = arith.truncf %101 : vector<64x16xf32> to vector<64x16xbf16>
    %cst_27 = arith.constant dense<0.000000e+00> : vector<64x8xf32>
    %104 = tpu.matmul %103, %102, %cst_27 {dimension_numbers = #tpu.dot_dimension_numbers<[1], [0], [0], [1], [0, 0, 1, 1], [], []>} : vector<64x16xbf16>, vector<16x8xbf16>, vector<64x8xf32> -> vector<64x8xf32>
    %c32 = arith.constant 32 : index
    %c0_28 = arith.constant 0 : index
    %105 = vector.load %arg6[%c32, %c0_28] : memref<224x128xf32, #tpu.memory_space<vmem>>, vector<1x8xf32>
    %106 = vector.broadcast %105 : vector<1x8xf32> to vector<64x8xf32>
    %107 = arith.addf %104, %106 : vector<64x8xf32>
    %c816 = arith.constant 816 : index
    %c0_29 = arith.constant 0 : index
    %108 = vector.load %arg2[%c816, %c0_29] : memref<4344x128xbf16, #tpu.memory_space<vmem>>, vector<8x48xbf16>
    %109 = arith.truncf %107 : vector<64x8xf32> to vector<64x8xbf16>
    %cst_30 = arith.constant dense<0.000000e+00> : vector<64x48xf32>
    %110 = tpu.matmul %109, %108, %cst_30 {dimension_numbers = #tpu.dot_dimension_numbers<[1], [0], [0], [1], [0, 0, 1, 1], [], []>} : vector<64x8xbf16>, vector<8x48xbf16>, vector<64x48xf32> -> vector<64x48xf32>
    %c40_31 = arith.constant 40 : index
    %c0_32 = arith.constant 0 : index
    %111 = vector.load %arg6[%c40_31, %c0_32] : memref<224x128xf32, #tpu.memory_space<vmem>>, vector<1x48xf32>
    %112 = vector.broadcast %111 : vector<1x48xf32> to vector<64x48xf32>
    %113 = arith.addf %110, %112 : vector<64x48xf32>
    %cst_33 = arith.constant 0.000000e+00 : f32
    %114 = vector.broadcast %cst_33 : f32 to vector<64x48xf32>
    %115 = arith.subf %114, %113 : vector<64x48xf32>
    %116 = math.exp %115 : vector<64x48xf32>
    %cst_34 = arith.constant 1.000000e+00 : f32
    %117 = vector.broadcast %cst_34 : f32 to vector<64x48xf32>
    %118 = arith.addf %117, %116 : vector<64x48xf32>
    %119 = tpu.reciprocal %118 {approx = true} : vector<64x48xf32> -> vector<64x48xf32>
    %120 = arith.mulf %113, %119 : vector<64x48xf32>
    %c824 = arith.constant 824 : index
    %c0_35 = arith.constant 0 : index
    %121 = vector.load %arg2[%c824, %c0_35] : memref<4344x128xbf16, #tpu.memory_space<vmem>>, vector<9x48xbf16>
    %122 = arith.extf %121 : vector<9x48xbf16> to vector<9x48xf32>
    %c672 = arith.constant 672 : index
    %c0_36 = arith.constant 0 : index
    %123 = vector.load %arg2[%c672, %c0_36] : memref<4344x128xbf16, #tpu.memory_space<vmem>>, vector<144x64xbf16>
    %124 = arith.truncf %120 : vector<64x48xf32> to vector<64x48xbf16>
    %cst_37 = arith.constant dense<0.000000e+00> : vector<144x48xf32>
    %125 = tpu.matmul %123, %124, %cst_37 {dimension_numbers = #tpu.dot_dimension_numbers<[1], [0], [0], [1], [0, 0, 1, 1], [], []>} : vector<144x64xbf16>, vector<64x48xbf16>, vector<144x48xf32> -> vector<144x48xf32>
    %126 = vector.extract_strided_slice %125 {offsets = [0, 0], sizes = [16, 48], strides = [1, 1]} : vector<144x48xf32> to vector<16x48xf32>
    %127 = vector.extract_strided_slice %122 {offsets = [0, 0], sizes = [1, 48], strides = [1, 1]} : vector<9x48xf32> to vector<1x48xf32>
    %128 = vector.broadcast %127 : vector<1x48xf32> to vector<16x48xf32>
    %129 = arith.mulf %126, %128 : vector<16x48xf32>
    %130 = vector.extract_strided_slice %125 {offsets = [16, 0], sizes = [16, 48], strides = [1, 1]} : vector<144x48xf32> to vector<16x48xf32>
    %131 = vector.extract_strided_slice %122 {offsets = [1, 0], sizes = [1, 48], strides = [1, 1]} : vector<9x48xf32> to vector<1x48xf32>
    %132 = vector.broadcast %131 : vector<1x48xf32> to vector<16x48xf32>
    %133 = arith.mulf %130, %132 : vector<16x48xf32>
    %134 = arith.addf %129, %133 : vector<16x48xf32>
    %135 = vector.extract_strided_slice %125 {offsets = [32, 0], sizes = [16, 48], strides = [1, 1]} : vector<144x48xf32> to vector<16x48xf32>
    %136 = vector.extract_strided_slice %122 {offsets = [2, 0], sizes = [1, 48], strides = [1, 1]} : vector<9x48xf32> to vector<1x48xf32>
    %137 = vector.broadcast %136 : vector<1x48xf32> to vector<16x48xf32>
    %138 = arith.mulf %135, %137 : vector<16x48xf32>
    %139 = arith.addf %134, %138 : vector<16x48xf32>
    %140 = vector.extract_strided_slice %125 {offsets = [48, 0], sizes = [16, 48], strides = [1, 1]} : vector<144x48xf32> to vector<16x48xf32>
    %141 = vector.extract_strided_slice %122 {offsets = [3, 0], sizes = [1, 48], strides = [1, 1]} : vector<9x48xf32> to vector<1x48xf32>
    %142 = vector.broadcast %141 : vector<1x48xf32> to vector<16x48xf32>
    %143 = arith.mulf %140, %142 : vector<16x48xf32>
    %144 = arith.addf %139, %143 : vector<16x48xf32>
    %145 = vector.extract_strided_slice %125 {offsets = [64, 0], sizes = [16, 48], strides = [1, 1]} : vector<144x48xf32> to vector<16x48xf32>
    %146 = vector.extract_strided_slice %122 {offsets = [4, 0], sizes = [1, 48], strides = [1, 1]} : vector<9x48xf32> to vector<1x48xf32>
    %147 = vector.broadcast %146 : vector<1x48xf32> to vector<16x48xf32>
    %148 = arith.mulf %145, %147 : vector<16x48xf32>
    %149 = arith.addf %144, %148 : vector<16x48xf32>
    %150 = vector.extract_strided_slice %125 {offsets = [80, 0], sizes = [16, 48], strides = [1, 1]} : vector<144x48xf32> to vector<16x48xf32>
    %151 = vector.extract_strided_slice %122 {offsets = [5, 0], sizes = [1, 48], strides = [1, 1]} : vector<9x48xf32> to vector<1x48xf32>
    %152 = vector.broadcast %151 : vector<1x48xf32> to vector<16x48xf32>
    %153 = arith.mulf %150, %152 : vector<16x48xf32>
    %154 = arith.addf %149, %153 : vector<16x48xf32>
    %155 = vector.extract_strided_slice %125 {offsets = [96, 0], sizes = [16, 48], strides = [1, 1]} : vector<144x48xf32> to vector<16x48xf32>
    %156 = vector.extract_strided_slice %122 {offsets = [6, 0], sizes = [1, 48], strides = [1, 1]} : vector<9x48xf32> to vector<1x48xf32>
    %157 = vector.broadcast %156 : vector<1x48xf32> to vector<16x48xf32>
    %158 = arith.mulf %155, %157 : vector<16x48xf32>
    %159 = arith.addf %154, %158 : vector<16x48xf32>
    %160 = vector.extract_strided_slice %125 {offsets = [112, 0], sizes = [16, 48], strides = [1, 1]} : vector<144x48xf32> to vector<16x48xf32>
    %161 = vector.extract_strided_slice %122 {offsets = [7, 0], sizes = [1, 48], strides = [1, 1]} : vector<9x48xf32> to vector<1x48xf32>
    %162 = vector.broadcast %161 : vector<1x48xf32> to vector<16x48xf32>
    %163 = arith.mulf %160, %162 : vector<16x48xf32>
    %164 = arith.addf %159, %163 : vector<16x48xf32>
    %165 = vector.extract_strided_slice %125 {offsets = [128, 0], sizes = [16, 48], strides = [1, 1]} : vector<144x48xf32> to vector<16x48xf32>
    %166 = vector.extract_strided_slice %122 {offsets = [8, 0], sizes = [1, 48], strides = [1, 1]} : vector<9x48xf32> to vector<1x48xf32>
    %167 = vector.broadcast %166 : vector<1x48xf32> to vector<16x48xf32>
    %168 = arith.mulf %165, %167 : vector<16x48xf32>
    %169 = arith.addf %164, %168 : vector<16x48xf32>
    %c48 = arith.constant 48 : index
    %c0_38 = arith.constant 0 : index
    %170 = vector.load %arg6[%c48, %c0_38] : memref<224x128xf32, #tpu.memory_space<vmem>>, vector<1x48xf32>
    %171 = vector.broadcast %170 : vector<1x48xf32> to vector<16x48xf32>
    %172 = arith.addf %169, %171 : vector<16x48xf32>
    %cst_39 = arith.constant 0.000000e+00 : f32
    %173 = vector.broadcast %cst_39 : f32 to vector<16x48xf32>
    %174 = arith.subf %173, %172 : vector<16x48xf32>
    %175 = math.exp %174 : vector<16x48xf32>
    %cst_40 = arith.constant 1.000000e+00 : f32
    %176 = vector.broadcast %cst_40 : f32 to vector<16x48xf32>
    %177 = arith.addf %176, %175 : vector<16x48xf32>
    %178 = tpu.reciprocal %177 {approx = true} : vector<16x48xf32> -> vector<16x48xf32>
    %179 = arith.mulf %172, %178 : vector<16x48xf32>
    %cst_41 = arith.constant dense<0.000000e+00> : vector<48xf32>
    %180 = vector.multi_reduction <add>, %179, %cst_41 [0] : vector<16x48xf32> to vector<48xf32>
    %181 = vector.shape_cast %180 : vector<48xf32> to vector<1x48xf32>
    %cst_42 = arith.constant 1.600000e+01 : f32
    %182 = vector.broadcast %cst_42 : f32 to vector<1x48xf32>
    %183 = arith.divf %181, %182 : vector<1x48xf32>
    %c840 = arith.constant 840 : index
    %c0_43 = arith.constant 0 : index
    %184 = vector.load %arg2[%c840, %c0_43] : memref<4344x128xbf16, #tpu.memory_space<vmem>>, vector<48x2xbf16>
    %185 = arith.truncf %183 : vector<1x48xf32> to vector<1x48xbf16>
    %cst_44 = arith.constant dense<0.000000e+00> : vector<1x2xf32>
    %186 = tpu.matmul %185, %184, %cst_44 {dimension_numbers = #tpu.dot_dimension_numbers<[1], [0], [0], [1], [0, 0, 1, 1], [], []>} : vector<1x48xbf16>, vector<48x2xbf16>, vector<1x2xf32> -> vector<1x2xf32>
    %c56 = arith.constant 56 : index
    %c0_45 = arith.constant 0 : index
    %187 = vector.load %arg6[%c56, %c0_45] : memref<224x128xf32, #tpu.memory_space<vmem>>, vector<1x2xf32>
    %188 = arith.addf %186, %187 : vector<1x2xf32>
    %cst_46 = arith.constant 0.000000e+00 : f32
    %189 = vector.broadcast %cst_46 : f32 to vector<1x2xf32>
    %190 = arith.subf %189, %188 : vector<1x2xf32>
    %191 = math.exp %190 : vector<1x2xf32>
    %cst_47 = arith.constant 1.000000e+00 : f32
    %192 = vector.broadcast %cst_47 : f32 to vector<1x2xf32>
    %193 = arith.addf %192, %191 : vector<1x2xf32>
    %194 = tpu.reciprocal %193 {approx = true} : vector<1x2xf32> -> vector<1x2xf32>
    %195 = arith.mulf %188, %194 : vector<1x2xf32>
    %c888 = arith.constant 888 : index
    %c0_48 = arith.constant 0 : index
    %196 = vector.load %arg2[%c888, %c0_48] : memref<4344x128xbf16, #tpu.memory_space<vmem>>, vector<2x48xbf16>
    %197 = arith.truncf %195 : vector<1x2xf32> to vector<1x2xbf16>
    %cst_49 = arith.constant dense<0.000000e+00> : vector<1x48xf32>
    %198 = tpu.matmul %197, %196, %cst_49 {dimension_numbers = #tpu.dot_dimension_numbers<[1], [0], [0], [1], [0, 0, 1, 1], [], []>} : vector<1x2xbf16>, vector<2x48xbf16>, vector<1x48xf32> -> vector<1x48xf32>
    %c64 = arith.constant 64 : index
    %c0_50 = arith.constant 0 : index
    %199 = vector.load %arg6[%c64, %c0_50] : memref<224x128xf32, #tpu.memory_space<vmem>>, vector<1x48xf32>
    %200 = arith.addf %198, %199 : vector<1x48xf32>
    %cst_51 = arith.constant 0.000000e+00 : f32
    %201 = vector.broadcast %cst_51 : f32 to vector<1x48xf32>
    %202 = arith.subf %201, %200 : vector<1x48xf32>
    %203 = math.exp %202 : vector<1x48xf32>
    %cst_52 = arith.constant 1.000000e+00 : f32
    %204 = vector.broadcast %cst_52 : f32 to vector<1x48xf32>
    %205 = arith.addf %204, %203 : vector<1x48xf32>
    %206 = tpu.reciprocal %205 {approx = true} : vector<1x48xf32> -> vector<1x48xf32>
    %207 = vector.broadcast %206 : vector<1x48xf32> to vector<16x48xf32>
    %208 = arith.mulf %179, %207 : vector<16x48xf32>
    %c896 = arith.constant 896 : index
    %c0_53 = arith.constant 0 : index
    %209 = vector.load %arg2[%c896, %c0_53] : memref<4344x128xbf16, #tpu.memory_space<vmem>>, vector<48x16xbf16>
    %210 = arith.truncf %208 : vector<16x48xf32> to vector<16x48xbf16>
    %cst_54 = arith.constant dense<0.000000e+00> : vector<16x16xf32>
    %211 = tpu.matmul %210, %209, %cst_54 {dimension_numbers = #tpu.dot_dimension_numbers<[1], [0], [0], [1], [0, 0, 1, 1], [], []>} : vector<16x48xbf16>, vector<48x16xbf16>, vector<16x16xf32> -> vector<16x16xf32>
    %c72 = arith.constant 72 : index
    %c0_55 = arith.constant 0 : index
    %212 = vector.load %arg6[%c72, %c0_55] : memref<224x128xf32, #tpu.memory_space<vmem>>, vector<1x16xf32>
    %213 = vector.broadcast %212 : vector<1x16xf32> to vector<16x16xf32>
    %214 = arith.addf %211, %213 : vector<16x16xf32>
    %c1088 = arith.constant 1088 : index
    %c0_56 = arith.constant 0 : index
    %215 = vector.load %arg2[%c1088, %c0_56] : memref<4344x128xbf16, #tpu.memory_space<vmem>>, vector<16x96xbf16>
    %216 = arith.truncf %214 : vector<16x16xf32> to vector<16x16xbf16>
    %cst_57 = arith.constant dense<0.000000e+00> : vector<16x96xf32>
    %217 = tpu.matmul %216, %215, %cst_57 {dimension_numbers = #tpu.dot_dimension_numbers<[1], [0], [0], [1], [0, 0, 1, 1], [], []>} : vector<16x16xbf16>, vector<16x96xbf16>, vector<16x96xf32> -> vector<16x96xf32>
    %c80 = arith.constant 80 : index
    %c0_58 = arith.constant 0 : index
    %218 = vector.load %arg6[%c80, %c0_58] : memref<224x128xf32, #tpu.memory_space<vmem>>, vector<1x96xf32>
    %219 = vector.broadcast %218 : vector<1x96xf32> to vector<16x96xf32>
    %220 = arith.addf %217, %219 : vector<16x96xf32>
    %cst_59 = arith.constant 0.000000e+00 : f32
    %221 = vector.broadcast %cst_59 : f32 to vector<16x96xf32>
    %222 = arith.subf %221, %220 : vector<16x96xf32>
    %223 = math.exp %222 : vector<16x96xf32>
    %cst_60 = arith.constant 1.000000e+00 : f32
    %224 = vector.broadcast %cst_60 : f32 to vector<16x96xf32>
    %225 = arith.addf %224, %223 : vector<16x96xf32>
    %226 = tpu.reciprocal %225 {approx = true} : vector<16x96xf32> -> vector<16x96xf32>
    %227 = arith.mulf %220, %226 : vector<16x96xf32>
    %c1104 = arith.constant 1104 : index
    %c0_61 = arith.constant 0 : index
    %228 = vector.load %arg2[%c1104, %c0_61] : memref<4344x128xbf16, #tpu.memory_space<vmem>>, vector<9x96xbf16>
    %229 = arith.extf %228 : vector<9x96xbf16> to vector<9x96xf32>
    %c944 = arith.constant 944 : index
    %c0_62 = arith.constant 0 : index
    %230 = vector.load %arg2[%c944, %c0_62] : memref<4344x128xbf16, #tpu.memory_space<vmem>>, vector<144x16xbf16>
    %231 = arith.truncf %227 : vector<16x96xf32> to vector<16x96xbf16>
    %cst_63 = arith.constant dense<0.000000e+00> : vector<144x96xf32>
    %232 = tpu.matmul %230, %231, %cst_63 {dimension_numbers = #tpu.dot_dimension_numbers<[1], [0], [0], [1], [0, 0, 1, 1], [], []>} : vector<144x16xbf16>, vector<16x96xbf16>, vector<144x96xf32> -> vector<144x96xf32>
    %233 = vector.extract_strided_slice %232 {offsets = [0, 0], sizes = [16, 96], strides = [1, 1]} : vector<144x96xf32> to vector<16x96xf32>
    %234 = vector.extract_strided_slice %229 {offsets = [0, 0], sizes = [1, 96], strides = [1, 1]} : vector<9x96xf32> to vector<1x96xf32>
    %235 = vector.broadcast %234 : vector<1x96xf32> to vector<16x96xf32>
    %236 = arith.mulf %233, %235 : vector<16x96xf32>
    %237 = vector.extract_strided_slice %232 {offsets = [16, 0], sizes = [16, 96], strides = [1, 1]} : vector<144x96xf32> to vector<16x96xf32>
    %238 = vector.extract_strided_slice %229 {offsets = [1, 0], sizes = [1, 96], strides = [1, 1]} : vector<9x96xf32> to vector<1x96xf32>
    %239 = vector.broadcast %238 : vector<1x96xf32> to vector<16x96xf32>
    %240 = arith.mulf %237, %239 : vector<16x96xf32>
    %241 = arith.addf %236, %240 : vector<16x96xf32>
    %242 = vector.extract_strided_slice %232 {offsets = [32, 0], sizes = [16, 96], strides = [1, 1]} : vector<144x96xf32> to vector<16x96xf32>
    %243 = vector.extract_strided_slice %229 {offsets = [2, 0], sizes = [1, 96], strides = [1, 1]} : vector<9x96xf32> to vector<1x96xf32>
    %244 = vector.broadcast %243 : vector<1x96xf32> to vector<16x96xf32>
    %245 = arith.mulf %242, %244 : vector<16x96xf32>
    %246 = arith.addf %241, %245 : vector<16x96xf32>
    %247 = vector.extract_strided_slice %232 {offsets = [48, 0], sizes = [16, 96], strides = [1, 1]} : vector<144x96xf32> to vector<16x96xf32>
    %248 = vector.extract_strided_slice %229 {offsets = [3, 0], sizes = [1, 96], strides = [1, 1]} : vector<9x96xf32> to vector<1x96xf32>
    %249 = vector.broadcast %248 : vector<1x96xf32> to vector<16x96xf32>
    %250 = arith.mulf %247, %249 : vector<16x96xf32>
    %251 = arith.addf %246, %250 : vector<16x96xf32>
    %252 = vector.extract_strided_slice %232 {offsets = [64, 0], sizes = [16, 96], strides = [1, 1]} : vector<144x96xf32> to vector<16x96xf32>
    %253 = vector.extract_strided_slice %229 {offsets = [4, 0], sizes = [1, 96], strides = [1, 1]} : vector<9x96xf32> to vector<1x96xf32>
    %254 = vector.broadcast %253 : vector<1x96xf32> to vector<16x96xf32>
    %255 = arith.mulf %252, %254 : vector<16x96xf32>
    %256 = arith.addf %251, %255 : vector<16x96xf32>
    %257 = vector.extract_strided_slice %232 {offsets = [80, 0], sizes = [16, 96], strides = [1, 1]} : vector<144x96xf32> to vector<16x96xf32>
    %258 = vector.extract_strided_slice %229 {offsets = [5, 0], sizes = [1, 96], strides = [1, 1]} : vector<9x96xf32> to vector<1x96xf32>
    %259 = vector.broadcast %258 : vector<1x96xf32> to vector<16x96xf32>
    %260 = arith.mulf %257, %259 : vector<16x96xf32>
    %261 = arith.addf %256, %260 : vector<16x96xf32>
    %262 = vector.extract_strided_slice %232 {offsets = [96, 0], sizes = [16, 96], strides = [1, 1]} : vector<144x96xf32> to vector<16x96xf32>
    %263 = vector.extract_strided_slice %229 {offsets = [6, 0], sizes = [1, 96], strides = [1, 1]} : vector<9x96xf32> to vector<1x96xf32>
    %264 = vector.broadcast %263 : vector<1x96xf32> to vector<16x96xf32>
    %265 = arith.mulf %262, %264 : vector<16x96xf32>
    %266 = arith.addf %261, %265 : vector<16x96xf32>
    %267 = vector.extract_strided_slice %232 {offsets = [112, 0], sizes = [16, 96], strides = [1, 1]} : vector<144x96xf32> to vector<16x96xf32>
    %268 = vector.extract_strided_slice %229 {offsets = [7, 0], sizes = [1, 96], strides = [1, 1]} : vector<9x96xf32> to vector<1x96xf32>
    %269 = vector.broadcast %268 : vector<1x96xf32> to vector<16x96xf32>
    %270 = arith.mulf %267, %269 : vector<16x96xf32>
    %271 = arith.addf %266, %270 : vector<16x96xf32>
    %272 = vector.extract_strided_slice %232 {offsets = [128, 0], sizes = [16, 96], strides = [1, 1]} : vector<144x96xf32> to vector<16x96xf32>
    %273 = vector.extract_strided_slice %229 {offsets = [8, 0], sizes = [1, 96], strides = [1, 1]} : vector<9x96xf32> to vector<1x96xf32>
    %274 = vector.broadcast %273 : vector<1x96xf32> to vector<16x96xf32>
    %275 = arith.mulf %272, %274 : vector<16x96xf32>
    %276 = arith.addf %271, %275 : vector<16x96xf32>
    %c88 = arith.constant 88 : index
    %c0_64 = arith.constant 0 : index
    %277 = vector.load %arg6[%c88, %c0_64] : memref<224x128xf32, #tpu.memory_space<vmem>>, vector<1x96xf32>
    %278 = vector.broadcast %277 : vector<1x96xf32> to vector<16x96xf32>
    %279 = arith.addf %276, %278 : vector<16x96xf32>
    %cst_65 = arith.constant 0.000000e+00 : f32
    %280 = vector.broadcast %cst_65 : f32 to vector<16x96xf32>
    %281 = arith.subf %280, %279 : vector<16x96xf32>
    %282 = math.exp %281 : vector<16x96xf32>
    %cst_66 = arith.constant 1.000000e+00 : f32
    %283 = vector.broadcast %cst_66 : f32 to vector<16x96xf32>
    %284 = arith.addf %283, %282 : vector<16x96xf32>
    %285 = tpu.reciprocal %284 {approx = true} : vector<16x96xf32> -> vector<16x96xf32>
    %286 = arith.mulf %279, %285 : vector<16x96xf32>
    %cst_67 = arith.constant dense<0.000000e+00> : vector<96xf32>
    %287 = vector.multi_reduction <add>, %286, %cst_67 [0] : vector<16x96xf32> to vector<96xf32>
    %288 = vector.shape_cast %287 : vector<96xf32> to vector<1x96xf32>
    %cst_68 = arith.constant 1.600000e+01 : f32
    %289 = vector.broadcast %cst_68 : f32 to vector<1x96xf32>
    %290 = arith.divf %288, %289 : vector<1x96xf32>
    %c1120 = arith.constant 1120 : index
    %c0_69 = arith.constant 0 : index
    %291 = vector.load %arg2[%c1120, %c0_69] : memref<4344x128xbf16, #tpu.memory_space<vmem>>, vector<96x4xbf16>
    %292 = arith.truncf %290 : vector<1x96xf32> to vector<1x96xbf16>
    %cst_70 = arith.constant dense<0.000000e+00> : vector<1x4xf32>
    %293 = tpu.matmul %292, %291, %cst_70 {dimension_numbers = #tpu.dot_dimension_numbers<[1], [0], [0], [1], [0, 0, 1, 1], [], []>} : vector<1x96xbf16>, vector<96x4xbf16>, vector<1x4xf32> -> vector<1x4xf32>
    %c96 = arith.constant 96 : index
    %c0_71 = arith.constant 0 : index
    %294 = vector.load %arg6[%c96, %c0_71] : memref<224x128xf32, #tpu.memory_space<vmem>>, vector<1x4xf32>
    %295 = arith.addf %293, %294 : vector<1x4xf32>
    %cst_72 = arith.constant 0.000000e+00 : f32
    %296 = vector.broadcast %cst_72 : f32 to vector<1x4xf32>
    %297 = arith.subf %296, %295 : vector<1x4xf32>
    %298 = math.exp %297 : vector<1x4xf32>
    %cst_73 = arith.constant 1.000000e+00 : f32
    %299 = vector.broadcast %cst_73 : f32 to vector<1x4xf32>
    %300 = arith.addf %299, %298 : vector<1x4xf32>
    %301 = tpu.reciprocal %300 {approx = true} : vector<1x4xf32> -> vector<1x4xf32>
    %302 = arith.mulf %295, %301 : vector<1x4xf32>
    %c1216 = arith.constant 1216 : index
    %c0_74 = arith.constant 0 : index
    %303 = vector.load %arg2[%c1216, %c0_74] : memref<4344x128xbf16, #tpu.memory_space<vmem>>, vector<4x96xbf16>
    %304 = arith.truncf %302 : vector<1x4xf32> to vector<1x4xbf16>
    %cst_75 = arith.constant dense<0.000000e+00> : vector<1x96xf32>
    %305 = tpu.matmul %304, %303, %cst_75 {dimension_numbers = #tpu.dot_dimension_numbers<[1], [0], [0], [1], [0, 0, 1, 1], [], []>} : vector<1x4xbf16>, vector<4x96xbf16>, vector<1x96xf32> -> vector<1x96xf32>
    %c104 = arith.constant 104 : index
    %c0_76 = arith.constant 0 : index
    %306 = vector.load %arg6[%c104, %c0_76] : memref<224x128xf32, #tpu.memory_space<vmem>>, vector<1x96xf32>
    %307 = arith.addf %305, %306 : vector<1x96xf32>
    %cst_77 = arith.constant 0.000000e+00 : f32
    %308 = vector.broadcast %cst_77 : f32 to vector<1x96xf32>
    %309 = arith.subf %308, %307 : vector<1x96xf32>
    %310 = math.exp %309 : vector<1x96xf32>
    %cst_78 = arith.constant 1.000000e+00 : f32
    %311 = vector.broadcast %cst_78 : f32 to vector<1x96xf32>
    %312 = arith.addf %311, %310 : vector<1x96xf32>
    %313 = tpu.reciprocal %312 {approx = true} : vector<1x96xf32> -> vector<1x96xf32>
    %314 = vector.broadcast %313 : vector<1x96xf32> to vector<16x96xf32>
    %315 = arith.mulf %286, %314 : vector<16x96xf32>
    %c1224 = arith.constant 1224 : index
    %c0_79 = arith.constant 0 : index
    %316 = vector.load %arg2[%c1224, %c0_79] : memref<4344x128xbf16, #tpu.memory_space<vmem>>, vector<96x16xbf16>
    %317 = arith.truncf %315 : vector<16x96xf32> to vector<16x96xbf16>
    %cst_80 = arith.constant dense<0.000000e+00> : vector<16x16xf32>
    %318 = tpu.matmul %317, %316, %cst_80 {dimension_numbers = #tpu.dot_dimension_numbers<[1], [0], [0], [1], [0, 0, 1, 1], [], []>} : vector<16x96xbf16>, vector<96x16xbf16>, vector<16x16xf32> -> vector<16x16xf32>
    %c112 = arith.constant 112 : index
    %c0_81 = arith.constant 0 : index
    %319 = vector.load %arg6[%c112, %c0_81] : memref<224x128xf32, #tpu.memory_space<vmem>>, vector<1x16xf32>
    %320 = vector.broadcast %319 : vector<1x16xf32> to vector<16x16xf32>
    %321 = arith.addf %318, %320 : vector<16x16xf32>
    %322 = arith.addf %321, %214 : vector<16x16xf32>
    %c1424 = arith.constant 1424 : index
    %c0_82 = arith.constant 0 : index
    %323 = vector.load %arg2[%c1424, %c0_82] : memref<4344x128xbf16, #tpu.memory_space<vmem>>, vector<16x96xbf16>
    %324 = arith.truncf %322 : vector<16x16xf32> to vector<16x16xbf16>
    %cst_83 = arith.constant dense<0.000000e+00> : vector<16x96xf32>
    %325 = tpu.matmul %324, %323, %cst_83 {dimension_numbers = #tpu.dot_dimension_numbers<[1], [0], [0], [1], [0, 0, 1, 1], [], []>} : vector<16x16xbf16>, vector<16x96xbf16>, vector<16x96xf32> -> vector<16x96xf32>
    %c120 = arith.constant 120 : index
    %c0_84 = arith.constant 0 : index
    %326 = vector.load %arg6[%c120, %c0_84] : memref<224x128xf32, #tpu.memory_space<vmem>>, vector<1x96xf32>
    %327 = vector.broadcast %326 : vector<1x96xf32> to vector<16x96xf32>
    %328 = arith.addf %325, %327 : vector<16x96xf32>
    %cst_85 = arith.constant 0.000000e+00 : f32
    %329 = vector.broadcast %cst_85 : f32 to vector<16x96xf32>
    %330 = arith.subf %329, %328 : vector<16x96xf32>
    %331 = math.exp %330 : vector<16x96xf32>
    %cst_86 = arith.constant 1.000000e+00 : f32
    %332 = vector.broadcast %cst_86 : f32 to vector<16x96xf32>
    %333 = arith.addf %332, %331 : vector<16x96xf32>
    %334 = tpu.reciprocal %333 {approx = true} : vector<16x96xf32> -> vector<16x96xf32>
    %335 = arith.mulf %328, %334 : vector<16x96xf32>
    %c1440 = arith.constant 1440 : index
    %c0_87 = arith.constant 0 : index
    %336 = vector.load %arg2[%c1440, %c0_87] : memref<4344x128xbf16, #tpu.memory_space<vmem>>, vector<25x96xbf16>
    %337 = arith.extf %336 : vector<25x96xbf16> to vector<25x96xf32>
    %c1320 = arith.constant 1320 : index
    %c0_88 = arith.constant 0 : index
    %338 = vector.load %arg2[%c1320, %c0_88] : memref<4344x128xbf16, #tpu.memory_space<vmem>>, vector<100x16xbf16>
    %339 = arith.truncf %335 : vector<16x96xf32> to vector<16x96xbf16>
    %cst_89 = arith.constant dense<0.000000e+00> : vector<100x96xf32>
    %340 = tpu.matmul %338, %339, %cst_89 {dimension_numbers = #tpu.dot_dimension_numbers<[1], [0], [0], [1], [0, 0, 1, 1], [], []>} : vector<100x16xbf16>, vector<16x96xbf16>, vector<100x96xf32> -> vector<100x96xf32>
    %341 = vector.extract_strided_slice %340 {offsets = [0, 0], sizes = [4, 96], strides = [1, 1]} : vector<100x96xf32> to vector<4x96xf32>
    %342 = vector.extract_strided_slice %337 {offsets = [0, 0], sizes = [1, 96], strides = [1, 1]} : vector<25x96xf32> to vector<1x96xf32>
    %343 = vector.broadcast %342 : vector<1x96xf32> to vector<4x96xf32>
    %344 = arith.mulf %341, %343 : vector<4x96xf32>
    %345 = vector.extract_strided_slice %340 {offsets = [4, 0], sizes = [4, 96], strides = [1, 1]} : vector<100x96xf32> to vector<4x96xf32>
    %346 = vector.extract_strided_slice %337 {offsets = [1, 0], sizes = [1, 96], strides = [1, 1]} : vector<25x96xf32> to vector<1x96xf32>
    %347 = vector.broadcast %346 : vector<1x96xf32> to vector<4x96xf32>
    %348 = arith.mulf %345, %347 : vector<4x96xf32>
    %349 = arith.addf %344, %348 : vector<4x96xf32>
    %350 = vector.extract_strided_slice %340 {offsets = [8, 0], sizes = [4, 96], strides = [1, 1]} : vector<100x96xf32> to vector<4x96xf32>
    %351 = vector.extract_strided_slice %337 {offsets = [2, 0], sizes = [1, 96], strides = [1, 1]} : vector<25x96xf32> to vector<1x96xf32>
    %352 = vector.broadcast %351 : vector<1x96xf32> to vector<4x96xf32>
    %353 = arith.mulf %350, %352 : vector<4x96xf32>
    %354 = arith.addf %349, %353 : vector<4x96xf32>
    %355 = vector.extract_strided_slice %340 {offsets = [12, 0], sizes = [4, 96], strides = [1, 1]} : vector<100x96xf32> to vector<4x96xf32>
    %356 = vector.extract_strided_slice %337 {offsets = [3, 0], sizes = [1, 96], strides = [1, 1]} : vector<25x96xf32> to vector<1x96xf32>
    %357 = vector.broadcast %356 : vector<1x96xf32> to vector<4x96xf32>
    %358 = arith.mulf %355, %357 : vector<4x96xf32>
    %359 = arith.addf %354, %358 : vector<4x96xf32>
    %360 = vector.extract_strided_slice %340 {offsets = [16, 0], sizes = [4, 96], strides = [1, 1]} : vector<100x96xf32> to vector<4x96xf32>
    %361 = vector.extract_strided_slice %337 {offsets = [4, 0], sizes = [1, 96], strides = [1, 1]} : vector<25x96xf32> to vector<1x96xf32>
    %362 = vector.broadcast %361 : vector<1x96xf32> to vector<4x96xf32>
    %363 = arith.mulf %360, %362 : vector<4x96xf32>
    %364 = arith.addf %359, %363 : vector<4x96xf32>
    %365 = vector.extract_strided_slice %340 {offsets = [20, 0], sizes = [4, 96], strides = [1, 1]} : vector<100x96xf32> to vector<4x96xf32>
    %366 = vector.extract_strided_slice %337 {offsets = [5, 0], sizes = [1, 96], strides = [1, 1]} : vector<25x96xf32> to vector<1x96xf32>
    %367 = vector.broadcast %366 : vector<1x96xf32> to vector<4x96xf32>
    %368 = arith.mulf %365, %367 : vector<4x96xf32>
    %369 = arith.addf %364, %368 : vector<4x96xf32>
    %370 = vector.extract_strided_slice %340 {offsets = [24, 0], sizes = [4, 96], strides = [1, 1]} : vector<100x96xf32> to vector<4x96xf32>
    %371 = vector.extract_strided_slice %337 {offsets = [6, 0], sizes = [1, 96], strides = [1, 1]} : vector<25x96xf32> to vector<1x96xf32>
    %372 = vector.broadcast %371 : vector<1x96xf32> to vector<4x96xf32>
    %373 = arith.mulf %370, %372 : vector<4x96xf32>
    %374 = arith.addf %369, %373 : vector<4x96xf32>
    %375 = vector.extract_strided_slice %340 {offsets = [28, 0], sizes = [4, 96], strides = [1, 1]} : vector<100x96xf32> to vector<4x96xf32>
    %376 = vector.extract_strided_slice %337 {offsets = [7, 0], sizes = [1, 96], strides = [1, 1]} : vector<25x96xf32> to vector<1x96xf32>
    %377 = vector.broadcast %376 : vector<1x96xf32> to vector<4x96xf32>
    %378 = arith.mulf %375, %377 : vector<4x96xf32>
    %379 = arith.addf %374, %378 : vector<4x96xf32>
    %380 = vector.extract_strided_slice %340 {offsets = [32, 0], sizes = [4, 96], strides = [1, 1]} : vector<100x96xf32> to vector<4x96xf32>
    %381 = vector.extract_strided_slice %337 {offsets = [8, 0], sizes = [1, 96], strides = [1, 1]} : vector<25x96xf32> to vector<1x96xf32>
    %382 = vector.broadcast %381 : vector<1x96xf32> to vector<4x96xf32>
    %383 = arith.mulf %380, %382 : vector<4x96xf32>
    %384 = arith.addf %379, %383 : vector<4x96xf32>
    %385 = vector.extract_strided_slice %340 {offsets = [36, 0], sizes = [4, 96], strides = [1, 1]} : vector<100x96xf32> to vector<4x96xf32>
    %386 = vector.extract_strided_slice %337 {offsets = [9, 0], sizes = [1, 96], strides = [1, 1]} : vector<25x96xf32> to vector<1x96xf32>
    %387 = vector.broadcast %386 : vector<1x96xf32> to vector<4x96xf32>
    %388 = arith.mulf %385, %387 : vector<4x96xf32>
    %389 = arith.addf %384, %388 : vector<4x96xf32>
    %390 = vector.extract_strided_slice %340 {offsets = [40, 0], sizes = [4, 96], strides = [1, 1]} : vector<100x96xf32> to vector<4x96xf32>
    %391 = vector.extract_strided_slice %337 {offsets = [10, 0], sizes = [1, 96], strides = [1, 1]} : vector<25x96xf32> to vector<1x96xf32>
    %392 = vector.broadcast %391 : vector<1x96xf32> to vector<4x96xf32>
    %393 = arith.mulf %390, %392 : vector<4x96xf32>
    %394 = arith.addf %389, %393 : vector<4x96xf32>
    %395 = vector.extract_strided_slice %340 {offsets = [44, 0], sizes = [4, 96], strides = [1, 1]} : vector<100x96xf32> to vector<4x96xf32>
    %396 = vector.extract_strided_slice %337 {offsets = [11, 0], sizes = [1, 96], strides = [1, 1]} : vector<25x96xf32> to vector<1x96xf32>
    %397 = vector.broadcast %396 : vector<1x96xf32> to vector<4x96xf32>
    %398 = arith.mulf %395, %397 : vector<4x96xf32>
    %399 = arith.addf %394, %398 : vector<4x96xf32>
    %400 = vector.extract_strided_slice %340 {offsets = [48, 0], sizes = [4, 96], strides = [1, 1]} : vector<100x96xf32> to vector<4x96xf32>
    %401 = vector.extract_strided_slice %337 {offsets = [12, 0], sizes = [1, 96], strides = [1, 1]} : vector<25x96xf32> to vector<1x96xf32>
    %402 = vector.broadcast %401 : vector<1x96xf32> to vector<4x96xf32>
    %403 = arith.mulf %400, %402 : vector<4x96xf32>
    %404 = arith.addf %399, %403 : vector<4x96xf32>
    %405 = vector.extract_strided_slice %340 {offsets = [52, 0], sizes = [4, 96], strides = [1, 1]} : vector<100x96xf32> to vector<4x96xf32>
    %406 = vector.extract_strided_slice %337 {offsets = [13, 0], sizes = [1, 96], strides = [1, 1]} : vector<25x96xf32> to vector<1x96xf32>
    %407 = vector.broadcast %406 : vector<1x96xf32> to vector<4x96xf32>
    %408 = arith.mulf %405, %407 : vector<4x96xf32>
    %409 = arith.addf %404, %408 : vector<4x96xf32>
    %410 = vector.extract_strided_slice %340 {offsets = [56, 0], sizes = [4, 96], strides = [1, 1]} : vector<100x96xf32> to vector<4x96xf32>
    %411 = vector.extract_strided_slice %337 {offsets = [14, 0], sizes = [1, 96], strides = [1, 1]} : vector<25x96xf32> to vector<1x96xf32>
    %412 = vector.broadcast %411 : vector<1x96xf32> to vector<4x96xf32>
    %413 = arith.mulf %410, %412 : vector<4x96xf32>
    %414 = arith.addf %409, %413 : vector<4x96xf32>
    %415 = vector.extract_strided_slice %340 {offsets = [60, 0], sizes = [4, 96], strides = [1, 1]} : vector<100x96xf32> to vector<4x96xf32>
    %416 = vector.extract_strided_slice %337 {offsets = [15, 0], sizes = [1, 96], strides = [1, 1]} : vector<25x96xf32> to vector<1x96xf32>
    %417 = vector.broadcast %416 : vector<1x96xf32> to vector<4x96xf32>
    %418 = arith.mulf %415, %417 : vector<4x96xf32>
    %419 = arith.addf %414, %418 : vector<4x96xf32>
    %420 = vector.extract_strided_slice %340 {offsets = [64, 0], sizes = [4, 96], strides = [1, 1]} : vector<100x96xf32> to vector<4x96xf32>
    %421 = vector.extract_strided_slice %337 {offsets = [16, 0], sizes = [1, 96], strides = [1, 1]} : vector<25x96xf32> to vector<1x96xf32>
    %422 = vector.broadcast %421 : vector<1x96xf32> to vector<4x96xf32>
    %423 = arith.mulf %420, %422 : vector<4x96xf32>
    %424 = arith.addf %419, %423 : vector<4x96xf32>
    %425 = vector.extract_strided_slice %340 {offsets = [68, 0], sizes = [4, 96], strides = [1, 1]} : vector<100x96xf32> to vector<4x96xf32>
    %426 = vector.extract_strided_slice %337 {offsets = [17, 0], sizes = [1, 96], strides = [1, 1]} : vector<25x96xf32> to vector<1x96xf32>
    %427 = vector.broadcast %426 : vector<1x96xf32> to vector<4x96xf32>
    %428 = arith.mulf %425, %427 : vector<4x96xf32>
    %429 = arith.addf %424, %428 : vector<4x96xf32>
    %430 = vector.extract_strided_slice %340 {offsets = [72, 0], sizes = [4, 96], strides = [1, 1]} : vector<100x96xf32> to vector<4x96xf32>
    %431 = vector.extract_strided_slice %337 {offsets = [18, 0], sizes = [1, 96], strides = [1, 1]} : vector<25x96xf32> to vector<1x96xf32>
    %432 = vector.broadcast %431 : vector<1x96xf32> to vector<4x96xf32>
    %433 = arith.mulf %430, %432 : vector<4x96xf32>
    %434 = arith.addf %429, %433 : vector<4x96xf32>
    %435 = vector.extract_strided_slice %340 {offsets = [76, 0], sizes = [4, 96], strides = [1, 1]} : vector<100x96xf32> to vector<4x96xf32>
    %436 = vector.extract_strided_slice %337 {offsets = [19, 0], sizes = [1, 96], strides = [1, 1]} : vector<25x96xf32> to vector<1x96xf32>
    %437 = vector.broadcast %436 : vector<1x96xf32> to vector<4x96xf32>
    %438 = arith.mulf %435, %437 : vector<4x96xf32>
    %439 = arith.addf %434, %438 : vector<4x96xf32>
    %440 = vector.extract_strided_slice %340 {offsets = [80, 0], sizes = [4, 96], strides = [1, 1]} : vector<100x96xf32> to vector<4x96xf32>
    %441 = vector.extract_strided_slice %337 {offsets = [20, 0], sizes = [1, 96], strides = [1, 1]} : vector<25x96xf32> to vector<1x96xf32>
    %442 = vector.broadcast %441 : vector<1x96xf32> to vector<4x96xf32>
    %443 = arith.mulf %440, %442 : vector<4x96xf32>
    %444 = arith.addf %439, %443 : vector<4x96xf32>
    %445 = vector.extract_strided_slice %340 {offsets = [84, 0], sizes = [4, 96], strides = [1, 1]} : vector<100x96xf32> to vector<4x96xf32>
    %446 = vector.extract_strided_slice %337 {offsets = [21, 0], sizes = [1, 96], strides = [1, 1]} : vector<25x96xf32> to vector<1x96xf32>
    %447 = vector.broadcast %446 : vector<1x96xf32> to vector<4x96xf32>
    %448 = arith.mulf %445, %447 : vector<4x96xf32>
    %449 = arith.addf %444, %448 : vector<4x96xf32>
    %450 = vector.extract_strided_slice %340 {offsets = [88, 0], sizes = [4, 96], strides = [1, 1]} : vector<100x96xf32> to vector<4x96xf32>
    %451 = vector.extract_strided_slice %337 {offsets = [22, 0], sizes = [1, 96], strides = [1, 1]} : vector<25x96xf32> to vector<1x96xf32>
    %452 = vector.broadcast %451 : vector<1x96xf32> to vector<4x96xf32>
    %453 = arith.mulf %450, %452 : vector<4x96xf32>
    %454 = arith.addf %449, %453 : vector<4x96xf32>
    %455 = vector.extract_strided_slice %340 {offsets = [92, 0], sizes = [4, 96], strides = [1, 1]} : vector<100x96xf32> to vector<4x96xf32>
    %456 = vector.extract_strided_slice %337 {offsets = [23, 0], sizes = [1, 96], strides = [1, 1]} : vector<25x96xf32> to vector<1x96xf32>
    %457 = vector.broadcast %456 : vector<1x96xf32> to vector<4x96xf32>
    %458 = arith.mulf %455, %457 : vector<4x96xf32>
    %459 = arith.addf %454, %458 : vector<4x96xf32>
    %460 = vector.extract_strided_slice %340 {offsets = [96, 0], sizes = [4, 96], strides = [1, 1]} : vector<100x96xf32> to vector<4x96xf32>
    %461 = vector.extract_strided_slice %337 {offsets = [24, 0], sizes = [1, 96], strides = [1, 1]} : vector<25x96xf32> to vector<1x96xf32>
    %462 = vector.broadcast %461 : vector<1x96xf32> to vector<4x96xf32>
    %463 = arith.mulf %460, %462 : vector<4x96xf32>
    %464 = arith.addf %459, %463 : vector<4x96xf32>
    %c128 = arith.constant 128 : index
    %c0_90 = arith.constant 0 : index
    %465 = vector.load %arg6[%c128, %c0_90] : memref<224x128xf32, #tpu.memory_space<vmem>>, vector<1x96xf32>
    %466 = vector.broadcast %465 : vector<1x96xf32> to vector<4x96xf32>
    %467 = arith.addf %464, %466 : vector<4x96xf32>
    %cst_91 = arith.constant 0.000000e+00 : f32
    %468 = vector.broadcast %cst_91 : f32 to vector<4x96xf32>
    %469 = arith.subf %468, %467 : vector<4x96xf32>
    %470 = math.exp %469 : vector<4x96xf32>
    %cst_92 = arith.constant 1.000000e+00 : f32
    %471 = vector.broadcast %cst_92 : f32 to vector<4x96xf32>
    %472 = arith.addf %471, %470 : vector<4x96xf32>
    %473 = tpu.reciprocal %472 {approx = true} : vector<4x96xf32> -> vector<4x96xf32>
    %474 = arith.mulf %467, %473 : vector<4x96xf32>
    %cst_93 = arith.constant dense<0.000000e+00> : vector<96xf32>
    %475 = vector.multi_reduction <add>, %474, %cst_93 [0] : vector<4x96xf32> to vector<96xf32>
    %476 = vector.shape_cast %475 : vector<96xf32> to vector<1x96xf32>
    %cst_94 = arith.constant 4.000000e+00 : f32
    %477 = vector.broadcast %cst_94 : f32 to vector<1x96xf32>
    %478 = arith.divf %476, %477 : vector<1x96xf32>
    %c1472 = arith.constant 1472 : index
    %c0_95 = arith.constant 0 : index
    %479 = vector.load %arg2[%c1472, %c0_95] : memref<4344x128xbf16, #tpu.memory_space<vmem>>, vector<96x4xbf16>
    %480 = arith.truncf %478 : vector<1x96xf32> to vector<1x96xbf16>
    %cst_96 = arith.constant dense<0.000000e+00> : vector<1x4xf32>
    %481 = tpu.matmul %480, %479, %cst_96 {dimension_numbers = #tpu.dot_dimension_numbers<[1], [0], [0], [1], [0, 0, 1, 1], [], []>} : vector<1x96xbf16>, vector<96x4xbf16>, vector<1x4xf32> -> vector<1x4xf32>
    %c136 = arith.constant 136 : index
    %c0_97 = arith.constant 0 : index
    %482 = vector.load %arg6[%c136, %c0_97] : memref<224x128xf32, #tpu.memory_space<vmem>>, vector<1x4xf32>
    %483 = arith.addf %481, %482 : vector<1x4xf32>
    %cst_98 = arith.constant 0.000000e+00 : f32
    %484 = vector.broadcast %cst_98 : f32 to vector<1x4xf32>
    %485 = arith.subf %484, %483 : vector<1x4xf32>
    %486 = math.exp %485 : vector<1x4xf32>
    %cst_99 = arith.constant 1.000000e+00 : f32
    %487 = vector.broadcast %cst_99 : f32 to vector<1x4xf32>
    %488 = arith.addf %487, %486 : vector<1x4xf32>
    %489 = tpu.reciprocal %488 {approx = true} : vector<1x4xf32> -> vector<1x4xf32>
    %490 = arith.mulf %483, %489 : vector<1x4xf32>
    %c1568 = arith.constant 1568 : index
    %c0_100 = arith.constant 0 : index
    %491 = vector.load %arg2[%c1568, %c0_100] : memref<4344x128xbf16, #tpu.memory_space<vmem>>, vector<4x96xbf16>
    %492 = arith.truncf %490 : vector<1x4xf32> to vector<1x4xbf16>
    %cst_101 = arith.constant dense<0.000000e+00> : vector<1x96xf32>
    %493 = tpu.matmul %492, %491, %cst_101 {dimension_numbers = #tpu.dot_dimension_numbers<[1], [0], [0], [1], [0, 0, 1, 1], [], []>} : vector<1x4xbf16>, vector<4x96xbf16>, vector<1x96xf32> -> vector<1x96xf32>
    %c144 = arith.constant 144 : index
    %c0_102 = arith.constant 0 : index
    %494 = vector.load %arg6[%c144, %c0_102] : memref<224x128xf32, #tpu.memory_space<vmem>>, vector<1x96xf32>
    %495 = arith.addf %493, %494 : vector<1x96xf32>
    %cst_103 = arith.constant 0.000000e+00 : f32
    %496 = vector.broadcast %cst_103 : f32 to vector<1x96xf32>
    %497 = arith.subf %496, %495 : vector<1x96xf32>
    %498 = math.exp %497 : vector<1x96xf32>
    %cst_104 = arith.constant 1.000000e+00 : f32
    %499 = vector.broadcast %cst_104 : f32 to vector<1x96xf32>
    %500 = arith.addf %499, %498 : vector<1x96xf32>
    %501 = tpu.reciprocal %500 {approx = true} : vector<1x96xf32> -> vector<1x96xf32>
    %502 = vector.broadcast %501 : vector<1x96xf32> to vector<4x96xf32>
    %503 = arith.mulf %474, %502 : vector<4x96xf32>
    %c1576 = arith.constant 1576 : index
    %c0_105 = arith.constant 0 : index
    %504 = vector.load %arg2[%c1576, %c0_105] : memref<4344x128xbf16, #tpu.memory_space<vmem>>, vector<96x24xbf16>
    %505 = arith.truncf %503 : vector<4x96xf32> to vector<4x96xbf16>
    %cst_106 = arith.constant dense<0.000000e+00> : vector<4x24xf32>
    %506 = tpu.matmul %505, %504, %cst_106 {dimension_numbers = #tpu.dot_dimension_numbers<[1], [0], [0], [1], [0, 0, 1, 1], [], []>} : vector<4x96xbf16>, vector<96x24xbf16>, vector<4x24xf32> -> vector<4x24xf32>
    %c152 = arith.constant 152 : index
    %c0_107 = arith.constant 0 : index
    %507 = vector.load %arg6[%c152, %c0_107] : memref<224x128xf32, #tpu.memory_space<vmem>>, vector<1x24xf32>
    %508 = vector.broadcast %507 : vector<1x24xf32> to vector<4x24xf32>
    %509 = arith.addf %506, %508 : vector<4x24xf32>
    %c0_108 = arith.constant 0 : index
    %c0_109 = arith.constant 0 : index
    %510 = vector.load %arg3[%c0_108, %c0_109] : memref<688x256xbf16, #tpu.memory_space<vmem>>, vector<24x144xbf16>
    %511 = arith.truncf %509 : vector<4x24xf32> to vector<4x24xbf16>
    %cst_110 = arith.constant dense<0.000000e+00> : vector<4x144xf32>
    %512 = tpu.matmul %511, %510, %cst_110 {dimension_numbers = #tpu.dot_dimension_numbers<[1], [0], [0], [1], [0, 0, 1, 1], [], []>} : vector<4x24xbf16>, vector<24x144xbf16>, vector<4x144xf32> -> vector<4x144xf32>
    %c0_111 = arith.constant 0 : index
    %c0_112 = arith.constant 0 : index
    %513 = vector.load %arg7[%c0_111, %c0_112] : memref<56x256xf32, #tpu.memory_space<vmem>>, vector<1x144xf32>
    %514 = vector.broadcast %513 : vector<1x144xf32> to vector<4x144xf32>
    %515 = arith.addf %512, %514 : vector<4x144xf32>
    %cst_113 = arith.constant 0.000000e+00 : f32
    %516 = vector.broadcast %cst_113 : f32 to vector<4x144xf32>
    %517 = arith.subf %516, %515 : vector<4x144xf32>
    %518 = math.exp %517 : vector<4x144xf32>
    %cst_114 = arith.constant 1.000000e+00 : f32
    %519 = vector.broadcast %cst_114 : f32 to vector<4x144xf32>
    %520 = arith.addf %519, %518 : vector<4x144xf32>
    %521 = tpu.reciprocal %520 {approx = true} : vector<4x144xf32> -> vector<4x144xf32>
    %522 = arith.mulf %515, %521 : vector<4x144xf32>
    %c24_115 = arith.constant 24 : index
    %c0_116 = arith.constant 0 : index
    %523 = vector.load %arg3[%c24_115, %c0_116] : memref<688x256xbf16, #tpu.memory_space<vmem>>, vector<9x144xbf16>
    %524 = arith.extf %523 : vector<9x144xbf16> to vector<9x144xf32>
    %c1672 = arith.constant 1672 : index
    %c0_117 = arith.constant 0 : index
    %525 = vector.load %arg2[%c1672, %c0_117] : memref<4344x128xbf16, #tpu.memory_space<vmem>>, vector<9x4xbf16>
    %526 = arith.truncf %522 : vector<4x144xf32> to vector<4x144xbf16>
    %cst_118 = arith.constant dense<0.000000e+00> : vector<9x144xf32>
    %527 = tpu.matmul %525, %526, %cst_118 {dimension_numbers = #tpu.dot_dimension_numbers<[1], [0], [0], [1], [0, 0, 1, 1], [], []>} : vector<9x4xbf16>, vector<4x144xbf16>, vector<9x144xf32> -> vector<9x144xf32>
    %528 = vector.extract_strided_slice %527 {offsets = [0, 0], sizes = [1, 144], strides = [1, 1]} : vector<9x144xf32> to vector<1x144xf32>
    %529 = vector.extract_strided_slice %524 {offsets = [0, 0], sizes = [1, 144], strides = [1, 1]} : vector<9x144xf32> to vector<1x144xf32>
    %530 = arith.mulf %528, %529 : vector<1x144xf32>
    %531 = vector.extract_strided_slice %527 {offsets = [1, 0], sizes = [1, 144], strides = [1, 1]} : vector<9x144xf32> to vector<1x144xf32>
    %532 = vector.extract_strided_slice %524 {offsets = [1, 0], sizes = [1, 144], strides = [1, 1]} : vector<9x144xf32> to vector<1x144xf32>
    %533 = arith.mulf %531, %532 : vector<1x144xf32>
    %534 = arith.addf %530, %533 : vector<1x144xf32>
    %535 = vector.extract_strided_slice %527 {offsets = [2, 0], sizes = [1, 144], strides = [1, 1]} : vector<9x144xf32> to vector<1x144xf32>
    %536 = vector.extract_strided_slice %524 {offsets = [2, 0], sizes = [1, 144], strides = [1, 1]} : vector<9x144xf32> to vector<1x144xf32>
    %537 = arith.mulf %535, %536 : vector<1x144xf32>
    %538 = arith.addf %534, %537 : vector<1x144xf32>
    %539 = vector.extract_strided_slice %527 {offsets = [3, 0], sizes = [1, 144], strides = [1, 1]} : vector<9x144xf32> to vector<1x144xf32>
    %540 = vector.extract_strided_slice %524 {offsets = [3, 0], sizes = [1, 144], strides = [1, 1]} : vector<9x144xf32> to vector<1x144xf32>
    %541 = arith.mulf %539, %540 : vector<1x144xf32>
    %542 = arith.addf %538, %541 : vector<1x144xf32>
    %543 = vector.extract_strided_slice %527 {offsets = [4, 0], sizes = [1, 144], strides = [1, 1]} : vector<9x144xf32> to vector<1x144xf32>
    %544 = vector.extract_strided_slice %524 {offsets = [4, 0], sizes = [1, 144], strides = [1, 1]} : vector<9x144xf32> to vector<1x144xf32>
    %545 = arith.mulf %543, %544 : vector<1x144xf32>
    %546 = arith.addf %542, %545 : vector<1x144xf32>
    %547 = vector.extract_strided_slice %527 {offsets = [5, 0], sizes = [1, 144], strides = [1, 1]} : vector<9x144xf32> to vector<1x144xf32>
    %548 = vector.extract_strided_slice %524 {offsets = [5, 0], sizes = [1, 144], strides = [1, 1]} : vector<9x144xf32> to vector<1x144xf32>
    %549 = arith.mulf %547, %548 : vector<1x144xf32>
    %550 = arith.addf %546, %549 : vector<1x144xf32>
    %551 = vector.extract_strided_slice %527 {offsets = [6, 0], sizes = [1, 144], strides = [1, 1]} : vector<9x144xf32> to vector<1x144xf32>
    %552 = vector.extract_strided_slice %524 {offsets = [6, 0], sizes = [1, 144], strides = [1, 1]} : vector<9x144xf32> to vector<1x144xf32>
    %553 = arith.mulf %551, %552 : vector<1x144xf32>
    %554 = arith.addf %550, %553 : vector<1x144xf32>
    %555 = vector.extract_strided_slice %527 {offsets = [7, 0], sizes = [1, 144], strides = [1, 1]} : vector<9x144xf32> to vector<1x144xf32>
    %556 = vector.extract_strided_slice %524 {offsets = [7, 0], sizes = [1, 144], strides = [1, 1]} : vector<9x144xf32> to vector<1x144xf32>
    %557 = arith.mulf %555, %556 : vector<1x144xf32>
    %558 = arith.addf %554, %557 : vector<1x144xf32>
    %559 = vector.extract_strided_slice %527 {offsets = [8, 0], sizes = [1, 144], strides = [1, 1]} : vector<9x144xf32> to vector<1x144xf32>
    %560 = vector.extract_strided_slice %524 {offsets = [8, 0], sizes = [1, 144], strides = [1, 1]} : vector<9x144xf32> to vector<1x144xf32>
    %561 = arith.mulf %559, %560 : vector<1x144xf32>
    %562 = arith.addf %558, %561 : vector<1x144xf32>
    %c8_119 = arith.constant 8 : index
    %c0_120 = arith.constant 0 : index
    %563 = vector.load %arg7[%c8_119, %c0_120] : memref<56x256xf32, #tpu.memory_space<vmem>>, vector<1x144xf32>
    %564 = arith.addf %562, %563 : vector<1x144xf32>
    %cst_121 = arith.constant 0.000000e+00 : f32
    %565 = vector.broadcast %cst_121 : f32 to vector<1x144xf32>
    %566 = arith.subf %565, %564 : vector<1x144xf32>
    %567 = math.exp %566 : vector<1x144xf32>
    %cst_122 = arith.constant 1.000000e+00 : f32
    %568 = vector.broadcast %cst_122 : f32 to vector<1x144xf32>
    %569 = arith.addf %568, %567 : vector<1x144xf32>
    %570 = tpu.reciprocal %569 {approx = true} : vector<1x144xf32> -> vector<1x144xf32>
    %571 = arith.mulf %564, %570 : vector<1x144xf32>
    %cst_123 = arith.constant dense<0.000000e+00> : vector<144xf32>
    %572 = vector.multi_reduction <add>, %571, %cst_123 [0] : vector<1x144xf32> to vector<144xf32>
    %573 = vector.shape_cast %572 : vector<144xf32> to vector<1x144xf32>
    %cst_124 = arith.constant 1.000000e+00 : f32
    %574 = vector.broadcast %cst_124 : f32 to vector<1x144xf32>
    %575 = arith.divf %573, %574 : vector<1x144xf32>
    %c1688 = arith.constant 1688 : index
    %c0_125 = arith.constant 0 : index
    %576 = vector.load %arg2[%c1688, %c0_125] : memref<4344x128xbf16, #tpu.memory_space<vmem>>, vector<144x6xbf16>
    %577 = arith.truncf %575 : vector<1x144xf32> to vector<1x144xbf16>
    %cst_126 = arith.constant dense<0.000000e+00> : vector<1x6xf32>
    %578 = tpu.matmul %577, %576, %cst_126 {dimension_numbers = #tpu.dot_dimension_numbers<[1], [0], [0], [1], [0, 0, 1, 1], [], []>} : vector<1x144xbf16>, vector<144x6xbf16>, vector<1x6xf32> -> vector<1x6xf32>
    %c160 = arith.constant 160 : index
    %c0_127 = arith.constant 0 : index
    %579 = vector.load %arg6[%c160, %c0_127] : memref<224x128xf32, #tpu.memory_space<vmem>>, vector<1x6xf32>
    %580 = arith.addf %578, %579 : vector<1x6xf32>
    %cst_128 = arith.constant 0.000000e+00 : f32
    %581 = vector.broadcast %cst_128 : f32 to vector<1x6xf32>
    %582 = arith.subf %581, %580 : vector<1x6xf32>
    %583 = math.exp %582 : vector<1x6xf32>
    %cst_129 = arith.constant 1.000000e+00 : f32
    %584 = vector.broadcast %cst_129 : f32 to vector<1x6xf32>
    %585 = arith.addf %584, %583 : vector<1x6xf32>
    %586 = tpu.reciprocal %585 {approx = true} : vector<1x6xf32> -> vector<1x6xf32>
    %587 = arith.mulf %580, %586 : vector<1x6xf32>
    %c40_130 = arith.constant 40 : index
    %c0_131 = arith.constant 0 : index
    %588 = vector.load %arg3[%c40_130, %c0_131] : memref<688x256xbf16, #tpu.memory_space<vmem>>, vector<6x144xbf16>
    %589 = arith.truncf %587 : vector<1x6xf32> to vector<1x6xbf16>
    %cst_132 = arith.constant dense<0.000000e+00> : vector<1x144xf32>
    %590 = tpu.matmul %589, %588, %cst_132 {dimension_numbers = #tpu.dot_dimension_numbers<[1], [0], [0], [1], [0, 0, 1, 1], [], []>} : vector<1x6xbf16>, vector<6x144xbf16>, vector<1x144xf32> -> vector<1x144xf32>
    %c16_133 = arith.constant 16 : index
    %c0_134 = arith.constant 0 : index
    %591 = vector.load %arg7[%c16_133, %c0_134] : memref<56x256xf32, #tpu.memory_space<vmem>>, vector<1x144xf32>
    %592 = arith.addf %590, %591 : vector<1x144xf32>
    %cst_135 = arith.constant 0.000000e+00 : f32
    %593 = vector.broadcast %cst_135 : f32 to vector<1x144xf32>
    %594 = arith.subf %593, %592 : vector<1x144xf32>
    %595 = math.exp %594 : vector<1x144xf32>
    %cst_136 = arith.constant 1.000000e+00 : f32
    %596 = vector.broadcast %cst_136 : f32 to vector<1x144xf32>
    %597 = arith.addf %596, %595 : vector<1x144xf32>
    %598 = tpu.reciprocal %597 {approx = true} : vector<1x144xf32> -> vector<1x144xf32>
    %599 = arith.mulf %571, %598 : vector<1x144xf32>
    %c1832 = arith.constant 1832 : index
    %c0_137 = arith.constant 0 : index
    %600 = vector.load %arg2[%c1832, %c0_137] : memref<4344x128xbf16, #tpu.memory_space<vmem>>, vector<144x40xbf16>
    %601 = arith.truncf %599 : vector<1x144xf32> to vector<1x144xbf16>
    %cst_138 = arith.constant dense<0.000000e+00> : vector<1x40xf32>
    %602 = tpu.matmul %601, %600, %cst_138 {dimension_numbers = #tpu.dot_dimension_numbers<[1], [0], [0], [1], [0, 0, 1, 1], [], []>} : vector<1x144xbf16>, vector<144x40xbf16>, vector<1x40xf32> -> vector<1x40xf32>
    %c168 = arith.constant 168 : index
    %c0_139 = arith.constant 0 : index
    %603 = vector.load %arg6[%c168, %c0_139] : memref<224x128xf32, #tpu.memory_space<vmem>>, vector<1x40xf32>
    %604 = arith.addf %602, %603 : vector<1x40xf32>
    %c48_140 = arith.constant 48 : index
    %c0_141 = arith.constant 0 : index
    %605 = vector.load %arg3[%c48_140, %c0_141] : memref<688x256xbf16, #tpu.memory_space<vmem>>, vector<40x240xbf16>
    %606 = arith.truncf %604 : vector<1x40xf32> to vector<1x40xbf16>
    %cst_142 = arith.constant dense<0.000000e+00> : vector<1x240xf32>
    %607 = tpu.matmul %606, %605, %cst_142 {dimension_numbers = #tpu.dot_dimension_numbers<[1], [0], [0], [1], [0, 0, 1, 1], [], []>} : vector<1x40xbf16>, vector<40x240xbf16>, vector<1x240xf32> -> vector<1x240xf32>
    %c24_143 = arith.constant 24 : index
    %c0_144 = arith.constant 0 : index
    %608 = vector.load %arg7[%c24_143, %c0_144] : memref<56x256xf32, #tpu.memory_space<vmem>>, vector<1x240xf32>
    %609 = arith.addf %607, %608 : vector<1x240xf32>
    %cst_145 = arith.constant 0.000000e+00 : f32
    %610 = vector.broadcast %cst_145 : f32 to vector<1x240xf32>
    %611 = arith.subf %610, %609 : vector<1x240xf32>
    %612 = math.exp %611 : vector<1x240xf32>
    %cst_146 = arith.constant 1.000000e+00 : f32
    %613 = vector.broadcast %cst_146 : f32 to vector<1x240xf32>
    %614 = arith.addf %613, %612 : vector<1x240xf32>
    %615 = tpu.reciprocal %614 {approx = true} : vector<1x240xf32> -> vector<1x240xf32>
    %616 = arith.mulf %609, %615 : vector<1x240xf32>
    %c88_147 = arith.constant 88 : index
    %c0_148 = arith.constant 0 : index
    %617 = vector.load %arg3[%c88_147, %c0_148] : memref<688x256xbf16, #tpu.memory_space<vmem>>, vector<1x240xbf16>
    %618 = arith.extf %617 : vector<1x240xbf16> to vector<1x240xf32>
    %619 = arith.mulf %616, %618 : vector<1x240xf32>
    %c32_149 = arith.constant 32 : index
    %c0_150 = arith.constant 0 : index
    %620 = vector.load %arg7[%c32_149, %c0_150] : memref<56x256xf32, #tpu.memory_space<vmem>>, vector<1x240xf32>
    %621 = arith.addf %619, %620 : vector<1x240xf32>
    %cst_151 = arith.constant 0.000000e+00 : f32
    %622 = vector.broadcast %cst_151 : f32 to vector<1x240xf32>
    %623 = arith.subf %622, %621 : vector<1x240xf32>
    %624 = math.exp %623 : vector<1x240xf32>
    %cst_152 = arith.constant 1.000000e+00 : f32
    %625 = vector.broadcast %cst_152 : f32 to vector<1x240xf32>
    %626 = arith.addf %625, %624 : vector<1x240xf32>
    %627 = tpu.reciprocal %626 {approx = true} : vector<1x240xf32> -> vector<1x240xf32>
    %628 = arith.mulf %621, %627 : vector<1x240xf32>
    %cst_153 = arith.constant dense<0.000000e+00> : vector<240xf32>
    %629 = vector.multi_reduction <add>, %628, %cst_153 [0] : vector<1x240xf32> to vector<240xf32>
    %630 = vector.shape_cast %629 : vector<240xf32> to vector<1x240xf32>
    %cst_154 = arith.constant 1.000000e+00 : f32
    %631 = vector.broadcast %cst_154 : f32 to vector<1x240xf32>
    %632 = arith.divf %630, %631 : vector<1x240xf32>
    %c1976 = arith.constant 1976 : index
    %c0_155 = arith.constant 0 : index
    %633 = vector.load %arg2[%c1976, %c0_155] : memref<4344x128xbf16, #tpu.memory_space<vmem>>, vector<240x10xbf16>
    %634 = arith.truncf %632 : vector<1x240xf32> to vector<1x240xbf16>
    %cst_156 = arith.constant dense<0.000000e+00> : vector<1x10xf32>
    %635 = tpu.matmul %634, %633, %cst_156 {dimension_numbers = #tpu.dot_dimension_numbers<[1], [0], [0], [1], [0, 0, 1, 1], [], []>} : vector<1x240xbf16>, vector<240x10xbf16>, vector<1x10xf32> -> vector<1x10xf32>
    %c176 = arith.constant 176 : index
    %c0_157 = arith.constant 0 : index
    %636 = vector.load %arg6[%c176, %c0_157] : memref<224x128xf32, #tpu.memory_space<vmem>>, vector<1x10xf32>
    %637 = arith.addf %635, %636 : vector<1x10xf32>
    %cst_158 = arith.constant 0.000000e+00 : f32
    %638 = vector.broadcast %cst_158 : f32 to vector<1x10xf32>
    %639 = arith.subf %638, %637 : vector<1x10xf32>
    %640 = math.exp %639 : vector<1x10xf32>
    %cst_159 = arith.constant 1.000000e+00 : f32
    %641 = vector.broadcast %cst_159 : f32 to vector<1x10xf32>
    %642 = arith.addf %641, %640 : vector<1x10xf32>
    %643 = tpu.reciprocal %642 {approx = true} : vector<1x10xf32> -> vector<1x10xf32>
    %644 = arith.mulf %637, %643 : vector<1x10xf32>
    %c96_160 = arith.constant 96 : index
    %c0_161 = arith.constant 0 : index
    %645 = vector.load %arg3[%c96_160, %c0_161] : memref<688x256xbf16, #tpu.memory_space<vmem>>, vector<10x240xbf16>
    %646 = arith.truncf %644 : vector<1x10xf32> to vector<1x10xbf16>
    %cst_162 = arith.constant dense<0.000000e+00> : vector<1x240xf32>
    %647 = tpu.matmul %646, %645, %cst_162 {dimension_numbers = #tpu.dot_dimension_numbers<[1], [0], [0], [1], [0, 0, 1, 1], [], []>} : vector<1x10xbf16>, vector<10x240xbf16>, vector<1x240xf32> -> vector<1x240xf32>
    %c40_163 = arith.constant 40 : index
    %c0_164 = arith.constant 0 : index
    %648 = vector.load %arg7[%c40_163, %c0_164] : memref<56x256xf32, #tpu.memory_space<vmem>>, vector<1x240xf32>
    %649 = arith.addf %647, %648 : vector<1x240xf32>
    %cst_165 = arith.constant 0.000000e+00 : f32
    %650 = vector.broadcast %cst_165 : f32 to vector<1x240xf32>
    %651 = arith.subf %650, %649 : vector<1x240xf32>
    %652 = math.exp %651 : vector<1x240xf32>
    %cst_166 = arith.constant 1.000000e+00 : f32
    %653 = vector.broadcast %cst_166 : f32 to vector<1x240xf32>
    %654 = arith.addf %653, %652 : vector<1x240xf32>
    %655 = tpu.reciprocal %654 {approx = true} : vector<1x240xf32> -> vector<1x240xf32>
    %656 = arith.mulf %628, %655 : vector<1x240xf32>
    %c2216 = arith.constant 2216 : index
    %c0_167 = arith.constant 0 : index
    %657 = vector.load %arg2[%c2216, %c0_167] : memref<4344x128xbf16, #tpu.memory_space<vmem>>, vector<240x56xbf16>
    %658 = arith.truncf %656 : vector<1x240xf32> to vector<1x240xbf16>
    %cst_168 = arith.constant dense<0.000000e+00> : vector<1x56xf32>
    %659 = tpu.matmul %658, %657, %cst_168 {dimension_numbers = #tpu.dot_dimension_numbers<[1], [0], [0], [1], [0, 0, 1, 1], [], []>} : vector<1x240xbf16>, vector<240x56xbf16>, vector<1x56xf32> -> vector<1x56xf32>
    %c184 = arith.constant 184 : index
    %c0_169 = arith.constant 0 : index
    %660 = vector.load %arg6[%c184, %c0_169] : memref<224x128xf32, #tpu.memory_space<vmem>>, vector<1x56xf32>
    %661 = arith.addf %659, %660 : vector<1x56xf32>
    %c0_170 = arith.constant 0 : index
    %c0_171 = arith.constant 0 : index
    %662 = vector.load %arg4[%c0_170, %c0_171] : memref<80x384xbf16, #tpu.memory_space<vmem>>, vector<56x336xbf16>
    %663 = arith.truncf %661 : vector<1x56xf32> to vector<1x56xbf16>
    %cst_172 = arith.constant dense<0.000000e+00> : vector<1x336xf32>
    %664 = tpu.matmul %663, %662, %cst_172 {dimension_numbers = #tpu.dot_dimension_numbers<[1], [0], [0], [1], [0, 0, 1, 1], [], []>} : vector<1x56xbf16>, vector<56x336xbf16>, vector<1x336xf32> -> vector<1x336xf32>
    %c0_173 = arith.constant 0 : index
    %c0_174 = arith.constant 0 : index
    %665 = vector.load %arg8[%c0_173, %c0_174] : memref<24x384xf32, #tpu.memory_space<vmem>>, vector<1x336xf32>
    %666 = arith.addf %664, %665 : vector<1x336xf32>
    %cst_175 = arith.constant 0.000000e+00 : f32
    %667 = vector.broadcast %cst_175 : f32 to vector<1x336xf32>
    %668 = arith.subf %667, %666 : vector<1x336xf32>
    %669 = math.exp %668 : vector<1x336xf32>
    %cst_176 = arith.constant 1.000000e+00 : f32
    %670 = vector.broadcast %cst_176 : f32 to vector<1x336xf32>
    %671 = arith.addf %670, %669 : vector<1x336xf32>
    %672 = tpu.reciprocal %671 {approx = true} : vector<1x336xf32> -> vector<1x336xf32>
    %673 = arith.mulf %666, %672 : vector<1x336xf32>
    %c56_177 = arith.constant 56 : index
    %c0_178 = arith.constant 0 : index
    %674 = vector.load %arg4[%c56_177, %c0_178] : memref<80x384xbf16, #tpu.memory_space<vmem>>, vector<1x336xbf16>
    %675 = arith.extf %674 : vector<1x336xbf16> to vector<1x336xf32>
    %676 = arith.mulf %673, %675 : vector<1x336xf32>
    %c8_179 = arith.constant 8 : index
    %c0_180 = arith.constant 0 : index
    %677 = vector.load %arg8[%c8_179, %c0_180] : memref<24x384xf32, #tpu.memory_space<vmem>>, vector<1x336xf32>
    %678 = arith.addf %676, %677 : vector<1x336xf32>
    %cst_181 = arith.constant 0.000000e+00 : f32
    %679 = vector.broadcast %cst_181 : f32 to vector<1x336xf32>
    %680 = arith.subf %679, %678 : vector<1x336xf32>
    %681 = math.exp %680 : vector<1x336xf32>
    %cst_182 = arith.constant 1.000000e+00 : f32
    %682 = vector.broadcast %cst_182 : f32 to vector<1x336xf32>
    %683 = arith.addf %682, %681 : vector<1x336xf32>
    %684 = tpu.reciprocal %683 {approx = true} : vector<1x336xf32> -> vector<1x336xf32>
    %685 = arith.mulf %678, %684 : vector<1x336xf32>
    %cst_183 = arith.constant dense<0.000000e+00> : vector<336xf32>
    %686 = vector.multi_reduction <add>, %685, %cst_183 [0] : vector<1x336xf32> to vector<336xf32>
    %687 = vector.shape_cast %686 : vector<336xf32> to vector<1x336xf32>
    %cst_184 = arith.constant 1.000000e+00 : f32
    %688 = vector.broadcast %cst_184 : f32 to vector<1x336xf32>
    %689 = arith.divf %687, %688 : vector<1x336xf32>
    %c2456 = arith.constant 2456 : index
    %c0_185 = arith.constant 0 : index
    %690 = vector.load %arg2[%c2456, %c0_185] : memref<4344x128xbf16, #tpu.memory_space<vmem>>, vector<336x14xbf16>
    %691 = arith.truncf %689 : vector<1x336xf32> to vector<1x336xbf16>
    %cst_186 = arith.constant dense<0.000000e+00> : vector<1x14xf32>
    %692 = tpu.matmul %691, %690, %cst_186 {dimension_numbers = #tpu.dot_dimension_numbers<[1], [0], [0], [1], [0, 0, 1, 1], [], []>} : vector<1x336xbf16>, vector<336x14xbf16>, vector<1x14xf32> -> vector<1x14xf32>
    %c192 = arith.constant 192 : index
    %c0_187 = arith.constant 0 : index
    %693 = vector.load %arg6[%c192, %c0_187] : memref<224x128xf32, #tpu.memory_space<vmem>>, vector<1x14xf32>
    %694 = arith.addf %692, %693 : vector<1x14xf32>
    %cst_188 = arith.constant 0.000000e+00 : f32
    %695 = vector.broadcast %cst_188 : f32 to vector<1x14xf32>
    %696 = arith.subf %695, %694 : vector<1x14xf32>
    %697 = math.exp %696 : vector<1x14xf32>
    %cst_189 = arith.constant 1.000000e+00 : f32
    %698 = vector.broadcast %cst_189 : f32 to vector<1x14xf32>
    %699 = arith.addf %698, %697 : vector<1x14xf32>
    %700 = tpu.reciprocal %699 {approx = true} : vector<1x14xf32> -> vector<1x14xf32>
    %701 = arith.mulf %694, %700 : vector<1x14xf32>
    %c64_190 = arith.constant 64 : index
    %c0_191 = arith.constant 0 : index
    %702 = vector.load %arg4[%c64_190, %c0_191] : memref<80x384xbf16, #tpu.memory_space<vmem>>, vector<14x336xbf16>
    %703 = arith.truncf %701 : vector<1x14xf32> to vector<1x14xbf16>
    %cst_192 = arith.constant dense<0.000000e+00> : vector<1x336xf32>
    %704 = tpu.matmul %703, %702, %cst_192 {dimension_numbers = #tpu.dot_dimension_numbers<[1], [0], [0], [1], [0, 0, 1, 1], [], []>} : vector<1x14xbf16>, vector<14x336xbf16>, vector<1x336xf32> -> vector<1x336xf32>
    %c16_193 = arith.constant 16 : index
    %c0_194 = arith.constant 0 : index
    %705 = vector.load %arg8[%c16_193, %c0_194] : memref<24x384xf32, #tpu.memory_space<vmem>>, vector<1x336xf32>
    %706 = arith.addf %704, %705 : vector<1x336xf32>
    %cst_195 = arith.constant 0.000000e+00 : f32
    %707 = vector.broadcast %cst_195 : f32 to vector<1x336xf32>
    %708 = arith.subf %707, %706 : vector<1x336xf32>
    %709 = math.exp %708 : vector<1x336xf32>
    %cst_196 = arith.constant 1.000000e+00 : f32
    %710 = vector.broadcast %cst_196 : f32 to vector<1x336xf32>
    %711 = arith.addf %710, %709 : vector<1x336xf32>
    %712 = tpu.reciprocal %711 {approx = true} : vector<1x336xf32> -> vector<1x336xf32>
    %713 = arith.mulf %685, %712 : vector<1x336xf32>
    %c2792 = arith.constant 2792 : index
    %c0_197 = arith.constant 0 : index
    %714 = vector.load %arg2[%c2792, %c0_197] : memref<4344x128xbf16, #tpu.memory_space<vmem>>, vector<336x96xbf16>
    %715 = arith.truncf %713 : vector<1x336xf32> to vector<1x336xbf16>
    %cst_198 = arith.constant dense<0.000000e+00> : vector<1x96xf32>
    %716 = tpu.matmul %715, %714, %cst_198 {dimension_numbers = #tpu.dot_dimension_numbers<[1], [0], [0], [1], [0, 0, 1, 1], [], []>} : vector<1x336xbf16>, vector<336x96xbf16>, vector<1x96xf32> -> vector<1x96xf32>
    %c200 = arith.constant 200 : index
    %c0_199 = arith.constant 0 : index
    %717 = vector.load %arg6[%c200, %c0_199] : memref<224x128xf32, #tpu.memory_space<vmem>>, vector<1x96xf32>
    %718 = arith.addf %716, %717 : vector<1x96xf32>
    %c0_200 = arith.constant 0 : index
    %c0_201 = arith.constant 0 : index
    %719 = vector.load %arg5[%c0_200, %c0_201] : memref<288x640xbf16, #tpu.memory_space<vmem>>, vector<96x576xbf16>
    %720 = arith.truncf %718 : vector<1x96xf32> to vector<1x96xbf16>
    %cst_202 = arith.constant dense<0.000000e+00> : vector<1x576xf32>
    %721 = tpu.matmul %720, %719, %cst_202 {dimension_numbers = #tpu.dot_dimension_numbers<[1], [0], [0], [1], [0, 0, 1, 1], [], []>} : vector<1x96xbf16>, vector<96x576xbf16>, vector<1x576xf32> -> vector<1x576xf32>
    %c0_203 = arith.constant 0 : index
    %c0_204 = arith.constant 0 : index
    %722 = vector.load %arg9[%c0_203, %c0_204] : memref<32x640xf32, #tpu.memory_space<vmem>>, vector<1x576xf32>
    %723 = arith.addf %721, %722 : vector<1x576xf32>
    %cst_205 = arith.constant 0.000000e+00 : f32
    %724 = vector.broadcast %cst_205 : f32 to vector<1x576xf32>
    %725 = arith.subf %724, %723 : vector<1x576xf32>
    %726 = math.exp %725 : vector<1x576xf32>
    %cst_206 = arith.constant 1.000000e+00 : f32
    %727 = vector.broadcast %cst_206 : f32 to vector<1x576xf32>
    %728 = arith.addf %727, %726 : vector<1x576xf32>
    %729 = tpu.reciprocal %728 {approx = true} : vector<1x576xf32> -> vector<1x576xf32>
    %730 = arith.mulf %723, %729 : vector<1x576xf32>
    %c96_207 = arith.constant 96 : index
    %c0_208 = arith.constant 0 : index
    %731 = vector.load %arg5[%c96_207, %c0_208] : memref<288x640xbf16, #tpu.memory_space<vmem>>, vector<1x576xbf16>
    %732 = arith.extf %731 : vector<1x576xbf16> to vector<1x576xf32>
    %733 = arith.mulf %730, %732 : vector<1x576xf32>
    %c8_209 = arith.constant 8 : index
    %c0_210 = arith.constant 0 : index
    %734 = vector.load %arg9[%c8_209, %c0_210] : memref<32x640xf32, #tpu.memory_space<vmem>>, vector<1x576xf32>
    %735 = arith.addf %733, %734 : vector<1x576xf32>
    %cst_211 = arith.constant 0.000000e+00 : f32
    %736 = vector.broadcast %cst_211 : f32 to vector<1x576xf32>
    %737 = arith.subf %736, %735 : vector<1x576xf32>
    %738 = math.exp %737 : vector<1x576xf32>
    %cst_212 = arith.constant 1.000000e+00 : f32
    %739 = vector.broadcast %cst_212 : f32 to vector<1x576xf32>
    %740 = arith.addf %739, %738 : vector<1x576xf32>
    %741 = tpu.reciprocal %740 {approx = true} : vector<1x576xf32> -> vector<1x576xf32>
    %742 = arith.mulf %735, %741 : vector<1x576xf32>
    %cst_213 = arith.constant dense<0.000000e+00> : vector<576xf32>
    %743 = vector.multi_reduction <add>, %742, %cst_213 [0] : vector<1x576xf32> to vector<576xf32>
    %744 = vector.shape_cast %743 : vector<576xf32> to vector<1x576xf32>
    %cst_214 = arith.constant 1.000000e+00 : f32
    %745 = vector.broadcast %cst_214 : f32 to vector<1x576xf32>
    %746 = arith.divf %744, %745 : vector<1x576xf32>
    %c3128 = arith.constant 3128 : index
    %c0_215 = arith.constant 0 : index
    %747 = vector.load %arg2[%c3128, %c0_215] : memref<4344x128xbf16, #tpu.memory_space<vmem>>, vector<576x24xbf16>
    %748 = arith.truncf %746 : vector<1x576xf32> to vector<1x576xbf16>
    %cst_216 = arith.constant dense<0.000000e+00> : vector<1x24xf32>
    %749 = tpu.matmul %748, %747, %cst_216 {dimension_numbers = #tpu.dot_dimension_numbers<[1], [0], [0], [1], [0, 0, 1, 1], [], []>} : vector<1x576xbf16>, vector<576x24xbf16>, vector<1x24xf32> -> vector<1x24xf32>
    %c208 = arith.constant 208 : index
    %c0_217 = arith.constant 0 : index
    %750 = vector.load %arg6[%c208, %c0_217] : memref<224x128xf32, #tpu.memory_space<vmem>>, vector<1x24xf32>
    %751 = arith.addf %749, %750 : vector<1x24xf32>
    %cst_218 = arith.constant 0.000000e+00 : f32
    %752 = vector.broadcast %cst_218 : f32 to vector<1x24xf32>
    %753 = arith.subf %752, %751 : vector<1x24xf32>
    %754 = math.exp %753 : vector<1x24xf32>
    %cst_219 = arith.constant 1.000000e+00 : f32
    %755 = vector.broadcast %cst_219 : f32 to vector<1x24xf32>
    %756 = arith.addf %755, %754 : vector<1x24xf32>
    %757 = tpu.reciprocal %756 {approx = true} : vector<1x24xf32> -> vector<1x24xf32>
    %758 = arith.mulf %751, %757 : vector<1x24xf32>
    %c104_220 = arith.constant 104 : index
    %c0_221 = arith.constant 0 : index
    %759 = vector.load %arg5[%c104_220, %c0_221] : memref<288x640xbf16, #tpu.memory_space<vmem>>, vector<24x576xbf16>
    %760 = arith.truncf %758 : vector<1x24xf32> to vector<1x24xbf16>
    %cst_222 = arith.constant dense<0.000000e+00> : vector<1x576xf32>
    %761 = tpu.matmul %760, %759, %cst_222 {dimension_numbers = #tpu.dot_dimension_numbers<[1], [0], [0], [1], [0, 0, 1, 1], [], []>} : vector<1x24xbf16>, vector<24x576xbf16>, vector<1x576xf32> -> vector<1x576xf32>
    %c16_223 = arith.constant 16 : index
    %c0_224 = arith.constant 0 : index
    %762 = vector.load %arg9[%c16_223, %c0_224] : memref<32x640xf32, #tpu.memory_space<vmem>>, vector<1x576xf32>
    %763 = arith.addf %761, %762 : vector<1x576xf32>
    %cst_225 = arith.constant 0.000000e+00 : f32
    %764 = vector.broadcast %cst_225 : f32 to vector<1x576xf32>
    %765 = arith.subf %764, %763 : vector<1x576xf32>
    %766 = math.exp %765 : vector<1x576xf32>
    %cst_226 = arith.constant 1.000000e+00 : f32
    %767 = vector.broadcast %cst_226 : f32 to vector<1x576xf32>
    %768 = arith.addf %767, %766 : vector<1x576xf32>
    %769 = tpu.reciprocal %768 {approx = true} : vector<1x576xf32> -> vector<1x576xf32>
    %770 = arith.mulf %742, %769 : vector<1x576xf32>
    %c112_227 = arith.constant 112 : index
    %c0_228 = arith.constant 0 : index
    %771 = vector.load %arg3[%c112_227, %c0_228] : memref<688x256xbf16, #tpu.memory_space<vmem>>, vector<576x160xbf16>
    %772 = arith.truncf %770 : vector<1x576xf32> to vector<1x576xbf16>
    %cst_229 = arith.constant dense<0.000000e+00> : vector<1x160xf32>
    %773 = tpu.matmul %772, %771, %cst_229 {dimension_numbers = #tpu.dot_dimension_numbers<[1], [0], [0], [1], [0, 0, 1, 1], [], []>} : vector<1x576xbf16>, vector<576x160xbf16>, vector<1x160xf32> -> vector<1x160xf32>
    %c48_230 = arith.constant 48 : index
    %c0_231 = arith.constant 0 : index
    %774 = vector.load %arg7[%c48_230, %c0_231] : memref<56x256xf32, #tpu.memory_space<vmem>>, vector<1x160xf32>
    %775 = arith.addf %773, %774 : vector<1x160xf32>
    %c128_232 = arith.constant 128 : index
    %c0_233 = arith.constant 0 : index
    %776 = vector.load %arg5[%c128_232, %c0_233] : memref<288x640xbf16, #tpu.memory_space<vmem>>, vector<160x640xbf16>
    %777 = arith.truncf %775 : vector<1x160xf32> to vector<1x160xbf16>
    %cst_234 = arith.constant dense<0.000000e+00> : vector<1x640xf32>
    %778 = tpu.matmul %777, %776, %cst_234 {dimension_numbers = #tpu.dot_dimension_numbers<[1], [0], [0], [1], [0, 0, 1, 1], [], []>} : vector<1x160xbf16>, vector<160x640xbf16>, vector<1x640xf32> -> vector<1x640xf32>
    %c24_235 = arith.constant 24 : index
    %c0_236 = arith.constant 0 : index
    %779 = vector.load %arg9[%c24_235, %c0_236] : memref<32x640xf32, #tpu.memory_space<vmem>>, vector<1x640xf32>
    %780 = arith.addf %778, %779 : vector<1x640xf32>
    %cst_237 = arith.constant 0.000000e+00 : f32
    %781 = vector.broadcast %cst_237 : f32 to vector<1x640xf32>
    %782 = arith.subf %781, %780 : vector<1x640xf32>
    %783 = math.exp %782 : vector<1x640xf32>
    %cst_238 = arith.constant 1.000000e+00 : f32
    %784 = vector.broadcast %cst_238 : f32 to vector<1x640xf32>
    %785 = arith.addf %784, %783 : vector<1x640xf32>
    %786 = tpu.reciprocal %785 {approx = true} : vector<1x640xf32> -> vector<1x640xf32>
    %787 = arith.mulf %780, %786 : vector<1x640xf32>
    %c3704 = arith.constant 3704 : index
    %c0_239 = arith.constant 0 : index
    %788 = vector.load %arg2[%c3704, %c0_239] : memref<4344x128xbf16, #tpu.memory_space<vmem>>, vector<640x1xbf16>
    %789 = arith.truncf %787 : vector<1x640xf32> to vector<1x640xbf16>
    %cst_240 = arith.constant dense<0.000000e+00> : vector<1x1xf32>
    %790 = tpu.matmul %789, %788, %cst_240 {dimension_numbers = #tpu.dot_dimension_numbers<[1], [0], [0], [1], [0, 0, 1, 1], [], []>} : vector<1x640xbf16>, vector<640x1xbf16>, vector<1x1xf32> -> vector<1x1xf32>
    %c216 = arith.constant 216 : index
    %c0_241 = arith.constant 0 : index
    %791 = vector.load %arg6[%c216, %c0_241] : memref<224x128xf32, #tpu.memory_space<vmem>>, vector<1x1xf32>
    %792 = arith.addf %790, %791 : vector<1x1xf32>
    %cst_242 = arith.constant 0.000000e+00 : f32
    %793 = vector.broadcast %cst_242 : f32 to vector<1x1xf32>
    %794 = arith.subf %793, %792 : vector<1x1xf32>
    %795 = math.exp %794 : vector<1x1xf32>
    %cst_243 = arith.constant 1.000000e+00 : f32
    %796 = vector.broadcast %cst_243 : f32 to vector<1x1xf32>
    %797 = arith.addf %796, %795 : vector<1x1xf32>
    %cst_244 = arith.constant 1.000000e+00 : f32
    %798 = vector.broadcast %cst_244 : f32 to vector<1x1xf32>
    %799 = arith.divf %798, %797 : vector<1x1xf32>
    %c0_245 = arith.constant 0 : index
    %c0_246 = arith.constant 0 : index
    %c0_247 = arith.constant 0 : index
    %800 = vector.load %arg10[%c0_245, %c0_246, %c0_247] : memref<1x1x1xf32, #tpu.memory_space<vmem>>, vector<1x1x1xf32>
    %801 = vector.shape_cast %800 : vector<1x1x1xf32> to vector<1x1xf32>
    %802 = vector.shape_cast %799 : vector<1x1xf32> to vector<1x1x1xf32>
    tpu.vector_store %arg10[%c0_245, %c0_246, %c0_247], %802 {strides = array<i32>} : memref<1x1x1xf32, #tpu.memory_space<vmem>>, vector<1x1x1xf32>,
    return
  }
  func.func @transform_0(%arg0: i32) -> (i32, i32, i32) {
    %c0_i32 = arith.constant 0 : i32
    %c0_i32_0 = arith.constant 0 : i32
    %c0_i32_1 = arith.constant 0 : i32
    return %arg0, %c0_i32, %c0_i32_0 : i32, i32, i32
  }
  func.func @transform_1(%arg0: i32) -> (i32, i32) {
    %c0_i32 = arith.constant 0 : i32
    %c0_i32_0 = arith.constant 0 : i32
    %c0_i32_1 = arith.constant 0 : i32
    return %c0_i32, %c0_i32_0 : i32, i32
  }
  func.func @transform_2(%arg0: i32) -> (i32, i32) {
    %c0_i32 = arith.constant 0 : i32
    %c0_i32_0 = arith.constant 0 : i32
    %c0_i32_1 = arith.constant 0 : i32
    return %c0_i32, %c0_i32_0 : i32, i32
  }
  func.func @transform_3(%arg0: i32) -> (i32, i32) {
    %c0_i32 = arith.constant 0 : i32
    %c0_i32_0 = arith.constant 0 : i32
    %c0_i32_1 = arith.constant 0 : i32
    return %c0_i32, %c0_i32_0 : i32, i32
  }
  func.func @transform_4(%arg0: i32) -> (i32, i32) {
    %c0_i32 = arith.constant 0 : i32
    %c0_i32_0 = arith.constant 0 : i32
    %c0_i32_1 = arith.constant 0 : i32
    return %c0_i32, %c0_i32_0 : i32, i32
  }
  func.func @transform_5(%arg0: i32) -> (i32, i32) {
    %c0_i32 = arith.constant 0 : i32
    %c0_i32_0 = arith.constant 0 : i32
    %c0_i32_1 = arith.constant 0 : i32
    return %c0_i32, %c0_i32_0 : i32, i32
  }
  func.func @transform_6(%arg0: i32) -> (i32, i32) {
    %c0_i32 = arith.constant 0 : i32
    %c0_i32_0 = arith.constant 0 : i32
    %c0_i32_1 = arith.constant 0 : i32
    return %c0_i32, %c0_i32_0 : i32, i32
  }
  func.func @transform_7(%arg0: i32) -> (i32, i32) {
    %c0_i32 = arith.constant 0 : i32
    %c0_i32_0 = arith.constant 0 : i32
    %c0_i32_1 = arith.constant 0 : i32
    return %c0_i32, %c0_i32_0 : i32, i32
  }
  func.func @transform_8(%arg0: i32) -> (i32, i32) {
    %c0_i32 = arith.constant 0 : i32
    %c0_i32_0 = arith.constant 0 : i32
    %c0_i32_1 = arith.constant 0 : i32
    return %c0_i32, %c0_i32_0 : i32, i32
  }
  func.func @transform_9(%arg0: i32) -> (i32, i32, i32) {
    %c0_i32 = arith.constant 0 : i32
    %c0_i32_0 = arith.constant 0 : i32
    %c0_i32_1 = arith.constant 0 : i32
    return %arg0, %c0_i32, %c0_i32_0 : i32, i32, i32
  }
}

</mosaic_0001>

<llo_original>
// kernel: efficientnet_b0_forward.1
$region0: #{efficientnet_b0_forward.1}
  #allocation0 [shape = 'u32[]', space=smem, size = 0x4, offset = 0x4, fixed_abs, tag = 'smem constant byte address 0x4 - core index']
  #allocation1 [shape = 'u32[72,128]{1,0:T(1,128)}', space=vmem, size = 0x9000, scoped, tag = 'internal scratch']
  %s0 = inlined_call_operand.vmem [shape: bf16[2,64,36], index: 0, kind: input, shape index: {}]
  %s1 = inlined_call_operand.vmem [shape: bf16[4344,128], index: 1, kind: input, shape index: {}]
  %s2 = inlined_call_operand.vmem [shape: bf16[688,256], index: 2, kind: input, shape index: {}]
  %s3 = inlined_call_operand.vmem [shape: bf16[80,384], index: 3, kind: input, shape index: {}]
  %s4 = inlined_call_operand.vmem [shape: bf16[288,640], index: 4, kind: input, shape index: {}]
  %s5 = inlined_call_operand.vmem [shape: f32[224,128], index: 5, kind: input, shape index: {}]
  %s6 = inlined_call_operand.vmem [shape: f32[56,256], index: 6, kind: input, shape index: {}]
  %s7 = inlined_call_operand.vmem [shape: f32[24,384], index: 7, kind: input, shape index: {}]
  %s8 = inlined_call_operand.vmem [shape: f32[32,640], index: 8, kind: input, shape index: {}]
  %s9 = inlined_call_operand.vmem [shape: f32[2,1,1], index: 9, kind: output, shape index: {}]
  %s10 = sld [smem:[#allocation0]]
  $region69: #{efficientnet_b0_forward.1} parent=0
    _
  %s12 = ssub.s32 1, %s10
  %s13 = scalar_select 0, %s12, %s10
  loop: start=0, step=1, limit=4
  $region2: #{efficientnet_b0_forward.1} parent=0 // loop_pre_header
    _
  $region3: #{efficientnet_b0_forward.1} parent=0 // loop_header
    %s15 = sphi 0, %s19
    %p16 = scmp.ge.s32.totalorder %s15, 4
    %s25 = sphi 0, %s27
    %s28 = sphi 0, %s25
    %s29 = sphi 0, %s28
    %s45 = sphi 0, %s29
    %s49 = sphi 0, %s49
    %s51 = sphi 0, %s49
    %s52 = sphi 0, %s51
    %s66 = sphi 0, %s52
    %s70 = sphi 0, %s70
    %s72 = sphi 0, %s70
    %s73 = sphi 0, %s72
    %s87 = sphi 0, %s73
    %s91 = sphi 0, %s91
    %s93 = sphi 0, %s91
    %s94 = sphi 0, %s93
    %s108 = sphi 0, %s94
    %s112 = sphi 0, %s112
    %s114 = sphi 0, %s112
    %s115 = sphi 0, %s114
    %s129 = sphi 0, %s115
    %s133 = sphi 0, %s133
    %s135 = sphi 0, %s133
    %s136 = sphi 0, %s135
    %s150 = sphi 0, %s136
    %s154 = sphi 0, %s154
    %s156 = sphi 0, %s154
    %s157 = sphi 0, %s156
    %s171 = sphi 0, %s157
    %s175 = sphi 0, %s175
    %s177 = sphi 0, %s175
    %s178 = sphi 0, %s177
    %s192 = sphi 0, %s178
    %s196 = sphi 0, %s196
    %s198 = sphi 0, %s196
    %s199 = sphi 0, %s198
    %s213 = sphi 0, %s199
    %s219 = sphi 0, %s221
    %s222 = sphi 0, %s219
    %s223 = sphi 0, %s222
    %s239 = sphi 0, %s223
  $region4: #{efficientnet_b0_forward.1} parent=0 // loop_header_branch
    %18 = sbr.rel (%p16) target = $region8
  $region5: #{efficientnet_b0_forward.1} parent=0 // loop_body
    %s20 = ssub.s32 %s15, 1
    %s21 = ssub.s32 %s15, 2
    %s22 = sadd.s32 %s15, 1
    %s23 = ssub.s32 %s15, %s22
    %p24 = scmp.eq.s32.totalorder %s23, 0
    %s26 = sadd.s32 %s25, 1
    %s27 = scalar_select %p24, %s25, %s26
    %p30 = pneg %p24
    %p31 = scmp.eq.s32.totalorder %s15, 1
    %p32 = por %p30, %p31
    %p33 = scmp.ne.s32.totalorder %s25, %s28
    %p34 = scmp.eq.s32.totalorder %s15, 0
    %p35 = por %p33, %p34
    %p36 = scmp.ne.s32.totalorder %s25, %s28
    %p37 = scmp.eq.s32.totalorder %s20, 1
    %p38 = por %p36, %p37
    %p39 = scmp.ne.s32.totalorder %s28, %s29
    %p40 = scmp.eq.s32.totalorder %s20, 0
    %p41 = por %p39, %p40
    %p42 = scmp.ne.s32.totalorder %s28, %s29
    %p43 = scmp.eq.s32.totalorder %s21, 1
    %p44 = por %p42, %p43
    %p46 = scmp.ne.s32.totalorder %s29, %s45
    %p47 = scmp.eq.s32.totalorder %s21, 0
    %p48 = por %p46, %p47
    %s50 = sadd.s32 %s49, 1
    %p53 = scmp.eq.s32.totalorder %s15, 1
    %p54 = scmp.ne.s32.totalorder %s49, %s51
    %p55 = scmp.eq.s32.totalorder %s15, 0
    %p56 = por %p54, %p55
    %p57 = scmp.ne.s32.totalorder %s49, %s51
    %p58 = scmp.eq.s32.totalorder %s20, 1
    %p59 = por %p57, %p58
    %p60 = scmp.ne.s32.totalorder %s51, %s52
    %p61 = scmp.eq.s32.totalorder %s20, 0
    %p62 = por %p60, %p61
    %p63 = scmp.ne.s32.totalorder %s51, %s52
    %p64 = scmp.eq.s32.totalorder %s21, 1
    %p65 = por %p63, %p64
    %p67 = scmp.ne.s32.totalorder %s52, %s66
    %p68 = scmp.eq.s32.totalorder %s21, 0
    %p69 = por %p67, %p68
    %s71 = sadd.s32 %s70, 1
    %p74 = scmp.eq.s32.totalorder %s15, 1
    %p75 = scmp.ne.s32.totalorder %s70, %s72
    %p76 = scmp.eq.s32.totalorder %s15, 0
    %p77 = por %p75, %p76
    %p78 = scmp.ne.s32.totalorder %s70, %s72
    %p79 = scmp.eq.s32.totalorder %s20, 1
    %p80 = por %p78, %p79
    %p81 = scmp.ne.s32.totalorder %s72, %s73
    %p82 = scmp.eq.s32.totalorder %s20, 0
    %p83 = por %p81, %p82
    %p84 = scmp.ne.s32.totalorder %s72, %s73
    %p85 = scmp.eq.s32.totalorder %s21, 1
    %p86 = por %p84, %p85
    %p88 = scmp.ne.s32.totalorder %s73, %s87
    %p89 = scmp.eq.s32.totalorder %s21, 0
    %p90 = por %p88, %p89
    %s92 = sadd.s32 %s91, 1
    %p95 = scmp.eq.s32.totalorder %s15, 1
    %p96 = scmp.ne.s32.totalorder %s91, %s93
    %p97 = scmp.eq.s32.totalorder %s15, 0
    %p98 = por %p96, %p97
    %p99 = scmp.ne.s32.totalorder %s91, %s93
    %p100 = scmp.eq.s32.totalorder %s20, 1
    %p101 = por %p99, %p100
    %p102 = scmp.ne.s32.totalorder %s93, %s94
    %p103 = scmp.eq.s32.totalorder %s20, 0
    %p104 = por %p102, %p103
    %p105 = scmp.ne.s32.totalorder %s93, %s94
    %p106 = scmp.eq.s32.totalorder %s21, 1
    %p107 = por %p105, %p106
    %p109 = scmp.ne.s32.totalorder %s94, %s108
    %p110 = scmp.eq.s32.totalorder %s21, 0
    %p111 = por %p109, %p110
    %s113 = sadd.s32 %s112, 1
    %p116 = scmp.eq.s32.totalorder %s15, 1
    %p117 = scmp.ne.s32.totalorder %s112, %s114
    %p118 = scmp.eq.s32.totalorder %s15, 0
    %p119 = por %p117, %p118
    %p120 = scmp.ne.s32.totalorder %s112, %s114
    %p121 = scmp.eq.s32.totalorder %s20, 1
    %p122 = por %p120, %p121
    %p123 = scmp.ne.s32.totalorder %s114, %s115
    %p124 = scmp.eq.s32.totalorder %s20, 0
    %p125 = por %p123, %p124
    %p126 = scmp.ne.s32.totalorder %s114, %s115
    %p127 = scmp.eq.s32.totalorder %s21, 1
    %p128 = por %p126, %p127
    %p130 = scmp.ne.s32.totalorder %s115, %s129
    %p131 = scmp.eq.s32.totalorder %s21, 0
    %p132 = por %p130, %p131
    %s134 = sadd.s32 %s133, 1
    %p137 = scmp.eq.s32.totalorder %s15, 1
    %p138 = scmp.ne.s32.totalorder %s133, %s135
    %p139 = scmp.eq.s32.totalorder %s15, 0
    %p140 = por %p138, %p139
    %p141 = scmp.ne.s32.totalorder %s133, %s135
    %p142 = scmp.eq.s32.totalorder %s20, 1
    %p143 = por %p141, %p142
    %p144 = scmp.ne.s32.totalorder %s135, %s136
    %p145 = scmp.eq.s32.totalorder %s20, 0
    %p146 = por %p144, %p145
    %p147 = scmp.ne.s32.totalorder %s135, %s136
    %p148 = scmp.eq.s32.totalorder %s21, 1
    %p149 = por %p147, %p148
    %p151 = scmp.ne.s32.totalorder %s136, %s150
    %p152 = scmp.eq.s32.totalorder %s21, 0
    %p153 = por %p151, %p152
    %s155 = sadd.s32 %s154, 1
    %p158 = scmp.eq.s32.totalorder %s15, 1
    %p159 = scmp.ne.s32.totalorder %s154, %s156
    %p160 = scmp.eq.s32.totalorder %s15, 0
    %p161 = por %p159, %p160
    %p162 = scmp.ne.s32.totalorder %s154, %s156
    %p163 = scmp.eq.s32.totalorder %s20, 1
    %p164 = por %p162, %p163
    %p165 = scmp.ne.s32.totalorder %s156, %s157
    %p166 = scmp.eq.s32.totalorder %s20, 0
    %p167 = por %p165, %p166
    %p168 = scmp.ne.s32.totalorder %s156, %s157
    %p169 = scmp.eq.s32.totalorder %s21, 1
    %p170 = por %p168, %p169
    %p172 = scmp.ne.s32.totalorder %s157, %s171
    %p173 = scmp.eq.s32.totalorder %s21, 0
    %p174 = por %p172, %p173
    %s176 = sadd.s32 %s175, 1
    %p179 = scmp.eq.s32.totalorder %s15, 1
    %p180 = scmp.ne.s32.totalorder %s175, %s177
    %p181 = scmp.eq.s32.totalorder %s15, 0
    %p182 = por %p180, %p181
    %p183 = scmp.ne.s32.totalorder %s175, %s177
    %p184 = scmp.eq.s32.totalorder %s20, 1
    %p185 = por %p183, %p184
    %p186 = scmp.ne.s32.totalorder %s177, %s178
    %p187 = scmp.eq.s32.totalorder %s20, 0
    %p188 = por %p186, %p187
    %p189 = scmp.ne.s32.totalorder %s177, %s178
    %p190 = scmp.eq.s32.totalorder %s21, 1
    %p191 = por %p189, %p190
    %p193 = scmp.ne.s32.totalorder %s178, %s192
    %p194 = scmp.eq.s32.totalorder %s21, 0
    %p195 = por %p193, %p194
    %s197 = sadd.s32 %s196, 1
    %p200 = scmp.eq.s32.totalorder %s15, 1
    %p201 = scmp.ne.s32.totalorder %s196, %s198
    %p202 = scmp.eq.s32.totalorder %s15, 0
    %p203 = por %p201, %p202
    %p204 = scmp.ne.s32.totalorder %s196, %s198
    %p205 = scmp.eq.s32.totalorder %s20, 1
    %p206 = por %p204, %p205
    %p207 = scmp.ne.s32.totalorder %s198, %s199
    %p208 = scmp.eq.s32.totalorder %s20, 0
    %p209 = por %p207, %p208
    %p210 = scmp.ne.s32.totalorder %s198, %s199
    %p211 = scmp.eq.s32.totalorder %s21, 1
    %p212 = por %p210, %p211
    %p214 = scmp.ne.s32.totalorder %s199, %s213
    %p215 = scmp.eq.s32.totalorder %s21, 0
    %p216 = por %p214, %p215
    %s217 = ssub.s32 %s15, %s22
    %p218 = scmp.eq.s32.totalorder %s217, 0
    %s220 = sadd.s32 %s219, 1
    %s221 = scalar_select %p218, %s219, %s220
    %p224 = pneg %p218
    %p225 = scmp.eq.s32.totalorder %s15, 1
    %p226 = por %p224, %p225
    %p227 = scmp.ne.s32.totalorder %s219, %s222
    %p228 = scmp.eq.s32.totalorder %s15, 0
    %p229 = por %p227, %p228
    %p230 = scmp.ne.s32.totalorder %s219, %s222
    %p231 = scmp.eq.s32.totalorder %s20, 1
    %p232 = por %p230, %p231
    %p233 = scmp.ne.s32.totalorder %s222, %s223
    %p234 = scmp.eq.s32.totalorder %s20, 0
    %p235 = por %p233, %p234
    %p236 = scmp.ne.s32.totalorder %s222, %s223
    %p237 = scmp.eq.s32.totalorder %s21, 1
    %p238 = por %p236, %p237
    %p240 = scmp.ne.s32.totalorder %s223, %s239
    %p241 = scmp.eq.s32.totalorder %s21, 0
    %p242 = por %p240, %p241
    %p243 = scmp.le.s32.totalorder 1, %s15
    %p244 = scmp.lt.s32.totalorder %s15, 3
    %p245 = pnand %p243, %p244
    %p246 = pneg %p245
    // Predicated region
    $region9: #{efficientnet_b0_forward.1} parent=5 // pred_check
      _
    $region10: #{efficientnet_b0_forward.1} parent=5 // pred_check_branch
      %248 = sbr.rel (%p245) target = $region12
    $region11: #{efficientnet_b0_forward.1} parent=5 // pred_region
      %s249 = ssub.s32 %s15, 1
      // Predicated region
      $region13: #{efficientnet_b0_forward.1} parent=11 // pred_check
        %p250 = pneg %p62
      $region14: #{efficientnet_b0_forward.1} parent=11 // pred_check_branch
        %252 = sbr.rel (%p250) target = $region16
      $region15: #{efficientnet_b0_forward.1} parent=11 // pred_region
        _
      $region16: #{efficientnet_b0_forward.1} parent=11 // pred_fallthru
        _
      // Predicated region
      $region17: #{efficientnet_b0_forward.1} parent=11 // pred_check
        %p253 = pneg %p83
      $region18: #{efficientnet_b0_forward.1} parent=11 // pred_check_branch
        %255 = sbr.rel (%p253) target = $region20
      $region19: #{efficientnet_b0_forward.1} parent=11 // pred_region
        _
      $region20: #{efficientnet_b0_forward.1} parent=11 // pred_fallthru
        _
      // Predicated region
      $region21: #{efficientnet_b0_forward.1} parent=11 // pred_check
        %p256 = pneg %p104
      $region22: #{efficientnet_b0_forward.1} parent=11 // pred_check_branch
        %258 = sbr.rel (%p256) target = $region24
      $region23: #{efficientnet_b0_forward.1} parent=11 // pred_region
        _
      $region24: #{efficientnet_b0_forward.1} parent=11 // pred_fallthru
        _
      // Predicated region
      $region25: #{efficientnet_b0_forward.1} parent=11 // pred_check
        %p259 = pneg %p125
      $region26: #{efficientnet_b0_forward.1} parent=11 // pred_check_branch
        %261 = sbr.rel (%p259) target = $region28
      $region27: #{efficientnet_b0_forward.1} parent=11 // pred_region
        _
      $region28: #{efficientnet_b0_forward.1} parent=11 // pred_fallthru
        _
      // Predicated region
      $region29: #{efficientnet_b0_forward.1} parent=11 // pred_check
        %p262 = pneg %p146
      $region30: #{efficientnet_b0_forward.1} parent=11 // pred_check_branch
        %264 = sbr.rel (%p262) target = $region32
      $region31: #{efficientnet_b0_forward.1} parent=11 // pred_region
        _
      $region32: #{efficientnet_b0_forward.1} parent=11 // pred_fallthru
        _
      // Predicated region
      $region33: #{efficientnet_b0_forward.1} parent=11 // pred_check
        %p265 = pneg %p167
      $region34: #{efficientnet_b0_forward.1} parent=11 // pred_check_branch
        %267 = sbr.rel (%p265) target = $region36
      $region35: #{efficientnet_b0_forward.1} parent=11 // pred_region
        _
      $region36: #{efficientnet_b0_forward.1} parent=11 // pred_fallthru
        _
      // Predicated region
      $region37: #{efficientnet_b0_forward.1} parent=11 // pred_check
        %p268 = pneg %p188
      $region38: #{efficientnet_b0_forward.1} parent=11 // pred_check_branch
        %270 = sbr.rel (%p268) target = $region40
      $region39: #{efficientnet_b0_forward.1} parent=11 // pred_region
        _
      $region40: #{efficientnet_b0_forward.1} parent=11 // pred_fallthru
        _
      // Predicated region
      $region41: #{efficientnet_b0_forward.1} parent=11 // pred_check
        %p271 = pneg %p209
      $region42: #{efficientnet_b0_forward.1} parent=11 // pred_check_branch
        %273 = sbr.rel (%p271) target = $region44
      $region43: #{efficientnet_b0_forward.1} parent=11 // pred_region
        _
      $region44: #{efficientnet_b0_forward.1} parent=11 // pred_fallthru
        _
    $region12: #{efficientnet_b0_forward.1} parent=5 // pred_fallthru
      _
    %p274 = scmp.lt.s32.totalorder %s15, 2
    // Predicated region
    $region45: #{efficientnet_b0_forward.1} parent=5 // pred_check
      %p275 = pneg %p274
    $region46: #{efficientnet_b0_forward.1} parent=5 // pred_check_branch
      %277 = sbr.rel (%p275) target = $region48
    $region47: #{efficientnet_b0_forward.1} parent=5 // pred_region
      // Predicated region
      $region49: #{efficientnet_b0_forward.1} parent=47 // pred_check
        %p278 = pneg %p35
      $region50: #{efficientnet_b0_forward.1} parent=47 // pred_check_branch
        %280 = sbr.rel (%p278) target = $region52
      $region51: #{efficientnet_b0_forward.1} parent=47 // pred_region
        %p281 = scmp.lt.s32.totalorder %s15, 1
        %s282 = scalar_select %p281, %s15, 1
        %s283 = smul.addr %s282, 8
        %s284 = smul.addr %s283, 4
        %s285 = scalar_lea.vmem %s0, %s284
      $region52: #{efficientnet_b0_forward.1} parent=47 // pred_fallthru
        _
    $region48: #{efficientnet_b0_forward.1} parent=5 // pred_fallthru
      _
    %p286 = scmp.le.s32.totalorder 1, %s15
    %p287 = scmp.lt.s32.totalorder %s15, 3
    %p288 = pnand %p286, %p287
    %p289 = pneg %p288
    // Predicated region
    $region53: #{efficientnet_b0_forward.1} parent=5 // pred_check
      _
    $region54: #{efficientnet_b0_forward.1} parent=5 // pred_check_branch
      %291 = sbr.rel (%p288) target = $region56
    $region55: #{efficientnet_b0_forward.1} parent=5 // pred_region
      %s292 = ssub.s32 %s15, 1
      %p293 = scmp.lt.s32.totalorder %s20, 1
      %s294 = scalar_select %p293, %s20, 1
      %s295 = smul.addr %s294, 8
      %s296 = smul.addr %s295, 4
      %s297 = scalar_lea.vmem %s0, %s296
      %p298 = pneg %p41
      %p299 = pneg %p38
      %p300 = pneg %p62
      %p301 = pneg %p59
      %p302 = pneg %p83
      %p303 = pneg %p80
      %p304 = pneg %p104
      %p305 = pneg %p101
      %p306 = pneg %p125
      %p307 = pneg %p122
      %p308 = pneg %p146
      %p309 = pneg %p143
      %p310 = pneg %p167
      %p311 = pneg %p164
      %p312 = pneg %p188
      %p313 = pneg %p185
      %p314 = pneg %p209
      %p315 = pneg %p206
      %p316 = pneg %p235
      %p317 = pneg %p232
      %p318 = scmp.lt.s32.totalorder %s20, 1
      %s319 = scalar_select %p318, %s20, 1
      %s320 = scalar_lea.vmem %s9, %s319
      %p321 = scmp.lt.s32.totalorder %s20, 1
      %s322 = scalar_select %p321, %s20, 1
      %s323 = smul.addr %s322, 8
      %s324 = smul.addr %s323, 4
      %s325 = scalar_lea.vmem %s0, %s324
      %p326 = scmp.lt.s32.totalorder %s20, 1
      %s327 = scalar_select %p326, %s20, 1
      %s328 = scalar_lea.vmem %s9, %s327
      %v330 = vld [vmem:[%s325] sm:$0xf]
      %v331 = vld [vmem:[%s325 + $0x4] sm:$0xf]
      %v332 = vld [vmem:[%s325 + $0x8] sm:$0xf]
      %v333 = vld [vmem:[%s325 + $0xc] sm:$0xf]
      %v334 = vld [vmem:[%s325 + $0x10] sm:$0xf]
      %v335 = vld [vmem:[%s325 + $0x14] sm:$0xf]
      %v336 = vld [vmem:[%s325 + $0x18] sm:$0xf]
      %v337 = vld [vmem:[%s325 + $0x1c] sm:$0xf]
      %v338 = vld [vmem:[%s1] sm:$0xf]
      %v339 = vld [vmem:[%s1 + $0x4] sm:$0xf]
      %v340 = vld [vmem:[%s1 + $0x8] sm:$0xf]
      %v341 = vld [vmem:[%s1 + $0xc] sm:$0xf]
      %v342 = vld [vmem:[%s1 + $0x10] sm:$0x3]
      %v343 = vld [vmem:[%s5] sm:$0x1]
      %v344 = vperm.slane %v343, 0
      %v353 = vunpack.c.l.b16 %v330
      %v354 = vunpack.c.l.b16 %v331
      %v355 = vunpack.c.l.b16 %v332
      %v356 = vunpack.c.l.b16 %v333
      %v357 = vunpack.c.l.b16 %v334
      %v358 = vunpack.c.l.b16 %v335
      %v359 = vunpack.c.l.b16 %v336
      %v360 = vunpack.c.l.b16 %v337
      %v361 = vpack.c.b16 %v354, %v353
      %v362 = vpack.c.b16 %v356, %v355
      %v363 = vpack.c.b16 %v358, %v357
      %v364 = vpack.c.b16 %v360, %v359
      %v370 = vunpack.c.l.b16 %v338
      %v371 = vunpack.c.l.b16 %v339
      %v372 = vunpack.c.l.b16 %v340
      %v373 = vunpack.c.l.b16 %v341
      %v374 = vunpack.c.l.b16 %v342
      %v375 = vpack.c.b16 %v371, %v370
      %v376 = vpack.c.b16 %v373, %v372
      %v377 = vpack.c.b16 %v374, %v374
      %vm380 = vcmask 293888
      %v382 = vsel %vm380, %v361, 0
      %v385 = vsel %vm380, %v362, 0
      %v388 = vsel %vm380, %v363, 0
      %v391 = vsel %vm380, %v364, 0
      %vm393 = vcmask 1041408
      %v395 = vsel %vm393, %v377, 0
      %397 = vmatpush.bf16.msra.mxu0 0
      %398 = vmatpush.bf16.msra.mxu0 0
      %399 = vmatpush.bf16.msra.mxu0 0
      %400 = vmatpush.bf16.msra.mxu0 0
      %401 = vmatpush.bf16.msra.mxu0 0
      %402 = vmatpush.bf16.msra.mxu0 %v395
      %403 = vmatpush.bf16.msra.mxu0 %v376
      %404 = vmatpush.bf16.msra.mxu0 %v375
      %405 = vmatmul.bf16.gmra.mxu0 %v382
      %v406 = vpop.f32.mrf.mxu0
      %v407 = vadd.f32 %v344, %v406
      %v408 = vpop.f32.mrf.mxu0
      %v409 = vadd.f32 %v344, %v408
      %410 = vmatmul.bf16.gmra.mxu0 %v385
      %v411 = vpop.f32.mrf.mxu0
      %v412 = vadd.f32 %v344, %v411
      %v413 = vpop.f32.mrf.mxu0
      %v414 = vadd.f32 %v344, %v413
      %415 = vmatmul.bf16.gmra.mxu0 %v388
      %v416 = vpop.f32.mrf.mxu0
      %v417 = vadd.f32 %v344, %v416
      %v418 = vpop.f32.mrf.mxu0
      %v419 = vadd.f32 %v344, %v418
      %420 = vmatmul.bf16.gmra.mxu0 %v391
      %v421 = vpop.f32.mrf.mxu0
      %v422 = vadd.f32 %v344, %v421
      %v423 = vpop.f32.mrf.mxu0
      %v424 = vadd.f32 %v344, %v423
      %425 = vdwg.mxu0
      %v426 = vsub.f32 0.0, %v407
      %v427 = vsub.f32 0.0, %v409
      %v428 = vsub.f32 0.0, %v412
      %v429 = vsub.f32 0.0, %v414
      %v430 = vsub.f32 0.0, %v417
      %v431 = vsub.f32 0.0, %v419
      %v432 = vsub.f32 0.0, %v422
      %v433 = vsub.f32 0.0, %v424
      %v434 = vmul.f32 %v426, 1.442695
      %v435 = vpow.pop %v434
      %v436 = vmul.f32 %v427, 1.442695
      %v437 = vpow.pop %v436
      %v438 = vmul.f32 %v428, 1.442695
      %v439 = vpow.pop %v438
      %v440 = vmul.f32 %v429, 1.442695
      %v441 = vpow.pop %v440
      %v442 = vmul.f32 %v430, 1.442695
      %v443 = vpow.pop %v442
      %v444 = vmul.f32 %v431, 1.442695
      %v445 = vpow.pop %v444
      %v446 = vmul.f32 %v432, 1.442695
      %v447 = vpow.pop %v446
      %v448 = vmul.f32 %v433, 1.442695
      %v449 = vpow.pop %v448
      %v450 = vadd.f32 %v435, 1.0
      %v451 = vadd.f32 %v437, 1.0
      %v452 = vadd.f32 %v439, 1.0
      %v453 = vadd.f32 %v441, 1.0
      %v454 = vadd.f32 %v443, 1.0
      %v455 = vadd.f32 %v445, 1.0
      %v456 = vadd.f32 %v447, 1.0
      %v457 = vadd.f32 %v449, 1.0
      %v458 = vrcp.pop %v450
      %v459 = vrcp.pop %v451
      %v460 = vrcp.pop %v452
      %v461 = vrcp.pop %v453
      %v462 = vrcp.pop %v454
      %v463 = vrcp.pop %v455
      %v464 = vrcp.pop %v456
      %v465 = vrcp.pop %v457
      %v466 = vmul.f32 %v407, %v458
      %v467 = vmul.f32 %v409, %v459
      %v468 = vmul.f32 %v412, %v460
      %v469 = vmul.f32 %v414, %v461
      %v470 = vmul.f32 %v417, %v462
      %v471 = vmul.f32 %v419, %v463
      %v472 = vmul.f32 %v422, %v464
      %v473 = vmul.f32 %v424, %v465
      %v474 = vld [vmem:[%s1 + $0x134] sm:$0xf]
      %v475 = vld [vmem:[%s1 + $0x138] sm:$0x1]
      %v476 = vunpack.c.l.bf16 %v474
      %v477 = vunpack.c.l.bf16 %v475
      %v478 = vld [vmem:[%s1 + $0x14] sm:$0xf]
      %v479 = vld [vmem:[%s1 + $0x18] sm:$0xf]
      %v480 = vld [vmem:[%s1 + $0x1c] sm:$0xf]
      %v481 = vld [vmem:[%s1 + $0x20] sm:$0xf]
      %v482 = vld [vmem:[%s1 + $0x24] sm:$0xf]
      %v483 = vld [vmem:[%s1 + $0x28] sm:$0xf]
      %v484 = vld [vmem:[%s1 + $0x2c] sm:$0xf]
      %v485 = vld [vmem:[%s1 + $0x30] sm:$0xf]
      %v486 = vld [vmem:[%s1 + $0x34] sm:$0xf]
      %v487 = vld [vmem:[%s1 + $0x38] sm:$0xf]
      %v488 = vld [vmem:[%s1 + $0x3c] sm:$0xf]
      %v489 = vld [vmem:[%s1 + $0x40] sm:$0xf]
      %v490 = vld [vmem:[%s1 + $0x44] sm:$0xf]
      %v491 = vld [vmem:[%s1 + $0x48] sm:$0xf]
      %v492 = vld [vmem:[%s1 + $0x4c] sm:$0xf]
      %v493 = vld [vmem:[%s1 + $0x50] sm:$0xf]
      %v494 = vld [vmem:[%s1 + $0x54] sm:$0xf]
      %v495 = vld [vmem:[%s1 + $0x58] sm:$0xf]
      %v496 = vld [vmem:[%s1 + $0x5c] sm:$0xf]
      %v497 = vld [vmem:[%s1 + $0x60] sm:$0xf]
      %v498 = vld [vmem:[%s1 + $0x64] sm:$0xf]
      %v499 = vld [vmem:[%s1 + $0x68] sm:$0xf]
      %v500 = vld [vmem:[%s1 + $0x6c] sm:$0xf]
      %v501 = vld [vmem:[%s1 + $0x70] sm:$0xf]
      %v502 = vld [vmem:[%s1 + $0x74] sm:$0xf]
      %v503 = vld [vmem:[%s1 + $0x78] sm:$0xf]
      %v504 = vld [vmem:[%s1 + $0x7c] sm:$0xf]
      %v505 = vld [vmem:[%s1 + $0x80] sm:$0xf]
      %v506 = vld [vmem:[%s1 + $0x84] sm:$0xf]
      %v507 = vld [vmem:[%s1 + $0x88] sm:$0xf]
      %v508 = vld [vmem:[%s1 + $0x8c] sm:$0xf]
      %v509 = vld [vmem:[%s1 + $0x90] sm:$0xf]
      %v510 = vld [vmem:[%s1 + $0x94] sm:$0xf]
      %v511 = vld [vmem:[%s1 + $0x98] sm:$0xf]
      %v512 = vld [vmem:[%s1 + $0x9c] sm:$0xf]
      %v513 = vld [vmem:[%s1 + $0xa0] sm:$0xf]
      %v514 = vld [vmem:[%s1 + $0xa4] sm:$0xf]
      %v515 = vld [vmem:[%s1 + $0xa8] sm:$0xf]
      %v516 = vld [vmem:[%s1 + $0xac] sm:$0xf]
      %v517 = vld [vmem:[%s1 + $0xb0] sm:$0xf]
      %v518 = vld [vmem:[%s1 + $0xb4] sm:$0xf]
      %v519 = vld [vmem:[%s1 + $0xb8] sm:$0xf]
      %v520 = vld [vmem:[%s1 + $0xbc] sm:$0xf]
      %v521 = vld [vmem:[%s1 + $0xc0] sm:$0xf]
      %v522 = vld [vmem:[%s1 + $0xc4] sm:$0xf]
      %v523 = vld [vmem:[%s1 + $0xc8] sm:$0xf]
      %v524 = vld [vmem:[%s1 + $0xcc] sm:$0xf]
      %v525 = vld [vmem:[%s1 + $0xd0] sm:$0xf]
      %v526 = vld [vmem:[%s1 + $0xd4] sm:$0xf]
      %v527 = vld [vmem:[%s1 + $0xd8] sm:$0xf]
      %v528 = vld [vmem:[%s1 + $0xdc] sm:$0xf]
      %v529 = vld [vmem:[%s1 + $0xe0] sm:$0xf]
      %v530 = vld [vmem:[%s1 + $0xe4] sm:$0xf]
      %v531 = vld [vmem:[%s1 + $0xe8] sm:$0xf]
      %v532 = vld [vmem:[%s1 + $0xec] sm:$0xf]
      %v533 = vld [vmem:[%s1 + $0xf0] sm:$0xf]
      %v534 = vld [vmem:[%s1 + $0xf4] sm:$0xf]
      %v535 = vld [vmem:[%s1 + $0xf8] sm:$0xf]
      %v536 = vld [vmem:[%s1 + $0xfc] sm:$0xf]
      %v537 = vld [vmem:[%s1 + $0x100] sm:$0xf]
      %v538 = vld [vmem:[%s1 + $0x104] sm:$0xf]
      %v539 = vld [vmem:[%s1 + $0x108] sm:$0xf]
      %v540 = vld [vmem:[%s1 + $0x10c] sm:$0xf]
      %v541 = vld [vmem:[%s1 + $0x110] sm:$0xf]
      %v542 = vld [vmem:[%s1 + $0x114] sm:$0xf]
      %v543 = vld [vmem:[%s1 + $0x118] sm:$0xf]
      %v544 = vld [vmem:[%s1 + $0x11c] sm:$0xf]
      %v545 = vld [vmem:[%s1 + $0x120] sm:$0xf]
      %v546 = vld [vmem:[%s1 + $0x124] sm:$0xf]
      %v547 = vld [vmem:[%s1 + $0x128] sm:$0xf]
      %v548 = vld [vmem:[%s1 + $0x12c] sm:$0xf]
      %v549 = vld [vmem:[%s1 + $0x130] sm:$0xf]
      %v550 = vpack.c.bf16 %v467, %v466
      %v551 = vpack.c.bf16 %v469, %v468
      %v552 = vpack.c.bf16 %v471, %v470
      %v553 = vpack.c.bf16 %v473, %v472
      %v626 = vunpack.c.l.b16 %v478
      %v627 = vunpack.c.l.b16 %v479
      %v628 = vunpack.c.l.b16 %v480
      %v629 = vunpack.c.l.b16 %v481
      %v630 = vunpack.c.l.b16 %v482
      %v631 = vunpack.c.l.b16 %v483
      %v632 = vunpack.c.l.b16 %v484
      %v633 = vunpack.c.l.b16 %v485
      %v634 = vunpack.c.l.b16 %v486
      %v635 = vunpack.c.l.b16 %v487
      %v636 = vunpack.c.l.b16 %v488
      %v637 = vunpack.c.l.b16 %v489
      %v638 = vunpack.c.l.b16 %v490
      %v639 = vunpack.c.l.b16 %v491
      %v640 = vunpack.c.l.b16 %v492
      %v641 = vunpack.c.l.b16 %v493
      %v642 = vunpack.c.l.b16 %v494
      %v643 = vunpack.c.l.b16 %v495
      %v644 = vunpack.c.l.b16 %v496
      %v645 = vunpack.c.l.b16 %v497
      %v646 = vunpack.c.l.b16 %v498
      %v647 = vunpack.c.l.b16 %v499
      %v648 = vunpack.c.l.b16 %v500
      %v649 = vunpack.c.l.b16 %v501
      %v650 = vunpack.c.l.b16 %v502
      %v651 = vunpack.c.l.b16 %v503
      %v652 = vunpack.c.l.b16 %v504
      %v653 = vunpack.c.l.b16 %v505
      %v654 = vunpack.c.l.b16 %v506
      %v655 = vunpack.c.l.b16 %v507
      %v656 = vunpack.c.l.b16 %v508
      %v657 = vunpack.c.l.b16 %v509
      %v658 = vunpack.c.l.b16 %v510
      %v659 = vunpack.c.l.b16 %v511
      %v660 = vunpack.c.l.b16 %v512
      %v661 = vunpack.c.l.b16 %v513
      %v662 = vunpack.c.l.b16 %v514
      %v663 = vunpack.c.l.b16 %v515
      %v664 = vunpack.c.l.b16 %v516
      %v665 = vunpack.c.l.b16 %v517
      %v666 = vunpack.c.l.b16 %v518
      %v667 = vunpack.c.l.b16 %v519
      %v668 = vunpack.c.l.b16 %v520
      %v669 = vunpack.c.l.b16 %v521
      %v670 = vunpack.c.l.b16 %v522
      %v671 = vunpack.c.l.b16 %v523
      %v672 = vunpack.c.l.b16 %v524
      %v673 = vunpack.c.l.b16 %v525
      %v674 = vunpack.c.l.b16 %v526
      %v675 = vunpack.c.l.b16 %v527
      %v676 = vunpack.c.l.b16 %v528
      %v677 = vunpack.c.l.b16 %v529
      %v678 = vunpack.c.l.b16 %v530
      %v679 = vunpack.c.l.b16 %v531
      %v680 = vunpack.c.l.b16 %v532
      %v681 = vunpack.c.l.b16 %v533
      %v682 = vunpack.c.l.b16 %v534
      %v683 = vunpack.c.l.b16 %v535
      %v684 = vunpack.c.l.b16 %v536
      %v685 = vunpack.c.l.b16 %v537
      %v686 = vunpack.c.l.b16 %v538
      %v687 = vunpack.c.l.b16 %v539
      %v688 = vunpack.c.l.b16 %v540
      %v689 = vunpack.c.l.b16 %v541
      %v690 = vunpack.c.l.b16 %v542
      %v691 = vunpack.c.l.b16 %v543
      %v692 = vunpack.c.l.b16 %v544
      %v693 = vunpack.c.l.b16 %v545
      %v694 = vunpack.c.l.b16 %v546
      %v695 = vunpack.c.l.b16 %v547
      %v696 = vunpack.c.l.b16 %v548
      %v697 = vunpack.c.l.b16 %v549
      %v698 = vpack.c.b16 %v627, %v626
      %v699 = vpack.c.b16 %v629, %v628
      %v700 = vpack.c.b16 %v631, %v630
      %v701 = vpack.c.b16 %v633, %v632
      %v702 = vpack.c.b16 %v635, %v634
      %v703 = vpack.c.b16 %v637, %v636
      %v704 = vpack.c.b16 %v639, %v638
      %v705 = vpack.c.b16 %v641, %v640
      %v706 = vpack.c.b16 %v643, %v642
      %v707 = vpack.c.b16 %v645, %v644
      %v708 = vpack.c.b16 %v647, %v646
      %v709 = vpack.c.b16 %v649, %v648
      %v710 = vpack.c.b16 %v651, %v650
      %v711 = vpack.c.b16 %v653, %v652
      %v712 = vpack.c.b16 %v655, %v654
      %v713 = vpack.c.b16 %v657, %v656
      %v714 = vpack.c.b16 %v659, %v658
      %v715 = vpack.c.b16 %v661, %v660
      %v716 = vpack.c.b16 %v663, %v662
      %v717 = vpack.c.b16 %v665, %v664
      %v718 = vpack.c.b16 %v667, %v666
      %v719 = vpack.c.b16 %v669, %v668
      %v720 = vpack.c.b16 %v671, %v670
      %v721 = vpack.c.b16 %v673, %v672
      %v722 = vpack.c.b16 %v675, %v674
      %v723 = vpack.c.b16 %v677, %v676
      %v724 = vpack.c.b16 %v679, %v678
      %v725 = vpack.c.b16 %v681, %v680
      %v726 = vpack.c.b16 %v683, %v682
      %v727 = vpack.c.b16 %v685, %v684
      %v728 = vpack.c.b16 %v687, %v686
      %v729 = vpack.c.b16 %v689, %v688
      %v730 = vpack.c.b16 %v691, %v690
      %v731 = vpack.c.b16 %v693, %v692
      %v732 = vpack.c.b16 %v695, %v694
      %v733 = vpack.c.b16 %v697, %v696
      %vm734 = vcmask 523264
      %v736 = vsel %vm734, %v698, 0
      %v739 = vsel %vm734, %v699, 0
      %v742 = vsel %vm734, %v700, 0
      %v745 = vsel %vm734, %v701, 0
      %v748 = vsel %vm734, %v702, 0
      %v751 = vsel %vm734, %v703, 0
      %v754 = vsel %vm734, %v704, 0
      %v757 = vsel %vm734, %v705, 0
      %v760 = vsel %vm734, %v706, 0
      %v763 = vsel %vm734, %v707, 0
      %v766 = vsel %vm734, %v708, 0
      %v769 = vsel %vm734, %v709, 0
      %v772 = vsel %vm734, %v710, 0
      %v775 = vsel %vm734, %v711, 0
      %v778 = vsel %vm734, %v712, 0
      %v781 = vsel %vm734, %v713, 0
      %v784 = vsel %vm734, %v714, 0
      %v787 = vsel %vm734, %v715, 0
      %v790 = vsel %vm734, %v716, 0
      %v793 = vsel %vm734, %v717, 0
      %v796 = vsel %vm734, %v718, 0
      %v799 = vsel %vm734, %v719, 0
      %v802 = vsel %vm734, %v720, 0
      %v805 = vsel %vm734, %v721, 0
      %v808 = vsel %vm734, %v722, 0
      %v811 = vsel %vm734, %v723, 0
      %v814 = vsel %vm734, %v724, 0
      %v817 = vsel %vm734, %v725, 0
      %v820 = vsel %vm734, %v726, 0
      %v823 = vsel %vm734, %v727, 0
      %v826 = vsel %vm734, %v728, 0
      %v829 = vsel %vm734, %v729, 0
      %v832 = vsel %vm734, %v730, 0
      %v835 = vsel %vm734, %v731, 0
      %v838 = vsel %vm734, %v732, 0
      %v841 = vsel %vm734, %v733, 0
      %843 = vmatpush.bf16.msra.mxu0 0
      %844 = vmatpush.bf16.msra.mxu0 0
      %845 = vmatpush.bf16.msra.mxu0 0
      %846 = vmatpush.bf16.msra.mxu0 0
      %847 = vmatpush.bf16.msra.mxu0 %v553
      %848 = vmatpush.bf16.msra.mxu0 %v552
      %849 = vmatpush.bf16.msra.mxu0 %v551
      %850 = vmatpush.bf16.msra.mxu0 %v550
      %851 = vmatmul.bf16.gmra.mxu0 %v736
      %v852 = vpop.f32.mrf.mxu0
      %v853 = vadd.f32 0.0, %v852
      %v854 = vpop.f32.mrf.mxu0
      %v855 = vadd.f32 0.0, %v854
      %856 = vmatmul.bf16.gmra.mxu0 %v739
      %v857 = vpop.f32.mrf.mxu0
      %v858 = vadd.f32 0.0, %v857
      %v859 = vpop.f32.mrf.mxu0
      %v860 = vadd.f32 0.0, %v859
      %861 = vmatmul.bf16.gmra.mxu0 %v742
      %v862 = vpop.f32.mrf.mxu0
      %v863 = vadd.f32 0.0, %v862
      %v864 = vpop.f32.mrf.mxu0
      %v865 = vadd.f32 0.0, %v864
      %866 = vmatmul.bf16.gmra.mxu0 %v745
      %v867 = vpop.f32.mrf.mxu0
      %v868 = vadd.f32 0.0, %v867
      %v869 = vpop.f32.mrf.mxu0
      %v870 = vadd.f32 0.0, %v869
      %871 = vmatmul.bf16.gmra.mxu0 %v748
      %v872 = vpop.f32.mrf.mxu0
      %v873 = vadd.f32 0.0, %v872
      %v874 = vpop.f32.mrf.mxu0
      %v875 = vadd.f32 0.0, %v874
      %876 = vmatmul.bf16.gmra.mxu0 %v751
      %v877 = vpop.f32.mrf.mxu0
      %v878 = vadd.f32 0.0, %v877
      %v879 = vpop.f32.mrf.mxu0
      %v880 = vadd.f32 0.0, %v879
      %881 = vmatmul.bf16.gmra.mxu0 %v754
      %v882 = vpop.f32.mrf.mxu0
      %v883 = vadd.f32 0.0, %v882
      %v884 = vpop.f32.mrf.mxu0
      %v885 = vadd.f32 0.0, %v884
      %886 = vmatmul.bf16.gmra.mxu0 %v757
      %v887 = vpop.f32.mrf.mxu0
      %v888 = vadd.f32 0.0, %v887
      %v889 = vpop.f32.mrf.mxu0
      %v890 = vadd.f32 0.0, %v889
      %891 = vmatmul.bf16.gmra.mxu0 %v760
      %v892 = vpop.f32.mrf.mxu0
      %v893 = vadd.f32 0.0, %v892
      %v894 = vpop.f32.mrf.mxu0
      %v895 = vadd.f32 0.0, %v894
      %896 = vmatmul.bf16.gmra.mxu0 %v763
      %v897 = vpop.f32.mrf.mxu0
      %v898 = vadd.f32 0.0, %v897
      %v899 = vpop.f32.mrf.mxu0
      %v900 = vadd.f32 0.0, %v899
      %901 = vmatmul.bf16.gmra.mxu0 %v766
      %v902 = vpop.f32.mrf.mxu0
      %v903 = vadd.f32 0.0, %v902
      %v904 = vpop.f32.mrf.mxu0
      %v905 = vadd.f32 0.0, %v904
      %906 = vmatmul.bf16.gmra.mxu0 %v769
      %v907 = vpop.f32.mrf.mxu0
      %v908 = vadd.f32 0.0, %v907
      %v909 = vpop.f32.mrf.mxu0
      %v910 = vadd.f32 0.0, %v909
      %911 = vmatmul.bf16.gmra.mxu0 %v772
      %v912 = vpop.f32.mrf.mxu0
      %v913 = vadd.f32 0.0, %v912
      %v914 = vpop.f32.mrf.mxu0
      %v915 = vadd.f32 0.0, %v914
      %916 = vmatmul.bf16.gmra.mxu0 %v775
      %v917 = vpop.f32.mrf.mxu0
      %v918 = vadd.f32 0.0, %v917
      %v919 = vpop.f32.mrf.mxu0
      %v920 = vadd.f32 0.0, %v919
      %921 = vmatmul.bf16.gmra.mxu0 %v778
      %v922 = vpop.f32.mrf.mxu0
      %v923 = vadd.f32 0.0, %v922
      %v924 = vpop.f32.mrf.mxu0
      %v925 = vadd.f32 0.0, %v924
      %926 = vmatmul.bf16.gmra.mxu0 %v781
      %v927 = vpop.f32.mrf.mxu0
      %v928 = vadd.f32 0.0, %v927
      %v929 = vpop.f32.mrf.mxu0
      %v930 = vadd.f32 0.0, %v929
      %931 = vmatmul.bf16.gmra.mxu0 %v784
      %v932 = vpop.f32.mrf.mxu0
      %v933 = vadd.f32 0.0, %v932
      %v934 = vpop.f32.mrf.mxu0
      %v935 = vadd.f32 0.0, %v934
      %936 = vmatmul.bf16.gmra.mxu0 %v787
      %v937 = vpop.f32.mrf.mxu0
      %v938 = vadd.f32 0.0, %v937
      %v939 = vpop.f32.mrf.mxu0
      %v940 = vadd.f32 0.0, %v939
      %941 = vmatmul.bf16.gmra.mxu0 %v790
      %v942 = vpop.f32.mrf.mxu0
      %v943 = vadd.f32 0.0, %v942
      %v944 = vpop.f32.mrf.mxu0
      %v945 = vadd.f32 0.0, %v944
      %946 = vmatmul.bf16.gmra.mxu0 %v793
      %v947 = vpop.f32.mrf.mxu0
      %v948 = vadd.f32 0.0, %v947
      %v949 = vpop.f32.mrf.mxu0
      %v950 = vadd.f32 0.0, %v949
      %951 = vmatmul.bf16.gmra.mxu0 %v796
      %v952 = vpop.f32.mrf.mxu0
      %v953 = vadd.f32 0.0, %v952
      %v954 = vpop.f32.mrf.mxu0
      %v955 = vadd.f32 0.0, %v954
      %956 = vmatmul.bf16.gmra.mxu0 %v799
      %v957 = vpop.f32.mrf.mxu0
      %v958 = vadd.f32 0.0, %v957
      %v959 = vpop.f32.mrf.mxu0
      %v960 = vadd.f32 0.0, %v959
      %961 = vmatmul.bf16.gmra.mxu0 %v802
      %v962 = vpop.f32.mrf.mxu0
      %v963 = vadd.f32 0.0, %v962
      %v964 = vpop.f32.mrf.mxu0
      %v965 = vadd.f32 0.0, %v964
      %966 = vmatmul.bf16.gmra.mxu0 %v805
      %v967 = vpop.f32.mrf.mxu0
      %v968 = vadd.f32 0.0, %v967
      %v969 = vpop.f32.mrf.mxu0
      %v970 = vadd.f32 0.0, %v969
      %971 = vmatmul.bf16.gmra.mxu0 %v808
      %v972 = vpop.f32.mrf.mxu0
      %v973 = vadd.f32 0.0, %v972
      %v974 = vpop.f32.mrf.mxu0
      %v975 = vadd.f32 0.0, %v974
      %976 = vmatmul.bf16.gmra.mxu0 %v811
      %v977 = vpop.f32.mrf.mxu0
      %v978 = vadd.f32 0.0, %v977
      %v979 = vpop.f32.mrf.mxu0
      %v980 = vadd.f32 0.0, %v979
      %981 = vmatmul.bf16.gmra.mxu0 %v814
      %v982 = vpop.f32.mrf.mxu0
      %v983 = vadd.f32 0.0, %v982
      %v984 = vpop.f32.mrf.mxu0
      %v985 = vadd.f32 0.0, %v984
      %986 = vmatmul.bf16.gmra.mxu0 %v817
      %v987 = vpop.f32.mrf.mxu0
      %v988 = vadd.f32 0.0, %v987
      %v989 = vpop.f32.mrf.mxu0
      %v990 = vadd.f32 0.0, %v989
      %991 = vmatmul.bf16.gmra.mxu0 %v820
      %v992 = vpop.f32.mrf.mxu0
      %v993 = vadd.f32 0.0, %v992
      %v994 = vpop.f32.mrf.mxu0
      %v995 = vadd.f32 0.0, %v994
      %996 = vmatmul.bf16.gmra.mxu0 %v823
      %v997 = vpop.f32.mrf.mxu0
      %v998 = vadd.f32 0.0, %v997
      %v999 = vpop.f32.mrf.mxu0
      %v1000 = vadd.f32 0.0, %v999
      %1001 = vmatmul.bf16.gmra.mxu0 %v826
      %v1002 = vpop.f32.mrf.mxu0
      %v1003 = vadd.f32 0.0, %v1002
      %v1004 = vpop.f32.mrf.mxu0
      %v1005 = vadd.f32 0.0, %v1004
      %1006 = vmatmul.bf16.gmra.mxu0 %v829
      %v1007 = vpop.f32.mrf.mxu0
      %v1008 = vadd.f32 0.0, %v1007
      %v1009 = vpop.f32.mrf.mxu0
      %v1010 = vadd.f32 0.0, %v1009
      %1011 = vmatmul.bf16.gmra.mxu0 %v832
      %v1012 = vpop.f32.mrf.mxu0
      %v1013 = vadd.f32 0.0, %v1012
      %v1014 = vpop.f32.mrf.mxu0
      %v1015 = vadd.f32 0.0, %v1014
      %1016 = vmatmul.bf16.gmra.mxu0 %v835
      %v1017 = vpop.f32.mrf.mxu0
      %v1018 = vadd.f32 0.0, %v1017
      %v1019 = vpop.f32.mrf.mxu0
      %v1020 = vadd.f32 0.0, %v1019
      %1021 = vmatmul.bf16.gmra.mxu0 %v838
      %v1022 = vpop.f32.mrf.mxu0
      %v1023 = vadd.f32 0.0, %v1022
      %v1024 = vpop.f32.mrf.mxu0
      %v1025 = vadd.f32 0.0, %v1024
      %1026 = vmatmul.bf16.gmra.mxu0 %v841
      %v1027 = vpop.f32.mrf.mxu0
      %v1028 = vadd.f32 0.0, %v1027
      %v1029 = vpop.f32.mrf.mxu0
      %v1030 = vadd.f32 0.0, %v1029
      %1031 = vdwg.mxu0
      %v1032 = vperm.slane %v476, 0
      %v1033 = vmul.f32 %v853, %v1032
      %v1034 = vmul.f32 %v855, %v1032
      %v1035 = vmul.f32 %v858, %v1032
      %v1036 = vmul.f32 %v860, %v1032
      %v1037 = vmul.f32 %v863, %v1032
      %v1038 = vmul.f32 %v865, %v1032
      %v1039 = vmul.f32 %v868, %v1032
      %v1040 = vmul.f32 %v870, %v1032
      %v1041 = vperm.slane %v476, 1
      %v1042 = vmul.f32 %v873, %v1041
      %v1043 = vmul.f32 %v875, %v1041
      %v1044 = vmul.f32 %v878, %v1041
      %v1045 = vmul.f32 %v880, %v1041
      %v1046 = vmul.f32 %v883, %v1041
      %v1047 = vmul.f32 %v885, %v1041
      %v1048 = vmul.f32 %v888, %v1041
      %v1049 = vmul.f32 %v890, %v1041
      %v1050 = vadd.f32 %v1033, %v1042
      %v1051 = vadd.f32 %v1034, %v1043
      %v1052 = vadd.f32 %v1035, %v1044
      %v1053 = vadd.f32 %v1036, %v1045
      %v1054 = vadd.f32 %v1037, %v1046
      %v1055 = vadd.f32 %v1038, %v1047
      %v1056 = vadd.f32 %v1039, %v1048
      %v1057 = vadd.f32 %v1040, %v1049
      %v1058 = vperm.slane %v476, 2
      %v1059 = vmul.f32 %v893, %v1058
      %v1060 = vmul.f32 %v895, %v1058
      %v1061 = vmul.f32 %v898, %v1058
      %v1062 = vmul.f32 %v900, %v1058
      %v1063 = vmul.f32 %v903, %v1058
      %v1064 = vmul.f32 %v905, %v1058
      %v1065 = vmul.f32 %v908, %v1058
      %v1066 = vmul.f32 %v910, %v1058
      %v1067 = vadd.f32 %v1050, %v1059
      %v1068 = vadd.f32 %v1051, %v1060
      %v1069 = vadd.f32 %v1052, %v1061
      %v1070 = vadd.f32 %v1053, %v1062
      %v1071 = vadd.f32 %v1054, %v1063
      %v1072 = vadd.f32 %v1055, %v1064
      %v1073 = vadd.f32 %v1056, %v1065
      %v1074 = vadd.f32 %v1057, %v1066
      %v1075 = vperm.slane %v476, 3
      %v1076 = vmul.f32 %v913, %v1075
      %v1077 = vmul.f32 %v915, %v1075
      %v1078 = vmul.f32 %v918, %v1075
      %v1079 = vmul.f32 %v920, %v1075
      %v1080 = vmul.f32 %v923, %v1075
      %v1081 = vmul.f32 %v925, %v1075
      %v1082 = vmul.f32 %v928, %v1075
      %v1083 = vmul.f32 %v930, %v1075
      %v1084 = vadd.f32 %v1067, %v1076
      %v1085 = vadd.f32 %v1068, %v1077
      %v1086 = vadd.f32 %v1069, %v1078
      %v1087 = vadd.f32 %v1070, %v1079
      %v1088 = vadd.f32 %v1071, %v1080
      %v1089 = vadd.f32 %v1072, %v1081
      %v1090 = vadd.f32 %v1073, %v1082
      %v1091 = vadd.f32 %v1074, %v1083
      %v1092 = vperm.slane %v476, 4
      %v1093 = vmul.f32 %v933, %v1092
      %v1094 = vmul.f32 %v935, %v1092
      %v1095 = vmul.f32 %v938, %v1092
      %v1096 = vmul.f32 %v940, %v1092
      %v1097 = vmul.f32 %v943, %v1092
      %v1098 = vmul.f32 %v945, %v1092
      %v1099 = vmul.f32 %v948, %v1092
      %v1100 = vmul.f32 %v950, %v1092
      %v1101 = vadd.f32 %v1084, %v1093
      %v1102 = vadd.f32 %v1085, %v1094
      %v1103 = vadd.f32 %v1086, %v1095
      %v1104 = vadd.f32 %v1087, %v1096
      %v1105 = vadd.f32 %v1088, %v1097
      %v1106 = vadd.f32 %v1089, %v1098
      %v1107 = vadd.f32 %v1090, %v1099
      %v1108 = vadd.f32 %v1091, %v1100
      %v1109 = vperm.slane %v476, 5
      %v1110 = vmul.f32 %v953, %v1109
      %v1111 = vmul.f32 %v955, %v1109
      %v1112 = vmul.f32 %v958, %v1109
      %v1113 = vmul.f32 %v960, %v1109
      %v1114 = vmul.f32 %v963, %v1109
      %v1115 = vmul.f32 %v965, %v1109
      %v1116 = vmul.f32 %v968, %v1109
      %v1117 = vmul.f32 %v970, %v1109
      %v1118 = vadd.f32 %v1101, %v1110
      %v1119 = vadd.f32 %v1102, %v1111
      %v1120 = vadd.f32 %v1103, %v1112
      %v1121 = vadd.f32 %v1104, %v1113
      %v1122 = vadd.f32 %v1105, %v1114
      %v1123 = vadd.f32 %v1106, %v1115
      %v1124 = vadd.f32 %v1107, %v1116
      %v1125 = vadd.f32 %v1108, %v1117
      %v1126 = vperm.slane %v476, 6
      %v1127 = vmul.f32 %v973, %v1126
      %v1128 = vmul.f32 %v975, %v1126
      %v1129 = vmul.f32 %v978, %v1126
      %v1130 = vmul.f32 %v980, %v1126
      %v1131 = vmul.f32 %v983, %v1126
      %v1132 = vmul.f32 %v985, %v1126
      %v1133 = vmul.f32 %v988, %v1126
      %v1134 = vmul.f32 %v990, %v1126
      %v1135 = vadd.f32 %v1118, %v1127
      %v1136 = vadd.f32 %v1119, %v1128
      %v1137 = vadd.f32 %v1120, %v1129
      %v1138 = vadd.f32 %v1121, %v1130
      %v1139 = vadd.f32 %v1122, %v1131
      %v1140 = vadd.f32 %v1123, %v1132
      %v1141 = vadd.f32 %v1124, %v1133
      %v1142 = vadd.f32 %v1125, %v1134
      %v1143 = vperm.slane %v476, 7
      %v1144 = vmul.f32 %v993, %v1143
      %v1145 = vmul.f32 %v995, %v1143
      %v1146 = vmul.f32 %v998, %v1143
      %v1147 = vmul.f32 %v1000, %v1143
      %v1148 = vmul.f32 %v1003, %v1143
      %v1149 = vmul.f32 %v1005, %v1143
      %v1150 = vmul.f32 %v1008, %v1143
      %v1151 = vmul.f32 %v1010, %v1143
      %v1152 = vadd.f32 %v1135, %v1144
      %v1153 = vadd.f32 %v1136, %v1145
      %v1154 = vadd.f32 %v1137, %v1146
      %v1155 = vadd.f32 %v1138, %v1147
      %v1156 = vadd.f32 %v1139, %v1148
      %v1157 = vadd.f32 %v1140, %v1149
      %v1158 = vadd.f32 %v1141, %v1150
      %v1159 = vadd.f32 %v1142, %v1151
      %v1160 = vperm.slane %v477, 0
      %v1161 = vmul.f32 %v1013, %v1160
      %v1162 = vmul.f32 %v1015, %v1160
      %v1163 = vmul.f32 %v1018, %v1160
      %v1164 = vmul.f32 %v1020, %v1160
      %v1165 = vmul.f32 %v1023, %v1160
      %v1166 = vmul.f32 %v1025, %v1160
      %v1167 = vmul.f32 %v1028, %v1160
      %v1168 = vmul.f32 %v1030, %v1160
      %v1169 = vadd.f32 %v1152, %v1161
      %v1170 = vadd.f32 %v1153, %v1162
      %v1171 = vadd.f32 %v1154, %v1163
      %v1172 = vadd.f32 %v1155, %v1164
      %v1173 = vadd.f32 %v1156, %v1165
      %v1174 = vadd.f32 %v1157, %v1166
      %v1175 = vadd.f32 %v1158, %v1167
      %v1176 = vadd.f32 %v1159, %v1168
      %v1177 = vld [vmem:[%s5 + $0x8] sm:$0x1]
      %v1178 = vperm.slane %v1177, 0
      %v1179 = vadd.f32 %v1169, %v1178
      %v1180 = vadd.f32 %v1170, %v1178
      %v1181 = vadd.f32 %v1171, %v1178
      %v1182 = vadd.f32 %v1172, %v1178
      %v1183 = vadd.f32 %v1173, %v1178
      %v1184 = vadd.f32 %v1174, %v1178
      %v1185 = vadd.f32 %v1175, %v1178
      %v1186 = vadd.f32 %v1176, %v1178
      %v1187 = vsub.f32 0.0, %v1179
      %v1188 = vsub.f32 0.0, %v1180
      %v1189 = vsub.f32 0.0, %v1181
      %v1190 = vsub.f32 0.0, %v1182
      %v1191 = vsub.f32 0.0, %v1183
      %v1192 = vsub.f32 0.0, %v1184
      %v1193 = vsub.f32 0.0, %v1185
      %v1194 = vsub.f32 0.0, %v1186
      %v1195 = vmul.f32 %v1187, 1.442695
      %v1196 = vpow.pop %v1195
      %v1197 = vmul.f32 %v1188, 1.442695
      %v1198 = vpow.pop %v1197
      %v1199 = vmul.f32 %v1189, 1.442695
      %v1200 = vpow.pop %v1199
      %v1201 = vmul.f32 %v1190, 1.442695
      %v1202 = vpow.pop %v1201
      %v1203 = vmul.f32 %v1191, 1.442695
      %v1204 = vpow.pop %v1203
      %v1205 = vmul.f32 %v1192, 1.442695
      %v1206 = vpow.pop %v1205
      %v1207 = vmul.f32 %v1193, 1.442695
      %v1208 = vpow.pop %v1207
      %v1209 = vmul.f32 %v1194, 1.442695
      %v1210 = vpow.pop %v1209
      %v1211 = vadd.f32 %v1196, 1.0
      %v1212 = vadd.f32 %v1198, 1.0
      %v1213 = vadd.f32 %v1200, 1.0
      %v1214 = vadd.f32 %v1202, 1.0
      %v1215 = vadd.f32 %v1204, 1.0
      %v1216 = vadd.f32 %v1206, 1.0
      %v1217 = vadd.f32 %v1208, 1.0
      %v1218 = vadd.f32 %v1210, 1.0
      %v1219 = vrcp.pop %v1211
      %v1220 = vrcp.pop %v1212
      %v1221 = vrcp.pop %v1213
      %v1222 = vrcp.pop %v1214
      %v1223 = vrcp.pop %v1215
      %v1224 = vrcp.pop %v1216
      %v1225 = vrcp.pop %v1217
      %v1226 = vrcp.pop %v1218
      %v1227 = vmul.f32 %v1179, %v1219
      %v1228 = vmul.f32 %v1180, %v1220
      %v1229 = vmul.f32 %v1181, %v1221
      %v1230 = vmul.f32 %v1182, %v1222
      %v1231 = vmul.f32 %v1183, %v1223
      %v1232 = vmul.f32 %v1184, %v1224
      %v1233 = vmul.f32 %v1185, %v1225
      %v1234 = vmul.f32 %v1186, %v1226
      %vm1235 = vcmask 130048
      %v1236 = vsel %vm1235, %v1227, 0.0
      %v1237 = vsel %vm1235, %v1228, 0.0
      %v1238 = vadd.f32 %v1236, %v1237
      %v1239 = vsel %vm1235, %v1229, 0.0
      %v1240 = vadd.f32 %v1238, %v1239
      %v1241 = vsel %vm1235, %v1230, 0.0
      %v1242 = vadd.f32 %v1240, %v1241
      %v1243 = vsel %vm1235, %v1231, 0.0
      %v1244 = vadd.f32 %v1242, %v1243
      %v1245 = vsel %vm1235, %v1232, 0.0
      %v1246 = vadd.f32 %v1244, %v1245
      %v1247 = vsel %vm1235, %v1233, 0.0
      %v1248 = vadd.f32 %v1246, %v1247
      %v1249 = vsel %vm1235, %v1234, 0.0
      %v1250 = vadd.f32 %v1248, %v1249
      %v1251 = vrot.slane %v1250, 4
      %v1252 = vadd.f32 %v1250, %v1251
      %v1253 = vrot.slane %v1252, 2
      %v1254 = vadd.f32 %v1252, %v1253
      %v1255 = vrot.slane %v1254, 1
      %v1256 = vadd.f32 %v1254, %v1255
      %v1257 = vrcp.pop 64.0
      %v1258 = vmul.f32 64.0, %v1257
      %v1259 = vsub.f32 1.0, %v1258
      %v1260 = vmul.f32 %v1257, %v1259
      %v1261 = vadd.f32 %v1257, %v1260
      %vm1262 = vweird.f32 %v1257
      %v1263 = vsel %vm1262, %v1257, %v1261
      %v1264 = vmul.f32 %v1256, %v1263
      %v1265 = vld [vmem:[%s1 + $0x13c] sm:$0xf]
      %v1266 = vld [vmem:[%s1 + $0x140] sm:$0xf]
      %v1267 = vpack.c.bf16 %v1264, %v1264
      %v1268 = vld [vmem:[%s5 + $0x10] sm:$0x1]
      %v1271 = vunpack.c.l.b16 %v1265
      %v1272 = vunpack.c.l.b16 %v1266
      %v1273 = vpack.c.b16 %v1272, %v1271
      %v1276 = vsel %vm1235, %v1267, 0
      %1278 = vmatpush.bf16.msra.mxu0 0
      %1279 = vmatpush.bf16.msra.mxu0 0
      %1280 = vmatpush.bf16.msra.mxu0 0
      %1281 = vmatpush.bf16.msra.mxu0 0
      %1282 = vmatpush.bf16.msra.mxu0 0
      %1283 = vmatpush.bf16.msra.mxu0 0
      %1284 = vmatpush.bf16.msra.mxu0 0
      %1285 = vmatpush.bf16.msra.mxu0 %v1273
      %1286 = vmatmul.bf16.gmra.mxu0 %v1276
      %v1287 = vpop.f32.mrf.mxu0
      %v1288 = vadd.f32 %v1268, %v1287
      %v1289 = vpop.f32.mrf.mxu0
      %1290 = vdwg.mxu0
      %v1291 = vsub.f32 0.0, %v1288
      %v1292 = vmul.f32 %v1291, 1.442695
      %v1293 = vpow.pop %v1292
      %v1294 = vadd.f32 %v1293, 1.0
      %v1295 = vrcp.pop %v1294
      %v1296 = vmul.f32 %v1288, %v1295
      %v1297 = vld [vmem:[%s1 + $0x144] sm:$0x3]
      %v1298 = vpack.c.bf16 %v1296, %v1296
      %v1299 = vld [vmem:[%s5 + $0x18] sm:$0x1]
      %vm1300 = vcmask 31744
      %v1302 = vsel %vm1300, %v1298, 0
      %v1305 = vsel %vm393, %v1297, 0
      %1307 = vmatpush.bf16.msra.mxu0 0
      %1308 = vmatpush.bf16.msra.mxu0 0
      %1309 = vmatpush.bf16.msra.mxu0 0
      %1310 = vmatpush.bf16.msra.mxu0 0
      %1311 = vmatpush.bf16.msra.mxu0 0
      %1312 = vmatpush.bf16.msra.mxu0 0
      %1313 = vmatpush.bf16.msra.mxu0 0
      %1314 = vmatpush.bf16.msra.mxu0 %v1305
      %1315 = vmatmul.bf16.gmra.mxu0 %v1302
      %v1316 = vpop.f32.mrf.mxu0
      %v1317 = vadd.f32 %v1299, %v1316
      %v1318 = vpop.f32.mrf.mxu0
      %1319 = vdwg.mxu0
      %v1320 = vsub.f32 0.0, %v1317
      %v1321 = vmul.f32 %v1320, 1.442695
      %v1322 = vpow.pop %v1321
      %v1323 = vadd.f32 %v1322, 1.0
      %v1324 = vrcp.pop %v1323
      %v1325 = vperm.slane %v1324, 0
      %v1326 = vmul.f32 %v1227, %v1325
      %v1327 = vmul.f32 %v1228, %v1325
      %v1328 = vmul.f32 %v1229, %v1325
      %v1329 = vmul.f32 %v1230, %v1325
      %v1330 = vmul.f32 %v1231, %v1325
      %v1331 = vmul.f32 %v1232, %v1325
      %v1332 = vmul.f32 %v1233, %v1325
      %v1333 = vmul.f32 %v1234, %v1325
      %v1334 = vld [vmem:[%s1 + $0x148] sm:$0xf]
      %v1335 = vld [vmem:[%s1 + $0x14c] sm:$0xf]
      %v1336 = vpack.c.bf16 %v1327, %v1326
      %v1337 = vpack.c.bf16 %v1329, %v1328
      %v1338 = vpack.c.bf16 %v1331, %v1330
      %v1339 = vpack.c.bf16 %v1333, %v1332
      %v1340 = vld [vmem:[%s5 + $0x20] sm:$0x1]
      %v1341 = vperm.slane %v1340, 0
      %v1344 = vunpack.c.l.b16 %v1334
      %v1345 = vunpack.c.l.b16 %v1335
      %v1346 = vpack.c.b16 %v1345, %v1344
      %v1349 = vsel %vm1235, %v1336, 0
      %v1352 = vsel %vm1235, %v1337, 0
      %v1355 = vsel %vm1235, %v1338, 0
      %v1358 = vsel %vm1235, %v1339, 0
      %1360 = vmatpush.bf16.msra.mxu0 0
      %1361 = vmatpush.bf16.msra.mxu0 0
      %1362 = vmatpush.bf16.msra.mxu0 0
      %1363 = vmatpush.bf16.msra.mxu0 0
      %1364 = vmatpush.bf16.msra.mxu0 0
      %1365 = vmatpush.bf16.msra.mxu0 0
      %1366 = vmatpush.bf16.msra.mxu0 0
      %1367 = vmatpush.bf16.msra.mxu0 %v1346
      %1368 = vmatmul.bf16.gmra.mxu0 %v1349
      %v1369 = vpop.f32.mrf.mxu0
      %v1370 = vadd.f32 %v1341, %v1369
      %v1371 = vpop.f32.mrf.mxu0
      %v1372 = vadd.f32 %v1341, %v1371
      %1373 = vmatmul.bf16.gmra.mxu0 %v1352
      %v1374 = vpop.f32.mrf.mxu0
      %v1375 = vadd.f32 %v1341, %v1374
      %v1376 = vpop.f32.mrf.mxu0
      %v1377 = vadd.f32 %v1341, %v1376
      %1378 = vmatmul.bf16.gmra.mxu0 %v1355
      %v1379 = vpop.f32.mrf.mxu0
      %v1380 = vadd.f32 %v1341, %v1379
      %v1381 = vpop.f32.mrf.mxu0
      %v1382 = vadd.f32 %v1341, %v1381
      %1383 = vmatmul.bf16.gmra.mxu0 %v1358
      %v1384 = vpop.f32.mrf.mxu0
      %v1385 = vadd.f32 %v1341, %v1384
      %v1386 = vpop.f32.mrf.mxu0
      %v1387 = vadd.f32 %v1341, %v1386
      %1388 = vdwg.mxu0
      %v1389 = vld [vmem:[%s1 + $0x198] sm:$0xf]
      %v1390 = vpack.c.bf16 %v1372, %v1370
      %v1391 = vpack.c.bf16 %v1377, %v1375
      %v1392 = vpack.c.bf16 %v1382, %v1380
      %v1393 = vpack.c.bf16 %v1387, %v1385
      %v1394 = vld [vmem:[%s5 + $0x28] sm:$0x1]
      %v1395 = vperm.slane %v1394, 0
      %vm1396 = vcmask 64512
      %v1398 = vsel %vm1396, %v1390, 0
      %v1401 = vsel %vm1396, %v1391, 0
      %v1404 = vsel %vm1396, %v1392, 0
      %v1407 = vsel %vm1396, %v1393, 0
      %vm1409 = vcmask 1043456
      %v1411 = vsel %vm1409, %v1389, 0
      %1413 = vmatpush.bf16.msra.mxu0 0
      %1414 = vmatpush.bf16.msra.mxu0 0
      %1415 = vmatpush.bf16.msra.mxu0 0
      %1416 = vmatpush.bf16.msra.mxu0 0
      %1417 = vmatpush.bf16.msra.mxu0 0
      %1418 = vmatpush.bf16.msra.mxu0 0
      %1419 = vmatpush.bf16.msra.mxu0 0
      %1420 = vmatpush.bf16.msra.mxu0 %v1411
      %1421 = vmatmul.bf16.gmra.mxu0 %v1398
      %v1422 = vpop.f32.mrf.mxu0
      %v1423 = vadd.f32 %v1395, %v1422
      %v1424 = vpop.f32.mrf.mxu0
      %v1425 = vadd.f32 %v1395, %v1424
      %1426 = vmatmul.bf16.gmra.mxu0 %v1401
      %v1427 = vpop.f32.mrf.mxu0
      %v1428 = vadd.f32 %v1395, %v1427
      %v1429 = vpop.f32.mrf.mxu0
      %v1430 = vadd.f32 %v1395, %v1429
      %1431 = vmatmul.bf16.gmra.mxu0 %v1404
      %v1432 = vpop.f32.mrf.mxu0
      %v1433 = vadd.f32 %v1395, %v1432
      %v1434 = vpop.f32.mrf.mxu0
      %v1435 = vadd.f32 %v1395, %v1434
      %1436 = vmatmul.bf16.gmra.mxu0 %v1407
      %v1437 = vpop.f32.mrf.mxu0
      %v1438 = vadd.f32 %v1395, %v1437
      %v1439 = vpop.f32.mrf.mxu0
      %v1440 = vadd.f32 %v1395, %v1439
      %1441 = vdwg.mxu0
      %v1442 = vsub.f32 0.0, %v1423
      %v1443 = vsub.f32 0.0, %v1425
      %v1444 = vsub.f32 0.0, %v1428
      %v1445 = vsub.f32 0.0, %v1430
      %v1446 = vsub.f32 0.0, %v1433
      %v1447 = vsub.f32 0.0, %v1435
      %v1448 = vsub.f32 0.0, %v1438
      %v1449 = vsub.f32 0.0, %v1440
      %v1450 = vmul.f32 %v1442, 1.442695
      %v1451 = vpow.pop %v1450
      %v1452 = vmul.f32 %v1443, 1.442695
      %v1453 = vpow.pop %v1452
      %v1454 = vmul.f32 %v1444, 1.442695
      %v1455 = vpow.pop %v1454
      %v1456 = vmul.f32 %v1445, 1.442695
      %v1457 = vpow.pop %v1456
      %v1458 = vmul.f32 %v1446, 1.442695
      %v1459 = vpow.pop %v1458
      %v1460 = vmul.f32 %v1447, 1.442695
      %v1461 = vpow.pop %v1460
      %v1462 = vmul.f32 %v1448, 1.442695
      %v1463 = vpow.pop %v1462
      %v1464 = vmul.f32 %v1449, 1.442695
      %v1465 = vpow.pop %v1464
      %v1466 = vadd.f32 %v1451, 1.0
      %v1467 = vadd.f32 %v1453, 1.0
      %v1468 = vadd.f32 %v1455, 1.0
      %v1469 = vadd.f32 %v1457, 1.0
      %v1470 = vadd.f32 %v1459, 1.0
      %v1471 = vadd.f32 %v1461, 1.0
      %v1472 = vadd.f32 %v1463, 1.0
      %v1473 = vadd.f32 %v1465, 1.0
      %v1474 = vrcp.pop %v1466
      %v1475 = vrcp.pop %v1467
      %v1476 = vrcp.pop %v1468
      %v1477 = vrcp.pop %v1469
      %v1478 = vrcp.pop %v1470
      %v1479 = vrcp.pop %v1471
      %v1480 = vrcp.pop %v1472
      %v1481 = vrcp.pop %v1473
      %v1482 = vmul.f32 %v1423, %v1474
      %v1483 = vmul.f32 %v1425, %v1475
      %v1484 = vmul.f32 %v1428, %v1476
      %v1485 = vmul.f32 %v1430, %v1477
      %v1486 = vmul.f32 %v1433, %v1478
      %v1487 = vmul.f32 %v1435, %v1479
      %v1488 = vmul.f32 %v1438, %v1480
      %v1489 = vmul.f32 %v1440, %v1481
      %v1490 = vld [vmem:[%s1 + $0x19c] sm:$0xf]
      %v1491 = vld [vmem:[%s1 + $0x1a0] sm:$0x1]
      %v1492 = vunpack.c.l.bf16 %v1490
      %v1493 = vunpack.c.l.bf16 %v1491
      %v1494 = vld [vmem:[%s1 + $0x150] sm:$0xf]
      %v1495 = vld [vmem:[%s1 + $0x154] sm:$0xf]
      %v1496 = vld [vmem:[%s1 + $0x158] sm:$0xf]
      %v1497 = vld [vmem:[%s1 + $0x15c] sm:$0xf]
      %v1498 = vld [vmem:[%s1 + $0x160] sm:$0xf]
      %v1499 = vld [vmem:[%s1 + $0x164] sm:$0xf]
      %v1500 = vld [vmem:[%s1 + $0x168] sm:$0xf]
      %v1501 = vld [vmem:[%s1 + $0x16c] sm:$0xf]
      %v1502 = vld [vmem:[%s1 + $0x170] sm:$0xf]
      %v1503 = vld [vmem:[%s1 + $0x174] sm:$0xf]
      %v1504 = vld [vmem:[%s1 + $0x178] sm:$0xf]
      %v1505 = vld [vmem:[%s1 + $0x17c] sm:$0xf]
      %v1506 = vld [vmem:[%s1 + $0x180] sm:$0xf]
      %v1507 = vld [vmem:[%s1 + $0x184] sm:$0xf]
      %v1508 = vld [vmem:[%s1 + $0x188] sm:$0xf]
      %v1509 = vld [vmem:[%s1 + $0x18c] sm:$0xf]
      %v1510 = vld [vmem:[%s1 + $0x190] sm:$0xf]
      %v1511 = vld [vmem:[%s1 + $0x194] sm:$0xf]
      %v1512 = vpack.c.bf16 %v1483, %v1482
      %v1513 = vpack.c.bf16 %v1485, %v1484
      %v1514 = vpack.c.bf16 %v1487, %v1486
      %v1515 = vpack.c.bf16 %v1489, %v1488
      %v1534 = vunpack.c.l.b16 %v1494
      %v1535 = vunpack.c.l.b16 %v1495
      %v1536 = vunpack.c.l.b16 %v1496
      %v1537 = vunpack.c.l.b16 %v1497
      %v1538 = vunpack.c.l.b16 %v1498
      %v1539 = vunpack.c.l.b16 %v1499
      %v1540 = vunpack.c.l.b16 %v1500
      %v1541 = vunpack.c.l.b16 %v1501
      %v1542 = vunpack.c.l.b16 %v1502
      %v1543 = vunpack.c.l.b16 %v1503
      %v1544 = vunpack.c.l.b16 %v1504
      %v1545 = vunpack.c.l.b16 %v1505
      %v1546 = vunpack.c.l.b16 %v1506
      %v1547 = vunpack.c.l.b16 %v1507
      %v1548 = vunpack.c.l.b16 %v1508
      %v1549 = vunpack.c.l.b16 %v1509
      %v1550 = vunpack.c.l.b16 %v1510
      %v1551 = vunpack.c.l.b16 %v1511
      %v1552 = vpack.c.b16 %v1535, %v1534
      %v1553 = vpack.c.b16 %v1537, %v1536
      %v1554 = vpack.c.b16 %v1539, %v1538
      %v1555 = vpack.c.b16 %v1541, %v1540
      %v1556 = vpack.c.b16 %v1543, %v1542
      %v1557 = vpack.c.b16 %v1545, %v1544
      %v1558 = vpack.c.b16 %v1547, %v1546
      %v1559 = vpack.c.b16 %v1549, %v1548
      %v1560 = vpack.c.b16 %v1551, %v1550
      %v1562 = vsel %vm734, %v1552, 0
      %v1565 = vsel %vm734, %v1553, 0
      %v1568 = vsel %vm734, %v1554, 0
      %v1571 = vsel %vm734, %v1555, 0
      %v1574 = vsel %vm734, %v1556, 0
      %v1577 = vsel %vm734, %v1557, 0
      %v1580 = vsel %vm734, %v1558, 0
      %v1583 = vsel %vm734, %v1559, 0
      %v1586 = vsel %vm734, %v1560, 0
      %1588 = vmatpush.bf16.msra.mxu0 0
      %1589 = vmatpush.bf16.msra.mxu0 0
      %1590 = vmatpush.bf16.msra.mxu0 0
      %1591 = vmatpush.bf16.msra.mxu0 0
      %1592 = vmatpush.bf16.msra.mxu0 %v1515
      %1593 = vmatpush.bf16.msra.mxu0 %v1514
      %1594 = vmatpush.bf16.msra.mxu0 %v1513
      %1595 = vmatpush.bf16.msra.mxu0 %v1512
      %1596 = vmatmul.bf16.gmra.mxu0 %v1562
      %v1597 = vpop.f32.mrf.mxu0
      %v1598 = vadd.f32 0.0, %v1597
      %v1599 = vpop.f32.mrf.mxu0
      %v1600 = vadd.f32 0.0, %v1599
      %1601 = vmatmul.bf16.gmra.mxu0 %v1565
      %v1602 = vpop.f32.mrf.mxu0
      %v1603 = vadd.f32 0.0, %v1602
      %v1604 = vpop.f32.mrf.mxu0
      %v1605 = vadd.f32 0.0, %v1604
      %1606 = vmatmul.bf16.gmra.mxu0 %v1568
      %v1607 = vpop.f32.mrf.mxu0
      %v1608 = vadd.f32 0.0, %v1607
      %v1609 = vpop.f32.mrf.mxu0
      %v1610 = vadd.f32 0.0, %v1609
      %1611 = vmatmul.bf16.gmra.mxu0 %v1571
      %v1612 = vpop.f32.mrf.mxu0
      %v1613 = vadd.f32 0.0, %v1612
      %v1614 = vpop.f32.mrf.mxu0
      %v1615 = vadd.f32 0.0, %v1614
      %1616 = vmatmul.bf16.gmra.mxu0 %v1574
      %v1617 = vpop.f32.mrf.mxu0
      %v1618 = vadd.f32 0.0, %v1617
      %v1619 = vpop.f32.mrf.mxu0
      %v1620 = vadd.f32 0.0, %v1619
      %1621 = vmatmul.bf16.gmra.mxu0 %v1577
      %v1622 = vpop.f32.mrf.mxu0
      %v1623 = vadd.f32 0.0, %v1622
      %v1624 = vpop.f32.mrf.mxu0
      %v1625 = vadd.f32 0.0, %v1624
      %1626 = vmatmul.bf16.gmra.mxu0 %v1580
      %v1627 = vpop.f32.mrf.mxu0
      %v1628 = vadd.f32 0.0, %v1627
      %v1629 = vpop.f32.mrf.mxu0
      %v1630 = vadd.f32 0.0, %v1629
      %1631 = vmatmul.bf16.gmra.mxu0 %v1583
      %v1632 = vpop.f32.mrf.mxu0
      %v1633 = vadd.f32 0.0, %v1632
      %v1634 = vpop.f32.mrf.mxu0
      %v1635 = vadd.f32 0.0, %v1634
      %1636 = vmatmul.bf16.gmra.mxu0 %v1586
      %v1637 = vpop.f32.mrf.mxu0
      %v1638 = vadd.f32 0.0, %v1637
      %v1639 = vpop.f32.mrf.mxu0
      %v1640 = vadd.f32 0.0, %v1639
      %1641 = vdwg.mxu0
      %v1642 = vperm.slane %v1492, 0
      %v1643 = vmul.f32 %v1598, %v1642
      %v1644 = vmul.f32 %v1600, %v1642
      %v1645 = vperm.slane %v1492, 1
      %v1646 = vmul.f32 %v1603, %v1645
      %v1647 = vmul.f32 %v1605, %v1645
      %v1648 = vadd.f32 %v1643, %v1646
      %v1649 = vadd.f32 %v1644, %v1647
      %v1650 = vperm.slane %v1492, 2
      %v1651 = vmul.f32 %v1608, %v1650
      %v1652 = vmul.f32 %v1610, %v1650
      %v1653 = vadd.f32 %v1648, %v1651
      %v1654 = vadd.f32 %v1649, %v1652
      %v1655 = vperm.slane %v1492, 3
      %v1656 = vmul.f32 %v1613, %v1655
      %v1657 = vmul.f32 %v1615, %v1655
      %v1658 = vadd.f32 %v1653, %v1656
      %v1659 = vadd.f32 %v1654, %v1657
      %v1660 = vperm.slane %v1492, 4
      %v1661 = vmul.f32 %v1618, %v1660
      %v1662 = vmul.f32 %v1620, %v1660
      %v1663 = vadd.f32 %v1658, %v1661
      %v1664 = vadd.f32 %v1659, %v1662
      %v1665 = vperm.slane %v1492, 5
      %v1666 = vmul.f32 %v1623, %v1665
      %v1667 = vmul.f32 %v1625, %v1665
      %v1668 = vadd.f32 %v1663, %v1666
      %v1669 = vadd.f32 %v1664, %v1667
      %v1670 = vperm.slane %v1492, 6
      %v1671 = vmul.f32 %v1628, %v1670
      %v1672 = vmul.f32 %v1630, %v1670
      %v1673 = vadd.f32 %v1668, %v1671
      %v1674 = vadd.f32 %v1669, %v1672
      %v1675 = vperm.slane %v1492, 7
      %v1676 = vmul.f32 %v1633, %v1675
      %v1677 = vmul.f32 %v1635, %v1675
      %v1678 = vadd.f32 %v1673, %v1676
      %v1679 = vadd.f32 %v1674, %v1677
      %v1680 = vperm.slane %v1493, 0
      %v1681 = vmul.f32 %v1638, %v1680
      %v1682 = vmul.f32 %v1640, %v1680
      %v1683 = vadd.f32 %v1678, %v1681
      %v1684 = vadd.f32 %v1679, %v1682
      %v1685 = vld [vmem:[%s5 + $0x30] sm:$0x1]
      %v1686 = vperm.slane %v1685, 0
      %v1687 = vadd.f32 %v1683, %v1686
      %v1688 = vadd.f32 %v1684, %v1686
      %v1689 = vsub.f32 0.0, %v1687
      %v1690 = vsub.f32 0.0, %v1688
      %v1691 = vmul.f32 %v1689, 1.442695
      %v1692 = vpow.pop %v1691
      %v1693 = vmul.f32 %v1690, 1.442695
      %v1694 = vpow.pop %v1693
      %v1695 = vadd.f32 %v1692, 1.0
      %v1696 = vadd.f32 %v1694, 1.0
      %v1697 = vrcp.pop %v1695
      %v1698 = vrcp.pop %v1696
      %v1699 = vmul.f32 %v1687, %v1697
      %v1700 = vmul.f32 %v1688, %v1698
      %vm1701 = vcmask 392192
      %v1702 = vsel %vm1701, %v1699, 0.0
      %v1703 = vsel %vm1701, %v1700, 0.0
      %v1704 = vadd.f32 %v1702, %v1703
      %v1705 = vrot.slane %v1704, 4
      %v1706 = vadd.f32 %v1704, %v1705
      %v1707 = vrot.slane %v1706, 2
      %v1708 = vadd.f32 %v1706, %v1707
      %v1709 = vrot.slane %v1708, 1
      %v1710 = vadd.f32 %v1708, %v1709
      %v1711 = vrcp.pop 16.0
      %v1712 = vmul.f32 16.0, %v1711
      %v1713 = vsub.f32 1.0, %v1712
      %v1714 = vmul.f32 %v1711, %v1713
      %v1715 = vadd.f32 %v1711, %v1714
      %vm1716 = vweird.f32 %v1711
      %v1717 = vsel %vm1716, %v1711, %v1715
      %v1718 = vmul.f32 %v1710, %v1717
      %v1719 = vld [vmem:[%s1 + $0x1a4] sm:$0xf]
      %v1720 = vld [vmem:[%s1 + $0x1a8] sm:$0xf]
      %v1721 = vld [vmem:[%s1 + $0x1ac] sm:$0xf]
      %v1722 = vld [vmem:[%s1 + $0x1b0] sm:$0xf]
      %v1723 = vld [vmem:[%s1 + $0x1b4] sm:$0xf]
      %v1724 = vld [vmem:[%s1 + $0x1b8] sm:$0xf]
      %v1725 = vpack.c.bf16 %v1718, %v1718
      %v1726 = vld [vmem:[%s5 + $0x38] sm:$0x1]
      %v1733 = vunpack.c.l.b16 %v1719
      %v1734 = vunpack.c.l.b16 %v1720
      %v1735 = vunpack.c.l.b16 %v1721
      %v1736 = vunpack.c.l.b16 %v1722
      %v1737 = vunpack.c.l.b16 %v1723
      %v1738 = vunpack.c.l.b16 %v1724
      %v1739 = vpack.c.b16 %v1734, %v1733
      %v1740 = vpack.c.b16 %v1736, %v1735
      %v1741 = vpack.c.b16 %v1738, %v1737
      %v1746 = vsel %vm1701, %v1725, 0
      %1748 = vmatpush.bf16.msra.mxu0 0
      %1749 = vmatpush.bf16.msra.mxu0 0
      %1750 = vmatpush.bf16.msra.mxu0 0
      %1751 = vmatpush.bf16.msra.mxu0 0
      %1752 = vmatpush.bf16.msra.mxu0 0
      %1753 = vmatpush.bf16.msra.mxu0 %v1741
      %1754 = vmatpush.bf16.msra.mxu0 %v1740
      %1755 = vmatpush.bf16.msra.mxu0 %v1739
      %1756 = vmatmul.bf16.gmra.mxu0 %v1746
      %v1757 = vpop.f32.mrf.mxu0
      %v1758 = vadd.f32 %v1726, %v1757
      %v1759 = vpop.f32.mrf.mxu0
      %1760 = vdwg.mxu0
      %v1761 = vsub.f32 0.0, %v1758
      %v1762 = vmul.f32 %v1761, 1.442695
      %v1763 = vpow.pop %v1762
      %v1764 = vadd.f32 %v1763, 1.0
      %v1765 = vrcp.pop %v1764
      %v1766 = vmul.f32 %v1758, %v1765
      %v1767 = vld [vmem:[%s1 + $0x1bc] sm:$0x1]
      %v1768 = vpack.c.bf16 %v1766, %v1766
      %v1769 = vld [vmem:[%s5 + $0x40] sm:$0x1]
      %vm1770 = vcmask 15360
      %v1772 = vsel %vm1770, %v1768, 0
      %vm1774 = vcmask 1040384
      %v1776 = vsel %vm1774, %v1767, 0
      %1778 = vmatpush.bf16.msra.mxu0 0
      %1779 = vmatpush.bf16.msra.mxu0 0
      %1780 = vmatpush.bf16.msra.mxu0 0
      %1781 = vmatpush.bf16.msra.mxu0 0
      %1782 = vmatpush.bf16.msra.mxu0 0
      %1783 = vmatpush.bf16.msra.mxu0 0
      %1784 = vmatpush.bf16.msra.mxu0 0
      %1785 = vmatpush.bf16.msra.mxu0 %v1776
      %1786 = vmatmul.bf16.gmra.mxu0 %v1772
      %v1787 = vpop.f32.mrf.mxu0
      %v1788 = vadd.f32 %v1769, %v1787
      %v1789 = vpop.f32.mrf.mxu0
      %1790 = vdwg.mxu0
      %v1791 = vsub.f32 0.0, %v1788
      %v1792 = vmul.f32 %v1791, 1.442695
      %v1793 = vpow.pop %v1792
      %v1794 = vadd.f32 %v1793, 1.0
      %v1795 = vrcp.pop %v1794
      %v1796 = vperm.slane %v1795, 0
      %v1797 = vmul.f32 %v1699, %v1796
      %v1798 = vmul.f32 %v1700, %v1796
      %v1799 = vld [vmem:[%s1 + $0x1c0] sm:$0xf]
      %v1800 = vld [vmem:[%s1 + $0x1c4] sm:$0xf]
      %v1801 = vld [vmem:[%s1 + $0x1c8] sm:$0xf]
      %v1802 = vld [vmem:[%s1 + $0x1cc] sm:$0xf]
      %v1803 = vld [vmem:[%s1 + $0x1d0] sm:$0xf]
      %v1804 = vld [vmem:[%s1 + $0x1d4] sm:$0xf]
      %v1805 = vpack.c.bf16 %v1798, %v1797
      %v1806 = vld [vmem:[%s5 + $0x48] sm:$0x1]
      %v1807 = vperm.slane %v1806, 0
      %v1814 = vunpack.c.l.b16 %v1799
      %v1815 = vunpack.c.l.b16 %v1800
      %v1816 = vunpack.c.l.b16 %v1801
      %v1817 = vunpack.c.l.b16 %v1802
      %v1818 = vunpack.c.l.b16 %v1803
      %v1819 = vunpack.c.l.b16 %v1804
      %v1820 = vpack.c.b16 %v1815, %v1814
      %v1821 = vpack.c.b16 %v1817, %v1816
      %v1822 = vpack.c.b16 %v1819, %v1818
      %v1827 = vsel %vm1701, %v1805, 0
      %1829 = vmatpush.bf16.msra.mxu0 0
      %1830 = vmatpush.bf16.msra.mxu0 0
      %1831 = vmatpush.bf16.msra.mxu0 0
      %1832 = vmatpush.bf16.msra.mxu0 0
      %1833 = vmatpush.bf16.msra.mxu0 0
      %1834 = vmatpush.bf16.msra.mxu0 %v1822
      %1835 = vmatpush.bf16.msra.mxu0 %v1821
      %1836 = vmatpush.bf16.msra.mxu0 %v1820
      %1837 = vmatmul.bf16.gmra.mxu0 %v1827
      %v1838 = vpop.f32.mrf.mxu0
      %v1839 = vadd.f32 %v1807, %v1838
      %v1840 = vpop.f32.mrf.mxu0
      %v1841 = vadd.f32 %v1807, %v1840
      %1842 = vdwg.mxu0
      %v1843 = vld [vmem:[%s1 + $0x220] sm:$0xf]
      %v1844 = vld [vmem:[%s1 + $0x224] sm:$0xf]
      %v1845 = vpack.c.bf16 %v1841, %v1839
      %v1846 = vld [vmem:[%s5 + $0x50] sm:$0x1]
      %v1847 = vperm.slane %v1846, 0
      %v1850 = vunpack.c.l.b16 %v1843
      %v1851 = vunpack.c.l.b16 %v1844
      %v1852 = vpack.c.b16 %v1851, %v1850
      %v1855 = vsel %vm1235, %v1845, 0
      %1857 = vmatpush.bf16.msra.mxu0 0
      %1858 = vmatpush.bf16.msra.mxu0 0
      %1859 = vmatpush.bf16.msra.mxu0 0
      %1860 = vmatpush.bf16.msra.mxu0 0
      %1861 = vmatpush.bf16.msra.mxu0 0
      %1862 = vmatpush.bf16.msra.mxu0 0
      %1863 = vmatpush.bf16.msra.mxu0 0
      %1864 = vmatpush.bf16.msra.mxu0 %v1852
      %1865 = vmatmul.bf16.gmra.mxu0 %v1855
      %v1866 = vpop.f32.mrf.mxu0
      %v1867 = vadd.f32 %v1847, %v1866
      %v1868 = vpop.f32.mrf.mxu0
      %v1869 = vadd.f32 %v1847, %v1868
      %1870 = vdwg.mxu0
      %v1871 = vsub.f32 0.0, %v1867
      %v1872 = vsub.f32 0.0, %v1869
      %v1873 = vmul.f32 %v1871, 1.442695
      %v1874 = vpow.pop %v1873
      %v1875 = vmul.f32 %v1872, 1.442695
      %v1876 = vpow.pop %v1875
      %v1877 = vadd.f32 %v1874, 1.0
      %v1878 = vadd.f32 %v1876, 1.0
      %v1879 = vrcp.pop %v1877
      %v1880 = vrcp.pop %v1878
      %v1881 = vmul.f32 %v1867, %v1879
      %v1882 = vmul.f32 %v1869, %v1880
      %v1883 = vld [vmem:[%s1 + $0x228] sm:$0xf]
      %v1884 = vld [vmem:[%s1 + $0x22c] sm:$0x1]
      %v1885 = vunpack.c.l.bf16 %v1883
      %v1886 = vunpack.c.l.bf16 %v1884
      %v1887 = vld [vmem:[%s1 + $0x1d8] sm:$0xf]
      %v1888 = vld [vmem:[%s1 + $0x1dc] sm:$0xf]
      %v1889 = vld [vmem:[%s1 + $0x1e0] sm:$0xf]
      %v1890 = vld [vmem:[%s1 + $0x1e4] sm:$0xf]
      %v1891 = vld [vmem:[%s1 + $0x1e8] sm:$0xf]
      %v1892 = vld [vmem:[%s1 + $0x1ec] sm:$0xf]
      %v1893 = vld [vmem:[%s1 + $0x1f0] sm:$0xf]
      %v1894 = vld [vmem:[%s1 + $0x1f4] sm:$0xf]
      %v1895 = vld [vmem:[%s1 + $0x1f8] sm:$0xf]
      %v1896 = vld [vmem:[%s1 + $0x1fc] sm:$0xf]
      %v1897 = vld [vmem:[%s1 + $0x200] sm:$0xf]
      %v1898 = vld [vmem:[%s1 + $0x204] sm:$0xf]
      %v1899 = vld [vmem:[%s1 + $0x208] sm:$0xf]
      %v1900 = vld [vmem:[%s1 + $0x20c] sm:$0xf]
      %v1901 = vld [vmem:[%s1 + $0x210] sm:$0xf]
      %v1902 = vld [vmem:[%s1 + $0x214] sm:$0xf]
      %v1903 = vld [vmem:[%s1 + $0x218] sm:$0xf]
      %v1904 = vld [vmem:[%s1 + $0x21c] sm:$0xf]
      %v1905 = vpack.c.bf16 %v1882, %v1881
      %v1924 = vunpack.c.l.b16 %v1887
      %v1925 = vunpack.c.l.b16 %v1888
      %v1926 = vunpack.c.l.b16 %v1889
      %v1927 = vunpack.c.l.b16 %v1890
      %v1928 = vunpack.c.l.b16 %v1891
      %v1929 = vunpack.c.l.b16 %v1892
      %v1930 = vunpack.c.l.b16 %v1893
      %v1931 = vunpack.c.l.b16 %v1894
      %v1932 = vunpack.c.l.b16 %v1895
      %v1933 = vunpack.c.l.b16 %v1896
      %v1934 = vunpack.c.l.b16 %v1897
      %v1935 = vunpack.c.l.b16 %v1898
      %v1936 = vunpack.c.l.b16 %v1899
      %v1937 = vunpack.c.l.b16 %v1900
      %v1938 = vunpack.c.l.b16 %v1901
      %v1939 = vunpack.c.l.b16 %v1902
      %v1940 = vunpack.c.l.b16 %v1903
      %v1941 = vunpack.c.l.b16 %v1904
      %v1942 = vpack.c.b16 %v1925, %v1924
      %v1943 = vpack.c.b16 %v1927, %v1926
      %v1944 = vpack.c.b16 %v1929, %v1928
      %v1945 = vpack.c.b16 %v1931, %v1930
      %v1946 = vpack.c.b16 %v1933, %v1932
      %v1947 = vpack.c.b16 %v1935, %v1934
      %v1948 = vpack.c.b16 %v1937, %v1936
      %v1949 = vpack.c.b16 %v1939, %v1938
      %v1950 = vpack.c.b16 %v1941, %v1940
      %v1952 = vsel %vm1235, %v1942, 0
      %v1955 = vsel %vm1235, %v1943, 0
      %v1958 = vsel %vm1235, %v1944, 0
      %v1961 = vsel %vm1235, %v1945, 0
      %v1964 = vsel %vm1235, %v1946, 0
      %v1967 = vsel %vm1235, %v1947, 0
      %v1970 = vsel %vm1235, %v1948, 0
      %v1973 = vsel %vm1235, %v1949, 0
      %v1976 = vsel %vm1235, %v1950, 0
      %1978 = vmatpush.bf16.msra.mxu0 0
      %1979 = vmatpush.bf16.msra.mxu0 0
      %1980 = vmatpush.bf16.msra.mxu0 0
      %1981 = vmatpush.bf16.msra.mxu0 0
      %1982 = vmatpush.bf16.msra.mxu0 0
      %1983 = vmatpush.bf16.msra.mxu0 0
      %1984 = vmatpush.bf16.msra.mxu0 0
      %1985 = vmatpush.bf16.msra.mxu0 %v1905
      %1986 = vmatmul.bf16.gmra.mxu0 %v1952
      %v1987 = vpop.f32.mrf.mxu0
      %v1988 = vadd.f32 0.0, %v1987
      %v1989 = vpop.f32.mrf.mxu0
      %v1990 = vadd.f32 0.0, %v1989
      %1991 = vmatmul.bf16.gmra.mxu0 %v1955
      %v1992 = vpop.f32.mrf.mxu0
      %v1993 = vadd.f32 0.0, %v1992
      %v1994 = vpop.f32.mrf.mxu0
      %v1995 = vadd.f32 0.0, %v1994
      %1996 = vmatmul.bf16.gmra.mxu0 %v1958
      %v1997 = vpop.f32.mrf.mxu0
      %v1998 = vadd.f32 0.0, %v1997
      %v1999 = vpop.f32.mrf.mxu0
      %v2000 = vadd.f32 0.0, %v1999
      %2001 = vmatmul.bf16.gmra.mxu0 %v1961
      %v2002 = vpop.f32.mrf.mxu0
      %v2003 = vadd.f32 0.0, %v2002
      %v2004 = vpop.f32.mrf.mxu0
      %v2005 = vadd.f32 0.0, %v2004
      %2006 = vmatmul.bf16.gmra.mxu0 %v1964
      %v2007 = vpop.f32.mrf.mxu0
      %v2008 = vadd.f32 0.0, %v2007
      %v2009 = vpop.f32.mrf.mxu0
      %v2010 = vadd.f32 0.0, %v2009
      %2011 = vmatmul.bf16.gmra.mxu0 %v1967
      %v2012 = vpop.f32.mrf.mxu0
      %v2013 = vadd.f32 0.0, %v2012
      %v2014 = vpop.f32.mrf.mxu0
      %v2015 = vadd.f32 0.0, %v2014
      %2016 = vmatmul.bf16.gmra.mxu0 %v1970
      %v2017 = vpop.f32.mrf.mxu0
      %v2018 = vadd.f32 0.0, %v2017
      %v2019 = vpop.f32.mrf.mxu0
      %v2020 = vadd.f32 0.0, %v2019
      %2021 = vmatmul.bf16.gmra.mxu0 %v1973
      %v2022 = vpop.f32.mrf.mxu0
      %v2023 = vadd.f32 0.0, %v2022
      %v2024 = vpop.f32.mrf.mxu0
      %v2025 = vadd.f32 0.0, %v2024
      %2026 = vmatmul.bf16.gmra.mxu0 %v1976
      %v2027 = vpop.f32.mrf.mxu0
      %v2028 = vadd.f32 0.0, %v2027
      %v2029 = vpop.f32.mrf.mxu0
      %v2030 = vadd.f32 0.0, %v2029
      %2031 = vdwg.mxu0
      %v2032 = vperm.slane %v1885, 0
      %v2033 = vmul.f32 %v1988, %v2032
      %v2034 = vmul.f32 %v1990, %v2032
      %v2035 = vperm.slane %v1885, 1
      %v2036 = vmul.f32 %v1993, %v2035
      %v2037 = vmul.f32 %v1995, %v2035
      %v2038 = vadd.f32 %v2033, %v2036
      %v2039 = vadd.f32 %v2034, %v2037
      %v2040 = vperm.slane %v1885, 2
      %v2041 = vmul.f32 %v1998, %v2040
      %v2042 = vmul.f32 %v2000, %v2040
      %v2043 = vadd.f32 %v2038, %v2041
      %v2044 = vadd.f32 %v2039, %v2042
      %v2045 = vperm.slane %v1885, 3
      %v2046 = vmul.f32 %v2003, %v2045
      %v2047 = vmul.f32 %v2005, %v2045
      %v2048 = vadd.f32 %v2043, %v2046
      %v2049 = vadd.f32 %v2044, %v2047
      %v2050 = vperm.slane %v1885, 4
      %v2051 = vmul.f32 %v2008, %v2050
      %v2052 = vmul.f32 %v2010, %v2050
      %v2053 = vadd.f32 %v2048, %v2051
      %v2054 = vadd.f32 %v2049, %v2052
      %v2055 = vperm.slane %v1885, 5
      %v2056 = vmul.f32 %v2013, %v2055
      %v2057 = vmul.f32 %v2015, %v2055
      %v2058 = vadd.f32 %v2053, %v2056
      %v2059 = vadd.f32 %v2054, %v2057
      %v2060 = vperm.slane %v1885, 6
      %v2061 = vmul.f32 %v2018, %v2060
      %v2062 = vmul.f32 %v2020, %v2060
      %v2063 = vadd.f32 %v2058, %v2061
      %v2064 = vadd.f32 %v2059, %v2062
      %v2065 = vperm.slane %v1885, 7
      %v2066 = vmul.f32 %v2023, %v2065
      %v2067 = vmul.f32 %v2025, %v2065
      %v2068 = vadd.f32 %v2063, %v2066
      %v2069 = vadd.f32 %v2064, %v2067
      %v2070 = vperm.slane %v1886, 0
      %v2071 = vmul.f32 %v2028, %v2070
      %v2072 = vmul.f32 %v2030, %v2070
      %v2073 = vadd.f32 %v2068, %v2071
      %v2074 = vadd.f32 %v2069, %v2072
      %v2075 = vld [vmem:[%s5 + $0x58] sm:$0x1]
      %v2076 = vperm.slane %v2075, 0
      %v2077 = vadd.f32 %v2073, %v2076
      %v2078 = vadd.f32 %v2074, %v2076
      %v2079 = vsub.f32 0.0, %v2077
      %v2080 = vsub.f32 0.0, %v2078
      %v2081 = vmul.f32 %v2079, 1.442695
      %v2082 = vpow.pop %v2081
      %v2083 = vmul.f32 %v2080, 1.442695
      %v2084 = vpow.pop %v2083
      %v2085 = vadd.f32 %v2082, 1.0
      %v2086 = vadd.f32 %v2084, 1.0
      %v2087 = vrcp.pop %v2085
      %v2088 = vrcp.pop %v2086
      %v2089 = vmul.f32 %v2077, %v2087
      %v2090 = vmul.f32 %v2078, %v2088
      %vm2091 = vcmask 785408
      %v2092 = vsel %vm2091, %v2089, 0.0
      %v2093 = vsel %vm2091, %v2090, 0.0
      %v2094 = vadd.f32 %v2092, %v2093
      %v2095 = vrot.slane %v2094, 4
      %v2096 = vadd.f32 %v2094, %v2095
      %v2097 = vrot.slane %v2096, 2
      %v2098 = vadd.f32 %v2096, %v2097
      %v2099 = vrot.slane %v2098, 1
      %v2100 = vadd.f32 %v2098, %v2099
      %v2101 = vmul.f32 %v2100, %v1717
      %v2102 = vld [vmem:[%s1 + $0x230] sm:$0xf]
      %v2103 = vld [vmem:[%s1 + $0x234] sm:$0xf]
      %v2104 = vld [vmem:[%s1 + $0x238] sm:$0xf]
      %v2105 = vld [vmem:[%s1 + $0x23c] sm:$0xf]
      %v2106 = vld [vmem:[%s1 + $0x240] sm:$0xf]
      %v2107 = vld [vmem:[%s1 + $0x244] sm:$0xf]
      %v2108 = vld [vmem:[%s1 + $0x248] sm:$0xf]
      %v2109 = vld [vmem:[%s1 + $0x24c] sm:$0xf]
      %v2110 = vld [vmem:[%s1 + $0x250] sm:$0xf]
      %v2111 = vld [vmem:[%s1 + $0x254] sm:$0xf]
      %v2112 = vld [vmem:[%s1 + $0x258] sm:$0xf]
      %v2113 = vld [vmem:[%s1 + $0x25c] sm:$0xf]
      %v2114 = vpack.c.bf16 %v2101, %v2101
      %v2115 = vld [vmem:[%s5 + $0x60] sm:$0x1]
      %v2128 = vunpack.c.l.b16 %v2102
      %v2129 = vunpack.c.l.b16 %v2103
      %v2130 = vunpack.c.l.b16 %v2104
      %v2131 = vunpack.c.l.b16 %v2105
      %v2132 = vunpack.c.l.b16 %v2106
      %v2133 = vunpack.c.l.b16 %v2107
      %v2134 = vunpack.c.l.b16 %v2108
      %v2135 = vunpack.c.l.b16 %v2109
      %v2136 = vunpack.c.l.b16 %v2110
      %v2137 = vunpack.c.l.b16 %v2111
      %v2138 = vunpack.c.l.b16 %v2112
      %v2139 = vunpack.c.l.b16 %v2113
      %v2140 = vpack.c.b16 %v2129, %v2128
      %v2141 = vpack.c.b16 %v2131, %v2130
      %v2142 = vpack.c.b16 %v2133, %v2132
      %v2143 = vpack.c.b16 %v2135, %v2134
      %v2144 = vpack.c.b16 %v2137, %v2136
      %v2145 = vpack.c.b16 %v2139, %v2138
      %v2153 = vsel %vm2091, %v2114, 0
      %2155 = vmatpush.bf16.msra.mxu0 0
      %2156 = vmatpush.bf16.msra.mxu0 0
      %2157 = vmatpush.bf16.msra.mxu0 %v2145
      %2158 = vmatpush.bf16.msra.mxu0 %v2144
      %2159 = vmatpush.bf16.msra.mxu0 %v2143
      %2160 = vmatpush.bf16.msra.mxu0 %v2142
      %2161 = vmatpush.bf16.msra.mxu0 %v2141
      %2162 = vmatpush.bf16.msra.mxu0 %v2140
      %2163 = vmatmul.bf16.gmra.mxu0 %v2153
      %v2164 = vpop.f32.mrf.mxu0
      %v2165 = vadd.f32 %v2115, %v2164
      %v2166 = vpop.f32.mrf.mxu0
      %2167 = vdwg.mxu0
      %v2168 = vsub.f32 0.0, %v2165
      %v2169 = vmul.f32 %v2168, 1.442695
      %v2170 = vpow.pop %v2169
      %v2171 = vadd.f32 %v2170, 1.0
      %v2172 = vrcp.pop %v2171
      %v2173 = vmul.f32 %v2165, %v2172
      %v2174 = vld [vmem:[%s1 + $0x260] sm:$0x3]
      %v2175 = vpack.c.bf16 %v2173, %v2173
      %v2176 = vld [vmem:[%s5 + $0x68] sm:$0x1]
      %v2178 = vsel %vm1300, %v2175, 0
      %v2181 = vsel %vm393, %v2174, 0
      %2183 = vmatpush.bf16.msra.mxu0 0
      %2184 = vmatpush.bf16.msra.mxu0 0
      %2185 = vmatpush.bf16.msra.mxu0 0
      %2186 = vmatpush.bf16.msra.mxu0 0
      %2187 = vmatpush.bf16.msra.mxu0 0
      %2188 = vmatpush.bf16.msra.mxu0 0
      %2189 = vmatpush.bf16.msra.mxu0 0
      %2190 = vmatpush.bf16.msra.mxu0 %v2181
      %2191 = vmatmul.bf16.gmra.mxu0 %v2178
      %v2192 = vpop.f32.mrf.mxu0
      %v2193 = vadd.f32 %v2176, %v2192
      %v2194 = vpop.f32.mrf.mxu0
      %2195 = vdwg.mxu0
      %v2196 = vsub.f32 0.0, %v2193
      %v2197 = vmul.f32 %v2196, 1.442695
      %v2198 = vpow.pop %v2197
      %v2199 = vadd.f32 %v2198, 1.0
      %v2200 = vrcp.pop %v2199
      %v2201 = vperm.slane %v2200, 0
      %v2202 = vmul.f32 %v2089, %v2201
      %v2203 = vmul.f32 %v2090, %v2201
      %v2204 = vld [vmem:[%s1 + $0x264] sm:$0xf]
      %v2205 = vld [vmem:[%s1 + $0x268] sm:$0xf]
      %v2206 = vld [vmem:[%s1 + $0x26c] sm:$0xf]
      %v2207 = vld [vmem:[%s1 + $0x270] sm:$0xf]
      %v2208 = vld [vmem:[%s1 + $0x274] sm:$0xf]
      %v2209 = vld [vmem:[%s1 + $0x278] sm:$0xf]
      %v2210 = vld [vmem:[%s1 + $0x27c] sm:$0xf]
      %v2211 = vld [vmem:[%s1 + $0x280] sm:$0xf]
      %v2212 = vld [vmem:[%s1 + $0x284] sm:$0xf]
      %v2213 = vld [vmem:[%s1 + $0x288] sm:$0xf]
      %v2214 = vld [vmem:[%s1 + $0x28c] sm:$0xf]
      %v2215 = vld [vmem:[%s1 + $0x290] sm:$0xf]
      %v2216 = vpack.c.bf16 %v2203, %v2202
      %v2217 = vld [vmem:[%s5 + $0x70] sm:$0x1]
      %v2218 = vperm.slane %v2217, 0
      %v2231 = vunpack.c.l.b16 %v2204
      %v2232 = vunpack.c.l.b16 %v2205
      %v2233 = vunpack.c.l.b16 %v2206
      %v2234 = vunpack.c.l.b16 %v2207
      %v2235 = vunpack.c.l.b16 %v2208
      %v2236 = vunpack.c.l.b16 %v2209
      %v2237 = vunpack.c.l.b16 %v2210
      %v2238 = vunpack.c.l.b16 %v2211
      %v2239 = vunpack.c.l.b16 %v2212
      %v2240 = vunpack.c.l.b16 %v2213
      %v2241 = vunpack.c.l.b16 %v2214
      %v2242 = vunpack.c.l.b16 %v2215
      %v2243 = vpack.c.b16 %v2232, %v2231
      %v2244 = vpack.c.b16 %v2234, %v2233
      %v2245 = vpack.c.b16 %v2236, %v2235
      %v2246 = vpack.c.b16 %v2238, %v2237
      %v2247 = vpack.c.b16 %v2240, %v2239
      %v2248 = vpack.c.b16 %v2242, %v2241
      %v2256 = vsel %vm2091, %v2216, 0
      %2258 = vmatpush.bf16.msra.mxu0 0
      %2259 = vmatpush.bf16.msra.mxu0 0
      %2260 = vmatpush.bf16.msra.mxu0 %v2248
      %2261 = vmatpush.bf16.msra.mxu0 %v2247
      %2262 = vmatpush.bf16.msra.mxu0 %v2246
      %2263 = vmatpush.bf16.msra.mxu0 %v2245
      %2264 = vmatpush.bf16.msra.mxu0 %v2244
      %2265 = vmatpush.bf16.msra.mxu0 %v2243
      %2266 = vmatmul.bf16.gmra.mxu0 %v2256
      %v2267 = vpop.f32.mrf.mxu0
      %v2268 = vadd.f32 %v2218, %v2267
      %v2269 = vpop.f32.mrf.mxu0
      %v2270 = vadd.f32 %v2218, %v2269
      %2271 = vdwg.mxu0
      %v2272 = vadd.f32 %v2268, %v1839
      %v2273 = vadd.f32 %v2270, %v1841
      %v2274 = vld [vmem:[%s1 + $0x2c8] sm:$0xf]
      %v2275 = vld [vmem:[%s1 + $0x2cc] sm:$0xf]
      %v2276 = vpack.c.bf16 %v2273, %v2272
      %v2277 = vld [vmem:[%s5 + $0x78] sm:$0x1]
      %v2278 = vperm.slane %v2277, 0
      %v2281 = vunpack.c.l.b16 %v2274
      %v2282 = vunpack.c.l.b16 %v2275
      %v2283 = vpack.c.b16 %v2282, %v2281
      %v2286 = vsel %vm1235, %v2276, 0
      %2288 = vmatpush.bf16.msra.mxu0 0
      %2289 = vmatpush.bf16.msra.mxu0 0
      %2290 = vmatpush.bf16.msra.mxu0 0
      %2291 = vmatpush.bf16.msra.mxu0 0
      %2292 = vmatpush.bf16.msra.mxu0 0
      %2293 = vmatpush.bf16.msra.mxu0 0
      %2294 = vmatpush.bf16.msra.mxu0 0
      %2295 = vmatpush.bf16.msra.mxu0 %v2283
      %2296 = vmatmul.bf16.gmra.mxu0 %v2286
      %v2297 = vpop.f32.mrf.mxu0
      %v2298 = vadd.f32 %v2278, %v2297
      %v2299 = vpop.f32.mrf.mxu0
      %v2300 = vadd.f32 %v2278, %v2299
      %2301 = vdwg.mxu0
      %v2302 = vsub.f32 0.0, %v2298
      %v2303 = vsub.f32 0.0, %v2300
      %v2304 = vmul.f32 %v2302, 1.442695
      %v2305 = vpow.pop %v2304
      %v2306 = vmul.f32 %v2303, 1.442695
      %v2307 = vpow.pop %v2306
      %v2308 = vadd.f32 %v2305, 1.0
      %v2309 = vadd.f32 %v2307, 1.0
      %v2310 = vrcp.pop %v2308
      %v2311 = vrcp.pop %v2309
      %v2312 = vmul.f32 %v2298, %v2310
      %v2313 = vmul.f32 %v2300, %v2311
      %v2314 = vld [vmem:[%s1 + $0x2d0] sm:$0xf]
      %v2315 = vld [vmem:[%s1 + $0x2d4] sm:$0xf]
      %v2316 = vld [vmem:[%s1 + $0x2d8] sm:$0xf]
      %v2317 = vld [vmem:[%s1 + $0x2dc] sm:$0x1]
      %v2318 = vunpack.c.l.bf16 %v2314
      %v2319 = vunpack.c.l.bf16 %v2315
      %v2320 = vunpack.c.l.bf16 %v2316
      %v2321 = vunpack.c.l.bf16 %v2317
      %v2322 = vld [vmem:[%s1 + $0x294] sm:$0xf]
      %v2323 = vld [vmem:[%s1 + $0x298] sm:$0xf]
      %v2324 = vld [vmem:[%s1 + $0x29c] sm:$0xf]
      %v2325 = vld [vmem:[%s1 + $0x2a0] sm:$0xf]
      %v2326 = vld [vmem:[%s1 + $0x2a4] sm:$0xf]
      %v2327 = vld [vmem:[%s1 + $0x2a8] sm:$0xf]
      %v2328 = vld [vmem:[%s1 + $0x2ac] sm:$0xf]
      %v2329 = vld [vmem:[%s1 + $0x2b0] sm:$0xf]
      %v2330 = vld [vmem:[%s1 + $0x2b4] sm:$0xf]
      %v2331 = vld [vmem:[%s1 + $0x2b8] sm:$0xf]
      %v2332 = vld [vmem:[%s1 + $0x2bc] sm:$0xf]
      %v2333 = vld [vmem:[%s1 + $0x2c0] sm:$0xf]
      %v2334 = vld [vmem:[%s1 + $0x2c4] sm:$0x3]
      %v2335 = vpack.c.bf16 %v2313, %v2312
      %v2349 = vunpack.c.l.b16 %v2322
      %v2350 = vunpack.c.l.b16 %v2323
      %v2351 = vunpack.c.l.b16 %v2324
      %v2352 = vunpack.c.l.b16 %v2325
      %v2353 = vunpack.c.l.b16 %v2326
      %v2354 = vunpack.c.l.b16 %v2327
      %v2355 = vunpack.c.l.b16 %v2328
      %v2356 = vunpack.c.l.b16 %v2329
      %v2357 = vunpack.c.l.b16 %v2330
      %v2358 = vunpack.c.l.b16 %v2331
      %v2359 = vunpack.c.l.b16 %v2332
      %v2360 = vunpack.c.l.b16 %v2333
      %v2361 = vunpack.c.l.b16 %v2334
      %v2362 = vpack.c.b16 %v2350, %v2349
      %v2363 = vpack.c.b16 %v2352, %v2351
      %v2364 = vpack.c.b16 %v2354, %v2353
      %v2365 = vpack.c.b16 %v2356, %v2355
      %v2366 = vpack.c.b16 %v2358, %v2357
      %v2367 = vpack.c.b16 %v2360, %v2359
      %v2368 = vpack.c.b16 %v2361, %v2361
      %v2370 = vsel %vm1235, %v2362, 0
      %v2373 = vsel %vm1235, %v2363, 0
      %v2376 = vsel %vm1235, %v2364, 0
      %v2379 = vsel %vm1235, %v2365, 0
      %v2382 = vsel %vm1235, %v2366, 0
      %v2385 = vsel %vm1235, %v2367, 0
      %v2388 = vsel %vm1235, %v2368, 0
      %2390 = vmatpush.bf16.msra.mxu0 0
      %2391 = vmatpush.bf16.msra.mxu0 0
      %2392 = vmatpush.bf16.msra.mxu0 0
      %2393 = vmatpush.bf16.msra.mxu0 0
      %2394 = vmatpush.bf16.msra.mxu0 0
      %2395 = vmatpush.bf16.msra.mxu0 0
      %2396 = vmatpush.bf16.msra.mxu0 0
      %2397 = vmatpush.bf16.msra.mxu0 %v2335
      %2398 = vmatmul.bf16.gmra.mxu0 %v2370
      %v2399 = vpop.f32.mrf.mxu0
      %v2400 = vadd.f32 0.0, %v2399
      %v2401 = vpop.f32.mrf.mxu0
      %v2402 = vadd.f32 0.0, %v2401
      %2403 = vmatmul.bf16.gmra.mxu0 %v2373
      %v2404 = vpop.f32.mrf.mxu0
      %v2405 = vadd.f32 0.0, %v2404
      %v2406 = vpop.f32.mrf.mxu0
      %v2407 = vadd.f32 0.0, %v2406
      %2408 = vmatmul.bf16.gmra.mxu0 %v2376
      %v2409 = vpop.f32.mrf.mxu0
      %v2410 = vadd.f32 0.0, %v2409
      %v2411 = vpop.f32.mrf.mxu0
      %v2412 = vadd.f32 0.0, %v2411
      %2413 = vmatmul.bf16.gmra.mxu0 %v2379
      %v2414 = vpop.f32.mrf.mxu0
      %v2415 = vadd.f32 0.0, %v2414
      %v2416 = vpop.f32.mrf.mxu0
      %v2417 = vadd.f32 0.0, %v2416
      %2418 = vmatmul.bf16.gmra.mxu0 %v2382
      %v2419 = vpop.f32.mrf.mxu0
      %v2420 = vadd.f32 0.0, %v2419
      %v2421 = vpop.f32.mrf.mxu0
      %v2422 = vadd.f32 0.0, %v2421
      %2423 = vmatmul.bf16.gmra.mxu0 %v2385
      %v2424 = vpop.f32.mrf.mxu0
      %v2425 = vadd.f32 0.0, %v2424
      %v2426 = vpop.f32.mrf.mxu0
      %v2427 = vadd.f32 0.0, %v2426
      %2428 = vmatmul.bf16.gmra.mxu0 %v2388
      %v2429 = vpop.f32.mrf.mxu0
      %v2430 = vadd.f32 0.0, %v2429
      %v2431 = vpop.f32.mrf.mxu0
      %2432 = vdwg.mxu0
      %v2433 = vperm.slane %v2318, 0
      %v2434 = vmul.f32 %v2400, %v2433
      %v2435 = vperm.slane %v2318, 1
      %v2436 = vmul.f32 %v2400, %v2435
      %v2438 = vrot.slane %v2436, 4
      %v2440 = vadd.f32 %v2434, %v2438
      %v2441 = vperm.slane %v2318, 2
      %v2442 = vmul.f32 %v2402, %v2441
      %v2443 = vadd.f32 %v2440, %v2442
      %v2444 = vperm.slane %v2318, 3
      %v2445 = vmul.f32 %v2402, %v2444
      %v2447 = vrot.slane %v2445, 4
      %v2449 = vadd.f32 %v2443, %v2447
      %v2450 = vperm.slane %v2318, 4
      %v2451 = vmul.f32 %v2405, %v2450
      %v2452 = vadd.f32 %v2449, %v2451
      %v2453 = vperm.slane %v2318, 5
      %v2454 = vmul.f32 %v2405, %v2453
      %v2456 = vrot.slane %v2454, 4
      %v2458 = vadd.f32 %v2452, %v2456
      %v2459 = vperm.slane %v2318, 6
      %v2460 = vmul.f32 %v2407, %v2459
      %v2461 = vadd.f32 %v2458, %v2460
      %v2462 = vperm.slane %v2318, 7
      %v2463 = vmul.f32 %v2407, %v2462
      %v2465 = vrot.slane %v2463, 4
      %v2467 = vadd.f32 %v2461, %v2465
      %v2468 = vperm.slane %v2319, 0
      %v2469 = vmul.f32 %v2410, %v2468
      %v2470 = vadd.f32 %v2467, %v2469
      %v2471 = vperm.slane %v2319, 1
      %v2472 = vmul.f32 %v2410, %v2471
      %v2474 = vrot.slane %v2472, 4
      %v2476 = vadd.f32 %v2470, %v2474
      %v2477 = vperm.slane %v2319, 2
      %v2478 = vmul.f32 %v2412, %v2477
      %v2479 = vadd.f32 %v2476, %v2478
      %v2480 = vperm.slane %v2319, 3
      %v2481 = vmul.f32 %v2412, %v2480
      %v2483 = vrot.slane %v2481, 4
      %v2485 = vadd.f32 %v2479, %v2483
      %v2486 = vperm.slane %v2319, 4
      %v2487 = vmul.f32 %v2415, %v2486
      %v2488 = vadd.f32 %v2485, %v2487
      %v2489 = vperm.slane %v2319, 5
      %v2490 = vmul.f32 %v2415, %v2489
      %v2492 = vrot.slane %v2490, 4
      %v2494 = vadd.f32 %v2488, %v2492
      %v2495 = vperm.slane %v2319, 6
      %v2496 = vmul.f32 %v2417, %v2495
      %v2497 = vadd.f32 %v2494, %v2496
      %v2498 = vperm.slane %v2319, 7
      %v2499 = vmul.f32 %v2417, %v2498
      %v2501 = vrot.slane %v2499, 4
      %v2503 = vadd.f32 %v2497, %v2501
      %v2504 = vperm.slane %v2320, 0
      %v2505 = vmul.f32 %v2420, %v2504
      %v2506 = vadd.f32 %v2503, %v2505
      %v2507 = vperm.slane %v2320, 1
      %v2508 = vmul.f32 %v2420, %v2507
      %v2510 = vrot.slane %v2508, 4
      %v2512 = vadd.f32 %v2506, %v2510
      %v2513 = vperm.slane %v2320, 2
      %v2514 = vmul.f32 %v2422, %v2513
      %v2515 = vadd.f32 %v2512, %v2514
      %v2516 = vperm.slane %v2320, 3
      %v2517 = vmul.f32 %v2422, %v2516
      %v2519 = vrot.slane %v2517, 4
      %v2521 = vadd.f32 %v2515, %v2519
      %v2522 = vperm.slane %v2320, 4
      %v2523 = vmul.f32 %v2425, %v2522
      %v2524 = vadd.f32 %v2521, %v2523
      %v2525 = vperm.slane %v2320, 5
      %v2526 = vmul.f32 %v2425, %v2525
      %v2528 = vrot.slane %v2526, 4
      %v2530 = vadd.f32 %v2524, %v2528
      %v2531 = vperm.slane %v2320, 6
      %v2532 = vmul.f32 %v2427, %v2531
      %v2533 = vadd.f32 %v2530, %v2532
      %v2534 = vperm.slane %v2320, 7
      %v2535 = vmul.f32 %v2427, %v2534
      %v2537 = vrot.slane %v2535, 4
      %v2539 = vadd.f32 %v2533, %v2537
      %v2540 = vperm.slane %v2321, 0
      %v2541 = vmul.f32 %v2430, %v2540
      %v2542 = vadd.f32 %v2539, %v2541
      %v2543 = vld [vmem:[%s5 + $0x80] sm:$0x1]
      %v2544 = vperm.slane %v2543, 0
      %v2545 = vadd.f32 %v2542, %v2544
      %v2546 = vsub.f32 0.0, %v2545
      %v2547 = vmul.f32 %v2546, 1.442695
      %v2548 = vpow.pop %v2547
      %v2549 = vadd.f32 %v2548, 1.0
      %v2550 = vrcp.pop %v2549
      %v2551 = vmul.f32 %v2545, %v2550
      %vm2552 = vcmask 781312
      %v2553 = vsel %vm2552, %v2551, 0.0
      %v2554 = vrot.slane %v2553, 4
      %v2555 = vadd.f32 %v2553, %v2554
      %v2556 = vrot.slane %v2555, 2
      %v2557 = vadd.f32 %v2555, %v2556
      %v2558 = vrot.slane %v2557, 1
      %v2559 = vadd.f32 %v2557, %v2558
      %v2560 = vrcp.pop 4.0
      %v2561 = vmul.f32 4.0, %v2560
      %v2562 = vsub.f32 1.0, %v2561
      %v2563 = vmul.f32 %v2560, %v2562
      %v2564 = vadd.f32 %v2560, %v2563
      %vm2565 = vweird.f32 %v2560
      %v2566 = vsel %vm2565, %v2560, %v2564
      %v2567 = vmul.f32 %v2559, %v2566
      %v2568 = vld [vmem:[%s1 + $0x2e0] sm:$0xf]
      %v2569 = vld [vmem:[%s1 + $0x2e4] sm:$0xf]
      %v2570 = vld [vmem:[%s1 + $0x2e8] sm:$0xf]
      %v2571 = vld [vmem:[%s1 + $0x2ec] sm:$0xf]
      %v2572 = vld [vmem:[%s1 + $0x2f0] sm:$0xf]
      %v2573 = vld [vmem:[%s1 + $0x2f4] sm:$0xf]
      %v2574 = vld [vmem:[%s1 + $0x2f8] sm:$0xf]
      %v2575 = vld [vmem:[%s1 + $0x2fc] sm:$0xf]
      %v2576 = vld [vmem:[%s1 + $0x300] sm:$0xf]
      %v2577 = vld [vmem:[%s1 + $0x304] sm:$0xf]
      %v2578 = vld [vmem:[%s1 + $0x308] sm:$0xf]
      %v2579 = vld [vmem:[%s1 + $0x30c] sm:$0xf]
      %v2580 = vpack.c.bf16 %v2567, %v2567
      %v2581 = vld [vmem:[%s5 + $0x88] sm:$0x1]
      %v2594 = vunpack.c.l.b16 %v2568
      %v2595 = vunpack.c.l.b16 %v2569
      %v2596 = vunpack.c.l.b16 %v2570
      %v2597 = vunpack.c.l.b16 %v2571
      %v2598 = vunpack.c.l.b16 %v2572
      %v2599 = vunpack.c.l.b16 %v2573
      %v2600 = vunpack.c.l.b16 %v2574
      %v2601 = vunpack.c.l.b16 %v2575
      %v2602 = vunpack.c.l.b16 %v2576
      %v2603 = vunpack.c.l.b16 %v2577
      %v2604 = vunpack.c.l.b16 %v2578
      %v2605 = vunpack.c.l.b16 %v2579
      %v2606 = vpack.c.b16 %v2595, %v2594
      %v2607 = vpack.c.b16 %v2597, %v2596
      %v2608 = vpack.c.b16 %v2599, %v2598
      %v2609 = vpack.c.b16 %v2601, %v2600
      %v2610 = vpack.c.b16 %v2603, %v2602
      %v2611 = vpack.c.b16 %v2605, %v2604
      %v2619 = vsel %vm2091, %v2580, 0
      %2621 = vmatpush.bf16.msra.mxu0 0
      %2622 = vmatpush.bf16.msra.mxu0 0
      %2623 = vmatpush.bf16.msra.mxu0 %v2611
      %2624 = vmatpush.bf16.msra.mxu0 %v2610
      %2625 = vmatpush.bf16.msra.mxu0 %v2609
      %2626 = vmatpush.bf16.msra.mxu0 %v2608
      %2627 = vmatpush.bf16.msra.mxu0 %v2607
      %2628 = vmatpush.bf16.msra.mxu0 %v2606
      %2629 = vmatmul.bf16.gmra.mxu0 %v2619
      %v2630 = vpop.f32.mrf.mxu0
      %v2631 = vadd.f32 %v2581, %v2630
      %v2632 = vpop.f32.mrf.mxu0
      %2633 = vdwg.mxu0
      %v2634 = vsub.f32 0.0, %v2631
      %v2635 = vmul.f32 %v2634, 1.442695
      %v2636 = vpow.pop %v2635
      %v2637 = vadd.f32 %v2636, 1.0
      %v2638 = vrcp.pop %v2637
      %v2639 = vmul.f32 %v2631, %v2638
      %v2640 = vld [vmem:[%s1 + $0x310] sm:$0x3]
      %v2641 = vpack.c.bf16 %v2639, %v2639
      %v2642 = vld [vmem:[%s5 + $0x90] sm:$0x1]
      %v2644 = vsel %vm1300, %v2641, 0
      %v2647 = vsel %vm393, %v2640, 0
      %2649 = vmatpush.bf16.msra.mxu0 0
      %2650 = vmatpush.bf16.msra.mxu0 0
      %2651 = vmatpush.bf16.msra.mxu0 0
      %2652 = vmatpush.bf16.msra.mxu0 0
      %2653 = vmatpush.bf16.msra.mxu0 0
      %2654 = vmatpush.bf16.msra.mxu0 0
      %2655 = vmatpush.bf16.msra.mxu0 0
      %2656 = vmatpush.bf16.msra.mxu0 %v2647
      %2657 = vmatmul.bf16.gmra.mxu0 %v2644
      %v2658 = vpop.f32.mrf.mxu0
      %v2659 = vadd.f32 %v2642, %v2658
      %v2660 = vpop.f32.mrf.mxu0
      %2661 = vdwg.mxu0
      %v2662 = vsub.f32 0.0, %v2659
      %v2663 = vmul.f32 %v2662, 1.442695
      %v2664 = vpow.pop %v2663
      %v2665 = vadd.f32 %v2664, 1.0
      %v2666 = vrcp.pop %v2665
      %v2667 = vperm.slane %v2666, 0
      %v2668 = vmul.f32 %v2551, %v2667
      %v2669 = vld [vmem:[%s1 + $0x314] sm:$0xf]
      %v2670 = vld [vmem:[%s1 + $0x318] sm:$0xf]
      %v2671 = vld [vmem:[%s1 + $0x31c] sm:$0xf]
      %v2672 = vld [vmem:[%s1 + $0x320] sm:$0xf]
      %v2673 = vld [vmem:[%s1 + $0x324] sm:$0xf]
      %v2674 = vld [vmem:[%s1 + $0x328] sm:$0xf]
      %v2675 = vld [vmem:[%s1 + $0x32c] sm:$0xf]
      %v2676 = vld [vmem:[%s1 + $0x330] sm:$0xf]
      %v2677 = vld [vmem:[%s1 + $0x334] sm:$0xf]
      %v2678 = vld [vmem:[%s1 + $0x338] sm:$0xf]
      %v2679 = vld [vmem:[%s1 + $0x33c] sm:$0xf]
      %v2680 = vld [vmem:[%s1 + $0x340] sm:$0xf]
      %v2681 = vpack.c.bf16 %v2668, %v2668
      %v2682 = vld [vmem:[%s5 + $0x98] sm:$0x1]
      %v2683 = vperm.slane %v2682, 0
      %v2696 = vunpack.c.l.b16 %v2669
      %v2697 = vunpack.c.l.b16 %v2670
      %v2698 = vunpack.c.l.b16 %v2671
      %v2699 = vunpack.c.l.b16 %v2672
      %v2700 = vunpack.c.l.b16 %v2673
      %v2701 = vunpack.c.l.b16 %v2674
      %v2702 = vunpack.c.l.b16 %v2675
      %v2703 = vunpack.c.l.b16 %v2676
      %v2704 = vunpack.c.l.b16 %v2677
      %v2705 = vunpack.c.l.b16 %v2678
      %v2706 = vunpack.c.l.b16 %v2679
      %v2707 = vunpack.c.l.b16 %v2680
      %v2708 = vpack.c.b16 %v2697, %v2696
      %v2709 = vpack.c.b16 %v2699, %v2698
      %v2710 = vpack.c.b16 %v2701, %v2700
      %v2711 = vpack.c.b16 %v2703, %v2702
      %v2712 = vpack.c.b16 %v2705, %v2704
      %v2713 = vpack.c.b16 %v2707, %v2706
      %v2721 = vsel %vm2091, %v2681, 0
      %2723 = vmatpush.bf16.msra.mxu0 0
      %2724 = vmatpush.bf16.msra.mxu0 0
      %2725 = vmatpush.bf16.msra.mxu0 %v2713
      %2726 = vmatpush.bf16.msra.mxu0 %v2712
      %2727 = vmatpush.bf16.msra.mxu0 %v2711
      %2728 = vmatpush.bf16.msra.mxu0 %v2710
      %2729 = vmatpush.bf16.msra.mxu0 %v2709
      %2730 = vmatpush.bf16.msra.mxu0 %v2708
      %2731 = vmatmul.bf16.gmra.mxu0 %v2721
      %v2732 = vpop.f32.mrf.mxu0
      %v2733 = vadd.f32 %v2683, %v2732
      %v2734 = vpop.f32.mrf.mxu0
      %2735 = vdwg.mxu0
      %v2736 = vld [vmem:[%s2] sm:$0xff]
      %v2737 = vld [vmem:[%s2 + $0x8] sm:$0xff]
      %v2738 = vld [vmem:[%s2 + $0x10] sm:$0xff]
      %v2739 = vpack.c.bf16 %v2733, %v2733
      %v2740 = vld [vmem:[%s6] ss:$8 sm:$0x3]
      %v2742 = vperm.slane %v2740, 0
      %v2743 = vperm.slane %v2740, 1
      %v2749 = vunpack.c.l.b16 %v2736
      %v2750 = vunpack.c.h.b16 %v2736
      %v2751 = vunpack.c.l.b16 %v2737
      %v2752 = vunpack.c.h.b16 %v2737
      %v2753 = vunpack.c.l.b16 %v2738
      %v2754 = vunpack.c.h.b16 %v2738
      %v2755 = vpack.c.b16 %v2751, %v2749
      %v2756 = vpack.c.b16 %v2752, %v2750
      %v2757 = vpack.c.b16 %v2753, %v2753
      %v2758 = vpack.c.b16 %v2754, %v2754
      %vm2761 = vcmask 195584
      %v2763 = vsel %vm2761, %v2739, 0
      %v2766 = vsel %vm1409, %v2757, 0
      %v2769 = vsel %vm1409, %v2758, 0
      %2771 = vmatpush.bf16.msra.mxu0 0
      %2772 = vmatpush.bf16.msra.mxu0 0
      %2773 = vmatpush.bf16.msra.mxu0 0
      %2774 = vmatpush.bf16.msra.mxu0 0
      %2775 = vmatpush.bf16.msra.mxu0 0
      %2776 = vmatpush.bf16.msra.mxu0 0
      %2777 = vmatpush.bf16.msra.mxu0 %v2766
      %2778 = vmatpush.bf16.msra.mxu0 %v2755
      %2779 = vmatmul.bf16.gmra.mxu0 %v2763
      %v2780 = vpop.f32.mrf.mxu0
      %v2781 = vadd.f32 %v2742, %v2780
      %v2782 = vpop.f32.mrf.mxu0
      %2783 = vdwg.mxu0
      %2784 = vmatpush.bf16.msra.mxu0 0
      %2785 = vmatpush.bf16.msra.mxu0 0
      %2786 = vmatpush.bf16.msra.mxu0 0
      %2787 = vmatpush.bf16.msra.mxu0 0
      %2788 = vmatpush.bf16.msra.mxu0 0
      %2789 = vmatpush.bf16.msra.mxu0 0
      %2790 = vmatpush.bf16.msra.mxu0 %v2769
      %2791 = vmatpush.bf16.msra.mxu0 %v2756
      %2792 = vmatmul.bf16.gmra.mxu0 %v2763
      %v2793 = vpop.f32.mrf.mxu0
      %v2794 = vadd.f32 %v2743, %v2793
      %v2795 = vpop.f32.mrf.mxu0
      %2796 = vdwg.mxu0
      %v2797 = vsub.f32 0.0, %v2781
      %v2798 = vsub.f32 0.0, %v2794
      %v2799 = vmul.f32 %v2797, 1.442695
      %v2800 = vpow.pop %v2799
      %v2801 = vmul.f32 %v2798, 1.442695
      %v2802 = vpow.pop %v2801
      %v2803 = vadd.f32 %v2800, 1.0
      %v2804 = vadd.f32 %v2802, 1.0
      %v2805 = vrcp.pop %v2803
      %v2806 = vrcp.pop %v2804
      %v2807 = vmul.f32 %v2781, %v2805
      %v2808 = vmul.f32 %v2794, %v2806
      %v2809 = vld [vmem:[%s2 + $0x18] sm:$0xff]
      %v2810 = vld [vmem:[%s2 + $0x20] sm:$0x11]
      %v2811 = vunpack.c.l.bf16 %v2809
      %v2812 = vunpack.c.h.bf16 %v2809
      %v2813 = vunpack.c.l.bf16 %v2810
      %v2814 = vunpack.c.h.bf16 %v2810
      %v2815 = vld [vmem:[%s1 + $0x344] sm:$0xf]
      %v2816 = vld [vmem:[%s1 + $0x348] sm:$0x1]
      %v2817 = vpack.c.bf16 %v2807, %v2807
      %v2818 = vpack.c.bf16 %v2808, %v2808
      %v2821 = vunpack.c.l.b16 %v2815
      %v2822 = vunpack.c.l.b16 %v2816
      %v2823 = vpack.c.b16 %v2822, %v2821
      %v2825 = vsel %vm1300, %v2823, 0
      %v2828 = vsel %vm393, %v2817, 0
      %v2831 = vsel %vm393, %v2818, 0
      %2833 = vmatpush.bf16.msra.mxu0 0
      %2834 = vmatpush.bf16.msra.mxu0 0
      %2835 = vmatpush.bf16.msra.mxu0 0
      %2836 = vmatpush.bf16.msra.mxu0 0
      %2837 = vmatpush.bf16.msra.mxu0 0
      %2838 = vmatpush.bf16.msra.mxu0 0
      %2839 = vmatpush.bf16.msra.mxu0 0
      %2840 = vmatpush.bf16.msra.mxu0 %v2828
      %2841 = vmatmul.bf16.gmra.mxu0 %v2825
      %v2842 = vpop.f32.mrf.mxu0
      %v2843 = vadd.f32 0.0, %v2842
      %v2844 = vpop.f32.mrf.mxu0
      %v2845 = vadd.f32 0.0, %v2844
      %2846 = vdwg.mxu0
      %2847 = vmatpush.bf16.msra.mxu0 0
      %2848 = vmatpush.bf16.msra.mxu0 0
      %2849 = vmatpush.bf16.msra.mxu0 0
      %2850 = vmatpush.bf16.msra.mxu0 0
      %2851 = vmatpush.bf16.msra.mxu0 0
      %2852 = vmatpush.bf16.msra.mxu0 0
      %2853 = vmatpush.bf16.msra.mxu0 0
      %2854 = vmatpush.bf16.msra.mxu0 %v2831
      %2855 = vmatmul.bf16.gmra.mxu0 %v2825
      %v2856 = vpop.f32.mrf.mxu0
      %v2857 = vadd.f32 0.0, %v2856
      %v2858 = vpop.f32.mrf.mxu0
      %v2859 = vadd.f32 0.0, %v2858
      %2860 = vdwg.mxu0
      %v2861 = vmul.f32 %v2843, %v2811
      %v2862 = vmul.f32 %v2857, %v2812
      %v2865 = vrot.slane %v2861, 1
      %v2866 = vrot.slane %v2862, 1
      %v2869 = vadd.f32 %v2861, %v2865
      %v2870 = vadd.f32 %v2862, %v2866
      %v2871 = vrot.slane %v2861, 2
      %v2872 = vrot.slane %v2862, 2
      %v2875 = vadd.f32 %v2869, %v2871
      %v2876 = vadd.f32 %v2870, %v2872
      %v2877 = vrot.slane %v2861, 3
      %v2878 = vrot.slane %v2862, 3
      %v2881 = vadd.f32 %v2875, %v2877
      %v2882 = vadd.f32 %v2876, %v2878
      %v2883 = vrot.slane %v2861, 4
      %v2884 = vrot.slane %v2862, 4
      %v2887 = vadd.f32 %v2881, %v2883
      %v2888 = vadd.f32 %v2882, %v2884
      %v2889 = vrot.slane %v2861, 5
      %v2890 = vrot.slane %v2862, 5
      %v2893 = vadd.f32 %v2887, %v2889
      %v2894 = vadd.f32 %v2888, %v2890
      %v2895 = vrot.slane %v2861, 6
      %v2896 = vrot.slane %v2862, 6
      %v2899 = vadd.f32 %v2893, %v2895
      %v2900 = vadd.f32 %v2894, %v2896
      %v2901 = vrot.slane %v2861, 7
      %v2902 = vrot.slane %v2862, 7
      %v2905 = vadd.f32 %v2899, %v2901
      %v2906 = vadd.f32 %v2900, %v2902
      %v2907 = vmul.f32 %v2845, %v2813
      %v2908 = vmul.f32 %v2859, %v2814
      %v2909 = vadd.f32 %v2905, %v2907
      %v2910 = vadd.f32 %v2906, %v2908
      %s2911 = scalar_lea.vmem %s6, 16
      %v2912 = vld [vmem:[%s2911] ss:$8 sm:$0x3]
      %v2914 = vperm.slane %v2912, 0
      %v2915 = vperm.slane %v2912, 1
      %v2918 = vadd.f32 %v2909, %v2914
      %v2919 = vadd.f32 %v2910, %v2915
      %v2920 = vsub.f32 0.0, %v2918
      %v2921 = vsub.f32 0.0, %v2919
      %v2922 = vmul.f32 %v2920, 1.442695
      %v2923 = vpow.pop %v2922
      %v2924 = vmul.f32 %v2921, 1.442695
      %v2925 = vpow.pop %v2924
      %v2926 = vadd.f32 %v2923, 1.0
      %v2927 = vadd.f32 %v2925, 1.0
      %v2928 = vrcp.pop %v2926
      %v2929 = vrcp.pop %v2927
      %v2930 = vmul.f32 %v2918, %v2928
      %v2931 = vmul.f32 %v2919, %v2929
      %v2932 = vadd.f32 %v2930, 0.0
      %v2933 = vadd.f32 %v2931, 0.0
      %v2934 = vld [vmem:[%s1 + $0x34c] sm:$0xf]
      %v2935 = vld [vmem:[%s1 + $0x350] sm:$0xf]
      %v2936 = vld [vmem:[%s1 + $0x354] sm:$0xf]
      %v2937 = vld [vmem:[%s1 + $0x358] sm:$0xf]
      %v2938 = vld [vmem:[%s1 + $0x35c] sm:$0xf]
      %v2939 = vld [vmem:[%s1 + $0x360] sm:$0xf]
      %v2940 = vld [vmem:[%s1 + $0x364] sm:$0xf]
      %v2941 = vld [vmem:[%s1 + $0x368] sm:$0xf]
      %v2942 = vld [vmem:[%s1 + $0x36c] sm:$0xf]
      %v2943 = vld [vmem:[%s1 + $0x370] sm:$0xf]
      %v2944 = vld [vmem:[%s1 + $0x374] sm:$0xf]
      %v2945 = vld [vmem:[%s1 + $0x378] sm:$0xf]
      %v2946 = vld [vmem:[%s1 + $0x37c] sm:$0xf]
      %v2947 = vld [vmem:[%s1 + $0x380] sm:$0xf]
      %v2948 = vld [vmem:[%s1 + $0x384] sm:$0xf]
      %v2949 = vld [vmem:[%s1 + $0x388] sm:$0xf]
      %v2950 = vld [vmem:[%s1 + $0x38c] sm:$0xf]
      %v2951 = vld [vmem:[%s1 + $0x390] sm:$0xf]
      %v2952 = vpack.c.bf16 %v2932, %v2932
      %v2953 = vpack.c.bf16 %v2933, %v2933
      %v2954 = vld [vmem:[%s5 + $0xa0] sm:$0x1]
      %v2973 = vunpack.c.l.b16 %v2934
      %v2974 = vunpack.c.l.b16 %v2935
      %v2975 = vunpack.c.l.b16 %v2936
      %v2976 = vunpack.c.l.b16 %v2937
      %v2977 = vunpack.c.l.b16 %v2938
      %v2978 = vunpack.c.l.b16 %v2939
      %v2979 = vunpack.c.l.b16 %v2940
      %v2980 = vunpack.c.l.b16 %v2941
      %v2981 = vunpack.c.l.b16 %v2942
      %v2982 = vunpack.c.l.b16 %v2943
      %v2983 = vunpack.c.l.b16 %v2944
      %v2984 = vunpack.c.l.b16 %v2945
      %v2985 = vunpack.c.l.b16 %v2946
      %v2986 = vunpack.c.l.b16 %v2947
      %v2987 = vunpack.c.l.b16 %v2948
      %v2988 = vunpack.c.l.b16 %v2949
      %v2989 = vunpack.c.l.b16 %v2950
      %v2990 = vunpack.c.l.b16 %v2951
      %v2991 = vpack.c.b16 %v2974, %v2973
      %v2992 = vpack.c.b16 %v2976, %v2975
      %v2993 = vpack.c.b16 %v2978, %v2977
      %v2994 = vpack.c.b16 %v2980, %v2979
      %v2995 = vpack.c.b16 %v2982, %v2981
      %v2996 = vpack.c.b16 %v2984, %v2983
      %v2997 = vpack.c.b16 %v2986, %v2985
      %v2998 = vpack.c.b16 %v2988, %v2987
      %v2999 = vpack.c.b16 %v2990, %v2989
      %v3010 = vsel %vm1235, %v2953, 0
      %3012 = vmatpush.bf16.msra.mxu0 %v2998
      %3013 = vmatpush.bf16.msra.mxu0 %v2997
      %3014 = vmatpush.bf16.msra.mxu0 %v2996
      %3015 = vmatpush.bf16.msra.mxu0 %v2995
      %3016 = vmatpush.bf16.msra.mxu0 %v2994
      %3017 = vmatpush.bf16.msra.mxu0 %v2993
      %3018 = vmatpush.bf16.msra.mxu0 %v2992
      %3019 = vmatpush.bf16.msra.mxu0 %v2991
      %3020 = vmatmul.bf16.gmra.mxu0 %v2952
      %v3021 = vpop.f32.mrf.mxu0
      %v3022 = vadd.f32 %v2954, %v3021
      %v3023 = vpop.f32.mrf.mxu0
      %3024 = vdwg.mxu0
      %3025 = vmatpush.bf16.msra.mxu0 0
      %3026 = vmatpush.bf16.msra.mxu0 0
      %3027 = vmatpush.bf16.msra.mxu0 0
      %3028 = vmatpush.bf16.msra.mxu0 0
      %3029 = vmatpush.bf16.msra.mxu0 0
      %3030 = vmatpush.bf16.msra.mxu0 0
      %3031 = vmatpush.bf16.msra.mxu0 0
      %3032 = vmatpush.bf16.msra.mxu0 %v2999
      %3033 = vmatmul.bf16.gmra.mxu0 %v3010
      %v3034 = vpop.f32.mrf.mxu0
      %v3035 = vadd.f32 %v3022, %v3034
      %v3036 = vpop.f32.mrf.mxu0
      %3037 = vdwg.mxu0
      %v3038 = vsub.f32 0.0, %v3035
      %v3039 = vmul.f32 %v3038, 1.442695
      %v3040 = vpow.pop %v3039
      %v3041 = vadd.f32 %v3040, 1.0
      %v3042 = vrcp.pop %v3041
      %v3043 = vmul.f32 %v3035, %v3042
      %v3044 = vld [vmem:[%s2 + $0x28] sm:$0x77]
      %v3045 = vpack.c.bf16 %v3043, %v3043
      %s3046 = scalar_lea.vmem %s6, 32
      %v3047 = vld [vmem:[%s3046] ss:$8 sm:$0x3]
      %v3049 = vunpack.c.l.b16 %v3044
      %v3050 = vunpack.c.h.b16 %v3044
      %v3051 = vpack.c.b16 %v3049, %v3049
      %v3052 = vpack.c.b16 %v3050, %v3050
      %v3054 = vperm.slane %v3047, 0
      %v3055 = vperm.slane %v3047, 1
      %vm3058 = vcmask 48128
      %v3060 = vsel %vm3058, %v3045, 0
      %vm3062 = vcmask 1042432
      %v3064 = vsel %vm3062, %v3051, 0
      %v3067 = vsel %vm3062, %v3052, 0
      %3069 = vmatpush.bf16.msra.mxu0 0
      %3070 = vmatpush.bf16.msra.mxu0 0
      %3071 = vmatpush.bf16.msra.mxu0 0
      %3072 = vmatpush.bf16.msra.mxu0 0
      %3073 = vmatpush.bf16.msra.mxu0 0
      %3074 = vmatpush.bf16.msra.mxu0 0
      %3075 = vmatpush.bf16.msra.mxu0 0
      %3076 = vmatpush.bf16.msra.mxu0 %v3064
      %3077 = vmatmul.bf16.gmra.mxu0 %v3060
      %v3078 = vpop.f32.mrf.mxu0
      %v3079 = vadd.f32 %v3054, %v3078
      %v3080 = vpop.f32.mrf.mxu0
      %3081 = vdwg.mxu0
      %3082 = vmatpush.bf16.msra.mxu0 0
      %3083 = vmatpush.bf16.msra.mxu0 0
      %3084 = vmatpush.bf16.msra.mxu0 0
      %3085 = vmatpush.bf16.msra.mxu0 0
      %3086 = vmatpush.bf16.msra.mxu0 0
      %3087 = vmatpush.bf16.msra.mxu0 0
      %3088 = vmatpush.bf16.msra.mxu0 0
      %3089 = vmatpush.bf16.msra.mxu0 %v3067
      %3090 = vmatmul.bf16.gmra.mxu0 %v3060
      %v3091 = vpop.f32.mrf.mxu0
      %v3092 = vadd.f32 %v3055, %v3091
      %v3093 = vpop.f32.mrf.mxu0
      %3094 = vdwg.mxu0
      %v3095 = vsub.f32 0.0, %v3079
      %v3096 = vsub.f32 0.0, %v3092
      %v3097 = vmul.f32 %v3095, 1.442695
      %v3098 = vpow.pop %v3097
      %v3099 = vmul.f32 %v3096, 1.442695
      %v3100 = vpow.pop %v3099
      %v3101 = vadd.f32 %v3098, 1.0
      %v3102 = vadd.f32 %v3100, 1.0
      %v3103 = vrcp.pop %v3101
      %v3104 = vrcp.pop %v3102
      %v3105 = vmul.f32 %v2930, %v3103
      %v3106 = vmul.f32 %v2931, %v3104
      %v3107 = vld [vmem:[%s1 + $0x394] sm:$0xf]
      %v3108 = vld [vmem:[%s1 + $0x398] sm:$0xf]
      %v3109 = vld [vmem:[%s1 + $0x39c] sm:$0xf]
      %v3110 = vld [vmem:[%s1 + $0x3a0] sm:$0xf]
      %v3111 = vld [vmem:[%s1 + $0x3a4] sm:$0xf]
      %v3112 = vld [vmem:[%s1 + $0x3a8] sm:$0xf]
      %v3113 = vld [vmem:[%s1 + $0x3ac] sm:$0xf]
      %v3114 = vld [vmem:[%s1 + $0x3b0] sm:$0xf]
      %v3115 = vld [vmem:[%s1 + $0x3b4] sm:$0xf]
      %v3116 = vld [vmem:[%s1 + $0x3b8] sm:$0xf]
      %v3117 = vld [vmem:[%s1 + $0x3bc] sm:$0xf]
      %v3118 = vld [vmem:[%s1 + $0x3c0] sm:$0xf]
      %v3119 = vld [vmem:[%s1 + $0x3c4] sm:$0xf]
      %v3120 = vld [vmem:[%s1 + $0x3c8] sm:$0xf]
      %v3121 = vld [vmem:[%s1 + $0x3cc] sm:$0xf]
      %v3122 = vld [vmem:[%s1 + $0x3d0] sm:$0xf]
      %v3123 = vld [vmem:[%s1 + $0x3d4] sm:$0xf]
      %v3124 = vld [vmem:[%s1 + $0x3d8] sm:$0xf]
      %v3125 = vpack.c.bf16 %v3105, %v3105
      %v3126 = vpack.c.bf16 %v3106, %v3106
      %v3127 = vld [vmem:[%s5 + $0xa8] sm:$0x1]
      %v3146 = vunpack.c.l.b16 %v3107
      %v3147 = vunpack.c.l.b16 %v3108
      %v3148 = vunpack.c.l.b16 %v3109
      %v3149 = vunpack.c.l.b16 %v3110
      %v3150 = vunpack.c.l.b16 %v3111
      %v3151 = vunpack.c.l.b16 %v3112
      %v3152 = vunpack.c.l.b16 %v3113
      %v3153 = vunpack.c.l.b16 %v3114
      %v3154 = vunpack.c.l.b16 %v3115
      %v3155 = vunpack.c.l.b16 %v3116
      %v3156 = vunpack.c.l.b16 %v3117
      %v3157 = vunpack.c.l.b16 %v3118
      %v3158 = vunpack.c.l.b16 %v3119
      %v3159 = vunpack.c.l.b16 %v3120
      %v3160 = vunpack.c.l.b16 %v3121
      %v3161 = vunpack.c.l.b16 %v3122
      %v3162 = vunpack.c.l.b16 %v3123
      %v3163 = vunpack.c.l.b16 %v3124
      %v3164 = vpack.c.b16 %v3147, %v3146
      %v3165 = vpack.c.b16 %v3149, %v3148
      %v3166 = vpack.c.b16 %v3151, %v3150
      %v3167 = vpack.c.b16 %v3153, %v3152
      %v3168 = vpack.c.b16 %v3155, %v3154
      %v3169 = vpack.c.b16 %v3157, %v3156
      %v3170 = vpack.c.b16 %v3159, %v3158
      %v3171 = vpack.c.b16 %v3161, %v3160
      %v3172 = vpack.c.b16 %v3163, %v3162
      %v3183 = vsel %vm1235, %v3126, 0
      %3185 = vmatpush.bf16.msra.mxu0 %v3171
      %3186 = vmatpush.bf16.msra.mxu0 %v3170
      %3187 = vmatpush.bf16.msra.mxu0 %v3169
      %3188 = vmatpush.bf16.msra.mxu0 %v3168
      %3189 = vmatpush.bf16.msra.mxu0 %v3167
      %3190 = vmatpush.bf16.msra.mxu0 %v3166
      %3191 = vmatpush.bf16.msra.mxu0 %v3165
      %3192 = vmatpush.bf16.msra.mxu0 %v3164
      %3193 = vmatmul.bf16.gmra.mxu0 %v3125
      %v3194 = vpop.f32.mrf.mxu0
      %v3195 = vadd.f32 %v3127, %v3194
      %v3196 = vpop.f32.mrf.mxu0
      %3197 = vdwg.mxu0
      %3198 = vmatpush.bf16.msra.mxu0 0
      %3199 = vmatpush.bf16.msra.mxu0 0
      %3200 = vmatpush.bf16.msra.mxu0 0
      %3201 = vmatpush.bf16.msra.mxu0 0
      %3202 = vmatpush.bf16.msra.mxu0 0
      %3203 = vmatpush.bf16.msra.mxu0 0
      %3204 = vmatpush.bf16.msra.mxu0 0
      %3205 = vmatpush.bf16.msra.mxu0 %v3172
      %3206 = vmatmul.bf16.gmra.mxu0 %v3183
      %v3207 = vpop.f32.mrf.mxu0
      %v3208 = vadd.f32 %v3195, %v3207
      %v3209 = vpop.f32.mrf.mxu0
      %3210 = vdwg.mxu0
      %v3211 = vld [vmem:[%s2 + $0x30] sm:$0xff]
      %v3212 = vld [vmem:[%s2 + $0x38] sm:$0xff]
      %v3213 = vld [vmem:[%s2 + $0x40] sm:$0xff]
      %v3214 = vld [vmem:[%s2 + $0x48] sm:$0xff]
      %v3215 = vld [vmem:[%s2 + $0x50] sm:$0xff]
      %v3216 = vpack.c.bf16 %v3208, %v3208
      %s3217 = scalar_lea.vmem %s6, 48
      %v3218 = vld [vmem:[%s3217] ss:$8 sm:$0x3]
      %v3224 = vunpack.c.l.b16 %v3211
      %v3225 = vunpack.c.h.b16 %v3211
      %v3226 = vunpack.c.l.b16 %v3212
      %v3227 = vunpack.c.h.b16 %v3212
      %v3228 = vunpack.c.l.b16 %v3213
      %v3229 = vunpack.c.h.b16 %v3213
      %v3230 = vunpack.c.l.b16 %v3214
      %v3231 = vunpack.c.h.b16 %v3214
      %v3232 = vunpack.c.l.b16 %v3215
      %v3233 = vunpack.c.h.b16 %v3215
      %v3234 = vpack.c.b16 %v3226, %v3224
      %v3235 = vpack.c.b16 %v3227, %v3225
      %v3236 = vpack.c.b16 %v3230, %v3228
      %v3237 = vpack.c.b16 %v3231, %v3229
      %v3238 = vpack.c.b16 %v3232, %v3232
      %v3239 = vpack.c.b16 %v3233, %v3233
      %v3245 = vperm.slane %v3218, 0
      %v3246 = vperm.slane %v3218, 1
      %vm3249 = vcmask 326656
      %v3251 = vsel %vm3249, %v3216, 0
      %v3254 = vsel %vm1409, %v3238, 0
      %v3257 = vsel %vm1409, %v3239, 0
      %3259 = vmatpush.bf16.msra.mxu0 0
      %3260 = vmatpush.bf16.msra.mxu0 0
      %3261 = vmatpush.bf16.msra.mxu0 0
      %3262 = vmatpush.bf16.msra.mxu0 0
      %3263 = vmatpush.bf16.msra.mxu0 0
      %3264 = vmatpush.bf16.msra.mxu0 %v3254
      %3265 = vmatpush.bf16.msra.mxu0 %v3236
      %3266 = vmatpush.bf16.msra.mxu0 %v3234
      %3267 = vmatmul.bf16.gmra.mxu0 %v3251
      %v3268 = vpop.f32.mrf.mxu0
      %v3269 = vadd.f32 %v3245, %v3268
      %v3270 = vpop.f32.mrf.mxu0
      %3271 = vdwg.mxu0
      %3272 = vmatpush.bf16.msra.mxu0 0
      %3273 = vmatpush.bf16.msra.mxu0 0
      %3274 = vmatpush.bf16.msra.mxu0 0
      %3275 = vmatpush.bf16.msra.mxu0 0
      %3276 = vmatpush.bf16.msra.mxu0 0
      %3277 = vmatpush.bf16.msra.mxu0 %v3257
      %3278 = vmatpush.bf16.msra.mxu0 %v3237
      %3279 = vmatpush.bf16.msra.mxu0 %v3235
      %3280 = vmatmul.bf16.gmra.mxu0 %v3251
      %v3281 = vpop.f32.mrf.mxu0
      %v3282 = vadd.f32 %v3246, %v3281
      %v3283 = vpop.f32.mrf.mxu0
      %3284 = vdwg.mxu0
      %v3285 = vsub.f32 0.0, %v3269
      %v3286 = vsub.f32 0.0, %v3282
      %v3287 = vmul.f32 %v3285, 1.442695
      %v3288 = vpow.pop %v3287
      %v3289 = vmul.f32 %v3286, 1.442695
      %v3290 = vpow.pop %v3289
      %v3291 = vadd.f32 %v3288, 1.0
      %v3292 = vadd.f32 %v3290, 1.0
      %v3293 = vrcp.pop %v3291
      %v3294 = vrcp.pop %v3292
      %v3295 = vmul.f32 %v3269, %v3293
      %v3296 = vmul.f32 %v3282, %v3294
      %v3297 = vld [vmem:[%s2 + $0x58] sm:$0x11]
      %v3298 = vunpack.c.l.bf16 %v3297
      %v3299 = vunpack.c.h.bf16 %v3297
      %v3300 = vmul.f32 %v3295, %v3298
      %v3301 = vmul.f32 %v3296, %v3299
      %s3302 = scalar_lea.vmem %s6, 64
      %v3303 = vld [vmem:[%s3302] ss:$8 sm:$0x3]
      %v3305 = vperm.slane %v3303, 0
      %v3306 = vperm.slane %v3303, 1
      %v3309 = vadd.f32 %v3300, %v3305
      %v3310 = vadd.f32 %v3301, %v3306
      %v3311 = vsub.f32 0.0, %v3309
      %v3312 = vsub.f32 0.0, %v3310
      %v3313 = vmul.f32 %v3311, 1.442695
      %v3314 = vpow.pop %v3313
      %v3315 = vmul.f32 %v3312, 1.442695
      %v3316 = vpow.pop %v3315
      %v3317 = vadd.f32 %v3314, 1.0
      %v3318 = vadd.f32 %v3316, 1.0
      %v3319 = vrcp.pop %v3317
      %v3320 = vrcp.pop %v3318
      %v3321 = vmul.f32 %v3309, %v3319
      %v3322 = vmul.f32 %v3310, %v3320
      %v3323 = vadd.f32 %v3321, 0.0
      %v3324 = vadd.f32 %v3322, 0.0
      %v3325 = vld [vmem:[%s1 + $0x3dc] sm:$0xf]
      %v3326 = vld [vmem:[%s1 + $0x3e0] sm:$0xf]
      %v3327 = vld [vmem:[%s1 + $0x3e4] sm:$0xf]
      %v3328 = vld [vmem:[%s1 + $0x3e8] sm:$0xf]
      %v3329 = vld [vmem:[%s1 + $0x3ec] sm:$0xf]
      %v3330 = vld [vmem:[%s1 + $0x3f0] sm:$0xf]
      %v3331 = vld [vmem:[%s1 + $0x3f4] sm:$0xf]
      %v3332 = vld [vmem:[%s1 + $0x3f8] sm:$0xf]
      %v3333 = vld [vmem:[%s1 + $0x3fc] sm:$0xf]
      %v3334 = vld [vmem:[%s1 + $0x400] sm:$0xf]
      %v3335 = vld [vmem:[%s1 + $0x404] sm:$0xf]
      %v3336 = vld [vmem:[%s1 + $0x408] sm:$0xf]
      %v3337 = vld [vmem:[%s1 + $0x40c] sm:$0xf]
      %v3338 = vld [vmem:[%s1 + $0x410] sm:$0xf]
      %v3339 = vld [vmem:[%s1 + $0x414] sm:$0xf]
      %v3340 = vld [vmem:[%s1 + $0x418] sm:$0xf]
      %v3341 = vld [vmem:[%s1 + $0x41c] sm:$0xf]
      %v3342 = vld [vmem:[%s1 + $0x420] sm:$0xf]
      %v3343 = vld [vmem:[%s1 + $0x424] sm:$0xf]
      %v3344 = vld [vmem:[%s1 + $0x428] sm:$0xf]
      %v3345 = vld [vmem:[%s1 + $0x42c] sm:$0xf]
      %v3346 = vld [vmem:[%s1 + $0x430] sm:$0xf]
      %v3347 = vld [vmem:[%s1 + $0x434] sm:$0xf]
      %v3348 = vld [vmem:[%s1 + $0x438] sm:$0xf]
      %v3349 = vld [vmem:[%s1 + $0x43c] sm:$0xf]
      %v3350 = vld [vmem:[%s1 + $0x440] sm:$0xf]
      %v3351 = vld [vmem:[%s1 + $0x444] sm:$0xf]
      %v3352 = vld [vmem:[%s1 + $0x448] sm:$0xf]
      %v3353 = vld [vmem:[%s1 + $0x44c] sm:$0xf]
      %v3354 = vld [vmem:[%s1 + $0x450] sm:$0xf]
      %v3355 = vpack.c.bf16 %v3323, %v3323
      %v3356 = vpack.c.bf16 %v3324, %v3324
      %v3357 = vld [vmem:[%s5 + $0xb0] sm:$0x1]
      %v3388 = vunpack.c.l.b16 %v3325
      %v3389 = vunpack.c.l.b16 %v3326
      %v3390 = vunpack.c.l.b16 %v3327
      %v3391 = vunpack.c.l.b16 %v3328
      %v3392 = vunpack.c.l.b16 %v3329
      %v3393 = vunpack.c.l.b16 %v3330
      %v3394 = vunpack.c.l.b16 %v3331
      %v3395 = vunpack.c.l.b16 %v3332
      %v3396 = vunpack.c.l.b16 %v3333
      %v3397 = vunpack.c.l.b16 %v3334
      %v3398 = vunpack.c.l.b16 %v3335
      %v3399 = vunpack.c.l.b16 %v3336
      %v3400 = vunpack.c.l.b16 %v3337
      %v3401 = vunpack.c.l.b16 %v3338
      %v3402 = vunpack.c.l.b16 %v3339
      %v3403 = vunpack.c.l.b16 %v3340
      %v3404 = vunpack.c.l.b16 %v3341
      %v3405 = vunpack.c.l.b16 %v3342
      %v3406 = vunpack.c.l.b16 %v3343
      %v3407 = vunpack.c.l.b16 %v3344
      %v3408 = vunpack.c.l.b16 %v3345
      %v3409 = vunpack.c.l.b16 %v3346
      %v3410 = vunpack.c.l.b16 %v3347
      %v3411 = vunpack.c.l.b16 %v3348
      %v3412 = vunpack.c.l.b16 %v3349
      %v3413 = vunpack.c.l.b16 %v3350
      %v3414 = vunpack.c.l.b16 %v3351
      %v3415 = vunpack.c.l.b16 %v3352
      %v3416 = vunpack.c.l.b16 %v3353
      %v3417 = vunpack.c.l.b16 %v3354
      %v3418 = vpack.c.b16 %v3389, %v3388
      %v3419 = vpack.c.b16 %v3391, %v3390
      %v3420 = vpack.c.b16 %v3393, %v3392
      %v3421 = vpack.c.b16 %v3395, %v3394
      %v3422 = vpack.c.b16 %v3397, %v3396
      %v3423 = vpack.c.b16 %v3399, %v3398
      %v3424 = vpack.c.b16 %v3401, %v3400
      %v3425 = vpack.c.b16 %v3403, %v3402
      %v3426 = vpack.c.b16 %v3405, %v3404
      %v3427 = vpack.c.b16 %v3407, %v3406
      %v3428 = vpack.c.b16 %v3409, %v3408
      %v3429 = vpack.c.b16 %v3411, %v3410
      %v3430 = vpack.c.b16 %v3413, %v3412
      %v3431 = vpack.c.b16 %v3415, %v3414
      %v3432 = vpack.c.b16 %v3417, %v3416
      %vm3448 = vcmask 916480
      %v3450 = vsel %vm3448, %v3356, 0
      %3452 = vmatpush.bf16.msra.mxu0 %v3425
      %3453 = vmatpush.bf16.msra.mxu0 %v3424
      %3454 = vmatpush.bf16.msra.mxu0 %v3423
      %3455 = vmatpush.bf16.msra.mxu0 %v3422
      %3456 = vmatpush.bf16.msra.mxu0 %v3421
      %3457 = vmatpush.bf16.msra.mxu0 %v3420
      %3458 = vmatpush.bf16.msra.mxu0 %v3419
      %3459 = vmatpush.bf16.msra.mxu0 %v3418
      %3460 = vmatmul.bf16.gmra.mxu0 %v3355
      %v3461 = vpop.f32.mrf.mxu0
      %v3462 = vadd.f32 %v3357, %v3461
      %v3463 = vpop.f32.mrf.mxu0
      %3464 = vdwg.mxu0
      %3465 = vmatpush.bf16.msra.mxu0 0
      %3466 = vmatpush.bf16.msra.mxu0 %v3432
      %3467 = vmatpush.bf16.msra.mxu0 %v3431
      %3468 = vmatpush.bf16.msra.mxu0 %v3430
      %3469 = vmatpush.bf16.msra.mxu0 %v3429
      %3470 = vmatpush.bf16.msra.mxu0 %v3428
      %3471 = vmatpush.bf16.msra.mxu0 %v3427
      %3472 = vmatpush.bf16.msra.mxu0 %v3426
      %3473 = vmatmul.bf16.gmra.mxu0 %v3450
      %v3474 = vpop.f32.mrf.mxu0
      %v3475 = vadd.f32 %v3462, %v3474
      %v3476 = vpop.f32.mrf.mxu0
      %3477 = vdwg.mxu0
      %v3478 = vsub.f32 0.0, %v3475
      %v3479 = vmul.f32 %v3478, 1.442695
      %v3480 = vpow.pop %v3479
      %v3481 = vadd.f32 %v3480, 1.0
      %v3482 = vrcp.pop %v3481
      %v3483 = vmul.f32 %v3475, %v3482
      %v3484 = vld [vmem:[%s2 + $0x60] sm:$0xff]
      %v3485 = vld [vmem:[%s2 + $0x68] sm:$0x11]
      %v3486 = vpack.c.bf16 %v3483, %v3483
      %s3487 = scalar_lea.vmem %s6, 80
      %v3488 = vld [vmem:[%s3487] ss:$8 sm:$0x3]
      %v3491 = vunpack.c.l.b16 %v3484
      %v3492 = vunpack.c.h.b16 %v3484
      %v3493 = vunpack.c.l.b16 %v3485
      %v3494 = vunpack.c.h.b16 %v3485
      %v3495 = vpack.c.b16 %v3493, %v3491
      %v3496 = vpack.c.b16 %v3494, %v3492
      %v3498 = vperm.slane %v3488, 0
      %v3499 = vperm.slane %v3488, 1
      %vm3502 = vcmask 80896
      %v3504 = vsel %vm3502, %v3486, 0
      %vm3506 = vcmask 1044480
      %v3508 = vsel %vm3506, %v3495, 0
      %v3511 = vsel %vm3506, %v3496, 0
      %3513 = vmatpush.bf16.msra.mxu0 0
      %3514 = vmatpush.bf16.msra.mxu0 0
      %3515 = vmatpush.bf16.msra.mxu0 0
      %3516 = vmatpush.bf16.msra.mxu0 0
      %3517 = vmatpush.bf16.msra.mxu0 0
      %3518 = vmatpush.bf16.msra.mxu0 0
      %3519 = vmatpush.bf16.msra.mxu0 0
      %3520 = vmatpush.bf16.msra.mxu0 %v3508
      %3521 = vmatmul.bf16.gmra.mxu0 %v3504
      %v3522 = vpop.f32.mrf.mxu0
      %v3523 = vadd.f32 %v3498, %v3522
      %v3524 = vpop.f32.mrf.mxu0
      %3525 = vdwg.mxu0
      %3526 = vmatpush.bf16.msra.mxu0 0
      %3527 = vmatpush.bf16.msra.mxu0 0
      %3528 = vmatpush.bf16.msra.mxu0 0
      %3529 = vmatpush.bf16.msra.mxu0 0
      %3530 = vmatpush.bf16.msra.mxu0 0
      %3531 = vmatpush.bf16.msra.mxu0 0
      %3532 = vmatpush.bf16.msra.mxu0 0
      %3533 = vmatpush.bf16.msra.mxu0 %v3511
      %3534 = vmatmul.bf16.gmra.mxu0 %v3504
      %v3535 = vpop.f32.mrf.mxu0
      %v3536 = vadd.f32 %v3499, %v3535
      %v3537 = vpop.f32.mrf.mxu0
      %3538 = vdwg.mxu0
      %v3539 = vsub.f32 0.0, %v3523
      %v3540 = vsub.f32 0.0, %v3536
      %v3541 = vmul.f32 %v3539, 1.442695
      %v3542 = vpow.pop %v3541
      %v3543 = vmul.f32 %v3540, 1.442695
      %v3544 = vpow.pop %v3543
      %v3545 = vadd.f32 %v3542, 1.0
      %v3546 = vadd.f32 %v3544, 1.0
      %v3547 = vrcp.pop %v3545
      %v3548 = vrcp.pop %v3546
      %v3549 = vmul.f32 %v3321, %v3547
      %v3550 = vmul.f32 %v3322, %v3548
      %v3551 = vld [vmem:[%s1 + $0x454] sm:$0xf]
      %v3552 = vld [vmem:[%s1 + $0x458] sm:$0xf]
      %v3553 = vld [vmem:[%s1 + $0x45c] sm:$0xf]
      %v3554 = vld [vmem:[%s1 + $0x460] sm:$0xf]
      %v3555 = vld [vmem:[%s1 + $0x464] sm:$0xf]
      %v3556 = vld [vmem:[%s1 + $0x468] sm:$0xf]
      %v3557 = vld [vmem:[%s1 + $0x46c] sm:$0xf]
      %v3558 = vld [vmem:[%s1 + $0x470] sm:$0xf]
      %v3559 = vld [vmem:[%s1 + $0x474] sm:$0xf]
      %v3560 = vld [vmem:[%s1 + $0x478] sm:$0xf]
      %v3561 = vld [vmem:[%s1 + $0x47c] sm:$0xf]
      %v3562 = vld [vmem:[%s1 + $0x480] sm:$0xf]
      %v3563 = vld [vmem:[%s1 + $0x484] sm:$0xf]
      %v3564 = vld [vmem:[%s1 + $0x488] sm:$0xf]
      %v3565 = vld [vmem:[%s1 + $0x48c] sm:$0xf]
      %v3566 = vld [vmem:[%s1 + $0x490] sm:$0xf]
      %v3567 = vld [vmem:[%s1 + $0x494] sm:$0xf]
      %v3568 = vld [vmem:[%s1 + $0x498] sm:$0xf]
      %v3569 = vld [vmem:[%s1 + $0x49c] sm:$0xf]
      %v3570 = vld [vmem:[%s1 + $0x4a0] sm:$0xf]
      %v3571 = vld [vmem:[%s1 + $0x4a4] sm:$0xf]
      %v3572 = vld [vmem:[%s1 + $0x4a8] sm:$0xf]
      %v3573 = vld [vmem:[%s1 + $0x4ac] sm:$0xf]
      %v3574 = vld [vmem:[%s1 + $0x4b0] sm:$0xf]
      %v3575 = vld [vmem:[%s1 + $0x4b4] sm:$0xf]
      %v3576 = vld [vmem:[%s1 + $0x4b8] sm:$0xf]
      %v3577 = vld [vmem:[%s1 + $0x4bc] sm:$0xf]
      %v3578 = vld [vmem:[%s1 + $0x4c0] sm:$0xf]
      %v3579 = vld [vmem:[%s1 + $0x4c4] sm:$0xf]
      %v3580 = vld [vmem:[%s1 + $0x4c8] sm:$0xf]
      %v3581 = vpack.c.bf16 %v3549, %v3549
      %v3582 = vpack.c.bf16 %v3550, %v3550
      %v3583 = vld [vmem:[%s5 + $0xb8] sm:$0x1]
      %v3614 = vunpack.c.l.b16 %v3551
      %v3615 = vunpack.c.l.b16 %v3552
      %v3616 = vunpack.c.l.b16 %v3553
      %v3617 = vunpack.c.l.b16 %v3554
      %v3618 = vunpack.c.l.b16 %v3555
      %v3619 = vunpack.c.l.b16 %v3556
      %v3620 = vunpack.c.l.b16 %v3557
      %v3621 = vunpack.c.l.b16 %v3558
      %v3622 = vunpack.c.l.b16 %v3559
      %v3623 = vunpack.c.l.b16 %v3560
      %v3624 = vunpack.c.l.b16 %v3561
      %v3625 = vunpack.c.l.b16 %v3562
      %v3626 = vunpack.c.l.b16 %v3563
      %v3627 = vunpack.c.l.b16 %v3564
      %v3628 = vunpack.c.l.b16 %v3565
      %v3629 = vunpack.c.l.b16 %v3566
      %v3630 = vunpack.c.l.b16 %v3567
      %v3631 = vunpack.c.l.b16 %v3568
      %v3632 = vunpack.c.l.b16 %v3569
      %v3633 = vunpack.c.l.b16 %v3570
      %v3634 = vunpack.c.l.b16 %v3571
      %v3635 = vunpack.c.l.b16 %v3572
      %v3636 = vunpack.c.l.b16 %v3573
      %v3637 = vunpack.c.l.b16 %v3574
      %v3638 = vunpack.c.l.b16 %v3575
      %v3639 = vunpack.c.l.b16 %v3576
      %v3640 = vunpack.c.l.b16 %v3577
      %v3641 = vunpack.c.l.b16 %v3578
      %v3642 = vunpack.c.l.b16 %v3579
      %v3643 = vunpack.c.l.b16 %v3580
      %v3644 = vpack.c.b16 %v3615, %v3614
      %v3645 = vpack.c.b16 %v3617, %v3616
      %v3646 = vpack.c.b16 %v3619, %v3618
      %v3647 = vpack.c.b16 %v3621, %v3620
      %v3648 = vpack.c.b16 %v3623, %v3622
      %v3649 = vpack.c.b16 %v3625, %v3624
      %v3650 = vpack.c.b16 %v3627, %v3626
      %v3651 = vpack.c.b16 %v3629, %v3628
      %v3652 = vpack.c.b16 %v3631, %v3630
      %v3653 = vpack.c.b16 %v3633, %v3632
      %v3654 = vpack.c.b16 %v3635, %v3634
      %v3655 = vpack.c.b16 %v3637, %v3636
      %v3656 = vpack.c.b16 %v3639, %v3638
      %v3657 = vpack.c.b16 %v3641, %v3640
      %v3658 = vpack.c.b16 %v3643, %v3642
      %v3675 = vsel %vm3448, %v3582, 0
      %3677 = vmatpush.bf16.msra.mxu0 %v3651
      %3678 = vmatpush.bf16.msra.mxu0 %v3650
      %3679 = vmatpush.bf16.msra.mxu0 %v3649
      %3680 = vmatpush.bf16.msra.mxu0 %v3648
      %3681 = vmatpush.bf16.msra.mxu0 %v3647
      %3682 = vmatpush.bf16.msra.mxu0 %v3646
      %3683 = vmatpush.bf16.msra.mxu0 %v3645
      %3684 = vmatpush.bf16.msra.mxu0 %v3644
      %3685 = vmatmul.bf16.gmra.mxu0 %v3581
      %v3686 = vpop.f32.mrf.mxu0
      %v3687 = vadd.f32 %v3583, %v3686
      %v3688 = vpop.f32.mrf.mxu0
      %3689 = vdwg.mxu0
      %3690 = vmatpush.bf16.msra.mxu0 0
      %3691 = vmatpush.bf16.msra.mxu0 %v3658
      %3692 = vmatpush.bf16.msra.mxu0 %v3657
      %3693 = vmatpush.bf16.msra.mxu0 %v3656
      %3694 = vmatpush.bf16.msra.mxu0 %v3655
      %3695 = vmatpush.bf16.msra.mxu0 %v3654
      %3696 = vmatpush.bf16.msra.mxu0 %v3653
      %3697 = vmatpush.bf16.msra.mxu0 %v3652
      %3698 = vmatmul.bf16.gmra.mxu0 %v3675
      %v3699 = vpop.f32.mrf.mxu0
      %v3700 = vadd.f32 %v3687, %v3699
      %v3701 = vpop.f32.mrf.mxu0
      %3702 = vdwg.mxu0
      %v3703 = vld [vmem:[%s3] sm:$0xff]
      %v3704 = vld [vmem:[%s3 + $0x8] sm:$0xf]
      %v3705 = vld [vmem:[%s3 + $0xc] sm:$0xff]
      %v3706 = vld [vmem:[%s3 + $0x14] sm:$0xf]
      %v3707 = vld [vmem:[%s3 + $0x18] sm:$0xff]
      %v3708 = vld [vmem:[%s3 + $0x20] sm:$0xf]
      %v3709 = vld [vmem:[%s3 + $0x24] sm:$0xff]
      %v3710 = vld [vmem:[%s3 + $0x2c] sm:$0xf]
      %v3711 = vld [vmem:[%s3 + $0x30] sm:$0xff]
      %v3712 = vld [vmem:[%s3 + $0x38] sm:$0xf]
      %v3713 = vld [vmem:[%s3 + $0x3c] sm:$0xff]
      %v3714 = vld [vmem:[%s3 + $0x44] sm:$0xf]
      %v3715 = vld [vmem:[%s3 + $0x48] sm:$0xff]
      %v3716 = vld [vmem:[%s3 + $0x50] sm:$0xf]
      %v3717 = vpack.c.bf16 %v3700, %v3700
      %v3718 = vld [vmem:[%s7] ss:$8 sm:$0x7]
      %v3733 = vunpack.c.l.b16 %v3703
      %v3734 = vunpack.c.h.b16 %v3703
      %v3735 = vunpack.c.l.b16 %v3704
      %v3736 = vunpack.c.l.b16 %v3705
      %v3737 = vunpack.c.h.b16 %v3705
      %v3738 = vunpack.c.l.b16 %v3706
      %v3739 = vunpack.c.l.b16 %v3707
      %v3740 = vunpack.c.h.b16 %v3707
      %v3741 = vunpack.c.l.b16 %v3708
      %v3742 = vunpack.c.l.b16 %v3709
      %v3743 = vunpack.c.h.b16 %v3709
      %v3744 = vunpack.c.l.b16 %v3710
      %v3745 = vunpack.c.l.b16 %v3711
      %v3746 = vunpack.c.h.b16 %v3711
      %v3747 = vunpack.c.l.b16 %v3712
      %v3748 = vunpack.c.l.b16 %v3713
      %v3749 = vunpack.c.h.b16 %v3713
      %v3750 = vunpack.c.l.b16 %v3714
      %v3751 = vunpack.c.l.b16 %v3715
      %v3752 = vunpack.c.h.b16 %v3715
      %v3753 = vunpack.c.l.b16 %v3716
      %v3754 = vpack.c.b16 %v3736, %v3733
      %v3755 = vpack.c.b16 %v3737, %v3734
      %v3756 = vpack.c.b16 %v3738, %v3735
      %v3757 = vpack.c.b16 %v3742, %v3739
      %v3758 = vpack.c.b16 %v3743, %v3740
      %v3759 = vpack.c.b16 %v3744, %v3741
      %v3760 = vpack.c.b16 %v3748, %v3745
      %v3761 = vpack.c.b16 %v3749, %v3746
      %v3762 = vpack.c.b16 %v3750, %v3747
      %v3763 = vpack.c.b16 %v3751, %v3751
      %v3764 = vpack.c.b16 %v3752, %v3752
      %v3765 = vpack.c.b16 %v3753, %v3753
      %v3776 = vperm.slane %v3718, 0
      %v3777 = vperm.slane %v3718, 1
      %v3778 = vperm.slane %v3718, 2
      %vm3782 = vcmask 457728
      %v3784 = vsel %vm3782, %v3717, 0
      %v3787 = vsel %vm1409, %v3763, 0
      %v3790 = vsel %vm1409, %v3764, 0
      %v3793 = vsel %vm1409, %v3765, 0
      %3795 = vmatpush.bf16.msra.mxu0 0
      %3796 = vmatpush.bf16.msra.mxu0 0
      %3797 = vmatpush.bf16.msra.mxu0 0
      %3798 = vmatpush.bf16.msra.mxu0 0
      %3799 = vmatpush.bf16.msra.mxu0 %v3787
      %3800 = vmatpush.bf16.msra.mxu0 %v3760
      %3801 = vmatpush.bf16.msra.mxu0 %v3757
      %3802 = vmatpush.bf16.msra.mxu0 %v3754
      %3803 = vmatmul.bf16.gmra.mxu0 %v3784
      %v3804 = vpop.f32.mrf.mxu0
      %v3805 = vadd.f32 %v3776, %v3804
      %v3806 = vpop.f32.mrf.mxu0
      %3807 = vdwg.mxu0
      %3808 = vmatpush.bf16.msra.mxu0 0
      %3809 = vmatpush.bf16.msra.mxu0 0
      %3810 = vmatpush.bf16.msra.mxu0 0
      %3811 = vmatpush.bf16.msra.mxu0 0
      %3812 = vmatpush.bf16.msra.mxu0 %v3790
      %3813 = vmatpush.bf16.msra.mxu0 %v3761
      %3814 = vmatpush.bf16.msra.mxu0 %v3758
      %3815 = vmatpush.bf16.msra.mxu0 %v3755
      %3816 = vmatmul.bf16.gmra.mxu0 %v3784
      %v3817 = vpop.f32.mrf.mxu0
      %v3818 = vadd.f32 %v3777, %v3817
      %v3819 = vpop.f32.mrf.mxu0
      %3820 = vdwg.mxu0
      %3821 = vmatpush.bf16.msra.mxu0 0
      %3822 = vmatpush.bf16.msra.mxu0 0
      %3823 = vmatpush.bf16.msra.mxu0 0
      %3824 = vmatpush.bf16.msra.mxu0 0
      %3825 = vmatpush.bf16.msra.mxu0 %v3793
      %3826 = vmatpush.bf16.msra.mxu0 %v3762
      %3827 = vmatpush.bf16.msra.mxu0 %v3759
      %3828 = vmatpush.bf16.msra.mxu0 %v3756
      %3829 = vmatmul.bf16.gmra.mxu0 %v3784
      %v3830 = vpop.f32.mrf.mxu0
      %v3831 = vadd.f32 %v3778, %v3830
      %v3832 = vpop.f32.mrf.mxu0
      %3833 = vdwg.mxu0
      %v3834 = vsub.f32 0.0, %v3805
      %v3835 = vsub.f32 0.0, %v3818
      %v3836 = vsub.f32 0.0, %v3831
      %v3837 = vmul.f32 %v3834, 1.442695
      %v3838 = vpow.pop %v3837
      %v3839 = vmul.f32 %v3835, 1.442695
      %v3840 = vpow.pop %v3839
      %v3841 = vmul.f32 %v3836, 1.442695
      %v3842 = vpow.pop %v3841
      %v3843 = vadd.f32 %v3838, 1.0
      %v3844 = vadd.f32 %v3840, 1.0
      %v3845 = vadd.f32 %v3842, 1.0
      %v3846 = vrcp.pop %v3843
      %v3847 = vrcp.pop %v3844
      %v3848 = vrcp.pop %v3845
      %v3849 = vmul.f32 %v3805, %v3846
      %v3850 = vmul.f32 %v3818, %v3847
      %v3851 = vmul.f32 %v3831, %v3848
      %v3852 = vld [vmem:[%s3 + $0x54] sm:$0x11]
      %v3853 = vld [vmem:[%s3 + $0x5c] sm:$0x1]
      %v3854 = vunpack.c.l.bf16 %v3852
      %v3855 = vunpack.c.h.bf16 %v3852
      %v3856 = vunpack.c.l.bf16 %v3853
      %v3857 = vmul.f32 %v3849, %v3854
      %v3858 = vmul.f32 %v3850, %v3855
      %v3859 = vmul.f32 %v3851, %v3856
      %s3860 = scalar_lea.vmem %s7, 24
      %v3861 = vld [vmem:[%s3860] ss:$8 sm:$0x7]
      %v3863 = vperm.slane %v3861, 0
      %v3864 = vperm.slane %v3861, 1
      %v3865 = vperm.slane %v3861, 2
      %v3869 = vadd.f32 %v3857, %v3863
      %v3870 = vadd.f32 %v3858, %v3864
      %v3871 = vadd.f32 %v3859, %v3865
      %v3872 = vsub.f32 0.0, %v3869
      %v3873 = vsub.f32 0.0, %v3870
      %v3874 = vsub.f32 0.0, %v3871
      %v3875 = vmul.f32 %v3872, 1.442695
      %v3876 = vpow.pop %v3875
      %v3877 = vmul.f32 %v3873, 1.442695
      %v3878 = vpow.pop %v3877
      %v3879 = vmul.f32 %v3874, 1.442695
      %v3880 = vpow.pop %v3879
      %v3881 = vadd.f32 %v3876, 1.0
      %v3882 = vadd.f32 %v3878, 1.0
      %v3883 = vadd.f32 %v3880, 1.0
      %v3884 = vrcp.pop %v3881
      %v3885 = vrcp.pop %v3882
      %v3886 = vrcp.pop %v3883
      %v3887 = vmul.f32 %v3869, %v3884
      %v3888 = vmul.f32 %v3870, %v3885
      %v3889 = vmul.f32 %v3871, %v3886
      %v3890 = vadd.f32 %v3887, 0.0
      %v3891 = vadd.f32 %v3888, 0.0
      %v3892 = vadd.f32 %v3889, 0.0
      %v3893 = vld [vmem:[%s1 + $0x4cc] sm:$0xf]
      %v3894 = vld [vmem:[%s1 + $0x4d0] sm:$0xf]
      %v3895 = vld [vmem:[%s1 + $0x4d4] sm:$0xf]
      %v3896 = vld [vmem:[%s1 + $0x4d8] sm:$0xf]
      %v3897 = vld [vmem:[%s1 + $0x4dc] sm:$0xf]
      %v3898 = vld [vmem:[%s1 + $0x4e0] sm:$0xf]
      %v3899 = vld [vmem:[%s1 + $0x4e4] sm:$0xf]
      %v3900 = vld [vmem:[%s1 + $0x4e8] sm:$0xf]
      %v3901 = vld [vmem:[%s1 + $0x4ec] sm:$0xf]
      %v3902 = vld [vmem:[%s1 + $0x4f0] sm:$0xf]
      %v3903 = vld [vmem:[%s1 + $0x4f4] sm:$0xf]
      %v3904 = vld [vmem:[%s1 + $0x4f8] sm:$0xf]
      %v3905 = vld [vmem:[%s1 + $0x4fc] sm:$0xf]
      %v3906 = vld [vmem:[%s1 + $0x500] sm:$0xf]
      %v3907 = vld [vmem:[%s1 + $0x504] sm:$0xf]
      %v3908 = vld [vmem:[%s1 + $0x508] sm:$0xf]
      %v3909 = vld [vmem:[%s1 + $0x50c] sm:$0xf]
      %v3910 = vld [vmem:[%s1 + $0x510] sm:$0xf]
      %v3911 = vld [vmem:[%s1 + $0x514] sm:$0xf]
      %v3912 = vld [vmem:[%s1 + $0x518] sm:$0xf]
      %v3913 = vld [vmem:[%s1 + $0x51c] sm:$0xf]
      %v3914 = vld [vmem:[%s1 + $0x520] sm:$0xf]
      %v3915 = vld [vmem:[%s1 + $0x524] sm:$0xf]
      %v3916 = vld [vmem:[%s1 + $0x528] sm:$0xf]
      %v3917 = vld [vmem:[%s1 + $0x52c] sm:$0xf]
      %v3918 = vld [vmem:[%s1 + $0x530] sm:$0xf]
      %v3919 = vld [vmem:[%s1 + $0x534] sm:$0xf]
      %v3920 = vld [vmem:[%s1 + $0x538] sm:$0xf]
      %v3921 = vld [vmem:[%s1 + $0x53c] sm:$0xf]
      %v3922 = vld [vmem:[%s1 + $0x540] sm:$0xf]
      %v3923 = vld [vmem:[%s1 + $0x544] sm:$0xf]
      %v3924 = vld [vmem:[%s1 + $0x548] sm:$0xf]
      %v3925 = vld [vmem:[%s1 + $0x54c] sm:$0xf]
      %v3926 = vld [vmem:[%s1 + $0x550] sm:$0xf]
      %v3927 = vld [vmem:[%s1 + $0x554] sm:$0xf]
      %v3928 = vld [vmem:[%s1 + $0x558] sm:$0xf]
      %v3929 = vld [vmem:[%s1 + $0x55c] sm:$0xf]
      %v3930 = vld [vmem:[%s1 + $0x560] sm:$0xf]
      %v3931 = vld [vmem:[%s1 + $0x564] sm:$0xf]
      %v3932 = vld [vmem:[%s1 + $0x568] sm:$0xf]
      %v3933 = vld [vmem:[%s1 + $0x56c] sm:$0xf]
      %v3934 = vld [vmem:[%s1 + $0x570] sm:$0xf]
      %v3935 = vpack.c.bf16 %v3890, %v3890
      %v3936 = vpack.c.bf16 %v3891, %v3891
      %v3937 = vpack.c.bf16 %v3892, %v3892
      %v3938 = vld [vmem:[%s5 + $0xc0] sm:$0x1]
      %v3981 = vunpack.c.l.b16 %v3893
      %v3982 = vunpack.c.l.b16 %v3894
      %v3983 = vunpack.c.l.b16 %v3895
      %v3984 = vunpack.c.l.b16 %v3896
      %v3985 = vunpack.c.l.b16 %v3897
      %v3986 = vunpack.c.l.b16 %v3898
      %v3987 = vunpack.c.l.b16 %v3899
      %v3988 = vunpack.c.l.b16 %v3900
      %v3989 = vunpack.c.l.b16 %v3901
      %v3990 = vunpack.c.l.b16 %v3902
      %v3991 = vunpack.c.l.b16 %v3903
      %v3992 = vunpack.c.l.b16 %v3904
      %v3993 = vunpack.c.l.b16 %v3905
      %v3994 = vunpack.c.l.b16 %v3906
      %v3995 = vunpack.c.l.b16 %v3907
      %v3996 = vunpack.c.l.b16 %v3908
      %v3997 = vunpack.c.l.b16 %v3909
      %v3998 = vunpack.c.l.b16 %v3910
      %v3999 = vunpack.c.l.b16 %v3911
      %v4000 = vunpack.c.l.b16 %v3912
      %v4001 = vunpack.c.l.b16 %v3913
      %v4002 = vunpack.c.l.b16 %v3914
      %v4003 = vunpack.c.l.b16 %v3915
      %v4004 = vunpack.c.l.b16 %v3916
      %v4005 = vunpack.c.l.b16 %v3917
      %v4006 = vunpack.c.l.b16 %v3918
      %v4007 = vunpack.c.l.b16 %v3919
      %v4008 = vunpack.c.l.b16 %v3920
      %v4009 = vunpack.c.l.b16 %v3921
      %v4010 = vunpack.c.l.b16 %v3922
      %v4011 = vunpack.c.l.b16 %v3923
      %v4012 = vunpack.c.l.b16 %v3924
      %v4013 = vunpack.c.l.b16 %v3925
      %v4014 = vunpack.c.l.b16 %v3926
      %v4015 = vunpack.c.l.b16 %v3927
      %v4016 = vunpack.c.l.b16 %v3928
      %v4017 = vunpack.c.l.b16 %v3929
      %v4018 = vunpack.c.l.b16 %v3930
      %v4019 = vunpack.c.l.b16 %v3931
      %v4020 = vunpack.c.l.b16 %v3932
      %v4021 = vunpack.c.l.b16 %v3933
      %v4022 = vunpack.c.l.b16 %v3934
      %v4023 = vpack.c.b16 %v3982, %v3981
      %v4024 = vpack.c.b16 %v3984, %v3983
      %v4025 = vpack.c.b16 %v3986, %v3985
      %v4026 = vpack.c.b16 %v3988, %v3987
      %v4027 = vpack.c.b16 %v3990, %v3989
      %v4028 = vpack.c.b16 %v3992, %v3991
      %v4029 = vpack.c.b16 %v3994, %v3993
      %v4030 = vpack.c.b16 %v3996, %v3995
      %v4031 = vpack.c.b16 %v3998, %v3997
      %v4032 = vpack.c.b16 %v4000, %v3999
      %v4033 = vpack.c.b16 %v4002, %v4001
      %v4034 = vpack.c.b16 %v4004, %v4003
      %v4035 = vpack.c.b16 %v4006, %v4005
      %v4036 = vpack.c.b16 %v4008, %v4007
      %v4037 = vpack.c.b16 %v4010, %v4009
      %v4038 = vpack.c.b16 %v4012, %v4011
      %v4039 = vpack.c.b16 %v4014, %v4013
      %v4040 = vpack.c.b16 %v4016, %v4015
      %v4041 = vpack.c.b16 %v4018, %v4017
      %v4042 = vpack.c.b16 %v4020, %v4019
      %v4043 = vpack.c.b16 %v4022, %v4021
      %vm4065 = vcmask 654336
      %v4067 = vsel %vm4065, %v3937, 0
      %4069 = vmatpush.bf16.msra.mxu0 %v4030
      %4070 = vmatpush.bf16.msra.mxu0 %v4029
      %4071 = vmatpush.bf16.msra.mxu0 %v4028
      %4072 = vmatpush.bf16.msra.mxu0 %v4027
      %4073 = vmatpush.bf16.msra.mxu0 %v4026
      %4074 = vmatpush.bf16.msra.mxu0 %v4025
      %4075 = vmatpush.bf16.msra.mxu0 %v4024
      %4076 = vmatpush.bf16.msra.mxu0 %v4023
      %4077 = vmatmul.bf16.gmra.mxu0 %v3935
      %v4078 = vpop.f32.mrf.mxu0
      %v4079 = vadd.f32 %v3938, %v4078
      %v4080 = vpop.f32.mrf.mxu0
      %4081 = vdwg.mxu0
      %4082 = vmatpush.bf16.msra.mxu0 %v4038
      %4083 = vmatpush.bf16.msra.mxu0 %v4037
      %4084 = vmatpush.bf16.msra.mxu0 %v4036
      %4085 = vmatpush.bf16.msra.mxu0 %v4035
      %4086 = vmatpush.bf16.msra.mxu0 %v4034
      %4087 = vmatpush.bf16.msra.mxu0 %v4033
      %4088 = vmatpush.bf16.msra.mxu0 %v4032
      %4089 = vmatpush.bf16.msra.mxu0 %v4031
      %4090 = vmatmul.bf16.gmra.mxu0 %v3936
      %v4091 = vpop.f32.mrf.mxu0
      %v4092 = vadd.f32 %v4079, %v4091
      %v4093 = vpop.f32.mrf.mxu0
      %4094 = vdwg.mxu0
      %4095 = vmatpush.bf16.msra.mxu0 0
      %4096 = vmatpush.bf16.msra.mxu0 0
      %4097 = vmatpush.bf16.msra.mxu0 0
      %4098 = vmatpush.bf16.msra.mxu0 %v4043
      %4099 = vmatpush.bf16.msra.mxu0 %v4042
      %4100 = vmatpush.bf16.msra.mxu0 %v4041
      %4101 = vmatpush.bf16.msra.mxu0 %v4040
      %4102 = vmatpush.bf16.msra.mxu0 %v4039
      %4103 = vmatmul.bf16.gmra.mxu0 %v4067
      %v4104 = vpop.f32.mrf.mxu0
      %v4105 = vadd.f32 %v4092, %v4104
      %v4106 = vpop.f32.mrf.mxu0
      %4107 = vdwg.mxu0
      %v4108 = vsub.f32 0.0, %v4105
      %v4109 = vmul.f32 %v4108, 1.442695
      %v4110 = vpow.pop %v4109
      %v4111 = vadd.f32 %v4110, 1.0
      %v4112 = vrcp.pop %v4111
      %v4113 = vmul.f32 %v4105, %v4112
      %v4114 = vld [vmem:[%s3 + $0x60] sm:$0xff]
      %v4115 = vld [vmem:[%s3 + $0x68] sm:$0xf]
      %v4116 = vld [vmem:[%s3 + $0x6c] sm:$0x77]
      %v4117 = vld [vmem:[%s3 + $0x74] sm:$0x7]
      %v4118 = vpack.c.bf16 %v4113, %v4113
      %s4119 = scalar_lea.vmem %s7, 48
      %v4120 = vld [vmem:[%s4119] ss:$8 sm:$0x7]
      %v4125 = vunpack.c.l.b16 %v4114
      %v4126 = vunpack.c.h.b16 %v4114
      %v4127 = vunpack.c.l.b16 %v4115
      %v4128 = vunpack.c.l.b16 %v4116
      %v4129 = vunpack.c.h.b16 %v4116
      %v4130 = vunpack.c.l.b16 %v4117
      %v4131 = vpack.c.b16 %v4128, %v4125
      %v4132 = vpack.c.b16 %v4129, %v4126
      %v4133 = vpack.c.b16 %v4130, %v4127
      %v4135 = vperm.slane %v4120, 0
      %v4136 = vperm.slane %v4120, 1
      %v4137 = vperm.slane %v4120, 2
      %vm4141 = vcmask 113664
      %v4143 = vsel %vm4141, %v4118, 0
      %vm4145 = vcmask 1046528
      %v4147 = vsel %vm4145, %v4131, 0
      %v4150 = vsel %vm4145, %v4132, 0
      %v4153 = vsel %vm4145, %v4133, 0
      %4155 = vmatpush.bf16.msra.mxu0 0
      %4156 = vmatpush.bf16.msra.mxu0 0
      %4157 = vmatpush.bf16.msra.mxu0 0
      %4158 = vmatpush.bf16.msra.mxu0 0
      %4159 = vmatpush.bf16.msra.mxu0 0
      %4160 = vmatpush.bf16.msra.mxu0 0
      %4161 = vmatpush.bf16.msra.mxu0 0
      %4162 = vmatpush.bf16.msra.mxu0 %v4147
      %4163 = vmatmul.bf16.gmra.mxu0 %v4143
      %v4164 = vpop.f32.mrf.mxu0
      %v4165 = vadd.f32 %v4135, %v4164
      %v4166 = vpop.f32.mrf.mxu0
      %4167 = vdwg.mxu0
      %4168 = vmatpush.bf16.msra.mxu0 0
      %4169 = vmatpush.bf16.msra.mxu0 0
      %4170 = vmatpush.bf16.msra.mxu0 0
      %4171 = vmatpush.bf16.msra.mxu0 0
      %4172 = vmatpush.bf16.msra.mxu0 0
      %4173 = vmatpush.bf16.msra.mxu0 0
      %4174 = vmatpush.bf16.msra.mxu0 0
      %4175 = vmatpush.bf16.msra.mxu0 %v4150
      %4176 = vmatmul.bf16.gmra.mxu0 %v4143
      %v4177 = vpop.f32.mrf.mxu0
      %v4178 = vadd.f32 %v4136, %v4177
      %v4179 = vpop.f32.mrf.mxu0
      %4180 = vdwg.mxu0
      %4181 = vmatpush.bf16.msra.mxu0 0
      %4182 = vmatpush.bf16.msra.mxu0 0
      %4183 = vmatpush.bf16.msra.mxu0 0
      %4184 = vmatpush.bf16.msra.mxu0 0
      %4185 = vmatpush.bf16.msra.mxu0 0
      %4186 = vmatpush.bf16.msra.mxu0 0
      %4187 = vmatpush.bf16.msra.mxu0 0
      %4188 = vmatpush.bf16.msra.mxu0 %v4153
      %4189 = vmatmul.bf16.gmra.mxu0 %v4143
      %v4190 = vpop.f32.mrf.mxu0
      %v4191 = vadd.f32 %v4137, %v4190
      %v4192 = vpop.f32.mrf.mxu0
      %4193 = vdwg.mxu0
      %v4194 = vsub.f32 0.0, %v4165
      %v4195 = vsub.f32 0.0, %v4178
      %v4196 = vsub.f32 0.0, %v4191
      %v4197 = vmul.f32 %v4194, 1.442695
      %v4198 = vpow.pop %v4197
      %v4199 = vmul.f32 %v4195, 1.442695
      %v4200 = vpow.pop %v4199
      %v4201 = vmul.f32 %v4196, 1.442695
      %v4202 = vpow.pop %v4201
      %v4203 = vadd.f32 %v4198, 1.0
      %v4204 = vadd.f32 %v4200, 1.0
      %v4205 = vadd.f32 %v4202, 1.0
      %v4206 = vrcp.pop %v4203
      %v4207 = vrcp.pop %v4204
      %v4208 = vrcp.pop %v4205
      %v4209 = vmul.f32 %v3887, %v4206
      %v4210 = vmul.f32 %v3888, %v4207
      %v4211 = vmul.f32 %v3889, %v4208
      %v4212 = vld [vmem:[%s1 + $0x574] sm:$0xf]
      %v4213 = vld [vmem:[%s1 + $0x578] sm:$0xf]
      %v4214 = vld [vmem:[%s1 + $0x57c] sm:$0xf]
      %v4215 = vld [vmem:[%s1 + $0x580] sm:$0xf]
      %v4216 = vld [vmem:[%s1 + $0x584] sm:$0xf]
      %v4217 = vld [vmem:[%s1 + $0x588] sm:$0xf]
      %v4218 = vld [vmem:[%s1 + $0x58c] sm:$0xf]
      %v4219 = vld [vmem:[%s1 + $0x590] sm:$0xf]
      %v4220 = vld [vmem:[%s1 + $0x594] sm:$0xf]
      %v4221 = vld [vmem:[%s1 + $0x598] sm:$0xf]
      %v4222 = vld [vmem:[%s1 + $0x59c] sm:$0xf]
      %v4223 = vld [vmem:[%s1 + $0x5a0] sm:$0xf]
      %v4224 = vld [vmem:[%s1 + $0x5a4] sm:$0xf]
      %v4225 = vld [vmem:[%s1 + $0x5a8] sm:$0xf]
      %v4226 = vld [vmem:[%s1 + $0x5ac] sm:$0xf]
      %v4227 = vld [vmem:[%s1 + $0x5b0] sm:$0xf]
      %v4228 = vld [vmem:[%s1 + $0x5b4] sm:$0xf]
      %v4229 = vld [vmem:[%s1 + $0x5b8] sm:$0xf]
      %v4230 = vld [vmem:[%s1 + $0x5bc] sm:$0xf]
      %v4231 = vld [vmem:[%s1 + $0x5c0] sm:$0xf]
      %v4232 = vld [vmem:[%s1 + $0x5c4] sm:$0xf]
      %v4233 = vld [vmem:[%s1 + $0x5c8] sm:$0xf]
      %v4234 = vld [vmem:[%s1 + $0x5cc] sm:$0xf]
      %v4235 = vld [vmem:[%s1 + $0x5d0] sm:$0xf]
      %v4236 = vld [vmem:[%s1 + $0x5d4] sm:$0xf]
      %v4237 = vld [vmem:[%s1 + $0x5d8] sm:$0xf]
      %v4238 = vld [vmem:[%s1 + $0x5dc] sm:$0xf]
      %v4239 = vld [vmem:[%s1 + $0x5e0] sm:$0xf]
      %v4240 = vld [vmem:[%s1 + $0x5e4] sm:$0xf]
      %v4241 = vld [vmem:[%s1 + $0x5e8] sm:$0xf]
      %v4242 = vld [vmem:[%s1 + $0x5ec] sm:$0xf]
      %v4243 = vld [vmem:[%s1 + $0x5f0] sm:$0xf]
      %v4244 = vld [vmem:[%s1 + $0x5f4] sm:$0xf]
      %v4245 = vld [vmem:[%s1 + $0x5f8] sm:$0xf]
      %v4246 = vld [vmem:[%s1 + $0x5fc] sm:$0xf]
      %v4247 = vld [vmem:[%s1 + $0x600] sm:$0xf]
      %v4248 = vld [vmem:[%s1 + $0x604] sm:$0xf]
      %v4249 = vld [vmem:[%s1 + $0x608] sm:$0xf]
      %v4250 = vld [vmem:[%s1 + $0x60c] sm:$0xf]
      %v4251 = vld [vmem:[%s1 + $0x610] sm:$0xf]
      %v4252 = vld [vmem:[%s1 + $0x614] sm:$0xf]
      %v4253 = vld [vmem:[%s1 + $0x618] sm:$0xf]
      %v4254 = vpack.c.bf16 %v4209, %v4209
      %v4255 = vpack.c.bf16 %v4210, %v4210
      %v4256 = vpack.c.bf16 %v4211, %v4211
      %v4257 = vld [vmem:[%s5 + $0xc8] sm:$0x1]
      %v4300 = vunpack.c.l.b16 %v4212
      %v4301 = vunpack.c.l.b16 %v4213
      %v4302 = vunpack.c.l.b16 %v4214
      %v4303 = vunpack.c.l.b16 %v4215
      %v4304 = vunpack.c.l.b16 %v4216
      %v4305 = vunpack.c.l.b16 %v4217
      %v4306 = vunpack.c.l.b16 %v4218
      %v4307 = vunpack.c.l.b16 %v4219
      %v4308 = vunpack.c.l.b16 %v4220
      %v4309 = vunpack.c.l.b16 %v4221
      %v4310 = vunpack.c.l.b16 %v4222
      %v4311 = vunpack.c.l.b16 %v4223
      %v4312 = vunpack.c.l.b16 %v4224
      %v4313 = vunpack.c.l.b16 %v4225
      %v4314 = vunpack.c.l.b16 %v4226
      %v4315 = vunpack.c.l.b16 %v4227
      %v4316 = vunpack.c.l.b16 %v4228
      %v4317 = vunpack.c.l.b16 %v4229
      %v4318 = vunpack.c.l.b16 %v4230
      %v4319 = vunpack.c.l.b16 %v4231
      %v4320 = vunpack.c.l.b16 %v4232
      %v4321 = vunpack.c.l.b16 %v4233
      %v4322 = vunpack.c.l.b16 %v4234
      %v4323 = vunpack.c.l.b16 %v4235
      %v4324 = vunpack.c.l.b16 %v4236
      %v4325 = vunpack.c.l.b16 %v4237
      %v4326 = vunpack.c.l.b16 %v4238
      %v4327 = vunpack.c.l.b16 %v4239
      %v4328 = vunpack.c.l.b16 %v4240
      %v4329 = vunpack.c.l.b16 %v4241
      %v4330 = vunpack.c.l.b16 %v4242
      %v4331 = vunpack.c.l.b16 %v4243
      %v4332 = vunpack.c.l.b16 %v4244
      %v4333 = vunpack.c.l.b16 %v4245
      %v4334 = vunpack.c.l.b16 %v4246
      %v4335 = vunpack.c.l.b16 %v4247
      %v4336 = vunpack.c.l.b16 %v4248
      %v4337 = vunpack.c.l.b16 %v4249
      %v4338 = vunpack.c.l.b16 %v4250
      %v4339 = vunpack.c.l.b16 %v4251
      %v4340 = vunpack.c.l.b16 %v4252
      %v4341 = vunpack.c.l.b16 %v4253
      %v4342 = vpack.c.b16 %v4301, %v4300
      %v4343 = vpack.c.b16 %v4303, %v4302
      %v4344 = vpack.c.b16 %v4305, %v4304
      %v4345 = vpack.c.b16 %v4307, %v4306
      %v4346 = vpack.c.b16 %v4309, %v4308
      %v4347 = vpack.c.b16 %v4311, %v4310
      %v4348 = vpack.c.b16 %v4313, %v4312
      %v4349 = vpack.c.b16 %v4315, %v4314
      %v4350 = vpack.c.b16 %v4317, %v4316
      %v4351 = vpack.c.b16 %v4319, %v4318
      %v4352 = vpack.c.b16 %v4321, %v4320
      %v4353 = vpack.c.b16 %v4323, %v4322
      %v4354 = vpack.c.b16 %v4325, %v4324
      %v4355 = vpack.c.b16 %v4327, %v4326
      %v4356 = vpack.c.b16 %v4329, %v4328
      %v4357 = vpack.c.b16 %v4331, %v4330
      %v4358 = vpack.c.b16 %v4333, %v4332
      %v4359 = vpack.c.b16 %v4335, %v4334
      %v4360 = vpack.c.b16 %v4337, %v4336
      %v4361 = vpack.c.b16 %v4339, %v4338
      %v4362 = vpack.c.b16 %v4341, %v4340
      %v4385 = vsel %vm4065, %v4256, 0
      %4387 = vmatpush.bf16.msra.mxu0 %v4349
      %4388 = vmatpush.bf16.msra.mxu0 %v4348
      %4389 = vmatpush.bf16.msra.mxu0 %v4347
      %4390 = vmatpush.bf16.msra.mxu0 %v4346
      %4391 = vmatpush.bf16.msra.mxu0 %v4345
      %4392 = vmatpush.bf16.msra.mxu0 %v4344
      %4393 = vmatpush.bf16.msra.mxu0 %v4343
      %4394 = vmatpush.bf16.msra.mxu0 %v4342
      %4395 = vmatmul.bf16.gmra.mxu0 %v4254
      %v4396 = vpop.f32.mrf.mxu0
      %v4397 = vadd.f32 %v4257, %v4396
      %v4398 = vpop.f32.mrf.mxu0
      %4399 = vdwg.mxu0
      %4400 = vmatpush.bf16.msra.mxu0 %v4357
      %4401 = vmatpush.bf16.msra.mxu0 %v4356
      %4402 = vmatpush.bf16.msra.mxu0 %v4355
      %4403 = vmatpush.bf16.msra.mxu0 %v4354
      %4404 = vmatpush.bf16.msra.mxu0 %v4353
      %4405 = vmatpush.bf16.msra.mxu0 %v4352
      %4406 = vmatpush.bf16.msra.mxu0 %v4351
      %4407 = vmatpush.bf16.msra.mxu0 %v4350
      %4408 = vmatmul.bf16.gmra.mxu0 %v4255
      %v4409 = vpop.f32.mrf.mxu0
      %v4410 = vadd.f32 %v4397, %v4409
      %v4411 = vpop.f32.mrf.mxu0
      %4412 = vdwg.mxu0
      %4413 = vmatpush.bf16.msra.mxu0 0
      %4414 = vmatpush.bf16.msra.mxu0 0
      %4415 = vmatpush.bf16.msra.mxu0 0
      %4416 = vmatpush.bf16.msra.mxu0 %v4362
      %4417 = vmatpush.bf16.msra.mxu0 %v4361
      %4418 = vmatpush.bf16.msra.mxu0 %v4360
      %4419 = vmatpush.bf16.msra.mxu0 %v4359
      %4420 = vmatpush.bf16.msra.mxu0 %v4358
      %4421 = vmatmul.bf16.gmra.mxu0 %v4385
      %v4422 = vpop.f32.mrf.mxu0
      %v4423 = vadd.f32 %v4410, %v4422
      %v4424 = vpop.f32.mrf.mxu0
      %4425 = vdwg.mxu0
      %v4426 = vld [vmem:[%s4] sm:$0xff]
      %v4427 = vld [vmem:[%s4 + $0x8] sm:$0xff]
      %v4428 = vld [vmem:[%s4 + $0x10] sm:$0xf]
      %v4429 = vld [vmem:[%s4 + $0x14] sm:$0xff]
      %v4430 = vld [vmem:[%s4 + $0x1c] sm:$0xff]
      %v4431 = vld [vmem:[%s4 + $0x24] sm:$0xf]
      %v4432 = vld [vmem:[%s4 + $0x28] sm:$0xff]
      %v4433 = vld [vmem:[%s4 + $0x30] sm:$0xff]
      %v4434 = vld [vmem:[%s4 + $0x38] sm:$0xf]
      %v4435 = vld [vmem:[%s4 + $0x3c] sm:$0xff]
      %v4436 = vld [vmem:[%s4 + $0x44] sm:$0xff]
      %v4437 = vld [vmem:[%s4 + $0x4c] sm:$0xf]
      %v4438 = vld [vmem:[%s4 + $0x50] sm:$0xff]
      %v4439 = vld [vmem:[%s4 + $0x58] sm:$0xff]
      %v4440 = vld [vmem:[%s4 + $0x60] sm:$0xf]
      %v4441 = vld [vmem:[%s4 + $0x64] sm:$0xff]
      %v4442 = vld [vmem:[%s4 + $0x6c] sm:$0xff]
      %v4443 = vld [vmem:[%s4 + $0x74] sm:$0xf]
      %v4444 = vld [vmem:[%s4 + $0x78] sm:$0xff]
      %v4445 = vld [vmem:[%s4 + $0x80] sm:$0xff]
      %v4446 = vld [vmem:[%s4 + $0x88] sm:$0xf]
      %v4447 = vld [vmem:[%s4 + $0x8c] sm:$0xff]
      %v4448 = vld [vmem:[%s4 + $0x94] sm:$0xff]
      %v4449 = vld [vmem:[%s4 + $0x9c] sm:$0xf]
      %v4450 = vld [vmem:[%s4 + $0xa0] sm:$0xff]
      %v4451 = vld [vmem:[%s4 + $0xa8] sm:$0xff]
      %v4452 = vld [vmem:[%s4 + $0xb0] sm:$0xf]
      %v4453 = vld [vmem:[%s4 + $0xb4] sm:$0xff]
      %v4454 = vld [vmem:[%s4 + $0xbc] sm:$0xff]
      %v4455 = vld [vmem:[%s4 + $0xc4] sm:$0xf]
      %v4456 = vld [vmem:[%s4 + $0xc8] sm:$0xff]
      %v4457 = vld [vmem:[%s4 + $0xd0] sm:$0xff]
      %v4458 = vld [vmem:[%s4 + $0xd8] sm:$0xf]
      %v4459 = vld [vmem:[%s4 + $0xdc] sm:$0xff]
      %v4460 = vld [vmem:[%s4 + $0xe4] sm:$0xff]
      %v4461 = vld [vmem:[%s4 + $0xec] sm:$0xf]
      %v4462 = vpack.c.bf16 %v4423, %v4423
      %v4463 = vld [vmem:[%s8] ss:$8 sm:$0xf]
      %v4464 = vld [vmem:[%s8] ss:$8 sm:$0x10]
      %v4465 = vor.u32 %v4463, %v4464
      %v4502 = vunpack.c.l.b16 %v4426
      %v4503 = vunpack.c.h.b16 %v4426
      %v4504 = vunpack.c.l.b16 %v4427
      %v4505 = vunpack.c.h.b16 %v4427
      %v4506 = vunpack.c.l.b16 %v4428
      %v4507 = vunpack.c.l.b16 %v4429
      %v4508 = vunpack.c.h.b16 %v4429
      %v4509 = vunpack.c.l.b16 %v4430
      %v4510 = vunpack.c.h.b16 %v4430
      %v4511 = vunpack.c.l.b16 %v4431
      %v4512 = vunpack.c.l.b16 %v4432
      %v4513 = vunpack.c.h.b16 %v4432
      %v4514 = vunpack.c.l.b16 %v4433
      %v4515 = vunpack.c.h.b16 %v4433
      %v4516 = vunpack.c.l.b16 %v4434
      %v4517 = vunpack.c.l.b16 %v4435
      %v4518 = vunpack.c.h.b16 %v4435
      %v4519 = vunpack.c.l.b16 %v4436
      %v4520 = vunpack.c.h.b16 %v4436
      %v4521 = vunpack.c.l.b16 %v4437
      %v4522 = vunpack.c.l.b16 %v4438
      %v4523 = vunpack.c.h.b16 %v4438
      %v4524 = vunpack.c.l.b16 %v4439
      %v4525 = vunpack.c.h.b16 %v4439
      %v4526 = vunpack.c.l.b16 %v4440
      %v4527 = vunpack.c.l.b16 %v4441
      %v4528 = vunpack.c.h.b16 %v4441
      %v4529 = vunpack.c.l.b16 %v4442
      %v4530 = vunpack.c.h.b16 %v4442
      %v4531 = vunpack.c.l.b16 %v4443
      %v4532 = vunpack.c.l.b16 %v4444
      %v4533 = vunpack.c.h.b16 %v4444
      %v4534 = vunpack.c.l.b16 %v4445
      %v4535 = vunpack.c.h.b16 %v4445
      %v4536 = vunpack.c.l.b16 %v4446
      %v4537 = vunpack.c.l.b16 %v4447
      %v4538 = vunpack.c.h.b16 %v4447
      %v4539 = vunpack.c.l.b16 %v4448
      %v4540 = vunpack.c.h.b16 %v4448
      %v4541 = vunpack.c.l.b16 %v4449
      %v4542 = vunpack.c.l.b16 %v4450
      %v4543 = vunpack.c.h.b16 %v4450
      %v4544 = vunpack.c.l.b16 %v4451
      %v4545 = vunpack.c.h.b16 %v4451
      %v4546 = vunpack.c.l.b16 %v4452
      %v4547 = vunpack.c.l.b16 %v4453
      %v4548 = vunpack.c.h.b16 %v4453
      %v4549 = vunpack.c.l.b16 %v4454
      %v4550 = vunpack.c.h.b16 %v4454
      %v4551 = vunpack.c.l.b16 %v4455
      %v4552 = vunpack.c.l.b16 %v4456
      %v4553 = vunpack.c.h.b16 %v4456
      %v4554 = vunpack.c.l.b16 %v4457
      %v4555 = vunpack.c.h.b16 %v4457
      %v4556 = vunpack.c.l.b16 %v4458
      %v4557 = vunpack.c.l.b16 %v4459
      %v4558 = vunpack.c.h.b16 %v4459
      %v4559 = vunpack.c.l.b16 %v4460
      %v4560 = vunpack.c.h.b16 %v4460
      %v4561 = vunpack.c.l.b16 %v4461
      %v4562 = vpack.c.b16 %v4507, %v4502
      %v4563 = vpack.c.b16 %v4508, %v4503
      %v4564 = vpack.c.b16 %v4509, %v4504
      %v4565 = vpack.c.b16 %v4510, %v4505
      %v4566 = vpack.c.b16 %v4511, %v4506
      %v4567 = vpack.c.b16 %v4517, %v4512
      %v4568 = vpack.c.b16 %v4518, %v4513
      %v4569 = vpack.c.b16 %v4519, %v4514
      %v4570 = vpack.c.b16 %v4520, %v4515
      %v4571 = vpack.c.b16 %v4521, %v4516
      %v4572 = vpack.c.b16 %v4527, %v4522
      %v4573 = vpack.c.b16 %v4528, %v4523
      %v4574 = vpack.c.b16 %v4529, %v4524
      %v4575 = vpack.c.b16 %v4530, %v4525
      %v4576 = vpack.c.b16 %v4531, %v4526
      %v4577 = vpack.c.b16 %v4537, %v4532
      %v4578 = vpack.c.b16 %v4538, %v4533
      %v4579 = vpack.c.b16 %v4539, %v4534
      %v4580 = vpack.c.b16 %v4540, %v4535
      %v4581 = vpack.c.b16 %v4541, %v4536
      %v4582 = vpack.c.b16 %v4547, %v4542
      %v4583 = vpack.c.b16 %v4548, %v4543
      %v4584 = vpack.c.b16 %v4549, %v4544
      %v4585 = vpack.c.b16 %v4550, %v4545
      %v4586 = vpack.c.b16 %v4551, %v4546
      %v4587 = vpack.c.b16 %v4557, %v4552
      %v4588 = vpack.c.b16 %v4558, %v4553
      %v4589 = vpack.c.b16 %v4559, %v4554
      %v4590 = vpack.c.b16 %v4560, %v4555
      %v4591 = vpack.c.b16 %v4561, %v4556
      %v4623 = vperm.slane %v4465, 0
      %v4624 = vperm.slane %v4465, 1
      %v4625 = vperm.slane %v4465, 2
      %v4626 = vperm.slane %v4465, 3
      %v4627 = vperm.slane %v4465, 4
      %v4634 = vsel %vm2091, %v4462, 0
      %4636 = vmatpush.bf16.msra.mxu0 0
      %4637 = vmatpush.bf16.msra.mxu0 0
      %4638 = vmatpush.bf16.msra.mxu0 %v4587
      %4639 = vmatpush.bf16.msra.mxu0 %v4582
      %4640 = vmatpush.bf16.msra.mxu0 %v4577
      %4641 = vmatpush.bf16.msra.mxu0 %v4572
      %4642 = vmatpush.bf16.msra.mxu0 %v4567
      %4643 = vmatpush.bf16.msra.mxu0 %v4562
      %4644 = vmatmul.bf16.gmra.mxu0 %v4634
      %v4645 = vpop.f32.mrf.mxu0
      %v4646 = vadd.f32 %v4623, %v4645
      %v4647 = vpop.f32.mrf.mxu0
      %4648 = vdwg.mxu0
      %4649 = vmatpush.bf16.msra.mxu0 0
      %4650 = vmatpush.bf16.msra.mxu0 0
      %4651 = vmatpush.bf16.msra.mxu0 %v4588
      %4652 = vmatpush.bf16.msra.mxu0 %v4583
      %4653 = vmatpush.bf16.msra.mxu0 %v4578
      %4654 = vmatpush.bf16.msra.mxu0 %v4573
      %4655 = vmatpush.bf16.msra.mxu0 %v4568
      %4656 = vmatpush.bf16.msra.mxu0 %v4563
      %4657 = vmatmul.bf16.gmra.mxu0 %v4634
      %v4658 = vpop.f32.mrf.mxu0
      %v4659 = vadd.f32 %v4624, %v4658
      %v4660 = vpop.f32.mrf.mxu0
      %4661 = vdwg.mxu0
      %4662 = vmatpush.bf16.msra.mxu0 0
      %4663 = vmatpush.bf16.msra.mxu0 0
      %4664 = vmatpush.bf16.msra.mxu0 %v4589
      %4665 = vmatpush.bf16.msra.mxu0 %v4584
      %4666 = vmatpush.bf16.msra.mxu0 %v4579
      %4667 = vmatpush.bf16.msra.mxu0 %v4574
      %4668 = vmatpush.bf16.msra.mxu0 %v4569
      %4669 = vmatpush.bf16.msra.mxu0 %v4564
      %4670 = vmatmul.bf16.gmra.mxu0 %v4634
      %v4671 = vpop.f32.mrf.mxu0
      %v4672 = vadd.f32 %v4625, %v4671
      %v4673 = vpop.f32.mrf.mxu0
      %4674 = vdwg.mxu0
      %4675 = vmatpush.bf16.msra.mxu0 0
      %4676 = vmatpush.bf16.msra.mxu0 0
      %4677 = vmatpush.bf16.msra.mxu0 %v4590
      %4678 = vmatpush.bf16.msra.mxu0 %v4585
      %4679 = vmatpush.bf16.msra.mxu0 %v4580
      %4680 = vmatpush.bf16.msra.mxu0 %v4575
      %4681 = vmatpush.bf16.msra.mxu0 %v4570
      %4682 = vmatpush.bf16.msra.mxu0 %v4565
      %4683 = vmatmul.bf16.gmra.mxu0 %v4634
      %v4684 = vpop.f32.mrf.mxu0
      %v4685 = vadd.f32 %v4626, %v4684
      %v4686 = vpop.f32.mrf.mxu0
      %4687 = vdwg.mxu0
      %4688 = vmatpush.bf16.msra.mxu0 0
      %4689 = vmatpush.bf16.msra.mxu0 0
      %4690 = vmatpush.bf16.msra.mxu0 %v4591
      %4691 = vmatpush.bf16.msra.mxu0 %v4586
      %4692 = vmatpush.bf16.msra.mxu0 %v4581
      %4693 = vmatpush.bf16.msra.mxu0 %v4576
      %4694 = vmatpush.bf16.msra.mxu0 %v4571
      %4695 = vmatpush.bf16.msra.mxu0 %v4566
      %4696 = vmatmul.bf16.gmra.mxu0 %v4634
      %v4697 = vpop.f32.mrf.mxu0
      %v4698 = vadd.f32 %v4627, %v4697
      %v4699 = vpop.f32.mrf.mxu0
      %4700 = vdwg.mxu0
      %v4701 = vsub.f32 0.0, %v4646
      %v4702 = vsub.f32 0.0, %v4659
      %v4703 = vsub.f32 0.0, %v4672
      %v4704 = vsub.f32 0.0, %v4685
      %v4705 = vsub.f32 0.0, %v4698
      %v4706 = vmul.f32 %v4701, 1.442695
      %v4707 = vpow.pop %v4706
      %v4708 = vmul.f32 %v4702, 1.442695
      %v4709 = vpow.pop %v4708
      %v4710 = vmul.f32 %v4703, 1.442695
      %v4711 = vpow.pop %v4710
      %v4712 = vmul.f32 %v4704, 1.442695
      %v4713 = vpow.pop %v4712
      %v4714 = vmul.f32 %v4705, 1.442695
      %v4715 = vpow.pop %v4714
      %v4716 = vadd.f32 %v4707, 1.0
      %v4717 = vadd.f32 %v4709, 1.0
      %v4718 = vadd.f32 %v4711, 1.0
      %v4719 = vadd.f32 %v4713, 1.0
      %v4720 = vadd.f32 %v4715, 1.0
      %v4721 = vrcp.pop %v4716
      %v4722 = vrcp.pop %v4717
      %v4723 = vrcp.pop %v4718
      %v4724 = vrcp.pop %v4719
      %v4725 = vrcp.pop %v4720
      %v4726 = vmul.f32 %v4646, %v4721
      %v4727 = vmul.f32 %v4659, %v4722
      %v4728 = vmul.f32 %v4672, %v4723
      %v4729 = vmul.f32 %v4685, %v4724
      %v4730 = vmul.f32 %v4698, %v4725
      %v4731 = vld [vmem:[%s4 + $0xf0] sm:$0x11]
      %v4732 = vld [vmem:[%s4 + $0xf8] sm:$0x11]
      %v4733 = vld [vmem:[%s4 + $0x100] sm:$0x1]
      %v4734 = vunpack.c.l.bf16 %v4731
      %v4735 = vunpack.c.h.bf16 %v4731
      %v4736 = vunpack.c.l.bf16 %v4732
      %v4737 = vunpack.c.h.bf16 %v4732
      %v4738 = vunpack.c.l.bf16 %v4733
      %v4739 = vmul.f32 %v4726, %v4734
      %v4740 = vmul.f32 %v4727, %v4735
      %v4741 = vmul.f32 %v4728, %v4736
      %v4742 = vmul.f32 %v4729, %v4737
      %v4743 = vmul.f32 %v4730, %v4738
      %s4744 = scalar_lea.vmem %s8, 40
      %v4745 = vld [vmem:[%s4744] ss:$8 sm:$0xf]
      %v4746 = vld [vmem:[%s4744] ss:$8 sm:$0x10]
      %v4747 = vor.u32 %v4745, %v4746
      %v4749 = vperm.slane %v4747, 0
      %v4750 = vperm.slane %v4747, 1
      %v4751 = vperm.slane %v4747, 2
      %v4752 = vperm.slane %v4747, 3
      %v4753 = vperm.slane %v4747, 4
      %v4759 = vadd.f32 %v4739, %v4749
      %v4760 = vadd.f32 %v4740, %v4750
      %v4761 = vadd.f32 %v4741, %v4751
      %v4762 = vadd.f32 %v4742, %v4752
      %v4763 = vadd.f32 %v4743, %v4753
      %v4764 = vsub.f32 0.0, %v4759
      %v4765 = vsub.f32 0.0, %v4760
      %v4766 = vsub.f32 0.0, %v4761
      %v4767 = vsub.f32 0.0, %v4762
      %v4768 = vsub.f32 0.0, %v4763
      %v4769 = vmul.f32 %v4764, 1.442695
      %v4770 = vpow.pop %v4769
      %v4771 = vmul.f32 %v4765, 1.442695
      %v4772 = vpow.pop %v4771
      %v4773 = vmul.f32 %v4766, 1.442695
      %v4774 = vpow.pop %v4773
      %v4775 = vmul.f32 %v4767, 1.442695
      %v4776 = vpow.pop %v4775
      %v4777 = vmul.f32 %v4768, 1.442695
      %v4778 = vpow.pop %v4777
      %v4779 = vadd.f32 %v4770, 1.0
      %v4780 = vadd.f32 %v4772, 1.0
      %v4781 = vadd.f32 %v4774, 1.0
      %v4782 = vadd.f32 %v4776, 1.0
      %v4783 = vadd.f32 %v4778, 1.0
      %v4784 = vrcp.pop %v4779
      %v4785 = vrcp.pop %v4780
      %v4786 = vrcp.pop %v4781
      %v4787 = vrcp.pop %v4782
      %v4788 = vrcp.pop %v4783
      %v4789 = vmul.f32 %v4759, %v4784
      %v4790 = vmul.f32 %v4760, %v4785
      %v4791 = vmul.f32 %v4761, %v4786
      %v4792 = vmul.f32 %v4762, %v4787
      %v4793 = vmul.f32 %v4763, %v4788
      %v4794 = vadd.f32 %v4789, 0.0
      %v4795 = vadd.f32 %v4790, 0.0
      %v4796 = vadd.f32 %v4791, 0.0
      %v4797 = vadd.f32 %v4792, 0.0
      %v4798 = vadd.f32 %v4793, 0.0
      %v4799 = vld [vmem:[%s1 + $0x61c] sm:$0xf]
      %v4800 = vld [vmem:[%s1 + $0x620] sm:$0xf]
      %v4801 = vld [vmem:[%s1 + $0x624] sm:$0xf]
      %v4802 = vld [vmem:[%s1 + $0x628] sm:$0xf]
      %v4803 = vld [vmem:[%s1 + $0x62c] sm:$0xf]
      %v4804 = vld [vmem:[%s1 + $0x630] sm:$0xf]
      %v4805 = vld [vmem:[%s1 + $0x634] sm:$0xf]
      %v4806 = vld [vmem:[%s1 + $0x638] sm:$0xf]
      %v4807 = vld [vmem:[%s1 + $0x63c] sm:$0xf]
      %v4808 = vld [vmem:[%s1 + $0x640] sm:$0xf]
      %v4809 = vld [vmem:[%s1 + $0x644] sm:$0xf]
      %v4810 = vld [vmem:[%s1 + $0x648] sm:$0xf]
      %v4811 = vld [vmem:[%s1 + $0x64c] sm:$0xf]
      %v4812 = vld [vmem:[%s1 + $0x650] sm:$0xf]
      %v4813 = vld [vmem:[%s1 + $0x654] sm:$0xf]
      %v4814 = vld [vmem:[%s1 + $0x658] sm:$0xf]
      %v4815 = vld [vmem:[%s1 + $0x65c] sm:$0xf]
      %v4816 = vld [vmem:[%s1 + $0x660] sm:$0xf]
      %v4817 = vld [vmem:[%s1 + $0x664] sm:$0xf]
      %v4818 = vld [vmem:[%s1 + $0x668] sm:$0xf]
      %v4819 = vld [vmem:[%s1 + $0x66c] sm:$0xf]
      %v4820 = vld [vmem:[%s1 + $0x670] sm:$0xf]
      %v4821 = vld [vmem:[%s1 + $0x674] sm:$0xf]
      %v4822 = vld [vmem:[%s1 + $0x678] sm:$0xf]
      %v4823 = vld [vmem:[%s1 + $0x67c] sm:$0xf]
      %v4824 = vld [vmem:[%s1 + $0x680] sm:$0xf]
      %v4825 = vld [vmem:[%s1 + $0x684] sm:$0xf]
      %v4826 = vld [vmem:[%s1 + $0x688] sm:$0xf]
      %v4827 = vld [vmem:[%s1 + $0x68c] sm:$0xf]
      %v4828 = vld [vmem:[%s1 + $0x690] sm:$0xf]
      %v4829 = vld [vmem:[%s1 + $0x694] sm:$0xf]
      %v4830 = vld [vmem:[%s1 + $0x698] sm:$0xf]
      %v4831 = vld [vmem:[%s1 + $0x69c] sm:$0xf]
      %v4832 = vld [vmem:[%s1 + $0x6a0] sm:$0xf]
      %v4833 = vld [vmem:[%s1 + $0x6a4] sm:$0xf]
      %v4834 = vld [vmem:[%s1 + $0x6a8] sm:$0xf]
      %v4835 = vld [vmem:[%s1 + $0x6ac] sm:$0xf]
      %v4836 = vld [vmem:[%s1 + $0x6b0] sm:$0xf]
      %v4837 = vld [vmem:[%s1 + $0x6b4] sm:$0xf]
      %v4838 = vld [vmem:[%s1 + $0x6b8] sm:$0xf]
      %v4839 = vld [vmem:[%s1 + $0x6bc] sm:$0xf]
      %v4840 = vld [vmem:[%s1 + $0x6c0] sm:$0xf]
      %v4841 = vld [vmem:[%s1 + $0x6c4] sm:$0xf]
      %v4842 = vld [vmem:[%s1 + $0x6c8] sm:$0xf]
      %v4843 = vld [vmem:[%s1 + $0x6cc] sm:$0xf]
      %v4844 = vld [vmem:[%s1 + $0x6d0] sm:$0xf]
      %v4845 = vld [vmem:[%s1 + $0x6d4] sm:$0xf]
      %v4846 = vld [vmem:[%s1 + $0x6d8] sm:$0xf]
      %v4847 = vld [vmem:[%s1 + $0x6dc] sm:$0xf]
      %v4848 = vld [vmem:[%s1 + $0x6e0] sm:$0xf]
      %v4849 = vld [vmem:[%s1 + $0x6e4] sm:$0xf]
      %v4850 = vld [vmem:[%s1 + $0x6e8] sm:$0xf]
      %v4851 = vld [vmem:[%s1 + $0x6ec] sm:$0xf]
      %v4852 = vld [vmem:[%s1 + $0x6f0] sm:$0xf]
      %v4853 = vld [vmem:[%s1 + $0x6f4] sm:$0xf]
      %v4854 = vld [vmem:[%s1 + $0x6f8] sm:$0xf]
      %v4855 = vld [vmem:[%s1 + $0x6fc] sm:$0xf]
      %v4856 = vld [vmem:[%s1 + $0x700] sm:$0xf]
      %v4857 = vld [vmem:[%s1 + $0x704] sm:$0xf]
      %v4858 = vld [vmem:[%s1 + $0x708] sm:$0xf]
      %v4859 = vld [vmem:[%s1 + $0x70c] sm:$0xf]
      %v4860 = vld [vmem:[%s1 + $0x710] sm:$0xf]
      %v4861 = vld [vmem:[%s1 + $0x714] sm:$0xf]
      %v4862 = vld [vmem:[%s1 + $0x718] sm:$0xf]
      %v4863 = vld [vmem:[%s1 + $0x71c] sm:$0xf]
      %v4864 = vld [vmem:[%s1 + $0x720] sm:$0xf]
      %v4865 = vld [vmem:[%s1 + $0x724] sm:$0xf]
      %v4866 = vld [vmem:[%s1 + $0x728] sm:$0xf]
      %v4867 = vld [vmem:[%s1 + $0x72c] sm:$0xf]
      %v4868 = vld [vmem:[%s1 + $0x730] sm:$0xf]
      %v4869 = vld [vmem:[%s1 + $0x734] sm:$0xf]
      %v4870 = vld [vmem:[%s1 + $0x738] sm:$0xf]
      %v4871 = vpack.c.bf16 %v4794, %v4794
      %v4872 = vpack.c.bf16 %v4795, %v4795
      %v4873 = vpack.c.bf16 %v4796, %v4796
      %v4874 = vpack.c.bf16 %v4797, %v4797
      %v4875 = vpack.c.bf16 %v4798, %v4798
      %v4876 = vld [vmem:[%s5 + $0xd0] sm:$0x1]
      %v4949 = vunpack.c.l.b16 %v4799
      %v4950 = vunpack.c.l.b16 %v4800
      %v4951 = vunpack.c.l.b16 %v4801
      %v4952 = vunpack.c.l.b16 %v4802
      %v4953 = vunpack.c.l.b16 %v4803
      %v4954 = vunpack.c.l.b16 %v4804
      %v4955 = vunpack.c.l.b16 %v4805
      %v4956 = vunpack.c.l.b16 %v4806
      %v4957 = vunpack.c.l.b16 %v4807
      %v4958 = vunpack.c.l.b16 %v4808
      %v4959 = vunpack.c.l.b16 %v4809
      %v4960 = vunpack.c.l.b16 %v4810
      %v4961 = vunpack.c.l.b16 %v4811
      %v4962 = vunpack.c.l.b16 %v4812
      %v4963 = vunpack.c.l.b16 %v4813
      %v4964 = vunpack.c.l.b16 %v4814
      %v4965 = vunpack.c.l.b16 %v4815
      %v4966 = vunpack.c.l.b16 %v4816
      %v4967 = vunpack.c.l.b16 %v4817
      %v4968 = vunpack.c.l.b16 %v4818
      %v4969 = vunpack.c.l.b16 %v4819
      %v4970 = vunpack.c.l.b16 %v4820
      %v4971 = vunpack.c.l.b16 %v4821
      %v4972 = vunpack.c.l.b16 %v4822
      %v4973 = vunpack.c.l.b16 %v4823
      %v4974 = vunpack.c.l.b16 %v4824
      %v4975 = vunpack.c.l.b16 %v4825
      %v4976 = vunpack.c.l.b16 %v4826
      %v4977 = vunpack.c.l.b16 %v4827
      %v4978 = vunpack.c.l.b16 %v4828
      %v4979 = vunpack.c.l.b16 %v4829
      %v4980 = vunpack.c.l.b16 %v4830
      %v4981 = vunpack.c.l.b16 %v4831
      %v4982 = vunpack.c.l.b16 %v4832
      %v4983 = vunpack.c.l.b16 %v4833
      %v4984 = vunpack.c.l.b16 %v4834
      %v4985 = vunpack.c.l.b16 %v4835
      %v4986 = vunpack.c.l.b16 %v4836
      %v4987 = vunpack.c.l.b16 %v4837
      %v4988 = vunpack.c.l.b16 %v4838
      %v4989 = vunpack.c.l.b16 %v4839
      %v4990 = vunpack.c.l.b16 %v4840
      %v4991 = vunpack.c.l.b16 %v4841
      %v4992 = vunpack.c.l.b16 %v4842
      %v4993 = vunpack.c.l.b16 %v4843
      %v4994 = vunpack.c.l.b16 %v4844
      %v4995 = vunpack.c.l.b16 %v4845
      %v4996 = vunpack.c.l.b16 %v4846
      %v4997 = vunpack.c.l.b16 %v4847
      %v4998 = vunpack.c.l.b16 %v4848
      %v4999 = vunpack.c.l.b16 %v4849
      %v5000 = vunpack.c.l.b16 %v4850
      %v5001 = vunpack.c.l.b16 %v4851
      %v5002 = vunpack.c.l.b16 %v4852
      %v5003 = vunpack.c.l.b16 %v4853
      %v5004 = vunpack.c.l.b16 %v4854
      %v5005 = vunpack.c.l.b16 %v4855
      %v5006 = vunpack.c.l.b16 %v4856
      %v5007 = vunpack.c.l.b16 %v4857
      %v5008 = vunpack.c.l.b16 %v4858
      %v5009 = vunpack.c.l.b16 %v4859
      %v5010 = vunpack.c.l.b16 %v4860
      %v5011 = vunpack.c.l.b16 %v4861
      %v5012 = vunpack.c.l.b16 %v4862
      %v5013 = vunpack.c.l.b16 %v4863
      %v5014 = vunpack.c.l.b16 %v4864
      %v5015 = vunpack.c.l.b16 %v4865
      %v5016 = vunpack.c.l.b16 %v4866
      %v5017 = vunpack.c.l.b16 %v4867
      %v5018 = vunpack.c.l.b16 %v4868
      %v5019 = vunpack.c.l.b16 %v4869
      %v5020 = vunpack.c.l.b16 %v4870
      %v5021 = vpack.c.b16 %v4950, %v4949
      %v5022 = vpack.c.b16 %v4952, %v4951
      %v5023 = vpack.c.b16 %v4954, %v4953
      %v5024 = vpack.c.b16 %v4956, %v4955
      %v5025 = vpack.c.b16 %v4958, %v4957
      %v5026 = vpack.c.b16 %v4960, %v4959
      %v5027 = vpack.c.b16 %v4962, %v4961
      %v5028 = vpack.c.b16 %v4964, %v4963
      %v5029 = vpack.c.b16 %v4966, %v4965
      %v5030 = vpack.c.b16 %v4968, %v4967
      %v5031 = vpack.c.b16 %v4970, %v4969
      %v5032 = vpack.c.b16 %v4972, %v4971
      %v5033 = vpack.c.b16 %v4974, %v4973
      %v5034 = vpack.c.b16 %v4976, %v4975
      %v5035 = vpack.c.b16 %v4978, %v4977
      %v5036 = vpack.c.b16 %v4980, %v4979
      %v5037 = vpack.c.b16 %v4982, %v4981
      %v5038 = vpack.c.b16 %v4984, %v4983
      %v5039 = vpack.c.b16 %v4986, %v4985
      %v5040 = vpack.c.b16 %v4988, %v4987
      %v5041 = vpack.c.b16 %v4990, %v4989
      %v5042 = vpack.c.b16 %v4992, %v4991
      %v5043 = vpack.c.b16 %v4994, %v4993
      %v5044 = vpack.c.b16 %v4996, %v4995
      %v5045 = vpack.c.b16 %v4998, %v4997
      %v5046 = vpack.c.b16 %v5000, %v4999
      %v5047 = vpack.c.b16 %v5002, %v5001
      %v5048 = vpack.c.b16 %v5004, %v5003
      %v5049 = vpack.c.b16 %v5006, %v5005
      %v5050 = vpack.c.b16 %v5008, %v5007
      %v5051 = vpack.c.b16 %v5010, %v5009
      %v5052 = vpack.c.b16 %v5012, %v5011
      %v5053 = vpack.c.b16 %v5014, %v5013
      %v5054 = vpack.c.b16 %v5016, %v5015
      %v5055 = vpack.c.b16 %v5018, %v5017
      %v5056 = vpack.c.b16 %v5020, %v5019
      %v5094 = vsel %vm734, %v4875, 0
      %5096 = vmatpush.bf16.msra.mxu0 %v5028
      %5097 = vmatpush.bf16.msra.mxu0 %v5027
      %5098 = vmatpush.bf16.msra.mxu0 %v5026
      %5099 = vmatpush.bf16.msra.mxu0 %v5025
      %5100 = vmatpush.bf16.msra.mxu0 %v5024
      %5101 = vmatpush.bf16.msra.mxu0 %v5023
      %5102 = vmatpush.bf16.msra.mxu0 %v5022
      %5103 = vmatpush.bf16.msra.mxu0 %v5021
      %5104 = vmatmul.bf16.gmra.mxu0 %v4871
      %v5105 = vpop.f32.mrf.mxu0
      %v5106 = vadd.f32 %v4876, %v5105
      %v5107 = vpop.f32.mrf.mxu0
      %5108 = vdwg.mxu0
      %5109 = vmatpush.bf16.msra.mxu0 %v5036
      %5110 = vmatpush.bf16.msra.mxu0 %v5035
      %5111 = vmatpush.bf16.msra.mxu0 %v5034
      %5112 = vmatpush.bf16.msra.mxu0 %v5033
      %5113 = vmatpush.bf16.msra.mxu0 %v5032
      %5114 = vmatpush.bf16.msra.mxu0 %v5031
      %5115 = vmatpush.bf16.msra.mxu0 %v5030
      %5116 = vmatpush.bf16.msra.mxu0 %v5029
      %5117 = vmatmul.bf16.gmra.mxu0 %v4872
      %v5118 = vpop.f32.mrf.mxu0
      %v5119 = vadd.f32 %v5106, %v5118
      %v5120 = vpop.f32.mrf.mxu0
      %5121 = vdwg.mxu0
      %5122 = vmatpush.bf16.msra.mxu0 %v5044
      %5123 = vmatpush.bf16.msra.mxu0 %v5043
      %5124 = vmatpush.bf16.msra.mxu0 %v5042
      %5125 = vmatpush.bf16.msra.mxu0 %v5041
      %5126 = vmatpush.bf16.msra.mxu0 %v5040
      %5127 = vmatpush.bf16.msra.mxu0 %v5039
      %5128 = vmatpush.bf16.msra.mxu0 %v5038
      %5129 = vmatpush.bf16.msra.mxu0 %v5037
      %5130 = vmatmul.bf16.gmra.mxu0 %v4873
      %v5131 = vpop.f32.mrf.mxu0
      %v5132 = vadd.f32 %v5119, %v5131
      %v5133 = vpop.f32.mrf.mxu0
      %5134 = vdwg.mxu0
      %5135 = vmatpush.bf16.msra.mxu0 %v5052
      %5136 = vmatpush.bf16.msra.mxu0 %v5051
      %5137 = vmatpush.bf16.msra.mxu0 %v5050
      %5138 = vmatpush.bf16.msra.mxu0 %v5049
      %5139 = vmatpush.bf16.msra.mxu0 %v5048
      %5140 = vmatpush.bf16.msra.mxu0 %v5047
      %5141 = vmatpush.bf16.msra.mxu0 %v5046
      %5142 = vmatpush.bf16.msra.mxu0 %v5045
      %5143 = vmatmul.bf16.gmra.mxu0 %v4874
      %v5144 = vpop.f32.mrf.mxu0
      %v5145 = vadd.f32 %v5132, %v5144
      %v5146 = vpop.f32.mrf.mxu0
      %5147 = vdwg.mxu0
      %5148 = vmatpush.bf16.msra.mxu0 0
      %5149 = vmatpush.bf16.msra.mxu0 0
      %5150 = vmatpush.bf16.msra.mxu0 0
      %5151 = vmatpush.bf16.msra.mxu0 0
      %5152 = vmatpush.bf16.msra.mxu0 %v5056
      %5153 = vmatpush.bf16.msra.mxu0 %v5055
      %5154 = vmatpush.bf16.msra.mxu0 %v5054
      %5155 = vmatpush.bf16.msra.mxu0 %v5053
      %5156 = vmatmul.bf16.gmra.mxu0 %v5094
      %v5157 = vpop.f32.mrf.mxu0
      %v5158 = vadd.f32 %v5145, %v5157
      %v5159 = vpop.f32.mrf.mxu0
      %5160 = vdwg.mxu0
      %v5161 = vsub.f32 0.0, %v5158
      %v5162 = vmul.f32 %v5161, 1.442695
      %v5163 = vpow.pop %v5162
      %v5164 = vadd.f32 %v5163, 1.0
      %v5165 = vrcp.pop %v5164
      %v5166 = vmul.f32 %v5158, %v5165
      %v5167 = vld [vmem:[%s4 + $0x104] sm:$0xff]
      %v5168 = vld [vmem:[%s4 + $0x10c] sm:$0xff]
      %v5169 = vld [vmem:[%s4 + $0x114] sm:$0xf]
      %v5170 = vld [vmem:[%s4 + $0x118] sm:$0xff]
      %v5171 = vld [vmem:[%s4 + $0x120] sm:$0xff]
      %v5172 = vld [vmem:[%s4 + $0x128] sm:$0xf]
      %v5173 = vld [vmem:[%s4 + $0x12c] sm:$0xff]
      %v5174 = vld [vmem:[%s4 + $0x134] sm:$0xff]
      %v5175 = vld [vmem:[%s4 + $0x13c] sm:$0xf]
      %v5176 = vpack.c.bf16 %v5166, %v5166
      %s5177 = scalar_lea.vmem %s8, 80
      %v5178 = vld [vmem:[%s5177] ss:$8 sm:$0xf]
      %v5179 = vld [vmem:[%s5177] ss:$8 sm:$0x10]
      %v5180 = vor.u32 %v5178, %v5179
      %v5190 = vunpack.c.l.b16 %v5167
      %v5191 = vunpack.c.h.b16 %v5167
      %v5192 = vunpack.c.l.b16 %v5168
      %v5193 = vunpack.c.h.b16 %v5168
      %v5194 = vunpack.c.l.b16 %v5169
      %v5195 = vunpack.c.l.b16 %v5170
      %v5196 = vunpack.c.h.b16 %v5170
      %v5197 = vunpack.c.l.b16 %v5171
      %v5198 = vunpack.c.h.b16 %v5171
      %v5199 = vunpack.c.l.b16 %v5172
      %v5200 = vunpack.c.l.b16 %v5173
      %v5201 = vunpack.c.h.b16 %v5173
      %v5202 = vunpack.c.l.b16 %v5174
      %v5203 = vunpack.c.h.b16 %v5174
      %v5204 = vunpack.c.l.b16 %v5175
      %v5205 = vpack.c.b16 %v5195, %v5190
      %v5206 = vpack.c.b16 %v5196, %v5191
      %v5207 = vpack.c.b16 %v5197, %v5192
      %v5208 = vpack.c.b16 %v5198, %v5193
      %v5209 = vpack.c.b16 %v5199, %v5194
      %v5210 = vpack.c.b16 %v5200, %v5200
      %v5211 = vpack.c.b16 %v5201, %v5201
      %v5212 = vpack.c.b16 %v5202, %v5202
      %v5213 = vpack.c.b16 %v5203, %v5203
      %v5214 = vpack.c.b16 %v5204, %v5204
      %v5221 = vperm.slane %v5180, 0
      %v5222 = vperm.slane %v5180, 1
      %v5223 = vperm.slane %v5180, 2
      %v5224 = vperm.slane %v5180, 3
      %v5225 = vperm.slane %v5180, 4
      %v5232 = vsel %vm2761, %v5176, 0
      %v5235 = vsel %vm1409, %v5210, 0
      %v5238 = vsel %vm1409, %v5211, 0
      %v5241 = vsel %vm1409, %v5212, 0
      %v5244 = vsel %vm1409, %v5213, 0
      %v5247 = vsel %vm1409, %v5214, 0
      %5249 = vmatpush.bf16.msra.mxu0 0
      %5250 = vmatpush.bf16.msra.mxu0 0
      %5251 = vmatpush.bf16.msra.mxu0 0
      %5252 = vmatpush.bf16.msra.mxu0 0
      %5253 = vmatpush.bf16.msra.mxu0 0
      %5254 = vmatpush.bf16.msra.mxu0 0
      %5255 = vmatpush.bf16.msra.mxu0 %v5235
      %5256 = vmatpush.bf16.msra.mxu0 %v5205
      %5257 = vmatmul.bf16.gmra.mxu0 %v5232
      %v5258 = vpop.f32.mrf.mxu0
      %v5259 = vadd.f32 %v5221, %v5258
      %v5260 = vpop.f32.mrf.mxu0
      %5261 = vdwg.mxu0
      %5262 = vmatpush.bf16.msra.mxu0 0
      %5263 = vmatpush.bf16.msra.mxu0 0
      %5264 = vmatpush.bf16.msra.mxu0 0
      %5265 = vmatpush.bf16.msra.mxu0 0
      %5266 = vmatpush.bf16.msra.mxu0 0
      %5267 = vmatpush.bf16.msra.mxu0 0
      %5268 = vmatpush.bf16.msra.mxu0 %v5238
      %5269 = vmatpush.bf16.msra.mxu0 %v5206
      %5270 = vmatmul.bf16.gmra.mxu0 %v5232
      %v5271 = vpop.f32.mrf.mxu0
      %v5272 = vadd.f32 %v5222, %v5271
      %v5273 = vpop.f32.mrf.mxu0
      %5274 = vdwg.mxu0
      %5275 = vmatpush.bf16.msra.mxu0 0
      %5276 = vmatpush.bf16.msra.mxu0 0
      %5277 = vmatpush.bf16.msra.mxu0 0
      %5278 = vmatpush.bf16.msra.mxu0 0
      %5279 = vmatpush.bf16.msra.mxu0 0
      %5280 = vmatpush.bf16.msra.mxu0 0
      %5281 = vmatpush.bf16.msra.mxu0 %v5241
      %5282 = vmatpush.bf16.msra.mxu0 %v5207
      %5283 = vmatmul.bf16.gmra.mxu0 %v5232
      %v5284 = vpop.f32.mrf.mxu0
      %v5285 = vadd.f32 %v5223, %v5284
      %v5286 = vpop.f32.mrf.mxu0
      %5287 = vdwg.mxu0
      %5288 = vmatpush.bf16.msra.mxu0 0
      %5289 = vmatpush.bf16.msra.mxu0 0
      %5290 = vmatpush.bf16.msra.mxu0 0
      %5291 = vmatpush.bf16.msra.mxu0 0
      %5292 = vmatpush.bf16.msra.mxu0 0
      %5293 = vmatpush.bf16.msra.mxu0 0
      %5294 = vmatpush.bf16.msra.mxu0 %v5244
      %5295 = vmatpush.bf16.msra.mxu0 %v5208
      %5296 = vmatmul.bf16.gmra.mxu0 %v5232
      %v5297 = vpop.f32.mrf.mxu0
      %v5298 = vadd.f32 %v5224, %v5297
      %v5299 = vpop.f32.mrf.mxu0
      %5300 = vdwg.mxu0
      %5301 = vmatpush.bf16.msra.mxu0 0
      %5302 = vmatpush.bf16.msra.mxu0 0
      %5303 = vmatpush.bf16.msra.mxu0 0
      %5304 = vmatpush.bf16.msra.mxu0 0
      %5305 = vmatpush.bf16.msra.mxu0 0
      %5306 = vmatpush.bf16.msra.mxu0 0
      %5307 = vmatpush.bf16.msra.mxu0 %v5247
      %5308 = vmatpush.bf16.msra.mxu0 %v5209
      %5309 = vmatmul.bf16.gmra.mxu0 %v5232
      %v5310 = vpop.f32.mrf.mxu0
      %v5311 = vadd.f32 %v5225, %v5310
      %v5312 = vpop.f32.mrf.mxu0
      %5313 = vdwg.mxu0
      %v5314 = vsub.f32 0.0, %v5259
      %v5315 = vsub.f32 0.0, %v5272
      %v5316 = vsub.f32 0.0, %v5285
      %v5317 = vsub.f32 0.0, %v5298
      %v5318 = vsub.f32 0.0, %v5311
      %v5319 = vmul.f32 %v5314, 1.442695
      %v5320 = vpow.pop %v5319
      %v5321 = vmul.f32 %v5315, 1.442695
      %v5322 = vpow.pop %v5321
      %v5323 = vmul.f32 %v5316, 1.442695
      %v5324 = vpow.pop %v5323
      %v5325 = vmul.f32 %v5317, 1.442695
      %v5326 = vpow.pop %v5325
      %v5327 = vmul.f32 %v5318, 1.442695
      %v5328 = vpow.pop %v5327
      %v5329 = vadd.f32 %v5320, 1.0
      %v5330 = vadd.f32 %v5322, 1.0
      %v5331 = vadd.f32 %v5324, 1.0
      %v5332 = vadd.f32 %v5326, 1.0
      %v5333 = vadd.f32 %v5328, 1.0
      %v5334 = vrcp.pop %v5329
      %v5335 = vrcp.pop %v5330
      %v5336 = vrcp.pop %v5331
      %v5337 = vrcp.pop %v5332
      %v5338 = vrcp.pop %v5333
      %v5339 = vmul.f32 %v4789, %v5334
      %v5340 = vmul.f32 %v4790, %v5335
      %v5341 = vmul.f32 %v4791, %v5336
      %v5342 = vmul.f32 %v4792, %v5337
      %v5343 = vmul.f32 %v4793, %v5338
      %v5344 = vld [vmem:[%s2 + $0x70] sm:$0xff]
      %v5345 = vld [vmem:[%s2 + $0x78] sm:$0xff]
      %v5346 = vld [vmem:[%s2 + $0x80] sm:$0xff]
      %v5347 = vld [vmem:[%s2 + $0x88] sm:$0xff]
      %v5348 = vld [vmem:[%s2 + $0x90] sm:$0xff]
      %v5349 = vld [vmem:[%s2 + $0x98] sm:$0xff]
      %v5350 = vld [vmem:[%s2 + $0xa0] sm:$0xff]
      %v5351 = vld [vmem:[%s2 + $0xa8] sm:$0xff]
      %v5352 = vld [vmem:[%s2 + $0xb0] sm:$0xff]
      %v5353 = vld [vmem:[%s2 + $0xb8] sm:$0xff]
      %v5354 = vld [vmem:[%s2 + $0xc0] sm:$0xff]
      %v5355 = vld [vmem:[%s2 + $0xc8] sm:$0xff]
      %v5356 = vld [vmem:[%s2 + $0xd0] sm:$0xff]
      %v5357 = vld [vmem:[%s2 + $0xd8] sm:$0xff]
      %v5358 = vld [vmem:[%s2 + $0xe0] sm:$0xff]
      %v5359 = vld [vmem:[%s2 + $0xe8] sm:$0xff]
      %v5360 = vld [vmem:[%s2 + $0xf0] sm:$0xff]
      %v5361 = vld [vmem:[%s2 + $0xf8] sm:$0xff]
      %v5362 = vld [vmem:[%s2 + $0x100] sm:$0xff]
      %v5363 = vld [vmem:[%s2 + $0x108] sm:$0xff]
      %v5364 = vld [vmem:[%s2 + $0x110] sm:$0xff]
      %v5365 = vld [vmem:[%s2 + $0x118] sm:$0xff]
      %v5366 = vld [vmem:[%s2 + $0x120] sm:$0xff]
      %v5367 = vld [vmem:[%s2 + $0x128] sm:$0xff]
      %v5368 = vld [vmem:[%s2 + $0x130] sm:$0xff]
      %v5369 = vld [vmem:[%s2 + $0x138] sm:$0xff]
      %v5370 = vld [vmem:[%s2 + $0x140] sm:$0xff]
      %v5371 = vld [vmem:[%s2 + $0x148] sm:$0xff]
      %v5372 = vld [vmem:[%s2 + $0x150] sm:$0xff]
      %v5373 = vld [vmem:[%s2 + $0x158] sm:$0xff]
      %v5374 = vld [vmem:[%s2 + $0x160] sm:$0xff]
      %v5375 = vld [vmem:[%s2 + $0x168] sm:$0xff]
      %v5376 = vld [vmem:[%s2 + $0x170] sm:$0xff]
      %v5377 = vld [vmem:[%s2 + $0x178] sm:$0xff]
      %v5378 = vld [vmem:[%s2 + $0x180] sm:$0xff]
      %v5379 = vld [vmem:[%s2 + $0x188] sm:$0xff]
      %v5380 = vld [vmem:[%s2 + $0x190] sm:$0xff]
      %v5381 = vld [vmem:[%s2 + $0x198] sm:$0xff]
      %v5382 = vld [vmem:[%s2 + $0x1a0] sm:$0xff]
      %v5383 = vld [vmem:[%s2 + $0x1a8] sm:$0xff]
      %v5384 = vld [vmem:[%s2 + $0x1b0] sm:$0xff]
      %v5385 = vld [vmem:[%s2 + $0x1b8] sm:$0xff]
      %v5386 = vld [vmem:[%s2 + $0x1c0] sm:$0xff]
      %v5387 = vld [vmem:[%s2 + $0x1c8] sm:$0xff]
      %v5388 = vld [vmem:[%s2 + $0x1d0] sm:$0xff]
      %v5389 = vld [vmem:[%s2 + $0x1d8] sm:$0xff]
      %v5390 = vld [vmem:[%s2 + $0x1e0] sm:$0xff]
      %v5391 = vld [vmem:[%s2 + $0x1e8] sm:$0xff]
      %v5392 = vld [vmem:[%s2 + $0x1f0] sm:$0xff]
      %v5393 = vld [vmem:[%s2 + $0x1f8] sm:$0xff]
      %v5394 = vld [vmem:[%s2 + $0x200] sm:$0xff]
      %v5395 = vld [vmem:[%s2 + $0x208] sm:$0xff]
      %v5396 = vld [vmem:[%s2 + $0x210] sm:$0xff]
      %v5397 = vld [vmem:[%s2 + $0x218] sm:$0xff]
      %v5398 = vld [vmem:[%s2 + $0x220] sm:$0xff]
      %v5399 = vld [vmem:[%s2 + $0x228] sm:$0xff]
      %v5400 = vld [vmem:[%s2 + $0x230] sm:$0xff]
      %v5401 = vld [vmem:[%s2 + $0x238] sm:$0xff]
      %v5402 = vld [vmem:[%s2 + $0x240] sm:$0xff]
      %v5403 = vld [vmem:[%s2 + $0x248] sm:$0xff]
      %v5404 = vld [vmem:[%s2 + $0x250] sm:$0xff]
      %v5405 = vld [vmem:[%s2 + $0x258] sm:$0xff]
      %v5406 = vld [vmem:[%s2 + $0x260] sm:$0xff]
      %v5407 = vld [vmem:[%s2 + $0x268] sm:$0xff]
      %v5408 = vld [vmem:[%s2 + $0x270] sm:$0xff]
      %v5409 = vld [vmem:[%s2 + $0x278] sm:$0xff]
      %v5410 = vld [vmem:[%s2 + $0x280] sm:$0xff]
      %v5411 = vld [vmem:[%s2 + $0x288] sm:$0xff]
      %v5412 = vld [vmem:[%s2 + $0x290] sm:$0xff]
      %v5413 = vld [vmem:[%s2 + $0x298] sm:$0xff]
      %v5414 = vld [vmem:[%s2 + $0x2a0] sm:$0xff]
      %v5415 = vld [vmem:[%s2 + $0x2a8] sm:$0xff]
      %v5416 = vpack.c.bf16 %v5339, %v5339
      %v5417 = vpack.c.bf16 %v5340, %v5340
      %v5418 = vpack.c.bf16 %v5341, %v5341
      %v5419 = vpack.c.bf16 %v5342, %v5342
      %v5420 = vpack.c.bf16 %v5343, %v5343
      %s5421 = scalar_lea.vmem %s6, 96
      %v5422 = vld [vmem:[%s5421] ss:$8 sm:$0x3]
      %v5495 = vunpack.c.l.b16 %v5344
      %v5496 = vunpack.c.h.b16 %v5344
      %v5497 = vunpack.c.l.b16 %v5345
      %v5498 = vunpack.c.h.b16 %v5345
      %v5499 = vunpack.c.l.b16 %v5346
      %v5500 = vunpack.c.h.b16 %v5346
      %v5501 = vunpack.c.l.b16 %v5347
      %v5502 = vunpack.c.h.b16 %v5347
      %v5503 = vunpack.c.l.b16 %v5348
      %v5504 = vunpack.c.h.b16 %v5348
      %v5505 = vunpack.c.l.b16 %v5349
      %v5506 = vunpack.c.h.b16 %v5349
      %v5507 = vunpack.c.l.b16 %v5350
      %v5508 = vunpack.c.h.b16 %v5350
      %v5509 = vunpack.c.l.b16 %v5351
      %v5510 = vunpack.c.h.b16 %v5351
      %v5511 = vunpack.c.l.b16 %v5352
      %v5512 = vunpack.c.h.b16 %v5352
      %v5513 = vunpack.c.l.b16 %v5353
      %v5514 = vunpack.c.h.b16 %v5353
      %v5515 = vunpack.c.l.b16 %v5354
      %v5516 = vunpack.c.h.b16 %v5354
      %v5517 = vunpack.c.l.b16 %v5355
      %v5518 = vunpack.c.h.b16 %v5355
      %v5519 = vunpack.c.l.b16 %v5356
      %v5520 = vunpack.c.h.b16 %v5356
      %v5521 = vunpack.c.l.b16 %v5357
      %v5522 = vunpack.c.h.b16 %v5357
      %v5523 = vunpack.c.l.b16 %v5358
      %v5524 = vunpack.c.h.b16 %v5358
      %v5525 = vunpack.c.l.b16 %v5359
      %v5526 = vunpack.c.h.b16 %v5359
      %v5527 = vunpack.c.l.b16 %v5360
      %v5528 = vunpack.c.h.b16 %v5360
      %v5529 = vunpack.c.l.b16 %v5361
      %v5530 = vunpack.c.h.b16 %v5361
      %v5531 = vunpack.c.l.b16 %v5362
      %v5532 = vunpack.c.h.b16 %v5362
      %v5533 = vunpack.c.l.b16 %v5363
      %v5534 = vunpack.c.h.b16 %v5363
      %v5535 = vunpack.c.l.b16 %v5364
      %v5536 = vunpack.c.h.b16 %v5364
      %v5537 = vunpack.c.l.b16 %v5365
      %v5538 = vunpack.c.h.b16 %v5365
      %v5539 = vunpack.c.l.b16 %v5366
      %v5540 = vunpack.c.h.b16 %v5366
      %v5541 = vunpack.c.l.b16 %v5367
      %v5542 = vunpack.c.h.b16 %v5367
      %v5543 = vunpack.c.l.b16 %v5368
      %v5544 = vunpack.c.h.b16 %v5368
      %v5545 = vunpack.c.l.b16 %v5369
      %v5546 = vunpack.c.h.b16 %v5369
      %v5547 = vunpack.c.l.b16 %v5370
      %v5548 = vunpack.c.h.b16 %v5370
      %v5549 = vunpack.c.l.b16 %v5371
      %v5550 = vunpack.c.h.b16 %v5371
      %v5551 = vunpack.c.l.b16 %v5372
      %v5552 = vunpack.c.h.b16 %v5372
      %v5553 = vunpack.c.l.b16 %v5373
      %v5554 = vunpack.c.h.b16 %v5373
      %v5555 = vunpack.c.l.b16 %v5374
      %v5556 = vunpack.c.h.b16 %v5374
      %v5557 = vunpack.c.l.b16 %v5375
      %v5558 = vunpack.c.h.b16 %v5375
      %v5559 = vunpack.c.l.b16 %v5376
      %v5560 = vunpack.c.h.b16 %v5376
      %v5561 = vunpack.c.l.b16 %v5377
      %v5562 = vunpack.c.h.b16 %v5377
      %v5563 = vunpack.c.l.b16 %v5378
      %v5564 = vunpack.c.h.b16 %v5378
      %v5565 = vunpack.c.l.b16 %v5379
      %v5566 = vunpack.c.h.b16 %v5379
      %v5567 = vunpack.c.l.b16 %v5380
      %v5568 = vunpack.c.h.b16 %v5380
      %v5569 = vunpack.c.l.b16 %v5381
      %v5570 = vunpack.c.h.b16 %v5381
      %v5571 = vunpack.c.l.b16 %v5382
      %v5572 = vunpack.c.h.b16 %v5382
      %v5573 = vunpack.c.l.b16 %v5383
      %v5574 = vunpack.c.h.b16 %v5383
      %v5575 = vunpack.c.l.b16 %v5384
      %v5576 = vunpack.c.h.b16 %v5384
      %v5577 = vunpack.c.l.b16 %v5385
      %v5578 = vunpack.c.h.b16 %v5385
      %v5579 = vunpack.c.l.b16 %v5386
      %v5580 = vunpack.c.h.b16 %v5386
      %v5581 = vunpack.c.l.b16 %v5387
      %v5582 = vunpack.c.h.b16 %v5387
      %v5583 = vunpack.c.l.b16 %v5388
      %v5584 = vunpack.c.h.b16 %v5388
      %v5585 = vunpack.c.l.b16 %v5389
      %v5586 = vunpack.c.h.b16 %v5389
      %v5587 = vunpack.c.l.b16 %v5390
      %v5588 = vunpack.c.h.b16 %v5390
      %v5589 = vunpack.c.l.b16 %v5391
      %v5590 = vunpack.c.h.b16 %v5391
      %v5591 = vunpack.c.l.b16 %v5392
      %v5592 = vunpack.c.h.b16 %v5392
      %v5593 = vunpack.c.l.b16 %v5393
      %v5594 = vunpack.c.h.b16 %v5393
      %v5595 = vunpack.c.l.b16 %v5394
      %v5596 = vunpack.c.h.b16 %v5394
      %v5597 = vunpack.c.l.b16 %v5395
      %v5598 = vunpack.c.h.b16 %v5395
      %v5599 = vunpack.c.l.b16 %v5396
      %v5600 = vunpack.c.h.b16 %v5396
      %v5601 = vunpack.c.l.b16 %v5397
      %v5602 = vunpack.c.h.b16 %v5397
      %v5603 = vunpack.c.l.b16 %v5398
      %v5604 = vunpack.c.h.b16 %v5398
      %v5605 = vunpack.c.l.b16 %v5399
      %v5606 = vunpack.c.h.b16 %v5399
      %v5607 = vunpack.c.l.b16 %v5400
      %v5608 = vunpack.c.h.b16 %v5400
      %v5609 = vunpack.c.l.b16 %v5401
      %v5610 = vunpack.c.h.b16 %v5401
      %v5611 = vunpack.c.l.b16 %v5402
      %v5612 = vunpack.c.h.b16 %v5402
      %v5613 = vunpack.c.l.b16 %v5403
      %v5614 = vunpack.c.h.b16 %v5403
      %v5615 = vunpack.c.l.b16 %v5404
      %v5616 = vunpack.c.h.b16 %v5404
      %v5617 = vunpack.c.l.b16 %v5405
      %v5618 = vunpack.c.h.b16 %v5405
      %v5619 = vunpack.c.l.b16 %v5406
      %v5620 = vunpack.c.h.b16 %v5406
      %v5621 = vunpack.c.l.b16 %v5407
      %v5622 = vunpack.c.h.b16 %v5407
      %v5623 = vunpack.c.l.b16 %v5408
      %v5624 = vunpack.c.h.b16 %v5408
      %v5625 = vunpack.c.l.b16 %v5409
      %v5626 = vunpack.c.h.b16 %v5409
      %v5627 = vunpack.c.l.b16 %v5410
      %v5628 = vunpack.c.h.b16 %v5410
      %v5629 = vunpack.c.l.b16 %v5411
      %v5630 = vunpack.c.h.b16 %v5411
      %v5631 = vunpack.c.l.b16 %v5412
      %v5632 = vunpack.c.h.b16 %v5412
      %v5633 = vunpack.c.l.b16 %v5413
      %v5634 = vunpack.c.h.b16 %v5413
      %v5635 = vunpack.c.l.b16 %v5414
      %v5636 = vunpack.c.h.b16 %v5414
      %v5637 = vunpack.c.l.b16 %v5415
      %v5638 = vunpack.c.h.b16 %v5415
      %v5639 = vpack.c.b16 %v5497, %v5495
      %v5640 = vpack.c.b16 %v5498, %v5496
      %v5641 = vpack.c.b16 %v5501, %v5499
      %v5642 = vpack.c.b16 %v5502, %v5500
      %v5643 = vpack.c.b16 %v5505, %v5503
      %v5644 = vpack.c.b16 %v5506, %v5504
      %v5645 = vpack.c.b16 %v5509, %v5507
      %v5646 = vpack.c.b16 %v5510, %v5508
      %v5647 = vpack.c.b16 %v5513, %v5511
      %v5648 = vpack.c.b16 %v5514, %v5512
      %v5649 = vpack.c.b16 %v5517, %v5515
      %v5650 = vpack.c.b16 %v5518, %v5516
      %v5651 = vpack.c.b16 %v5521, %v5519
      %v5652 = vpack.c.b16 %v5522, %v5520
      %v5653 = vpack.c.b16 %v5525, %v5523
      %v5654 = vpack.c.b16 %v5526, %v5524
      %v5655 = vpack.c.b16 %v5529, %v5527
      %v5656 = vpack.c.b16 %v5530, %v5528
      %v5657 = vpack.c.b16 %v5533, %v5531
      %v5658 = vpack.c.b16 %v5534, %v5532
      %v5659 = vpack.c.b16 %v5537, %v5535
      %v5660 = vpack.c.b16 %v5538, %v5536
      %v5661 = vpack.c.b16 %v5541, %v5539
      %v5662 = vpack.c.b16 %v5542, %v5540
      %v5663 = vpack.c.b16 %v5545, %v5543
      %v5664 = vpack.c.b16 %v5546, %v5544
      %v5665 = vpack.c.b16 %v5549, %v5547
      %v5666 = vpack.c.b16 %v5550, %v5548
      %v5667 = vpack.c.b16 %v5553, %v5551
      %v5668 = vpack.c.b16 %v5554, %v5552
      %v5669 = vpack.c.b16 %v5557, %v5555
      %v5670 = vpack.c.b16 %v5558, %v5556
      %v5671 = vpack.c.b16 %v5561, %v5559
      %v5672 = vpack.c.b16 %v5562, %v5560
      %v5673 = vpack.c.b16 %v5565, %v5563
      %v5674 = vpack.c.b16 %v5566, %v5564
      %v5675 = vpack.c.b16 %v5569, %v5567
      %v5676 = vpack.c.b16 %v5570, %v5568
      %v5677 = vpack.c.b16 %v5573, %v5571
      %v5678 = vpack.c.b16 %v5574, %v5572
      %v5679 = vpack.c.b16 %v5577, %v5575
      %v5680 = vpack.c.b16 %v5578, %v5576
      %v5681 = vpack.c.b16 %v5581, %v5579
      %v5682 = vpack.c.b16 %v5582, %v5580
      %v5683 = vpack.c.b16 %v5585, %v5583
      %v5684 = vpack.c.b16 %v5586, %v5584
      %v5685 = vpack.c.b16 %v5589, %v5587
      %v5686 = vpack.c.b16 %v5590, %v5588
      %v5687 = vpack.c.b16 %v5593, %v5591
      %v5688 = vpack.c.b16 %v5594, %v5592
      %v5689 = vpack.c.b16 %v5597, %v5595
      %v5690 = vpack.c.b16 %v5598, %v5596
      %v5691 = vpack.c.b16 %v5601, %v5599
      %v5692 = vpack.c.b16 %v5602, %v5600
      %v5693 = vpack.c.b16 %v5605, %v5603
      %v5694 = vpack.c.b16 %v5606, %v5604
      %v5695 = vpack.c.b16 %v5609, %v5607
      %v5696 = vpack.c.b16 %v5610, %v5608
      %v5697 = vpack.c.b16 %v5613, %v5611
      %v5698 = vpack.c.b16 %v5614, %v5612
      %v5699 = vpack.c.b16 %v5617, %v5615
      %v5700 = vpack.c.b16 %v5618, %v5616
      %v5701 = vpack.c.b16 %v5621, %v5619
      %v5702 = vpack.c.b16 %v5622, %v5620
      %v5703 = vpack.c.b16 %v5625, %v5623
      %v5704 = vpack.c.b16 %v5626, %v5624
      %v5705 = vpack.c.b16 %v5629, %v5627
      %v5706 = vpack.c.b16 %v5630, %v5628
      %v5707 = vpack.c.b16 %v5633, %v5631
      %v5708 = vpack.c.b16 %v5634, %v5632
      %v5709 = vpack.c.b16 %v5637, %v5635
      %v5710 = vpack.c.b16 %v5638, %v5636
      %v5784 = vperm.slane %v5422, 0
      %v5785 = vperm.slane %v5422, 1
      %v5789 = vsel %vm734, %v5420, 0
      %5791 = vmatpush.bf16.msra.mxu0 %v5653
      %5792 = vmatpush.bf16.msra.mxu0 %v5651
      %5793 = vmatpush.bf16.msra.mxu0 %v5649
      %5794 = vmatpush.bf16.msra.mxu0 %v5647
      %5795 = vmatpush.bf16.msra.mxu0 %v5645
      %5796 = vmatpush.bf16.msra.mxu0 %v5643
      %5797 = vmatpush.bf16.msra.mxu0 %v5641
      %5798 = vmatpush.bf16.msra.mxu0 %v5639
      %5799 = vmatmul.bf16.gmra.mxu0 %v5416
      %v5800 = vpop.f32.mrf.mxu0
      %v5801 = vadd.f32 %v5784, %v5800
      %v5802 = vpop.f32.mrf.mxu0
      %5803 = vdwg.mxu0
      %5804 = vmatpush.bf16.msra.mxu0 %v5669
      %5805 = vmatpush.bf16.msra.mxu0 %v5667
      %5806 = vmatpush.bf16.msra.mxu0 %v5665
      %5807 = vmatpush.bf16.msra.mxu0 %v5663
      %5808 = vmatpush.bf16.msra.mxu0 %v5661
      %5809 = vmatpush.bf16.msra.mxu0 %v5659
      %5810 = vmatpush.bf16.msra.mxu0 %v5657
      %5811 = vmatpush.bf16.msra.mxu0 %v5655
      %5812 = vmatmul.bf16.gmra.mxu0 %v5417
      %v5813 = vpop.f32.mrf.mxu0
      %v5814 = vadd.f32 %v5801, %v5813
      %v5815 = vpop.f32.mrf.mxu0
      %5816 = vdwg.mxu0
      %5817 = vmatpush.bf16.msra.mxu0 %v5685
      %5818 = vmatpush.bf16.msra.mxu0 %v5683
      %5819 = vmatpush.bf16.msra.mxu0 %v5681
      %5820 = vmatpush.bf16.msra.mxu0 %v5679
      %5821 = vmatpush.bf16.msra.mxu0 %v5677
      %5822 = vmatpush.bf16.msra.mxu0 %v5675
      %5823 = vmatpush.bf16.msra.mxu0 %v5673
      %5824 = vmatpush.bf16.msra.mxu0 %v5671
      %5825 = vmatmul.bf16.gmra.mxu0 %v5418
      %v5826 = vpop.f32.mrf.mxu0
      %v5827 = vadd.f32 %v5814, %v5826
      %v5828 = vpop.f32.mrf.mxu0
      %5829 = vdwg.mxu0
      %5830 = vmatpush.bf16.msra.mxu0 %v5701
      %5831 = vmatpush.bf16.msra.mxu0 %v5699
      %5832 = vmatpush.bf16.msra.mxu0 %v5697
      %5833 = vmatpush.bf16.msra.mxu0 %v5695
      %5834 = vmatpush.bf16.msra.mxu0 %v5693
      %5835 = vmatpush.bf16.msra.mxu0 %v5691
      %5836 = vmatpush.bf16.msra.mxu0 %v5689
      %5837 = vmatpush.bf16.msra.mxu0 %v5687
      %5838 = vmatmul.bf16.gmra.mxu0 %v5419
      %v5839 = vpop.f32.mrf.mxu0
      %v5840 = vadd.f32 %v5827, %v5839
      %v5841 = vpop.f32.mrf.mxu0
      %5842 = vdwg.mxu0
      %5843 = vmatpush.bf16.msra.mxu0 0
      %5844 = vmatpush.bf16.msra.mxu0 0
      %5845 = vmatpush.bf16.msra.mxu0 0
      %5846 = vmatpush.bf16.msra.mxu0 0
      %5847 = vmatpush.bf16.msra.mxu0 %v5709
      %5848 = vmatpush.bf16.msra.mxu0 %v5707
      %5849 = vmatpush.bf16.msra.mxu0 %v5705
      %5850 = vmatpush.bf16.msra.mxu0 %v5703
      %5851 = vmatmul.bf16.gmra.mxu0 %v5789
      %v5852 = vpop.f32.mrf.mxu0
      %v5853 = vadd.f32 %v5840, %v5852
      %v5854 = vpop.f32.mrf.mxu0
      %5855 = vdwg.mxu0
      %5856 = vmatpush.bf16.msra.mxu0 %v5654
      %5857 = vmatpush.bf16.msra.mxu0 %v5652
      %5858 = vmatpush.bf16.msra.mxu0 %v5650
      %5859 = vmatpush.bf16.msra.mxu0 %v5648
      %5860 = vmatpush.bf16.msra.mxu0 %v5646
      %5861 = vmatpush.bf16.msra.mxu0 %v5644
      %5862 = vmatpush.bf16.msra.mxu0 %v5642
      %5863 = vmatpush.bf16.msra.mxu0 %v5640
      %5864 = vmatmul.bf16.gmra.mxu0 %v5416
      %v5865 = vpop.f32.mrf.mxu0
      %v5866 = vadd.f32 %v5785, %v5865
      %v5867 = vpop.f32.mrf.mxu0
      %5868 = vdwg.mxu0
      %5869 = vmatpush.bf16.msra.mxu0 %v5670
      %5870 = vmatpush.bf16.msra.mxu0 %v5668
      %5871 = vmatpush.bf16.msra.mxu0 %v5666
      %5872 = vmatpush.bf16.msra.mxu0 %v5664
      %5873 = vmatpush.bf16.msra.mxu0 %v5662
      %5874 = vmatpush.bf16.msra.mxu0 %v5660
      %5875 = vmatpush.bf16.msra.mxu0 %v5658
      %5876 = vmatpush.bf16.msra.mxu0 %v5656
      %5877 = vmatmul.bf16.gmra.mxu0 %v5417
      %v5878 = vpop.f32.mrf.mxu0
      %v5879 = vadd.f32 %v5866, %v5878
      %v5880 = vpop.f32.mrf.mxu0
      %5881 = vdwg.mxu0
      %5882 = vmatpush.bf16.msra.mxu0 %v5686
      %5883 = vmatpush.bf16.msra.mxu0 %v5684
      %5884 = vmatpush.bf16.msra.mxu0 %v5682
      %5885 = vmatpush.bf16.msra.mxu0 %v5680
      %5886 = vmatpush.bf16.msra.mxu0 %v5678
      %5887 = vmatpush.bf16.msra.mxu0 %v5676
      %5888 = vmatpush.bf16.msra.mxu0 %v5674
      %5889 = vmatpush.bf16.msra.mxu0 %v5672
      %5890 = vmatmul.bf16.gmra.mxu0 %v5418
      %v5891 = vpop.f32.mrf.mxu0
      %v5892 = vadd.f32 %v5879, %v5891
      %v5893 = vpop.f32.mrf.mxu0
      %5894 = vdwg.mxu0
      %5895 = vmatpush.bf16.msra.mxu0 %v5702
      %5896 = vmatpush.bf16.msra.mxu0 %v5700
      %5897 = vmatpush.bf16.msra.mxu0 %v5698
      %5898 = vmatpush.bf16.msra.mxu0 %v5696
      %5899 = vmatpush.bf16.msra.mxu0 %v5694
      %5900 = vmatpush.bf16.msra.mxu0 %v5692
      %5901 = vmatpush.bf16.msra.mxu0 %v5690
      %5902 = vmatpush.bf16.msra.mxu0 %v5688
      %5903 = vmatmul.bf16.gmra.mxu0 %v5419
      %v5904 = vpop.f32.mrf.mxu0
      %v5905 = vadd.f32 %v5892, %v5904
      %v5906 = vpop.f32.mrf.mxu0
      %5907 = vdwg.mxu0
      %5908 = vmatpush.bf16.msra.mxu0 0
      %5909 = vmatpush.bf16.msra.mxu0 0
      %5910 = vmatpush.bf16.msra.mxu0 0
      %5911 = vmatpush.bf16.msra.mxu0 0
      %5912 = vmatpush.bf16.msra.mxu0 %v5710
      %5913 = vmatpush.bf16.msra.mxu0 %v5708
      %5914 = vmatpush.bf16.msra.mxu0 %v5706
      %5915 = vmatpush.bf16.msra.mxu0 %v5704
      %5916 = vmatmul.bf16.gmra.mxu0 %v5789
      %v5917 = vpop.f32.mrf.mxu0
      %v5918 = vadd.f32 %v5905, %v5917
      %v5919 = vpop.f32.mrf.mxu0
      %5920 = vdwg.mxu0
      %v5921 = vld [vmem:[%s4 + $0x140] sm:$0xff]
      %v5922 = vld [vmem:[%s4 + $0x148] sm:$0xff]
      %v5923 = vld [vmem:[%s4 + $0x150] sm:$0xf]
      %v5924 = vld [vmem:[%s4 + $0x154] sm:$0xff]
      %v5925 = vld [vmem:[%s4 + $0x15c] sm:$0xff]
      %v5926 = vld [vmem:[%s4 + $0x164] sm:$0xf]
      %v5927 = vld [vmem:[%s4 + $0x168] sm:$0xff]
      %v5928 = vld [vmem:[%s4 + $0x170] sm:$0xff]
      %v5929 = vld [vmem:[%s4 + $0x178] sm:$0xf]
      %v5930 = vld [vmem:[%s4 + $0x17c] sm:$0xff]
      %v5931 = vld [vmem:[%s4 + $0x184] sm:$0xff]
      %v5932 = vld [vmem:[%s4 + $0x18c] sm:$0xf]
      %v5933 = vld [vmem:[%s4 + $0x190] sm:$0xff]
      %v5934 = vld [vmem:[%s4 + $0x198] sm:$0xff]
      %v5935 = vld [vmem:[%s4 + $0x1a0] sm:$0xf]
      %v5936 = vld [vmem:[%s4 + $0x1a4] sm:$0xff]
      %v5937 = vld [vmem:[%s4 + $0x1ac] sm:$0xff]
      %v5938 = vld [vmem:[%s4 + $0x1b4] sm:$0xf]
      %v5939 = vld [vmem:[%s4 + $0x1b8] sm:$0xff]
      %v5940 = vld [vmem:[%s4 + $0x1c0] sm:$0xff]
      %v5941 = vld [vmem:[%s4 + $0x1c8] sm:$0xf]
      %v5942 = vld [vmem:[%s4 + $0x1cc] sm:$0xff]
      %v5943 = vld [vmem:[%s4 + $0x1d4] sm:$0xff]
      %v5944 = vld [vmem:[%s4 + $0x1dc] sm:$0xf]
      %v5945 = vld [vmem:[%s4 + $0x1e0] sm:$0xff]
      %v5946 = vld [vmem:[%s4 + $0x1e8] sm:$0xff]
      %v5947 = vld [vmem:[%s4 + $0x1f0] sm:$0xf]
      %v5948 = vld [vmem:[%s4 + $0x1f4] sm:$0xff]
      %v5949 = vld [vmem:[%s4 + $0x1fc] sm:$0xff]
      %v5950 = vld [vmem:[%s4 + $0x204] sm:$0xf]
      %v5951 = vld [vmem:[%s4 + $0x208] sm:$0xff]
      %v5952 = vld [vmem:[%s4 + $0x210] sm:$0xff]
      %v5953 = vld [vmem:[%s4 + $0x218] sm:$0xf]
      %v5954 = vld [vmem:[%s4 + $0x21c] sm:$0xff]
      %v5955 = vld [vmem:[%s4 + $0x224] sm:$0xff]
      %v5956 = vld [vmem:[%s4 + $0x22c] sm:$0xf]
      %v5957 = vld [vmem:[%s4 + $0x230] sm:$0xff]
      %v5958 = vld [vmem:[%s4 + $0x238] sm:$0xff]
      %v5959 = vld [vmem:[%s4 + $0x240] sm:$0xf]
      %v5960 = vld [vmem:[%s4 + $0x244] sm:$0xff]
      %v5961 = vld [vmem:[%s4 + $0x24c] sm:$0xff]
      %v5962 = vld [vmem:[%s4 + $0x254] sm:$0xf]
      %v5963 = vld [vmem:[%s4 + $0x258] sm:$0xff]
      %v5964 = vld [vmem:[%s4 + $0x260] sm:$0xff]
      %v5965 = vld [vmem:[%s4 + $0x268] sm:$0xf]
      %v5966 = vld [vmem:[%s4 + $0x26c] sm:$0xff]
      %v5967 = vld [vmem:[%s4 + $0x274] sm:$0xff]
      %v5968 = vld [vmem:[%s4 + $0x27c] sm:$0xf]
      %v5969 = vld [vmem:[%s4 + $0x280] sm:$0xff]
      %v5970 = vld [vmem:[%s4 + $0x288] sm:$0xff]
      %v5971 = vld [vmem:[%s4 + $0x290] sm:$0xf]
      %v5972 = vld [vmem:[%s4 + $0x294] sm:$0xff]
      %v5973 = vld [vmem:[%s4 + $0x29c] sm:$0xff]
      %v5974 = vld [vmem:[%s4 + $0x2a4] sm:$0xf]
      %v5975 = vld [vmem:[%s4 + $0x2a8] sm:$0xff]
      %v5976 = vld [vmem:[%s4 + $0x2b0] sm:$0xff]
      %v5977 = vld [vmem:[%s4 + $0x2b8] sm:$0xf]
      %v5978 = vld [vmem:[%s4 + $0x2bc] sm:$0xff]
      %v5979 = vld [vmem:[%s4 + $0x2c4] sm:$0xff]
      %v5980 = vld [vmem:[%s4 + $0x2cc] sm:$0xf]
      %v5981 = vpack.c.bf16 %v5853, %v5853
      %v5982 = vpack.c.bf16 %v5918, %v5918
      %s5983 = scalar_lea.vmem %s8, 120
      %v5984 = vld [vmem:[%s5983] ss:$8 sm:$0xf]
      %v5985 = vld [vmem:[%s5983] ss:$8 sm:$0x10]
      %v5986 = vor.u32 %v5984, %v5985
      %v6047 = vunpack.c.l.b16 %v5921
      %v6048 = vunpack.c.h.b16 %v5921
      %v6049 = vunpack.c.l.b16 %v5922
      %v6050 = vunpack.c.h.b16 %v5922
      %v6051 = vunpack.c.l.b16 %v5923
      %v6052 = vunpack.c.l.b16 %v5924
      %v6053 = vunpack.c.h.b16 %v5924
      %v6054 = vunpack.c.l.b16 %v5925
      %v6055 = vunpack.c.h.b16 %v5925
      %v6056 = vunpack.c.l.b16 %v5926
      %v6057 = vunpack.c.l.b16 %v5927
      %v6058 = vunpack.c.h.b16 %v5927
      %v6059 = vunpack.c.l.b16 %v5928
      %v6060 = vunpack.c.h.b16 %v5928
      %v6061 = vunpack.c.l.b16 %v5929
      %v6062 = vunpack.c.l.b16 %v5930
      %v6063 = vunpack.c.h.b16 %v5930
      %v6064 = vunpack.c.l.b16 %v5931
      %v6065 = vunpack.c.h.b16 %v5931
      %v6066 = vunpack.c.l.b16 %v5932
      %v6067 = vunpack.c.l.b16 %v5933
      %v6068 = vunpack.c.h.b16 %v5933
      %v6069 = vunpack.c.l.b16 %v5934
      %v6070 = vunpack.c.h.b16 %v5934
      %v6071 = vunpack.c.l.b16 %v5935
      %v6072 = vunpack.c.l.b16 %v5936
      %v6073 = vunpack.c.h.b16 %v5936
      %v6074 = vunpack.c.l.b16 %v5937
      %v6075 = vunpack.c.h.b16 %v5937
      %v6076 = vunpack.c.l.b16 %v5938
      %v6077 = vunpack.c.l.b16 %v5939
      %v6078 = vunpack.c.h.b16 %v5939
      %v6079 = vunpack.c.l.b16 %v5940
      %v6080 = vunpack.c.h.b16 %v5940
      %v6081 = vunpack.c.l.b16 %v5941
      %v6082 = vunpack.c.l.b16 %v5942
      %v6083 = vunpack.c.h.b16 %v5942
      %v6084 = vunpack.c.l.b16 %v5943
      %v6085 = vunpack.c.h.b16 %v5943
      %v6086 = vunpack.c.l.b16 %v5944
      %v6087 = vunpack.c.l.b16 %v5945
      %v6088 = vunpack.c.h.b16 %v5945
      %v6089 = vunpack.c.l.b16 %v5946
      %v6090 = vunpack.c.h.b16 %v5946
      %v6091 = vunpack.c.l.b16 %v5947
      %v6092 = vunpack.c.l.b16 %v5948
      %v6093 = vunpack.c.h.b16 %v5948
      %v6094 = vunpack.c.l.b16 %v5949
      %v6095 = vunpack.c.h.b16 %v5949
      %v6096 = vunpack.c.l.b16 %v5950
      %v6097 = vunpack.c.l.b16 %v5951
      %v6098 = vunpack.c.h.b16 %v5951
      %v6099 = vunpack.c.l.b16 %v5952
      %v6100 = vunpack.c.h.b16 %v5952
      %v6101 = vunpack.c.l.b16 %v5953
      %v6102 = vunpack.c.l.b16 %v5954
      %v6103 = vunpack.c.h.b16 %v5954
      %v6104 = vunpack.c.l.b16 %v5955
      %v6105 = vunpack.c.h.b16 %v5955
      %v6106 = vunpack.c.l.b16 %v5956
      %v6107 = vunpack.c.l.b16 %v5957
      %v6108 = vunpack.c.h.b16 %v5957
      %v6109 = vunpack.c.l.b16 %v5958
      %v6110 = vunpack.c.h.b16 %v5958
      %v6111 = vunpack.c.l.b16 %v5959
      %v6112 = vunpack.c.l.b16 %v5960
      %v6113 = vunpack.c.h.b16 %v5960
      %v6114 = vunpack.c.l.b16 %v5961
      %v6115 = vunpack.c.h.b16 %v5961
      %v6116 = vunpack.c.l.b16 %v5962
      %v6117 = vunpack.c.l.b16 %v5963
      %v6118 = vunpack.c.h.b16 %v5963
      %v6119 = vunpack.c.l.b16 %v5964
      %v6120 = vunpack.c.h.b16 %v5964
      %v6121 = vunpack.c.l.b16 %v5965
      %v6122 = vunpack.c.l.b16 %v5966
      %v6123 = vunpack.c.h.b16 %v5966
      %v6124 = vunpack.c.l.b16 %v5967
      %v6125 = vunpack.c.h.b16 %v5967
      %v6126 = vunpack.c.l.b16 %v5968
      %v6127 = vunpack.c.l.b16 %v5969
      %v6128 = vunpack.c.h.b16 %v5969
      %v6129 = vunpack.c.l.b16 %v5970
      %v6130 = vunpack.c.h.b16 %v5970
      %v6131 = vunpack.c.l.b16 %v5971
      %v6132 = vunpack.c.l.b16 %v5972
      %v6133 = vunpack.c.h.b16 %v5972
      %v6134 = vunpack.c.l.b16 %v5973
      %v6135 = vunpack.c.h.b16 %v5973
      %v6136 = vunpack.c.l.b16 %v5974
      %v6137 = vunpack.c.l.b16 %v5975
      %v6138 = vunpack.c.h.b16 %v5975
      %v6139 = vunpack.c.l.b16 %v5976
      %v6140 = vunpack.c.h.b16 %v5976
      %v6141 = vunpack.c.l.b16 %v5977
      %v6142 = vunpack.c.l.b16 %v5978
      %v6143 = vunpack.c.h.b16 %v5978
      %v6144 = vunpack.c.l.b16 %v5979
      %v6145 = vunpack.c.h.b16 %v5979
      %v6146 = vunpack.c.l.b16 %v5980
      %v6147 = vpack.c.b16 %v6052, %v6047
      %v6148 = vpack.c.b16 %v6053, %v6048
      %v6149 = vpack.c.b16 %v6054, %v6049
      %v6150 = vpack.c.b16 %v6055, %v6050
      %v6151 = vpack.c.b16 %v6056, %v6051
      %v6152 = vpack.c.b16 %v6062, %v6057
      %v6153 = vpack.c.b16 %v6063, %v6058
      %v6154 = vpack.c.b16 %v6064, %v6059
      %v6155 = vpack.c.b16 %v6065, %v6060
      %v6156 = vpack.c.b16 %v6066, %v6061
      %v6157 = vpack.c.b16 %v6072, %v6067
      %v6158 = vpack.c.b16 %v6073, %v6068
      %v6159 = vpack.c.b16 %v6074, %v6069
      %v6160 = vpack.c.b16 %v6075, %v6070
      %v6161 = vpack.c.b16 %v6076, %v6071
      %v6162 = vpack.c.b16 %v6082, %v6077
      %v6163 = vpack.c.b16 %v6083, %v6078
      %v6164 = vpack.c.b16 %v6084, %v6079
      %v6165 = vpack.c.b16 %v6085, %v6080
      %v6166 = vpack.c.b16 %v6086, %v6081
      %v6167 = vpack.c.b16 %v6092, %v6087
      %v6168 = vpack.c.b16 %v6093, %v6088
      %v6169 = vpack.c.b16 %v6094, %v6089
      %v6170 = vpack.c.b16 %v6095, %v6090
      %v6171 = vpack.c.b16 %v6096, %v6091
      %v6172 = vpack.c.b16 %v6102, %v6097
      %v6173 = vpack.c.b16 %v6103, %v6098
      %v6174 = vpack.c.b16 %v6104, %v6099
      %v6175 = vpack.c.b16 %v6105, %v6100
      %v6176 = vpack.c.b16 %v6106, %v6101
      %v6177 = vpack.c.b16 %v6112, %v6107
      %v6178 = vpack.c.b16 %v6113, %v6108
      %v6179 = vpack.c.b16 %v6114, %v6109
      %v6180 = vpack.c.b16 %v6115, %v6110
      %v6181 = vpack.c.b16 %v6116, %v6111
      %v6182 = vpack.c.b16 %v6122, %v6117
      %v6183 = vpack.c.b16 %v6123, %v6118
      %v6184 = vpack.c.b16 %v6124, %v6119
      %v6185 = vpack.c.b16 %v6125, %v6120
      %v6186 = vpack.c.b16 %v6126, %v6121
      %v6187 = vpack.c.b16 %v6132, %v6127
      %v6188 = vpack.c.b16 %v6133, %v6128
      %v6189 = vpack.c.b16 %v6134, %v6129
      %v6190 = vpack.c.b16 %v6135, %v6130
      %v6191 = vpack.c.b16 %v6136, %v6131
      %v6192 = vpack.c.b16 %v6142, %v6137
      %v6193 = vpack.c.b16 %v6143, %v6138
      %v6194 = vpack.c.b16 %v6144, %v6139
      %v6195 = vpack.c.b16 %v6145, %v6140
      %v6196 = vpack.c.b16 %v6146, %v6141
      %v6248 = vperm.slane %v5986, 0
      %v6249 = vperm.slane %v5986, 1
      %v6250 = vperm.slane %v5986, 2
      %v6251 = vperm.slane %v5986, 3
      %v6252 = vperm.slane %v5986, 4
      %vm6258 = vcmask 261120
      %v6260 = vsel %vm6258, %v5982, 0
      %6262 = vmatpush.bf16.msra.mxu0 %v6182
      %6263 = vmatpush.bf16.msra.mxu0 %v6177
      %6264 = vmatpush.bf16.msra.mxu0 %v6172
      %6265 = vmatpush.bf16.msra.mxu0 %v6167
      %6266 = vmatpush.bf16.msra.mxu0 %v6162
      %6267 = vmatpush.bf16.msra.mxu0 %v6157
      %6268 = vmatpush.bf16.msra.mxu0 %v6152
      %6269 = vmatpush.bf16.msra.mxu0 %v6147
      %6270 = vmatmul.bf16.gmra.mxu0 %v5981
      %v6271 = vpop.f32.mrf.mxu0
      %v6272 = vadd.f32 %v6248, %v6271
      %v6273 = vpop.f32.mrf.mxu0
      %6274 = vdwg.mxu0
      %6275 = vmatpush.bf16.msra.mxu0 0
      %6276 = vmatpush.bf16.msra.mxu0 0
      %6277 = vmatpush.bf16.msra.mxu0 0
      %6278 = vmatpush.bf16.msra.mxu0 0
      %6279 = vmatpush.bf16.msra.mxu0 0
      %6280 = vmatpush.bf16.msra.mxu0 0
      %6281 = vmatpush.bf16.msra.mxu0 %v6192
      %6282 = vmatpush.bf16.msra.mxu0 %v6187
      %6283 = vmatmul.bf16.gmra.mxu0 %v6260
      %v6284 = vpop.f32.mrf.mxu0
      %v6285 = vadd.f32 %v6272, %v6284
      %v6286 = vpop.f32.mrf.mxu0
      %6287 = vdwg.mxu0
      %6288 = vmatpush.bf16.msra.mxu0 %v6183
      %6289 = vmatpush.bf16.msra.mxu0 %v6178
      %6290 = vmatpush.bf16.msra.mxu0 %v6173
      %6291 = vmatpush.bf16.msra.mxu0 %v6168
      %6292 = vmatpush.bf16.msra.mxu0 %v6163
      %6293 = vmatpush.bf16.msra.mxu0 %v6158
      %6294 = vmatpush.bf16.msra.mxu0 %v6153
      %6295 = vmatpush.bf16.msra.mxu0 %v6148
      %6296 = vmatmul.bf16.gmra.mxu0 %v5981
      %v6297 = vpop.f32.mrf.mxu0
      %v6298 = vadd.f32 %v6249, %v6297
      %v6299 = vpop.f32.mrf.mxu0
      %6300 = vdwg.mxu0
      %6301 = vmatpush.bf16.msra.mxu0 0
      %6302 = vmatpush.bf16.msra.mxu0 0
      %6303 = vmatpush.bf16.msra.mxu0 0
      %6304 = vmatpush.bf16.msra.mxu0 0
      %6305 = vmatpush.bf16.msra.mxu0 0
      %6306 = vmatpush.bf16.msra.mxu0 0
      %6307 = vmatpush.bf16.msra.mxu0 %v6193
      %6308 = vmatpush.bf16.msra.mxu0 %v6188
      %6309 = vmatmul.bf16.gmra.mxu0 %v6260
      %v6310 = vpop.f32.mrf.mxu0
      %v6311 = vadd.f32 %v6298, %v6310
      %v6312 = vpop.f32.mrf.mxu0
      %6313 = vdwg.mxu0
      %6314 = vmatpush.bf16.msra.mxu0 %v6184
      %6315 = vmatpush.bf16.msra.mxu0 %v6179
      %6316 = vmatpush.bf16.msra.mxu0 %v6174
      %6317 = vmatpush.bf16.msra.mxu0 %v6169
      %6318 = vmatpush.bf16.msra.mxu0 %v6164
      %6319 = vmatpush.bf16.msra.mxu0 %v6159
      %6320 = vmatpush.bf16.msra.mxu0 %v6154
      %6321 = vmatpush.bf16.msra.mxu0 %v6149
      %6322 = vmatmul.bf16.gmra.mxu0 %v5981
      %v6323 = vpop.f32.mrf.mxu0
      %v6324 = vadd.f32 %v6250, %v6323
      %v6325 = vpop.f32.mrf.mxu0
      %6326 = vdwg.mxu0
      %6327 = vmatpush.bf16.msra.mxu0 0
      %6328 = vmatpush.bf16.msra.mxu0 0
      %6329 = vmatpush.bf16.msra.mxu0 0
      %6330 = vmatpush.bf16.msra.mxu0 0
      %6331 = vmatpush.bf16.msra.mxu0 0
      %6332 = vmatpush.bf16.msra.mxu0 0
      %6333 = vmatpush.bf16.msra.mxu0 %v6194
      %6334 = vmatpush.bf16.msra.mxu0 %v6189
      %6335 = vmatmul.bf16.gmra.mxu0 %v6260
      %v6336 = vpop.f32.mrf.mxu0
      %v6337 = vadd.f32 %v6324, %v6336
      %v6338 = vpop.f32.mrf.mxu0
      %6339 = vdwg.mxu0
      %6340 = vmatpush.bf16.msra.mxu0 %v6185
      %6341 = vmatpush.bf16.msra.mxu0 %v6180
      %6342 = vmatpush.bf16.msra.mxu0 %v6175
      %6343 = vmatpush.bf16.msra.mxu0 %v6170
      %6344 = vmatpush.bf16.msra.mxu0 %v6165
      %6345 = vmatpush.bf16.msra.mxu0 %v6160
      %6346 = vmatpush.bf16.msra.mxu0 %v6155
      %6347 = vmatpush.bf16.msra.mxu0 %v6150
      %6348 = vmatmul.bf16.gmra.mxu0 %v5981
      %v6349 = vpop.f32.mrf.mxu0
      %v6350 = vadd.f32 %v6251, %v6349
      %v6351 = vpop.f32.mrf.mxu0
      %6352 = vdwg.mxu0
      %6353 = vmatpush.bf16.msra.mxu0 0
      %6354 = vmatpush.bf16.msra.mxu0 0
      %6355 = vmatpush.bf16.msra.mxu0 0
      %6356 = vmatpush.bf16.msra.mxu0 0
      %6357 = vmatpush.bf16.msra.mxu0 0
      %6358 = vmatpush.bf16.msra.mxu0 0
      %6359 = vmatpush.bf16.msra.mxu0 %v6195
      %6360 = vmatpush.bf16.msra.mxu0 %v6190
      %6361 = vmatmul.bf16.gmra.mxu0 %v6260
      %v6362 = vpop.f32.mrf.mxu0
      %v6363 = vadd.f32 %v6350, %v6362
      %v6364 = vpop.f32.mrf.mxu0
      %6365 = vdwg.mxu0
      %6366 = vmatpush.bf16.msra.mxu0 %v6186
      %6367 = vmatpush.bf16.msra.mxu0 %v6181
      %6368 = vmatpush.bf16.msra.mxu0 %v6176
      %6369 = vmatpush.bf16.msra.mxu0 %v6171
      %6370 = vmatpush.bf16.msra.mxu0 %v6166
      %6371 = vmatpush.bf16.msra.mxu0 %v6161
      %6372 = vmatpush.bf16.msra.mxu0 %v6156
      %6373 = vmatpush.bf16.msra.mxu0 %v6151
      %6374 = vmatmul.bf16.gmra.mxu0 %v5981
      %v6375 = vpop.f32.mrf.mxu0
      %v6376 = vadd.f32 %v6252, %v6375
      %v6377 = vpop.f32.mrf.mxu0
      %6378 = vdwg.mxu0
      %6379 = vmatpush.bf16.msra.mxu0 0
      %6380 = vmatpush.bf16.msra.mxu0 0
      %6381 = vmatpush.bf16.msra.mxu0 0
      %6382 = vmatpush.bf16.msra.mxu0 0
      %6383 = vmatpush.bf16.msra.mxu0 0
      %6384 = vmatpush.bf16.msra.mxu0 0
      %6385 = vmatpush.bf16.msra.mxu0 %v6196
      %6386 = vmatpush.bf16.msra.mxu0 %v6191
      %6387 = vmatmul.bf16.gmra.mxu0 %v6260
      %v6388 = vpop.f32.mrf.mxu0
      %v6389 = vadd.f32 %v6376, %v6388
      %v6390 = vpop.f32.mrf.mxu0
      %6391 = vdwg.mxu0
      %v6392 = vsub.f32 0.0, %v6285
      %v6393 = vsub.f32 0.0, %v6311
      %v6394 = vsub.f32 0.0, %v6337
      %v6395 = vsub.f32 0.0, %v6363
      %v6396 = vsub.f32 0.0, %v6389
      %v6397 = vmul.f32 %v6392, 1.442695
      %v6398 = vpow.pop %v6397
      %v6399 = vmul.f32 %v6393, 1.442695
      %v6400 = vpow.pop %v6399
      %v6401 = vmul.f32 %v6394, 1.442695
      %v6402 = vpow.pop %v6401
      %v6403 = vmul.f32 %v6395, 1.442695
      %v6404 = vpow.pop %v6403
      %v6405 = vmul.f32 %v6396, 1.442695
      %v6406 = vpow.pop %v6405
      %v6407 = vadd.f32 %v6398, 1.0
      %v6408 = vadd.f32 %v6400, 1.0
      %v6409 = vadd.f32 %v6402, 1.0
      %v6410 = vadd.f32 %v6404, 1.0
      %v6411 = vadd.f32 %v6406, 1.0
      %v6412 = vrcp.pop %v6407
      %v6413 = vrcp.pop %v6408
      %v6414 = vrcp.pop %v6409
      %v6415 = vrcp.pop %v6410
      %v6416 = vrcp.pop %v6411
      %v6417 = vmul.f32 %v6285, %v6412
      %v6418 = vmul.f32 %v6311, %v6413
      %v6419 = vmul.f32 %v6337, %v6414
      %v6420 = vmul.f32 %v6363, %v6415
      %v6421 = vmul.f32 %v6389, %v6416
      %v6422 = vld [vmem:[%s1 + $0x73c] sm:$0xf]
      %v6423 = vld [vmem:[%s1 + $0x740] sm:$0xf]
      %v6424 = vld [vmem:[%s1 + $0x744] sm:$0xf]
      %v6425 = vld [vmem:[%s1 + $0x748] sm:$0xf]
      %v6426 = vld [vmem:[%s1 + $0x74c] sm:$0xf]
      %v6427 = vld [vmem:[%s1 + $0x750] sm:$0xf]
      %v6428 = vld [vmem:[%s1 + $0x754] sm:$0xf]
      %v6429 = vld [vmem:[%s1 + $0x758] sm:$0xf]
      %v6430 = vld [vmem:[%s1 + $0x75c] sm:$0xf]
      %v6431 = vld [vmem:[%s1 + $0x760] sm:$0xf]
      %v6432 = vld [vmem:[%s1 + $0x764] sm:$0xf]
      %v6433 = vld [vmem:[%s1 + $0x768] sm:$0xf]
      %v6434 = vld [vmem:[%s1 + $0x76c] sm:$0xf]
      %v6435 = vld [vmem:[%s1 + $0x770] sm:$0xf]
      %v6436 = vld [vmem:[%s1 + $0x774] sm:$0xf]
      %v6437 = vld [vmem:[%s1 + $0x778] sm:$0xf]
      %v6438 = vld [vmem:[%s1 + $0x77c] sm:$0xf]
      %v6439 = vld [vmem:[%s1 + $0x780] sm:$0xf]
      %v6440 = vld [vmem:[%s1 + $0x784] sm:$0xf]
      %v6441 = vld [vmem:[%s1 + $0x788] sm:$0xf]
      %v6442 = vld [vmem:[%s1 + $0x78c] sm:$0xf]
      %v6443 = vld [vmem:[%s1 + $0x790] sm:$0xf]
      %v6444 = vld [vmem:[%s1 + $0x794] sm:$0xf]
      %v6445 = vld [vmem:[%s1 + $0x798] sm:$0xf]
      %v6446 = vld [vmem:[%s1 + $0x79c] sm:$0xf]
      %v6447 = vld [vmem:[%s1 + $0x7a0] sm:$0xf]
      %v6448 = vld [vmem:[%s1 + $0x7a4] sm:$0xf]
      %v6449 = vld [vmem:[%s1 + $0x7a8] sm:$0xf]
      %v6450 = vld [vmem:[%s1 + $0x7ac] sm:$0xf]
      %v6451 = vld [vmem:[%s1 + $0x7b0] sm:$0xf]
      %v6452 = vld [vmem:[%s1 + $0x7b4] sm:$0xf]
      %v6453 = vld [vmem:[%s1 + $0x7b8] sm:$0xf]
      %v6454 = vld [vmem:[%s1 + $0x7bc] sm:$0xf]
      %v6455 = vld [vmem:[%s1 + $0x7c0] sm:$0xf]
      %v6456 = vld [vmem:[%s1 + $0x7c4] sm:$0xf]
      %v6457 = vld [vmem:[%s1 + $0x7c8] sm:$0xf]
      %v6458 = vld [vmem:[%s1 + $0x7cc] sm:$0xf]
      %v6459 = vld [vmem:[%s1 + $0x7d0] sm:$0xf]
      %v6460 = vld [vmem:[%s1 + $0x7d4] sm:$0xf]
      %v6461 = vld [vmem:[%s1 + $0x7d8] sm:$0xf]
      %v6462 = vld [vmem:[%s1 + $0x7dc] sm:$0xf]
      %v6463 = vld [vmem:[%s1 + $0x7e0] sm:$0xf]
      %v6464 = vld [vmem:[%s1 + $0x7e4] sm:$0xf]
      %v6465 = vld [vmem:[%s1 + $0x7e8] sm:$0xf]
      %v6466 = vld [vmem:[%s1 + $0x7ec] sm:$0xf]
      %v6467 = vld [vmem:[%s1 + $0x7f0] sm:$0xf]
      %v6468 = vld [vmem:[%s1 + $0x7f4] sm:$0xf]
      %v6469 = vld [vmem:[%s1 + $0x7f8] sm:$0xf]
      %v6470 = vld [vmem:[%s1 + $0x7fc] sm:$0xf]
      %v6471 = vld [vmem:[%s1 + $0x800] sm:$0xf]
      %v6472 = vld [vmem:[%s1 + $0x804] sm:$0xf]
      %v6473 = vld [vmem:[%s1 + $0x808] sm:$0xf]
      %v6474 = vld [vmem:[%s1 + $0x80c] sm:$0xf]
      %v6475 = vld [vmem:[%s1 + $0x810] sm:$0xf]
      %v6476 = vld [vmem:[%s1 + $0x814] sm:$0xf]
      %v6477 = vld [vmem:[%s1 + $0x818] sm:$0xf]
      %v6478 = vld [vmem:[%s1 + $0x81c] sm:$0xf]
      %v6479 = vld [vmem:[%s1 + $0x820] sm:$0xf]
      %v6480 = vld [vmem:[%s1 + $0x824] sm:$0xf]
      %v6481 = vld [vmem:[%s1 + $0x828] sm:$0xf]
      %v6482 = vld [vmem:[%s1 + $0x82c] sm:$0xf]
      %v6483 = vld [vmem:[%s1 + $0x830] sm:$0xf]
      %v6484 = vld [vmem:[%s1 + $0x834] sm:$0xf]
      %v6485 = vld [vmem:[%s1 + $0x838] sm:$0xf]
      %v6486 = vld [vmem:[%s1 + $0x83c] sm:$0xf]
      %v6487 = vld [vmem:[%s1 + $0x840] sm:$0xf]
      %v6488 = vld [vmem:[%s1 + $0x844] sm:$0xf]
      %v6489 = vld [vmem:[%s1 + $0x848] sm:$0xf]
      %v6490 = vld [vmem:[%s1 + $0x84c] sm:$0xf]
      %v6491 = vld [vmem:[%s1 + $0x850] sm:$0xf]
      %v6492 = vld [vmem:[%s1 + $0x854] sm:$0xf]
      %v6493 = vld [vmem:[%s1 + $0x858] sm:$0xf]
      %v6494 = vld [vmem:[%s1 + $0x85c] sm:$0xf]
      %v6495 = vld [vmem:[%s1 + $0x860] sm:$0xf]
      %v6496 = vld [vmem:[%s1 + $0x864] sm:$0xf]
      %v6497 = vld [vmem:[%s1 + $0x868] sm:$0xf]
      %v6498 = vld [vmem:[%s1 + $0x86c] sm:$0xf]
      %v6499 = vld [vmem:[%s1 + $0x870] sm:$0xf]
      %v6500 = vld [vmem:[%s1 + $0x874] sm:$0xf]
      %v6501 = vld [vmem:[%s1 + $0x878] sm:$0xf]
      %v6502 = vpack.c.bf16 %v6417, %v6417
      %v6503 = vpack.c.bf16 %v6418, %v6418
      %v6504 = vpack.c.bf16 %v6419, %v6419
      %v6505 = vpack.c.bf16 %v6420, %v6420
      %v6506 = vpack.c.bf16 %v6421, %v6421
      %v6507 = vld [vmem:[%s5 + $0xd8] sm:$0x1]
      %v6588 = vunpack.c.l.b16 %v6422
      %v6589 = vunpack.c.l.b16 %v6423
      %v6590 = vunpack.c.l.b16 %v6424
      %v6591 = vunpack.c.l.b16 %v6425
      %v6592 = vunpack.c.l.b16 %v6426
      %v6593 = vunpack.c.l.b16 %v6427
      %v6594 = vunpack.c.l.b16 %v6428
      %v6595 = vunpack.c.l.b16 %v6429
      %v6596 = vunpack.c.l.b16 %v6430
      %v6597 = vunpack.c.l.b16 %v6431
      %v6598 = vunpack.c.l.b16 %v6432
      %v6599 = vunpack.c.l.b16 %v6433
      %v6600 = vunpack.c.l.b16 %v6434
      %v6601 = vunpack.c.l.b16 %v6435
      %v6602 = vunpack.c.l.b16 %v6436
      %v6603 = vunpack.c.l.b16 %v6437
      %v6604 = vunpack.c.l.b16 %v6438
      %v6605 = vunpack.c.l.b16 %v6439
      %v6606 = vunpack.c.l.b16 %v6440
      %v6607 = vunpack.c.l.b16 %v6441
      %v6608 = vunpack.c.l.b16 %v6442
      %v6609 = vunpack.c.l.b16 %v6443
      %v6610 = vunpack.c.l.b16 %v6444
      %v6611 = vunpack.c.l.b16 %v6445
      %v6612 = vunpack.c.l.b16 %v6446
      %v6613 = vunpack.c.l.b16 %v6447
      %v6614 = vunpack.c.l.b16 %v6448
      %v6615 = vunpack.c.l.b16 %v6449
      %v6616 = vunpack.c.l.b16 %v6450
      %v6617 = vunpack.c.l.b16 %v6451
      %v6618 = vunpack.c.l.b16 %v6452
      %v6619 = vunpack.c.l.b16 %v6453
      %v6620 = vunpack.c.l.b16 %v6454
      %v6621 = vunpack.c.l.b16 %v6455
      %v6622 = vunpack.c.l.b16 %v6456
      %v6623 = vunpack.c.l.b16 %v6457
      %v6624 = vunpack.c.l.b16 %v6458
      %v6625 = vunpack.c.l.b16 %v6459
      %v6626 = vunpack.c.l.b16 %v6460
      %v6627 = vunpack.c.l.b16 %v6461
      %v6628 = vunpack.c.l.b16 %v6462
      %v6629 = vunpack.c.l.b16 %v6463
      %v6630 = vunpack.c.l.b16 %v6464
      %v6631 = vunpack.c.l.b16 %v6465
      %v6632 = vunpack.c.l.b16 %v6466
      %v6633 = vunpack.c.l.b16 %v6467
      %v6634 = vunpack.c.l.b16 %v6468
      %v6635 = vunpack.c.l.b16 %v6469
      %v6636 = vunpack.c.l.b16 %v6470
      %v6637 = vunpack.c.l.b16 %v6471
      %v6638 = vunpack.c.l.b16 %v6472
      %v6639 = vunpack.c.l.b16 %v6473
      %v6640 = vunpack.c.l.b16 %v6474
      %v6641 = vunpack.c.l.b16 %v6475
      %v6642 = vunpack.c.l.b16 %v6476
      %v6643 = vunpack.c.l.b16 %v6477
      %v6644 = vunpack.c.l.b16 %v6478
      %v6645 = vunpack.c.l.b16 %v6479
      %v6646 = vunpack.c.l.b16 %v6480
      %v6647 = vunpack.c.l.b16 %v6481
      %v6648 = vunpack.c.l.b16 %v6482
      %v6649 = vunpack.c.l.b16 %v6483
      %v6650 = vunpack.c.l.b16 %v6484
      %v6651 = vunpack.c.l.b16 %v6485
      %v6652 = vunpack.c.l.b16 %v6486
      %v6653 = vunpack.c.l.b16 %v6487
      %v6654 = vunpack.c.l.b16 %v6488
      %v6655 = vunpack.c.l.b16 %v6489
      %v6656 = vunpack.c.l.b16 %v6490
      %v6657 = vunpack.c.l.b16 %v6491
      %v6658 = vunpack.c.l.b16 %v6492
      %v6659 = vunpack.c.l.b16 %v6493
      %v6660 = vunpack.c.l.b16 %v6494
      %v6661 = vunpack.c.l.b16 %v6495
      %v6662 = vunpack.c.l.b16 %v6496
      %v6663 = vunpack.c.l.b16 %v6497
      %v6664 = vunpack.c.l.b16 %v6498
      %v6665 = vunpack.c.l.b16 %v6499
      %v6666 = vunpack.c.l.b16 %v6500
      %v6667 = vunpack.c.l.b16 %v6501
      %v6668 = vpack.c.b16 %v6589, %v6588
      %v6669 = vpack.c.b16 %v6591, %v6590
      %v6670 = vpack.c.b16 %v6593, %v6592
      %v6671 = vpack.c.b16 %v6595, %v6594
      %v6672 = vpack.c.b16 %v6597, %v6596
      %v6673 = vpack.c.b16 %v6599, %v6598
      %v6674 = vpack.c.b16 %v6601, %v6600
      %v6675 = vpack.c.b16 %v6603, %v6602
      %v6676 = vpack.c.b16 %v6605, %v6604
      %v6677 = vpack.c.b16 %v6607, %v6606
      %v6678 = vpack.c.b16 %v6609, %v6608
      %v6679 = vpack.c.b16 %v6611, %v6610
      %v6680 = vpack.c.b16 %v6613, %v6612
      %v6681 = vpack.c.b16 %v6615, %v6614
      %v6682 = vpack.c.b16 %v6617, %v6616
      %v6683 = vpack.c.b16 %v6619, %v6618
      %v6684 = vpack.c.b16 %v6621, %v6620
      %v6685 = vpack.c.b16 %v6623, %v6622
      %v6686 = vpack.c.b16 %v6625, %v6624
      %v6687 = vpack.c.b16 %v6627, %v6626
      %v6688 = vpack.c.b16 %v6629, %v6628
      %v6689 = vpack.c.b16 %v6631, %v6630
      %v6690 = vpack.c.b16 %v6633, %v6632
      %v6691 = vpack.c.b16 %v6635, %v6634
      %v6692 = vpack.c.b16 %v6637, %v6636
      %v6693 = vpack.c.b16 %v6639, %v6638
      %v6694 = vpack.c.b16 %v6641, %v6640
      %v6695 = vpack.c.b16 %v6643, %v6642
      %v6696 = vpack.c.b16 %v6645, %v6644
      %v6697 = vpack.c.b16 %v6647, %v6646
      %v6698 = vpack.c.b16 %v6649, %v6648
      %v6699 = vpack.c.b16 %v6651, %v6650
      %v6700 = vpack.c.b16 %v6653, %v6652
      %v6701 = vpack.c.b16 %v6655, %v6654
      %v6702 = vpack.c.b16 %v6657, %v6656
      %v6703 = vpack.c.b16 %v6659, %v6658
      %v6704 = vpack.c.b16 %v6661, %v6660
      %v6705 = vpack.c.b16 %v6663, %v6662
      %v6706 = vpack.c.b16 %v6665, %v6664
      %v6707 = vpack.c.b16 %v6667, %v6666
      %6748 = vmatpush.bf16.msra.mxu0 %v6675
      %6749 = vmatpush.bf16.msra.mxu0 %v6674
      %6750 = vmatpush.bf16.msra.mxu0 %v6673
      %6751 = vmatpush.bf16.msra.mxu0 %v6672
      %6752 = vmatpush.bf16.msra.mxu0 %v6671
      %6753 = vmatpush.bf16.msra.mxu0 %v6670
      %6754 = vmatpush.bf16.msra.mxu0 %v6669
      %6755 = vmatpush.bf16.msra.mxu0 %v6668
      %6756 = vmatmul.bf16.gmra.mxu0 %v6502
      %v6757 = vpop.f32.mrf.mxu0
      %v6758 = vadd.f32 %v6507, %v6757
      %v6759 = vpop.f32.mrf.mxu0
      %6760 = vdwg.mxu0
      %6761 = vmatpush.bf16.msra.mxu0 %v6683
      %6762 = vmatpush.bf16.msra.mxu0 %v6682
      %6763 = vmatpush.bf16.msra.mxu0 %v6681
      %6764 = vmatpush.bf16.msra.mxu0 %v6680
      %6765 = vmatpush.bf16.msra.mxu0 %v6679
      %6766 = vmatpush.bf16.msra.mxu0 %v6678
      %6767 = vmatpush.bf16.msra.mxu0 %v6677
      %6768 = vmatpush.bf16.msra.mxu0 %v6676
      %6769 = vmatmul.bf16.gmra.mxu0 %v6503
      %v6770 = vpop.f32.mrf.mxu0
      %v6771 = vadd.f32 %v6758, %v6770
      %v6772 = vpop.f32.mrf.mxu0
      %6773 = vdwg.mxu0
      %6774 = vmatpush.bf16.msra.mxu0 %v6691
      %6775 = vmatpush.bf16.msra.mxu0 %v6690
      %6776 = vmatpush.bf16.msra.mxu0 %v6689
      %6777 = vmatpush.bf16.msra.mxu0 %v6688
      %6778 = vmatpush.bf16.msra.mxu0 %v6687
      %6779 = vmatpush.bf16.msra.mxu0 %v6686
      %6780 = vmatpush.bf16.msra.mxu0 %v6685
      %6781 = vmatpush.bf16.msra.mxu0 %v6684
      %6782 = vmatmul.bf16.gmra.mxu0 %v6504
      %v6783 = vpop.f32.mrf.mxu0
      %v6784 = vadd.f32 %v6771, %v6783
      %v6785 = vpop.f32.mrf.mxu0
      %6786 = vdwg.mxu0
      %6787 = vmatpush.bf16.msra.mxu0 %v6699
      %6788 = vmatpush.bf16.msra.mxu0 %v6698
      %6789 = vmatpush.bf16.msra.mxu0 %v6697
      %6790 = vmatpush.bf16.msra.mxu0 %v6696
      %6791 = vmatpush.bf16.msra.mxu0 %v6695
      %6792 = vmatpush.bf16.msra.mxu0 %v6694
      %6793 = vmatpush.bf16.msra.mxu0 %v6693
      %6794 = vmatpush.bf16.msra.mxu0 %v6692
      %6795 = vmatmul.bf16.gmra.mxu0 %v6505
      %v6796 = vpop.f32.mrf.mxu0
      %v6797 = vadd.f32 %v6784, %v6796
      %v6798 = vpop.f32.mrf.mxu0
      %6799 = vdwg.mxu0
      %6800 = vmatpush.bf16.msra.mxu0 %v6707
      %6801 = vmatpush.bf16.msra.mxu0 %v6706
      %6802 = vmatpush.bf16.msra.mxu0 %v6705
      %6803 = vmatpush.bf16.msra.mxu0 %v6704
      %6804 = vmatpush.bf16.msra.mxu0 %v6703
      %6805 = vmatpush.bf16.msra.mxu0 %v6702
      %6806 = vmatpush.bf16.msra.mxu0 %v6701
      %6807 = vmatpush.bf16.msra.mxu0 %v6700
      %6808 = vmatmul.bf16.gmra.mxu0 %v6506
      %v6809 = vpop.f32.mrf.mxu0
      %v6810 = vadd.f32 %v6797, %v6809
      %v6811 = vpop.f32.mrf.mxu0
      %6812 = vdwg.mxu0
      %v6813 = vsub.f32 0.0, %v6810
      %v6814 = vmul.f32 %v6813, 1.442695
      %v6815 = vpow.pop %v6814
      %v6816 = vadd.f32 %v6815, 1.0
      %v6817 = vrcp.pop %v6816
      %v6818 = vmul.f32 %v6816, %v6817
      %v6819 = vsub.f32 1.0, %v6818
      %v6820 = vmul.f32 %v6817, %v6819
      %v6821 = vadd.f32 %v6817, %v6820
      %vm6822 = vweird.f32 %v6816
      %vm6823 = vweird.f32 %v6817
      %vm6824 = vmor %vm6822, %vm6823
      %v6825 = vsel %vm6824, %v6817, %v6821
      %v6826 = vand.u32 2147483647, %v6816
      %vm6827 = vcmp.eq.f32.partialorder %v6826, 8.507059e+37
      %v6828 = vand.u32 %v6816, 2147483648
      %v6829 = vor.u32 1.1754944e-38, %v6828
      %v6830 = vsel %vm6827, %v6829, %v6825
      %v6831 = vmul.f32 1.0, %v6830
      %vm6832 = vcmask 0
      %6833 = vst.msk [vmem:[%s328] sm:$0x1] %vm6832, %v6831
      %p6834 = scmp.lt.s32.totalorder %s20, 1
      %s6835 = scalar_select %p6834, %s20, 1
      %s6836 = scalar_lea.vmem %s9, %s6835
      // Predicated region
      $region57: #{efficientnet_b0_forward.1} parent=55 // pred_check
        %p6837 = pneg %p232
      $region58: #{efficientnet_b0_forward.1} parent=55 // pred_check_branch
        %6839 = sbr.rel (%p6837) target = $region60
      $region59: #{efficientnet_b0_forward.1} parent=55 // pred_region
        _
      $region60: #{efficientnet_b0_forward.1} parent=55 // pred_fallthru
        _
    $region56: #{efficientnet_b0_forward.1} parent=5 // pred_fallthru
      _
    %p6840 = scmp.le.s32.totalorder 2, %s15
    // Predicated region
    $region61: #{efficientnet_b0_forward.1} parent=5 // pred_check
      %p6841 = pneg %p6840
    $region62: #{efficientnet_b0_forward.1} parent=5 // pred_check_branch
      %6843 = sbr.rel (%p6841) target = $region64
    $region63: #{efficientnet_b0_forward.1} parent=5 // pred_region
      %s6844 = ssub.s32 %s15, 2
      // Predicated region
      $region65: #{efficientnet_b0_forward.1} parent=63 // pred_check
        %p6845 = pneg %p238
      $region66: #{efficientnet_b0_forward.1} parent=63 // pred_check_branch
        %6847 = sbr.rel (%p6845) target = $region68
      $region67: #{efficientnet_b0_forward.1} parent=63 // pred_region
        %p6848 = scmp.lt.s32.totalorder %s21, 1
        %s6849 = scalar_select %p6848, %s21, 1
        %s6850 = scalar_lea.vmem %s9, %s6849
      $region68: #{efficientnet_b0_forward.1} parent=63 // pred_fallthru
        _
    $region64: #{efficientnet_b0_forward.1} parent=5 // pred_fallthru
      _
  $region6: #{efficientnet_b0_forward.1} parent=0 // loop_footer
    %s19 = sadd.s32 1, %s15
  $region7: #{efficientnet_b0_forward.1} parent=0 // loop_footer_branch
    %14 = sbr.rel target = $region3
  $region8: #{efficientnet_b0_forward.1} parent=0 // loop_exit
    _

</llo_original>
